<compile_context>
chip_gen: v7x
topology: tpu7x:2x2x1
jax: 0.10.0
libtpu: 0.0.40
codegen_flags: <defaults>
</compile_context>

<pallas_src>
import functools

import jax
import jax.numpy as jnp
from jax.experimental import pallas as pl
from jax.experimental.pallas import tpu as pltpu


def _conv3x3_onto_slab(buf_ref, w_ref, b_ref, *, H, W, mxu_dtype, relu):
    """One 3x3 'same' conv as a single (H*W, 9*Cin) x (9*Cin, Cout) matmul.

    buf_ref: (H+2, W+2, Cin) zero-border padded activation (VMEM, f32)
    w_ref:   (9*Cin, Cout)   taps flattened with row order (dy, dx, cin)
    b_ref:   (1, Cout)       f32 bias
    returns  (H*W, Cout)     f32
    """
    cin = buf_ref.shape[-1]
    act = buf_ref[...]                                        # (H+2, W+2, Cin)
    # Fold dx into the lane axis: 3 column-shifted views, concatenated.
    wide = jnp.concatenate([act[:, dx:dx + W, :] for dx in range(3)], axis=-1)
    # Fold dy via cheap leading-dim slices -> im2col slab (H*W, 9*Cin),
    # ordered (dy, dx, cin) to match w.reshape(9*Cin, Cout) in the wrapper.
    slab = jnp.concatenate(
        [wide[dy:dy + H].reshape(H * W, 3 * cin) for dy in range(3)], axis=-1)
    y = jnp.dot(slab.astype(mxu_dtype), w_ref[...],
                preferred_element_type=jnp.float32)           # MXU, f32 acc
    y = y + b_ref[...]                                        # f32 epilogue
    if relu:
        y = jnp.maximum(y, 0.0)
    return y


def _fused_cnn_kernel(x_ref, w0, w1, w2, w3, w4, b0, b1, b2, b3, b4,
                      o_ref, pad_in, buf_a, buf_b, *, H, W, mxu_dtype):
    hid = buf_a.shape[-1]
    conv = functools.partial(_conv3x3_onto_slab, H=H, W=W, mxu_dtype=mxu_dtype)

    # Zero the padded scratch every grid step: keeps the 1-pixel 'same' border
    # at 0 and makes each batch element fully independent (required for the
    # "parallel" grid axis / v7x 2-TensorCore sharding).  ~0.1 MB of vst.
    pad_in[...] = jnp.zeros_like(pad_in)
    buf_a[...] = jnp.zeros_like(buf_a)
    buf_b[...] = jnp.zeros_like(buf_b)

    # In-kernel 'same' padding: copy the unpadded input block into the interior.
    pad_in[1:H + 1, 1:W + 1, :] = x_ref[0].astype(pad_in.dtype)

    # conv1 .. conv4 (+ReLU): intermediates stay in VMEM (ping-pong buffers).
    y = conv(pad_in, w0, b0, relu=True)
    buf_a[1:H + 1, 1:W + 1, :] = y.reshape(H, W, hid)
    y = conv(buf_a, w1, b1, relu=True)
    buf_b[1:H + 1, 1:W + 1, :] = y.reshape(H, W, hid)
    y = conv(buf_b, w2, b2, relu=True)
    buf_a[1:H + 1, 1:W + 1, :] = y.reshape(H, W, hid)
    y = conv(buf_a, w3, b3, relu=True)
    buf_b[1:H + 1, 1:W + 1, :] = y.reshape(H, W, hid)
    # conv5: no ReLU, straight to the output block.
    y = conv(buf_b, w4, b4, relu=False)
    o_ref[...] = y.reshape(1, H, W, o_ref.shape[-1]).astype(o_ref.dtype)


def cnn_layer_forward(x, params, *, mxu_dtype=jnp.bfloat16):
    """Fused forward pass. x: (N, H, W, 2) NHWC -> (N, H, W, 2) NHWC."""
    N, H, W, cin0 = x.shape
    assert len(params) == 5 and cin0 == params[0][0].shape[2]
    hid = params[0][0].shape[-1]
    cout_last = params[-1][0].shape[-1]

    # Pre-reshape + pre-cast weights ONCE in the wrapper (no per-tap converts
    # inside the kernel): (3, 3, Cin, Cout) -> (9*Cin, Cout), rows (dy, dx, cin).
    w_flat = [w.reshape(9 * w.shape[2], w.shape[3]).astype(mxu_dtype)
              for (w, _) in params]
    b_flat = [b.reshape(1, -1).astype(jnp.float32) for (_, b) in params]

    kernel = functools.partial(_fused_cnn_kernel, H=H, W=W, mxu_dtype=mxu_dtype)

    w_specs = [pl.BlockSpec(wf.shape, lambda n: (0, 0)) for wf in w_flat]
    b_specs = [pl.BlockSpec(bf.shape, lambda n: (0, 0)) for bf in b_flat]

    return pl.pallas_call(
        kernel,
        out_shape=jax.ShapeDtypeStruct((N, H, W, cout_last), x.dtype),
        grid_spec=pltpu.PrefetchScalarGridSpec(
            num_scalar_prefetch=0,
            grid=(N,),
            in_specs=([pl.BlockSpec((1, H, W, cin0), lambda n: (n, 0, 0, 0))]
                      + w_specs + b_specs),
            out_specs=pl.BlockSpec((1, H, W, cout_last),
                                   lambda n: (n, 0, 0, 0)),
            scratch_shapes=[
                pltpu.VMEM((H + 2, W + 2, cin0), jnp.float32),  # padded input
                pltpu.VMEM((H + 2, W + 2, hid), jnp.float32),   # ping
                pltpu.VMEM((H + 2, W + 2, hid), jnp.float32),   # pong
            ],
        ),
        compiler_params=pltpu.CompilerParams(
            dimension_semantics=("parallel",),   # v7x: one batch elem per TC
        ),
    )(x, *w_flat, *b_flat)


def init_cnn_layer_params(key, hiddim=32):
    """Deterministic synthetic init matching nn.Conv2d shapes (HWIO layout)."""
    dims = [(2, hiddim), (hiddim, hiddim), (hiddim, hiddim),
            (hiddim, hiddim), (hiddim, 2)]
    params = []
    for i, (cin, cout) in enumerate(dims):
        kw, kb = jax.random.split(jax.random.fold_in(key, i))
        fan_in = cin * 9
        bound = 1.0 / jnp.sqrt(fan_in)
        w = jax.random.uniform(kw, (3, 3, cin, cout), jnp.float32,
                               minval=-bound, maxval=bound)
        b = jax.random.uniform(kb, (cout,), jnp.float32,
                               minval=-bound, maxval=bound)
        params.append((w, b))
    return params


if __name__ == "__main__":
    key = jax.random.PRNGKey(0)
    kx, kp = jax.random.split(key)

    N, H, W = 2, 16, 16
    hiddim = 32  # small synthetic hidden dim (module default is 72)

    x = jax.random.normal(kx, (N, H, W, 2), dtype=jnp.float32)
    params = init_cnn_layer_params(kp, hiddim=hiddim)

    # Pure-JAX reference (f32, highest precision).
    def ref_forward(x, params):
        y = x
        for i, (w, b) in enumerate(params):
            y = jax.lax.conv_general_dilated(
                y, w, window_strides=(1, 1), padding="SAME",
                dimension_numbers=("NHWC", "HWIO", "NHWC"),
                precision=jax.lax.Precision.HIGHEST) + b
            if i < len(params) - 1:
                y = jnp.maximum(y, 0.0)
        return y

    ref = ref_forward(x, params)

    # 1) f32 MXU operands: validates the fused conv math tightly.
    out_f32 = jax.block_until_ready(
        cnn_layer_forward(x, params, mxu_dtype=jnp.float32))
    assert out_f32.shape == (N, H, W, 2) and out_f32.dtype == jnp.float32
    assert jnp.allclose(out_f32, ref, atol=5e-4, rtol=5e-4), \
        float(jnp.max(jnp.abs(out_f32 - ref)))

    # 2) bf16 MXU operands + f32 accumulation (default perf config, v6e/v7x).
    #    Looser tolerance accounts for bf16 operand rounding across 5 layers.
    out = jax.block_until_ready(cnn_layer_forward(x, params))
    assert out.shape == (N, H, W, 2) and out.dtype == jnp.float32
    assert jnp.allclose(out, ref, atol=2e-2, rtol=2e-2), \
        float(jnp.max(jnp.abs(out - ref)))

    print("KERNEL_OK")
</pallas_src>

<mosaic_0001>
module attributes {stable_mosaic.version = 11 : i64} {
  func.func @_fused_cnn_kernel(%arg0: i32, %arg1: memref<1x16x16x2xf32, #tpu.memory_space<vmem>>, %arg2: memref<18x32xf32, #tpu.memory_space<vmem>>, %arg3: memref<288x32xf32, #tpu.memory_space<vmem>>, %arg4: memref<288x32xf32, #tpu.memory_space<vmem>>, %arg5: memref<288x32xf32, #tpu.memory_space<vmem>>, %arg6: memref<288x2xf32, #tpu.memory_space<vmem>>, %arg7: memref<1x32xf32, #tpu.memory_space<vmem>>, %arg8: memref<1x32xf32, #tpu.memory_space<vmem>>, %arg9: memref<1x32xf32, #tpu.memory_space<vmem>>, %arg10: memref<1x32xf32, #tpu.memory_space<vmem>>, %arg11: memref<1x2xf32, #tpu.memory_space<vmem>>, %arg12: memref<1x16x16x2xf32, #tpu.memory_space<vmem>>, %arg13: memref<18x18x2xf32, #tpu.memory_space<vmem>>, %arg14: memref<18x18x32xf32, #tpu.memory_space<vmem>>, %arg15: memref<18x18x32xf32, #tpu.memory_space<vmem>>) attributes {dimension_semantics = [#tpu.dimension_semantics<parallel>], iteration_bounds = array<i64: 2>, scalar_prefetch = 0 : i64, scratch_operands = 3 : i64, tpu.core_type = #tpu.core_type<tc>, window_params = [{transform_indices = @transform_0, window_bounds = array<i64: 1, 16, 16, 2>}, {pipeline_mode = #tpu.pipeline_mode<synchronous>, transform_indices = @transform_1, window_bounds = array<i64: 18, 32>}, {pipeline_mode = #tpu.pipeline_mode<synchronous>, transform_indices = @transform_2, window_bounds = array<i64: 288, 32>}, {pipeline_mode = #tpu.pipeline_mode<synchronous>, transform_indices = @transform_3, window_bounds = array<i64: 288, 32>}, {pipeline_mode = #tpu.pipeline_mode<synchronous>, transform_indices = @transform_4, window_bounds = array<i64: 288, 32>}, {pipeline_mode = #tpu.pipeline_mode<synchronous>, transform_indices = @transform_5, window_bounds = array<i64: 288, 2>}, {pipeline_mode = #tpu.pipeline_mode<synchronous>, transform_indices = @transform_6, window_bounds = array<i64: 1, 32>}, {pipeline_mode = #tpu.pipeline_mode<synchronous>, transform_indices = @transform_7, window_bounds = array<i64: 1, 32>}, {pipeline_mode = #tpu.pipeline_mode<synchronous>, transform_indices = @transform_8, window_bounds = array<i64: 1, 32>}, {pipeline_mode = #tpu.pipeline_mode<synchronous>, transform_indices = @transform_9, window_bounds = array<i64: 1, 32>}, {pipeline_mode = #tpu.pipeline_mode<synchronous>, transform_indices = @transform_10, window_bounds = array<i64: 1, 2>}, {transform_indices = @transform_11, window_bounds = array<i64: 1, 16, 16, 2>}]} {
    %cst = arith.constant 0.000000e+00 : f32
    %0 = vector.broadcast %cst : f32 to vector<18x18x2xf32>
    %c0 = arith.constant 0 : index
    %c0_0 = arith.constant 0 : index
    %c0_1 = arith.constant 0 : index
    %1 = vector.load %arg13[%c0, %c0_0, %c0_1] : memref<18x18x2xf32, #tpu.memory_space<vmem>>, vector<18x18x2xf32>
    tpu.vector_store %arg13[%c0, %c0_0, %c0_1], %0 {strides = array<i32>} : memref<18x18x2xf32, #tpu.memory_space<vmem>>, vector<18x18x2xf32>,
    %cst_2 = arith.constant 0.000000e+00 : f32
    %2 = vector.broadcast %cst_2 : f32 to vector<18x18x32xf32>
    %c0_3 = arith.constant 0 : index
    %c0_4 = arith.constant 0 : index
    %c0_5 = arith.constant 0 : index
    %3 = vector.load %arg14[%c0_3, %c0_4, %c0_5] : memref<18x18x32xf32, #tpu.memory_space<vmem>>, vector<18x18x32xf32>
    tpu.vector_store %arg14[%c0_3, %c0_4, %c0_5], %2 {strides = array<i32>} : memref<18x18x32xf32, #tpu.memory_space<vmem>>, vector<18x18x32xf32>,
    %cst_6 = arith.constant 0.000000e+00 : f32
    %4 = vector.broadcast %cst_6 : f32 to vector<18x18x32xf32>
    %c0_7 = arith.constant 0 : index
    %c0_8 = arith.constant 0 : index
    %c0_9 = arith.constant 0 : index
    %5 = vector.load %arg15[%c0_7, %c0_8, %c0_9] : memref<18x18x32xf32, #tpu.memory_space<vmem>>, vector<18x18x32xf32>
    tpu.vector_store %arg15[%c0_7, %c0_8, %c0_9], %4 {strides = array<i32>} : memref<18x18x32xf32, #tpu.memory_space<vmem>>, vector<18x18x32xf32>,
    %c0_10 = arith.constant 0 : index
    %c0_11 = arith.constant 0 : index
    %c0_12 = arith.constant 0 : index
    %c0_13 = arith.constant 0 : index
    %6 = vector.load %arg1[%c0_10, %c0_11, %c0_12, %c0_13] : memref<1x16x16x2xf32, #tpu.memory_space<vmem>>, vector<1x16x16x2xf32>
    %7 = vector.shape_cast %6 : vector<1x16x16x2xf32> to vector<16x16x2xf32>
    %c1 = arith.constant 1 : index
    %c1_14 = arith.constant 1 : index
    %c0_15 = arith.constant 0 : index
    %8 = vector.load %arg13[%c1, %c1_14, %c0_15] : memref<18x18x2xf32, #tpu.memory_space<vmem>>, vector<16x16x2xf32>
    tpu.vector_store %arg13[%c1, %c1_14, %c0_15], %7 {strides = array<i32>} : memref<18x18x2xf32, #tpu.memory_space<vmem>>, vector<16x16x2xf32>,
    %c0_16 = arith.constant 0 : index
    %c0_17 = arith.constant 0 : index
    %c0_18 = arith.constant 0 : index
    %9 = vector.load %arg13[%c0_16, %c0_17, %c0_18] : memref<18x18x2xf32, #tpu.memory_space<vmem>>, vector<18x18x2xf32>
    %10 = vector.extract_strided_slice %9 {offsets = [0, 0, 0], sizes = [18, 16, 2], strides = [1, 1, 1]} : vector<18x18x2xf32> to vector<18x16x2xf32>
    %11 = vector.extract_strided_slice %9 {offsets = [0, 1, 0], sizes = [18, 16, 2], strides = [1, 1, 1]} : vector<18x18x2xf32> to vector<18x16x2xf32>
    %12 = vector.extract_strided_slice %9 {offsets = [0, 2, 0], sizes = [18, 16, 2], strides = [1, 1, 1]} : vector<18x18x2xf32> to vector<18x16x2xf32>
    %13 = tpu.concatenate %10, %11, %12 in 2 : vector<18x16x2xf32>, vector<18x16x2xf32>, vector<18x16x2xf32> -> vector<18x16x6xf32>
    %14 = vector.extract_strided_slice %13 {offsets = [0, 0, 0], sizes = [16, 16, 6], strides = [1, 1, 1]} : vector<18x16x6xf32> to vector<16x16x6xf32>
    %15 = vector.shape_cast %14 : vector<16x16x6xf32> to vector<256x6xf32>
    %16 = vector.extract_strided_slice %13 {offsets = [1, 0, 0], sizes = [16, 16, 6], strides = [1, 1, 1]} : vector<18x16x6xf32> to vector<16x16x6xf32>
    %17 = vector.shape_cast %16 : vector<16x16x6xf32> to vector<256x6xf32>
    %18 = vector.extract_strided_slice %13 {offsets = [2, 0, 0], sizes = [16, 16, 6], strides = [1, 1, 1]} : vector<18x16x6xf32> to vector<16x16x6xf32>
    %19 = vector.shape_cast %18 : vector<16x16x6xf32> to vector<256x6xf32>
    %20 = tpu.concatenate %15, %17, %19 in 1 : vector<256x6xf32>, vector<256x6xf32>, vector<256x6xf32> -> vector<256x18xf32>
    %c0_19 = arith.constant 0 : index
    %c0_20 = arith.constant 0 : index
    %21 = vector.load %arg2[%c0_19, %c0_20] : memref<18x32xf32, #tpu.memory_space<vmem>>, vector<18x32xf32>
    %cst_21 = arith.constant dense<0.000000e+00> : vector<256x32xf32>
    %22 = tpu.matmul %20, %21, %cst_21 {dimension_numbers = #tpu.dot_dimension_numbers<[1], [0], [0], [1], [0, 0, 1, 1], [], []>} : vector<256x18xf32>, vector<18x32xf32>, vector<256x32xf32> -> vector<256x32xf32>
    %c0_22 = arith.constant 0 : index
    %c0_23 = arith.constant 0 : index
    %23 = vector.load %arg7[%c0_22, %c0_23] : memref<1x32xf32, #tpu.memory_space<vmem>>, vector<1x32xf32>
    %24 = vector.broadcast %23 : vector<1x32xf32> to vector<256x32xf32>
    %25 = arith.addf %22, %24 : vector<256x32xf32>
    %cst_24 = arith.constant 0.000000e+00 : f32
    %26 = vector.broadcast %cst_24 : f32 to vector<256x32xf32>
    %27 = arith.maximumf %25, %26 : vector<256x32xf32>
    %28 = vector.shape_cast %27 : vector<256x32xf32> to vector<16x16x32xf32>
    %c1_25 = arith.constant 1 : index
    %c1_26 = arith.constant 1 : index
    %c0_27 = arith.constant 0 : index
    %29 = vector.load %arg14[%c1_25, %c1_26, %c0_27] : memref<18x18x32xf32, #tpu.memory_space<vmem>>, vector<16x16x32xf32>
    tpu.vector_store %arg14[%c1_25, %c1_26, %c0_27], %28 {strides = array<i32>} : memref<18x18x32xf32, #tpu.memory_space<vmem>>, vector<16x16x32xf32>,
    %c0_28 = arith.constant 0 : index
    %c0_29 = arith.constant 0 : index
    %c0_30 = arith.constant 0 : index
    %30 = vector.load %arg14[%c0_28, %c0_29, %c0_30] : memref<18x18x32xf32, #tpu.memory_space<vmem>>, vector<18x18x32xf32>
    %31 = vector.extract_strided_slice %30 {offsets = [0, 0, 0], sizes = [18, 16, 32], strides = [1, 1, 1]} : vector<18x18x32xf32> to vector<18x16x32xf32>
    %32 = vector.extract_strided_slice %30 {offsets = [0, 1, 0], sizes = [18, 16, 32], strides = [1, 1, 1]} : vector<18x18x32xf32> to vector<18x16x32xf32>
    %33 = vector.extract_strided_slice %30 {offsets = [0, 2, 0], sizes = [18, 16, 32], strides = [1, 1, 1]} : vector<18x18x32xf32> to vector<18x16x32xf32>
    %34 = tpu.concatenate %31, %32, %33 in 2 : vector<18x16x32xf32>, vector<18x16x32xf32>, vector<18x16x32xf32> -> vector<18x16x96xf32>
    %35 = vector.extract_strided_slice %34 {offsets = [0, 0, 0], sizes = [16, 16, 96], strides = [1, 1, 1]} : vector<18x16x96xf32> to vector<16x16x96xf32>
    %36 = vector.shape_cast %35 : vector<16x16x96xf32> to vector<256x96xf32>
    %37 = vector.extract_strided_slice %34 {offsets = [1, 0, 0], sizes = [16, 16, 96], strides = [1, 1, 1]} : vector<18x16x96xf32> to vector<16x16x96xf32>
    %38 = vector.shape_cast %37 : vector<16x16x96xf32> to vector<256x96xf32>
    %39 = vector.extract_strided_slice %34 {offsets = [2, 0, 0], sizes = [16, 16, 96], strides = [1, 1, 1]} : vector<18x16x96xf32> to vector<16x16x96xf32>
    %40 = vector.shape_cast %39 : vector<16x16x96xf32> to vector<256x96xf32>
    %41 = tpu.concatenate %36, %38, %40 in 1 : vector<256x96xf32>, vector<256x96xf32>, vector<256x96xf32> -> vector<256x288xf32>
    %c0_31 = arith.constant 0 : index
    %c0_32 = arith.constant 0 : index
    %42 = vector.load %arg3[%c0_31, %c0_32] : memref<288x32xf32, #tpu.memory_space<vmem>>, vector<288x32xf32>
    %cst_33 = arith.constant dense<0.000000e+00> : vector<256x32xf32>
    %43 = tpu.matmul %41, %42, %cst_33 {dimension_numbers = #tpu.dot_dimension_numbers<[1], [0], [0], [1], [0, 0, 1, 1], [], []>} : vector<256x288xf32>, vector<288x32xf32>, vector<256x32xf32> -> vector<256x32xf32>
    %c0_34 = arith.constant 0 : index
    %c0_35 = arith.constant 0 : index
    %44 = vector.load %arg8[%c0_34, %c0_35] : memref<1x32xf32, #tpu.memory_space<vmem>>, vector<1x32xf32>
    %45 = vector.broadcast %44 : vector<1x32xf32> to vector<256x32xf32>
    %46 = arith.addf %43, %45 : vector<256x32xf32>
    %cst_36 = arith.constant 0.000000e+00 : f32
    %47 = vector.broadcast %cst_36 : f32 to vector<256x32xf32>
    %48 = arith.maximumf %46, %47 : vector<256x32xf32>
    %49 = vector.shape_cast %48 : vector<256x32xf32> to vector<16x16x32xf32>
    %c1_37 = arith.constant 1 : index
    %c1_38 = arith.constant 1 : index
    %c0_39 = arith.constant 0 : index
    %50 = vector.load %arg15[%c1_37, %c1_38, %c0_39] : memref<18x18x32xf32, #tpu.memory_space<vmem>>, vector<16x16x32xf32>
    tpu.vector_store %arg15[%c1_37, %c1_38, %c0_39], %49 {strides = array<i32>} : memref<18x18x32xf32, #tpu.memory_space<vmem>>, vector<16x16x32xf32>,
    %c0_40 = arith.constant 0 : index
    %c0_41 = arith.constant 0 : index
    %c0_42 = arith.constant 0 : index
    %51 = vector.load %arg15[%c0_40, %c0_41, %c0_42] : memref<18x18x32xf32, #tpu.memory_space<vmem>>, vector<18x18x32xf32>
    %52 = vector.extract_strided_slice %51 {offsets = [0, 0, 0], sizes = [18, 16, 32], strides = [1, 1, 1]} : vector<18x18x32xf32> to vector<18x16x32xf32>
    %53 = vector.extract_strided_slice %51 {offsets = [0, 1, 0], sizes = [18, 16, 32], strides = [1, 1, 1]} : vector<18x18x32xf32> to vector<18x16x32xf32>
    %54 = vector.extract_strided_slice %51 {offsets = [0, 2, 0], sizes = [18, 16, 32], strides = [1, 1, 1]} : vector<18x18x32xf32> to vector<18x16x32xf32>
    %55 = tpu.concatenate %52, %53, %54 in 2 : vector<18x16x32xf32>, vector<18x16x32xf32>, vector<18x16x32xf32> -> vector<18x16x96xf32>
    %56 = vector.extract_strided_slice %55 {offsets = [0, 0, 0], sizes = [16, 16, 96], strides = [1, 1, 1]} : vector<18x16x96xf32> to vector<16x16x96xf32>
    %57 = vector.shape_cast %56 : vector<16x16x96xf32> to vector<256x96xf32>
    %58 = vector.extract_strided_slice %55 {offsets = [1, 0, 0], sizes = [16, 16, 96], strides = [1, 1, 1]} : vector<18x16x96xf32> to vector<16x16x96xf32>
    %59 = vector.shape_cast %58 : vector<16x16x96xf32> to vector<256x96xf32>
    %60 = vector.extract_strided_slice %55 {offsets = [2, 0, 0], sizes = [16, 16, 96], strides = [1, 1, 1]} : vector<18x16x96xf32> to vector<16x16x96xf32>
    %61 = vector.shape_cast %60 : vector<16x16x96xf32> to vector<256x96xf32>
    %62 = tpu.concatenate %57, %59, %61 in 1 : vector<256x96xf32>, vector<256x96xf32>, vector<256x96xf32> -> vector<256x288xf32>
    %c0_43 = arith.constant 0 : index
    %c0_44 = arith.constant 0 : index
    %63 = vector.load %arg4[%c0_43, %c0_44] : memref<288x32xf32, #tpu.memory_space<vmem>>, vector<288x32xf32>
    %cst_45 = arith.constant dense<0.000000e+00> : vector<256x32xf32>
    %64 = tpu.matmul %62, %63, %cst_45 {dimension_numbers = #tpu.dot_dimension_numbers<[1], [0], [0], [1], [0, 0, 1, 1], [], []>} : vector<256x288xf32>, vector<288x32xf32>, vector<256x32xf32> -> vector<256x32xf32>
    %c0_46 = arith.constant 0 : index
    %c0_47 = arith.constant 0 : index
    %65 = vector.load %arg9[%c0_46, %c0_47] : memref<1x32xf32, #tpu.memory_space<vmem>>, vector<1x32xf32>
    %66 = vector.broadcast %65 : vector<1x32xf32> to vector<256x32xf32>
    %67 = arith.addf %64, %66 : vector<256x32xf32>
    %cst_48 = arith.constant 0.000000e+00 : f32
    %68 = vector.broadcast %cst_48 : f32 to vector<256x32xf32>
    %69 = arith.maximumf %67, %68 : vector<256x32xf32>
    %70 = vector.shape_cast %69 : vector<256x32xf32> to vector<16x16x32xf32>
    %c1_49 = arith.constant 1 : index
    %c1_50 = arith.constant 1 : index
    %c0_51 = arith.constant 0 : index
    %71 = vector.load %arg14[%c1_49, %c1_50, %c0_51] : memref<18x18x32xf32, #tpu.memory_space<vmem>>, vector<16x16x32xf32>
    tpu.vector_store %arg14[%c1_49, %c1_50, %c0_51], %70 {strides = array<i32>} : memref<18x18x32xf32, #tpu.memory_space<vmem>>, vector<16x16x32xf32>,
    %c0_52 = arith.constant 0 : index
    %c0_53 = arith.constant 0 : index
    %c0_54 = arith.constant 0 : index
    %72 = vector.load %arg14[%c0_52, %c0_53, %c0_54] : memref<18x18x32xf32, #tpu.memory_space<vmem>>, vector<18x18x32xf32>
    %73 = vector.extract_strided_slice %72 {offsets = [0, 0, 0], sizes = [18, 16, 32], strides = [1, 1, 1]} : vector<18x18x32xf32> to vector<18x16x32xf32>
    %74 = vector.extract_strided_slice %72 {offsets = [0, 1, 0], sizes = [18, 16, 32], strides = [1, 1, 1]} : vector<18x18x32xf32> to vector<18x16x32xf32>
    %75 = vector.extract_strided_slice %72 {offsets = [0, 2, 0], sizes = [18, 16, 32], strides = [1, 1, 1]} : vector<18x18x32xf32> to vector<18x16x32xf32>
    %76 = tpu.concatenate %73, %74, %75 in 2 : vector<18x16x32xf32>, vector<18x16x32xf32>, vector<18x16x32xf32> -> vector<18x16x96xf32>
    %77 = vector.extract_strided_slice %76 {offsets = [0, 0, 0], sizes = [16, 16, 96], strides = [1, 1, 1]} : vector<18x16x96xf32> to vector<16x16x96xf32>
    %78 = vector.shape_cast %77 : vector<16x16x96xf32> to vector<256x96xf32>
    %79 = vector.extract_strided_slice %76 {offsets = [1, 0, 0], sizes = [16, 16, 96], strides = [1, 1, 1]} : vector<18x16x96xf32> to vector<16x16x96xf32>
    %80 = vector.shape_cast %79 : vector<16x16x96xf32> to vector<256x96xf32>
    %81 = vector.extract_strided_slice %76 {offsets = [2, 0, 0], sizes = [16, 16, 96], strides = [1, 1, 1]} : vector<18x16x96xf32> to vector<16x16x96xf32>
    %82 = vector.shape_cast %81 : vector<16x16x96xf32> to vector<256x96xf32>
    %83 = tpu.concatenate %78, %80, %82 in 1 : vector<256x96xf32>, vector<256x96xf32>, vector<256x96xf32> -> vector<256x288xf32>
    %c0_55 = arith.constant 0 : index
    %c0_56 = arith.constant 0 : index
    %84 = vector.load %arg5[%c0_55, %c0_56] : memref<288x32xf32, #tpu.memory_space<vmem>>, vector<288x32xf32>
    %cst_57 = arith.constant dense<0.000000e+00> : vector<256x32xf32>
    %85 = tpu.matmul %83, %84, %cst_57 {dimension_numbers = #tpu.dot_dimension_numbers<[1], [0], [0], [1], [0, 0, 1, 1], [], []>} : vector<256x288xf32>, vector<288x32xf32>, vector<256x32xf32> -> vector<256x32xf32>
    %c0_58 = arith.constant 0 : index
    %c0_59 = arith.constant 0 : index
    %86 = vector.load %arg10[%c0_58, %c0_59] : memref<1x32xf32, #tpu.memory_space<vmem>>, vector<1x32xf32>
    %87 = vector.broadcast %86 : vector<1x32xf32> to vector<256x32xf32>
    %88 = arith.addf %85, %87 : vector<256x32xf32>
    %cst_60 = arith.constant 0.000000e+00 : f32
    %89 = vector.broadcast %cst_60 : f32 to vector<256x32xf32>
    %90 = arith.maximumf %88, %89 : vector<256x32xf32>
    %91 = vector.shape_cast %90 : vector<256x32xf32> to vector<16x16x32xf32>
    %c1_61 = arith.constant 1 : index
    %c1_62 = arith.constant 1 : index
    %c0_63 = arith.constant 0 : index
    %92 = vector.load %arg15[%c1_61, %c1_62, %c0_63] : memref<18x18x32xf32, #tpu.memory_space<vmem>>, vector<16x16x32xf32>
    tpu.vector_store %arg15[%c1_61, %c1_62, %c0_63], %91 {strides = array<i32>} : memref<18x18x32xf32, #tpu.memory_space<vmem>>, vector<16x16x32xf32>,
    %c0_64 = arith.constant 0 : index
    %c0_65 = arith.constant 0 : index
    %c0_66 = arith.constant 0 : index
    %93 = vector.load %arg15[%c0_64, %c0_65, %c0_66] : memref<18x18x32xf32, #tpu.memory_space<vmem>>, vector<18x18x32xf32>
    %94 = vector.extract_strided_slice %93 {offsets = [0, 0, 0], sizes = [18, 16, 32], strides = [1, 1, 1]} : vector<18x18x32xf32> to vector<18x16x32xf32>
    %95 = vector.extract_strided_slice %93 {offsets = [0, 1, 0], sizes = [18, 16, 32], strides = [1, 1, 1]} : vector<18x18x32xf32> to vector<18x16x32xf32>
    %96 = vector.extract_strided_slice %93 {offsets = [0, 2, 0], sizes = [18, 16, 32], strides = [1, 1, 1]} : vector<18x18x32xf32> to vector<18x16x32xf32>
    %97 = tpu.concatenate %94, %95, %96 in 2 : vector<18x16x32xf32>, vector<18x16x32xf32>, vector<18x16x32xf32> -> vector<18x16x96xf32>
    %98 = vector.extract_strided_slice %97 {offsets = [0, 0, 0], sizes = [16, 16, 96], strides = [1, 1, 1]} : vector<18x16x96xf32> to vector<16x16x96xf32>
    %99 = vector.shape_cast %98 : vector<16x16x96xf32> to vector<256x96xf32>
    %100 = vector.extract_strided_slice %97 {offsets = [1, 0, 0], sizes = [16, 16, 96], strides = [1, 1, 1]} : vector<18x16x96xf32> to vector<16x16x96xf32>
    %101 = vector.shape_cast %100 : vector<16x16x96xf32> to vector<256x96xf32>
    %102 = vector.extract_strided_slice %97 {offsets = [2, 0, 0], sizes = [16, 16, 96], strides = [1, 1, 1]} : vector<18x16x96xf32> to vector<16x16x96xf32>
    %103 = vector.shape_cast %102 : vector<16x16x96xf32> to vector<256x96xf32>
    %104 = tpu.concatenate %99, %101, %103 in 1 : vector<256x96xf32>, vector<256x96xf32>, vector<256x96xf32> -> vector<256x288xf32>
    %c0_67 = arith.constant 0 : index
    %c0_68 = arith.constant 0 : index
    %105 = vector.load %arg6[%c0_67, %c0_68] : memref<288x2xf32, #tpu.memory_space<vmem>>, vector<288x2xf32>
    %cst_69 = arith.constant dense<0.000000e+00> : vector<256x2xf32>
    %106 = tpu.matmul %104, %105, %cst_69 {dimension_numbers = #tpu.dot_dimension_numbers<[1], [0], [0], [1], [0, 0, 1, 1], [], []>} : vector<256x288xf32>, vector<288x2xf32>, vector<256x2xf32> -> vector<256x2xf32>
    %c0_70 = arith.constant 0 : index
    %c0_71 = arith.constant 0 : index
    %107 = vector.load %arg11[%c0_70, %c0_71] : memref<1x2xf32, #tpu.memory_space<vmem>>, vector<1x2xf32>
    %108 = vector.broadcast %107 : vector<1x2xf32> to vector<256x2xf32>
    %109 = arith.addf %106, %108 : vector<256x2xf32>
    %110 = vector.shape_cast %109 : vector<256x2xf32> to vector<1x16x16x2xf32>
    %c0_72 = arith.constant 0 : index
    %c0_73 = arith.constant 0 : index
    %c0_74 = arith.constant 0 : index
    %c0_75 = arith.constant 0 : index
    %111 = vector.load %arg12[%c0_72, %c0_73, %c0_74, %c0_75] : memref<1x16x16x2xf32, #tpu.memory_space<vmem>>, vector<1x16x16x2xf32>
    tpu.vector_store %arg12[%c0_72, %c0_73, %c0_74, %c0_75], %110 {strides = array<i32>} : memref<1x16x16x2xf32, #tpu.memory_space<vmem>>, vector<1x16x16x2xf32>,
    return
  }
  func.func @transform_0(%arg0: i32) -> (i32, i32, i32, i32) {
    %c0_i32 = arith.constant 0 : i32
    %c0_i32_0 = arith.constant 0 : i32
    %c0_i32_1 = arith.constant 0 : i32
    %c0_i32_2 = arith.constant 0 : i32
    return %arg0, %c0_i32, %c0_i32_0, %c0_i32_1 : i32, i32, i32, i32
  }
  func.func @transform_1(%arg0: i32) -> (i32, i32) {
    %c0_i32 = arith.constant 0 : i32
    %c0_i32_0 = arith.constant 0 : i32
    %c0_i32_1 = arith.constant 0 : i32
    return %c0_i32, %c0_i32_0 : i32, i32
  }
  func.func @transform_2(%arg0: i32) -> (i32, i32) {
    %c0_i32 = arith.constant 0 : i32
    %c0_i32_0 = arith.constant 0 : i32
    %c0_i32_1 = arith.constant 0 : i32
    return %c0_i32, %c0_i32_0 : i32, i32
  }
  func.func @transform_3(%arg0: i32) -> (i32, i32) {
    %c0_i32 = arith.constant 0 : i32
    %c0_i32_0 = arith.constant 0 : i32
    %c0_i32_1 = arith.constant 0 : i32
    return %c0_i32, %c0_i32_0 : i32, i32
  }
  func.func @transform_4(%arg0: i32) -> (i32, i32) {
    %c0_i32 = arith.constant 0 : i32
    %c0_i32_0 = arith.constant 0 : i32
    %c0_i32_1 = arith.constant 0 : i32
    return %c0_i32, %c0_i32_0 : i32, i32
  }
  func.func @transform_5(%arg0: i32) -> (i32, i32) {
    %c0_i32 = arith.constant 0 : i32
    %c0_i32_0 = arith.constant 0 : i32
    %c0_i32_1 = arith.constant 0 : i32
    return %c0_i32, %c0_i32_0 : i32, i32
  }
  func.func @transform_6(%arg0: i32) -> (i32, i32) {
    %c0_i32 = arith.constant 0 : i32
    %c0_i32_0 = arith.constant 0 : i32
    %c0_i32_1 = arith.constant 0 : i32
    return %c0_i32, %c0_i32_0 : i32, i32
  }
  func.func @transform_7(%arg0: i32) -> (i32, i32) {
    %c0_i32 = arith.constant 0 : i32
    %c0_i32_0 = arith.constant 0 : i32
    %c0_i32_1 = arith.constant 0 : i32
    return %c0_i32, %c0_i32_0 : i32, i32
  }
  func.func @transform_8(%arg0: i32) -> (i32, i32) {
    %c0_i32 = arith.constant 0 : i32
    %c0_i32_0 = arith.constant 0 : i32
    %c0_i32_1 = arith.constant 0 : i32
    return %c0_i32, %c0_i32_0 : i32, i32
  }
  func.func @transform_9(%arg0: i32) -> (i32, i32) {
    %c0_i32 = arith.constant 0 : i32
    %c0_i32_0 = arith.constant 0 : i32
    %c0_i32_1 = arith.constant 0 : i32
    return %c0_i32, %c0_i32_0 : i32, i32
  }
  func.func @transform_10(%arg0: i32) -> (i32, i32) {
    %c0_i32 = arith.constant 0 : i32
    %c0_i32_0 = arith.constant 0 : i32
    %c0_i32_1 = arith.constant 0 : i32
    return %c0_i32, %c0_i32_0 : i32, i32
  }
  func.func @transform_11(%arg0: i32) -> (i32, i32, i32, i32) {
    %c0_i32 = arith.constant 0 : i32
    %c0_i32_0 = arith.constant 0 : i32
    %c0_i32_1 = arith.constant 0 : i32
    %c0_i32_2 = arith.constant 0 : i32
    return %arg0, %c0_i32, %c0_i32_0, %c0_i32_1 : i32, i32, i32, i32
  }
}

</mosaic_0001>

<llo_original>
// kernel: tpu_custom_call.1
$region0: #{tpu_custom_call.1}
  #allocation0 [shape = 'u32[]', space=smem, size = 0x4, offset = 0x4, fixed_abs, tag = 'smem constant byte address 0x4 - core index']
  #allocation1 [shape = 'u32[144,128]{1,0:T(1,128)}', space=vmem, size = 0x12000, scoped, tag = 'internal scratch']
  #allocation2 [shape = 'f32[18,18,2]{2,1,0:T(8,128)}', space=vmem, size = 0x36000, scoped, tag = 'scratch operand']
  #allocation3 [shape = 'f32[18,18,32]{2,1,0:T(8,128)}', space=vmem, size = 0x36000, scoped, tag = 'scratch operand']
  #allocation4 [shape = 'f32[18,18,32]{2,1,0:T(8,128)}', space=vmem, size = 0x36000, scoped, tag = 'scratch operand']
  %s0 = inlined_call_operand.vmem [shape: f32[2,16,16,2], index: 0, kind: input, shape index: {}]
  %s1 = inlined_call_operand.vmem [shape: f32[18,32], index: 1, kind: input, shape index: {}]
  %s2 = inlined_call_operand.vmem [shape: f32[288,32], index: 2, kind: input, shape index: {}]
  %s3 = inlined_call_operand.vmem [shape: f32[288,32], index: 3, kind: input, shape index: {}]
  %s4 = inlined_call_operand.vmem [shape: f32[288,32], index: 4, kind: input, shape index: {}]
  %s5 = inlined_call_operand.vmem [shape: f32[288,2], index: 5, kind: input, shape index: {}]
  %s6 = inlined_call_operand.vmem [shape: f32[1,32], index: 6, kind: input, shape index: {}]
  %s7 = inlined_call_operand.vmem [shape: f32[1,32], index: 7, kind: input, shape index: {}]
  %s8 = inlined_call_operand.vmem [shape: f32[1,32], index: 8, kind: input, shape index: {}]
  %s9 = inlined_call_operand.vmem [shape: f32[1,32], index: 9, kind: input, shape index: {}]
  %s10 = inlined_call_operand.vmem [shape: f32[1,2], index: 10, kind: input, shape index: {}]
  %s11 = inlined_call_operand.vmem [shape: f32[2,16,16,2], index: 11, kind: output, shape index: {}]
  %s12 = sld [smem:[#allocation0]]
  $region77: #{tpu_custom_call.1} parent=0
    _
  %s14 = ssub.s32 1, %s12
  %s15 = scalar_select 0, %s14, %s12
  loop: start=0, step=1, limit=4
  $region2: #{tpu_custom_call.1} parent=0 // loop_pre_header
    _
  $region3: #{tpu_custom_call.1} parent=0 // loop_header
    %s17 = sphi 0, %s21
    %p18 = scmp.ge.s32.totalorder %s17, 4
    %s27 = sphi 0, %s29
    %s30 = sphi 0, %s27
    %s31 = sphi 0, %s30
    %s47 = sphi 0, %s31
    %s51 = sphi 0, %s51
    %s53 = sphi 0, %s51
    %s54 = sphi 0, %s53
    %s68 = sphi 0, %s54
    %s72 = sphi 0, %s72
    %s74 = sphi 0, %s72
    %s75 = sphi 0, %s74
    %s89 = sphi 0, %s75
    %s93 = sphi 0, %s93
    %s95 = sphi 0, %s93
    %s96 = sphi 0, %s95
    %s110 = sphi 0, %s96
    %s114 = sphi 0, %s114
    %s116 = sphi 0, %s114
    %s117 = sphi 0, %s116
    %s131 = sphi 0, %s117
    %s135 = sphi 0, %s135
    %s137 = sphi 0, %s135
    %s138 = sphi 0, %s137
    %s152 = sphi 0, %s138
    %s156 = sphi 0, %s156
    %s158 = sphi 0, %s156
    %s159 = sphi 0, %s158
    %s173 = sphi 0, %s159
    %s177 = sphi 0, %s177
    %s179 = sphi 0, %s177
    %s180 = sphi 0, %s179
    %s194 = sphi 0, %s180
    %s198 = sphi 0, %s198
    %s200 = sphi 0, %s198
    %s201 = sphi 0, %s200
    %s215 = sphi 0, %s201
    %s219 = sphi 0, %s219
    %s221 = sphi 0, %s219
    %s222 = sphi 0, %s221
    %s236 = sphi 0, %s222
    %s240 = sphi 0, %s240
    %s242 = sphi 0, %s240
    %s243 = sphi 0, %s242
    %s257 = sphi 0, %s243
    %s263 = sphi 0, %s265
    %s266 = sphi 0, %s263
    %s267 = sphi 0, %s266
    %s283 = sphi 0, %s267
  $region4: #{tpu_custom_call.1} parent=0 // loop_header_branch
    %20 = sbr.rel (%p18) target = $region8
  $region5: #{tpu_custom_call.1} parent=0 // loop_body
    %s22 = ssub.s32 %s17, 1
    %s23 = ssub.s32 %s17, 2
    %s24 = sadd.s32 %s17, 1
    %s25 = ssub.s32 %s17, %s24
    %p26 = scmp.eq.s32.totalorder %s25, 0
    %s28 = sadd.s32 %s27, 1
    %s29 = scalar_select %p26, %s27, %s28
    %p32 = pneg %p26
    %p33 = scmp.eq.s32.totalorder %s17, 1
    %p34 = por %p32, %p33
    %p35 = scmp.ne.s32.totalorder %s27, %s30
    %p36 = scmp.eq.s32.totalorder %s17, 0
    %p37 = por %p35, %p36
    %p38 = scmp.ne.s32.totalorder %s27, %s30
    %p39 = scmp.eq.s32.totalorder %s22, 1
    %p40 = por %p38, %p39
    %p41 = scmp.ne.s32.totalorder %s30, %s31
    %p42 = scmp.eq.s32.totalorder %s22, 0
    %p43 = por %p41, %p42
    %p44 = scmp.ne.s32.totalorder %s30, %s31
    %p45 = scmp.eq.s32.totalorder %s23, 1
    %p46 = por %p44, %p45
    %p48 = scmp.ne.s32.totalorder %s31, %s47
    %p49 = scmp.eq.s32.totalorder %s23, 0
    %p50 = por %p48, %p49
    %s52 = sadd.s32 %s51, 1
    %p55 = scmp.eq.s32.totalorder %s17, 1
    %p56 = scmp.ne.s32.totalorder %s51, %s53
    %p57 = scmp.eq.s32.totalorder %s17, 0
    %p58 = por %p56, %p57
    %p59 = scmp.ne.s32.totalorder %s51, %s53
    %p60 = scmp.eq.s32.totalorder %s22, 1
    %p61 = por %p59, %p60
    %p62 = scmp.ne.s32.totalorder %s53, %s54
    %p63 = scmp.eq.s32.totalorder %s22, 0
    %p64 = por %p62, %p63
    %p65 = scmp.ne.s32.totalorder %s53, %s54
    %p66 = scmp.eq.s32.totalorder %s23, 1
    %p67 = por %p65, %p66
    %p69 = scmp.ne.s32.totalorder %s54, %s68
    %p70 = scmp.eq.s32.totalorder %s23, 0
    %p71 = por %p69, %p70
    %s73 = sadd.s32 %s72, 1
    %p76 = scmp.eq.s32.totalorder %s17, 1
    %p77 = scmp.ne.s32.totalorder %s72, %s74
    %p78 = scmp.eq.s32.totalorder %s17, 0
    %p79 = por %p77, %p78
    %p80 = scmp.ne.s32.totalorder %s72, %s74
    %p81 = scmp.eq.s32.totalorder %s22, 1
    %p82 = por %p80, %p81
    %p83 = scmp.ne.s32.totalorder %s74, %s75
    %p84 = scmp.eq.s32.totalorder %s22, 0
    %p85 = por %p83, %p84
    %p86 = scmp.ne.s32.totalorder %s74, %s75
    %p87 = scmp.eq.s32.totalorder %s23, 1
    %p88 = por %p86, %p87
    %p90 = scmp.ne.s32.totalorder %s75, %s89
    %p91 = scmp.eq.s32.totalorder %s23, 0
    %p92 = por %p90, %p91
    %s94 = sadd.s32 %s93, 1
    %p97 = scmp.eq.s32.totalorder %s17, 1
    %p98 = scmp.ne.s32.totalorder %s93, %s95
    %p99 = scmp.eq.s32.totalorder %s17, 0
    %p100 = por %p98, %p99
    %p101 = scmp.ne.s32.totalorder %s93, %s95
    %p102 = scmp.eq.s32.totalorder %s22, 1
    %p103 = por %p101, %p102
    %p104 = scmp.ne.s32.totalorder %s95, %s96
    %p105 = scmp.eq.s32.totalorder %s22, 0
    %p106 = por %p104, %p105
    %p107 = scmp.ne.s32.totalorder %s95, %s96
    %p108 = scmp.eq.s32.totalorder %s23, 1
    %p109 = por %p107, %p108
    %p111 = scmp.ne.s32.totalorder %s96, %s110
    %p112 = scmp.eq.s32.totalorder %s23, 0
    %p113 = por %p111, %p112
    %s115 = sadd.s32 %s114, 1
    %p118 = scmp.eq.s32.totalorder %s17, 1
    %p119 = scmp.ne.s32.totalorder %s114, %s116
    %p120 = scmp.eq.s32.totalorder %s17, 0
    %p121 = por %p119, %p120
    %p122 = scmp.ne.s32.totalorder %s114, %s116
    %p123 = scmp.eq.s32.totalorder %s22, 1
    %p124 = por %p122, %p123
    %p125 = scmp.ne.s32.totalorder %s116, %s117
    %p126 = scmp.eq.s32.totalorder %s22, 0
    %p127 = por %p125, %p126
    %p128 = scmp.ne.s32.totalorder %s116, %s117
    %p129 = scmp.eq.s32.totalorder %s23, 1
    %p130 = por %p128, %p129
    %p132 = scmp.ne.s32.totalorder %s117, %s131
    %p133 = scmp.eq.s32.totalorder %s23, 0
    %p134 = por %p132, %p133
    %s136 = sadd.s32 %s135, 1
    %p139 = scmp.eq.s32.totalorder %s17, 1
    %p140 = scmp.ne.s32.totalorder %s135, %s137
    %p141 = scmp.eq.s32.totalorder %s17, 0
    %p142 = por %p140, %p141
    %p143 = scmp.ne.s32.totalorder %s135, %s137
    %p144 = scmp.eq.s32.totalorder %s22, 1
    %p145 = por %p143, %p144
    %p146 = scmp.ne.s32.totalorder %s137, %s138
    %p147 = scmp.eq.s32.totalorder %s22, 0
    %p148 = por %p146, %p147
    %p149 = scmp.ne.s32.totalorder %s137, %s138
    %p150 = scmp.eq.s32.totalorder %s23, 1
    %p151 = por %p149, %p150
    %p153 = scmp.ne.s32.totalorder %s138, %s152
    %p154 = scmp.eq.s32.totalorder %s23, 0
    %p155 = por %p153, %p154
    %s157 = sadd.s32 %s156, 1
    %p160 = scmp.eq.s32.totalorder %s17, 1
    %p161 = scmp.ne.s32.totalorder %s156, %s158
    %p162 = scmp.eq.s32.totalorder %s17, 0
    %p163 = por %p161, %p162
    %p164 = scmp.ne.s32.totalorder %s156, %s158
    %p165 = scmp.eq.s32.totalorder %s22, 1
    %p166 = por %p164, %p165
    %p167 = scmp.ne.s32.totalorder %s158, %s159
    %p168 = scmp.eq.s32.totalorder %s22, 0
    %p169 = por %p167, %p168
    %p170 = scmp.ne.s32.totalorder %s158, %s159
    %p171 = scmp.eq.s32.totalorder %s23, 1
    %p172 = por %p170, %p171
    %p174 = scmp.ne.s32.totalorder %s159, %s173
    %p175 = scmp.eq.s32.totalorder %s23, 0
    %p176 = por %p174, %p175
    %s178 = sadd.s32 %s177, 1
    %p181 = scmp.eq.s32.totalorder %s17, 1
    %p182 = scmp.ne.s32.totalorder %s177, %s179
    %p183 = scmp.eq.s32.totalorder %s17, 0
    %p184 = por %p182, %p183
    %p185 = scmp.ne.s32.totalorder %s177, %s179
    %p186 = scmp.eq.s32.totalorder %s22, 1
    %p187 = por %p185, %p186
    %p188 = scmp.ne.s32.totalorder %s179, %s180
    %p189 = scmp.eq.s32.totalorder %s22, 0
    %p190 = por %p188, %p189
    %p191 = scmp.ne.s32.totalorder %s179, %s180
    %p192 = scmp.eq.s32.totalorder %s23, 1
    %p193 = por %p191, %p192
    %p195 = scmp.ne.s32.totalorder %s180, %s194
    %p196 = scmp.eq.s32.totalorder %s23, 0
    %p197 = por %p195, %p196
    %s199 = sadd.s32 %s198, 1
    %p202 = scmp.eq.s32.totalorder %s17, 1
    %p203 = scmp.ne.s32.totalorder %s198, %s200
    %p204 = scmp.eq.s32.totalorder %s17, 0
    %p205 = por %p203, %p204
    %p206 = scmp.ne.s32.totalorder %s198, %s200
    %p207 = scmp.eq.s32.totalorder %s22, 1
    %p208 = por %p206, %p207
    %p209 = scmp.ne.s32.totalorder %s200, %s201
    %p210 = scmp.eq.s32.totalorder %s22, 0
    %p211 = por %p209, %p210
    %p212 = scmp.ne.s32.totalorder %s200, %s201
    %p213 = scmp.eq.s32.totalorder %s23, 1
    %p214 = por %p212, %p213
    %p216 = scmp.ne.s32.totalorder %s201, %s215
    %p217 = scmp.eq.s32.totalorder %s23, 0
    %p218 = por %p216, %p217
    %s220 = sadd.s32 %s219, 1
    %p223 = scmp.eq.s32.totalorder %s17, 1
    %p224 = scmp.ne.s32.totalorder %s219, %s221
    %p225 = scmp.eq.s32.totalorder %s17, 0
    %p226 = por %p224, %p225
    %p227 = scmp.ne.s32.totalorder %s219, %s221
    %p228 = scmp.eq.s32.totalorder %s22, 1
    %p229 = por %p227, %p228
    %p230 = scmp.ne.s32.totalorder %s221, %s222
    %p231 = scmp.eq.s32.totalorder %s22, 0
    %p232 = por %p230, %p231
    %p233 = scmp.ne.s32.totalorder %s221, %s222
    %p234 = scmp.eq.s32.totalorder %s23, 1
    %p235 = por %p233, %p234
    %p237 = scmp.ne.s32.totalorder %s222, %s236
    %p238 = scmp.eq.s32.totalorder %s23, 0
    %p239 = por %p237, %p238
    %s241 = sadd.s32 %s240, 1
    %p244 = scmp.eq.s32.totalorder %s17, 1
    %p245 = scmp.ne.s32.totalorder %s240, %s242
    %p246 = scmp.eq.s32.totalorder %s17, 0
    %p247 = por %p245, %p246
    %p248 = scmp.ne.s32.totalorder %s240, %s242
    %p249 = scmp.eq.s32.totalorder %s22, 1
    %p250 = por %p248, %p249
    %p251 = scmp.ne.s32.totalorder %s242, %s243
    %p252 = scmp.eq.s32.totalorder %s22, 0
    %p253 = por %p251, %p252
    %p254 = scmp.ne.s32.totalorder %s242, %s243
    %p255 = scmp.eq.s32.totalorder %s23, 1
    %p256 = por %p254, %p255
    %p258 = scmp.ne.s32.totalorder %s243, %s257
    %p259 = scmp.eq.s32.totalorder %s23, 0
    %p260 = por %p258, %p259
    %s261 = ssub.s32 %s17, %s24
    %p262 = scmp.eq.s32.totalorder %s261, 0
    %s264 = sadd.s32 %s263, 1
    %s265 = scalar_select %p262, %s263, %s264
    %p268 = pneg %p262
    %p269 = scmp.eq.s32.totalorder %s17, 1
    %p270 = por %p268, %p269
    %p271 = scmp.ne.s32.totalorder %s263, %s266
    %p272 = scmp.eq.s32.totalorder %s17, 0
    %p273 = por %p271, %p272
    %p274 = scmp.ne.s32.totalorder %s263, %s266
    %p275 = scmp.eq.s32.totalorder %s22, 1
    %p276 = por %p274, %p275
    %p277 = scmp.ne.s32.totalorder %s266, %s267
    %p278 = scmp.eq.s32.totalorder %s22, 0
    %p279 = por %p277, %p278
    %p280 = scmp.ne.s32.totalorder %s266, %s267
    %p281 = scmp.eq.s32.totalorder %s23, 1
    %p282 = por %p280, %p281
    %p284 = scmp.ne.s32.totalorder %s267, %s283
    %p285 = scmp.eq.s32.totalorder %s23, 0
    %p286 = por %p284, %p285
    %p287 = scmp.le.s32.totalorder 1, %s17
    %p288 = scmp.lt.s32.totalorder %s17, 3
    %p289 = pnand %p287, %p288
    %p290 = pneg %p289
    // Predicated region
    $region9: #{tpu_custom_call.1} parent=5 // pred_check
      _
    $region10: #{tpu_custom_call.1} parent=5 // pred_check_branch
      %292 = sbr.rel (%p289) target = $region12
    $region11: #{tpu_custom_call.1} parent=5 // pred_region
      %s293 = ssub.s32 %s17, 1
      // Predicated region
      $region13: #{tpu_custom_call.1} parent=11 // pred_check
        %p294 = pneg %p64
      $region14: #{tpu_custom_call.1} parent=11 // pred_check_branch
        %296 = sbr.rel (%p294) target = $region16
      $region15: #{tpu_custom_call.1} parent=11 // pred_region
        _
      $region16: #{tpu_custom_call.1} parent=11 // pred_fallthru
        _
      // Predicated region
      $region17: #{tpu_custom_call.1} parent=11 // pred_check
        %p297 = pneg %p85
      $region18: #{tpu_custom_call.1} parent=11 // pred_check_branch
        %299 = sbr.rel (%p297) target = $region20
      $region19: #{tpu_custom_call.1} parent=11 // pred_region
        _
      $region20: #{tpu_custom_call.1} parent=11 // pred_fallthru
        _
      // Predicated region
      $region21: #{tpu_custom_call.1} parent=11 // pred_check
        %p300 = pneg %p106
      $region22: #{tpu_custom_call.1} parent=11 // pred_check_branch
        %302 = sbr.rel (%p300) target = $region24
      $region23: #{tpu_custom_call.1} parent=11 // pred_region
        _
      $region24: #{tpu_custom_call.1} parent=11 // pred_fallthru
        _
      // Predicated region
      $region25: #{tpu_custom_call.1} parent=11 // pred_check
        %p303 = pneg %p127
      $region26: #{tpu_custom_call.1} parent=11 // pred_check_branch
        %305 = sbr.rel (%p303) target = $region28
      $region27: #{tpu_custom_call.1} parent=11 // pred_region
        _
      $region28: #{tpu_custom_call.1} parent=11 // pred_fallthru
        _
      // Predicated region
      $region29: #{tpu_custom_call.1} parent=11 // pred_check
        %p306 = pneg %p148
      $region30: #{tpu_custom_call.1} parent=11 // pred_check_branch
        %308 = sbr.rel (%p306) target = $region32
      $region31: #{tpu_custom_call.1} parent=11 // pred_region
        _
      $region32: #{tpu_custom_call.1} parent=11 // pred_fallthru
        _
      // Predicated region
      $region33: #{tpu_custom_call.1} parent=11 // pred_check
        %p309 = pneg %p169
      $region34: #{tpu_custom_call.1} parent=11 // pred_check_branch
        %311 = sbr.rel (%p309) target = $region36
      $region35: #{tpu_custom_call.1} parent=11 // pred_region
        _
      $region36: #{tpu_custom_call.1} parent=11 // pred_fallthru
        _
      // Predicated region
      $region37: #{tpu_custom_call.1} parent=11 // pred_check
        %p312 = pneg %p190
      $region38: #{tpu_custom_call.1} parent=11 // pred_check_branch
        %314 = sbr.rel (%p312) target = $region40
      $region39: #{tpu_custom_call.1} parent=11 // pred_region
        _
      $region40: #{tpu_custom_call.1} parent=11 // pred_fallthru
        _
      // Predicated region
      $region41: #{tpu_custom_call.1} parent=11 // pred_check
        %p315 = pneg %p211
      $region42: #{tpu_custom_call.1} parent=11 // pred_check_branch
        %317 = sbr.rel (%p315) target = $region44
      $region43: #{tpu_custom_call.1} parent=11 // pred_region
        _
      $region44: #{tpu_custom_call.1} parent=11 // pred_fallthru
        _
      // Predicated region
      $region45: #{tpu_custom_call.1} parent=11 // pred_check
        %p318 = pneg %p232
      $region46: #{tpu_custom_call.1} parent=11 // pred_check_branch
        %320 = sbr.rel (%p318) target = $region48
      $region47: #{tpu_custom_call.1} parent=11 // pred_region
        _
      $region48: #{tpu_custom_call.1} parent=11 // pred_fallthru
        _
      // Predicated region
      $region49: #{tpu_custom_call.1} parent=11 // pred_check
        %p321 = pneg %p253
      $region50: #{tpu_custom_call.1} parent=11 // pred_check_branch
        %323 = sbr.rel (%p321) target = $region52
      $region51: #{tpu_custom_call.1} parent=11 // pred_region
        _
      $region52: #{tpu_custom_call.1} parent=11 // pred_fallthru
        _
    $region12: #{tpu_custom_call.1} parent=5 // pred_fallthru
      _
    %p324 = scmp.lt.s32.totalorder %s17, 2
    // Predicated region
    $region53: #{tpu_custom_call.1} parent=5 // pred_check
      %p325 = pneg %p324
    $region54: #{tpu_custom_call.1} parent=5 // pred_check_branch
      %327 = sbr.rel (%p325) target = $region56
    $region55: #{tpu_custom_call.1} parent=5 // pred_region
      // Predicated region
      $region57: #{tpu_custom_call.1} parent=55 // pred_check
        %p328 = pneg %p37
      $region58: #{tpu_custom_call.1} parent=55 // pred_check_branch
        %330 = sbr.rel (%p328) target = $region60
      $region59: #{tpu_custom_call.1} parent=55 // pred_region
        %p331 = scmp.lt.s32.totalorder %s17, 1
        %s332 = scalar_select %p331, %s17, 1
        %s333 = smul.addr %s332, 32
        %s334 = smul.addr %s333, 8
        %s335 = scalar_lea.vmem %s0, %s334
      $region60: #{tpu_custom_call.1} parent=55 // pred_fallthru
        _
    $region56: #{tpu_custom_call.1} parent=5 // pred_fallthru
      _
    %p336 = scmp.le.s32.totalorder 1, %s17
    %p337 = scmp.lt.s32.totalorder %s17, 3
    %p338 = pnand %p336, %p337
    %p339 = pneg %p338
    // Predicated region
    $region61: #{tpu_custom_call.1} parent=5 // pred_check
      _
    $region62: #{tpu_custom_call.1} parent=5 // pred_check_branch
      %341 = sbr.rel (%p338) target = $region64
    $region63: #{tpu_custom_call.1} parent=5 // pred_region
      %s342 = ssub.s32 %s17, 1
      %p343 = scmp.lt.s32.totalorder %s22, 1
      %s344 = scalar_select %p343, %s22, 1
      %s345 = smul.addr %s344, 32
      %s346 = smul.addr %s345, 8
      %s347 = scalar_lea.vmem %s0, %s346
      %p348 = pneg %p43
      %p349 = pneg %p40
      %p350 = pneg %p64
      %p351 = pneg %p61
      %p352 = pneg %p85
      %p353 = pneg %p82
      %p354 = pneg %p106
      %p355 = pneg %p103
      %p356 = pneg %p127
      %p357 = pneg %p124
      %p358 = pneg %p148
      %p359 = pneg %p145
      %p360 = pneg %p169
      %p361 = pneg %p166
      %p362 = pneg %p190
      %p363 = pneg %p187
      %p364 = pneg %p211
      %p365 = pneg %p208
      %p366 = pneg %p232
      %p367 = pneg %p229
      %p368 = pneg %p253
      %p369 = pneg %p250
      %p370 = pneg %p279
      %p371 = pneg %p276
      %p372 = scmp.lt.s32.totalorder %s22, 1
      %s373 = scalar_select %p372, %s22, 1
      %s374 = smul.addr %s373, 32
      %s375 = smul.addr %s374, 8
      %s376 = scalar_lea.vmem %s11, %s375
      %p377 = scmp.lt.s32.totalorder %s22, 1
      %s378 = scalar_select %p377, %s22, 1
      %s379 = smul.addr %s378, 32
      %s380 = smul.addr %s379, 8
      %s381 = scalar_lea.vmem %s0, %s380
      %p382 = scmp.lt.s32.totalorder %s22, 1
      %s383 = scalar_select %p382, %s22, 1
      %s384 = smul.addr %s383, 32
      %s385 = smul.addr %s384, 8
      %s386 = scalar_lea.vmem %s11, %s385
      %vm387 = vcmask 15360
      %388 = vst.msk [vmem:[#allocation2] sm:$0xff] %vm387, 0.0
      %389 = vst.msk [vmem:[#allocation2 + $0x8] sm:$0xff] %vm387, 0.0
      %vm390 = vcmask 9216
      %391 = vst.msk [vmem:[#allocation2 + $0x10] sm:$0x3] %vm390, 0.0
      %392 = vst.msk [vmem:[#allocation2 + $0x18] sm:$0xff] %vm387, 0.0
      %393 = vst.msk [vmem:[#allocation2 + $0x20] sm:$0xff] %vm387, 0.0
      %394 = vst.msk [vmem:[#allocation2 + $0x28] sm:$0x3] %vm390, 0.0
      %395 = vst.msk [vmem:[#allocation2 + $0x30] sm:$0xff] %vm387, 0.0
      %396 = vst.msk [vmem:[#allocation2 + $0x38] sm:$0xff] %vm387, 0.0
      %397 = vst.msk [vmem:[#allocation2 + $0x40] sm:$0x3] %vm390, 0.0
      %398 = vst.msk [vmem:[#allocation2 + $0x48] sm:$0xff] %vm387, 0.0
      %399 = vst.msk [vmem:[#allocation2 + $0x50] sm:$0xff] %vm387, 0.0
      %400 = vst.msk [vmem:[#allocation2 + $0x58] sm:$0x3] %vm390, 0.0
      %401 = vst.msk [vmem:[#allocation2 + $0x60] sm:$0xff] %vm387, 0.0
      %402 = vst.msk [vmem:[#allocation2 + $0x68] sm:$0xff] %vm387, 0.0
      %403 = vst.msk [vmem:[#allocation2 + $0x70] sm:$0x3] %vm390, 0.0
      %404 = vst.msk [vmem:[#allocation2 + $0x78] sm:$0xff] %vm387, 0.0
      %405 = vst.msk [vmem:[#allocation2 + $0x80] sm:$0xff] %vm387, 0.0
      %406 = vst.msk [vmem:[#allocation2 + $0x88] sm:$0x3] %vm390, 0.0
      %407 = vst.msk [vmem:[#allocation2 + $0x90] sm:$0xff] %vm387, 0.0
      %408 = vst.msk [vmem:[#allocation2 + $0x98] sm:$0xff] %vm387, 0.0
      %409 = vst.msk [vmem:[#allocation2 + $0xa0] sm:$0x3] %vm390, 0.0
      %410 = vst.msk [vmem:[#allocation2 + $0xa8] sm:$0xff] %vm387, 0.0
      %411 = vst.msk [vmem:[#allocation2 + $0xb0] sm:$0xff] %vm387, 0.0
      %412 = vst.msk [vmem:[#allocation2 + $0xb8] sm:$0x3] %vm390, 0.0
      %413 = vst.msk [vmem:[#allocation2 + $0xc0] sm:$0xff] %vm387, 0.0
      %414 = vst.msk [vmem:[#allocation2 + $0xc8] sm:$0xff] %vm387, 0.0
      %415 = vst.msk [vmem:[#allocation2 + $0xd0] sm:$0x3] %vm390, 0.0
      %416 = vst.msk [vmem:[#allocation2 + $0xd8] sm:$0xff] %vm387, 0.0
      %417 = vst.msk [vmem:[#allocation2 + $0xe0] sm:$0xff] %vm387, 0.0
      %418 = vst.msk [vmem:[#allocation2 + $0xe8] sm:$0x3] %vm390, 0.0
      %419 = vst.msk [vmem:[#allocation2 + $0xf0] sm:$0xff] %vm387, 0.0
      %420 = vst.msk [vmem:[#allocation2 + $0xf8] sm:$0xff] %vm387, 0.0
      %421 = vst.msk [vmem:[#allocation2 + $0x100] sm:$0x3] %vm390, 0.0
      %422 = vst.msk [vmem:[#allocation2 + $0x108] sm:$0xff] %vm387, 0.0
      %423 = vst.msk [vmem:[#allocation2 + $0x110] sm:$0xff] %vm387, 0.0
      %424 = vst.msk [vmem:[#allocation2 + $0x118] sm:$0x3] %vm390, 0.0
      %425 = vst.msk [vmem:[#allocation2 + $0x120] sm:$0xff] %vm387, 0.0
      %426 = vst.msk [vmem:[#allocation2 + $0x128] sm:$0xff] %vm387, 0.0
      %427 = vst.msk [vmem:[#allocation2 + $0x130] sm:$0x3] %vm390, 0.0
      %428 = vst.msk [vmem:[#allocation2 + $0x138] sm:$0xff] %vm387, 0.0
      %429 = vst.msk [vmem:[#allocation2 + $0x140] sm:$0xff] %vm387, 0.0
      %430 = vst.msk [vmem:[#allocation2 + $0x148] sm:$0x3] %vm390, 0.0
      %431 = vst.msk [vmem:[#allocation2 + $0x150] sm:$0xff] %vm387, 0.0
      %432 = vst.msk [vmem:[#allocation2 + $0x158] sm:$0xff] %vm387, 0.0
      %433 = vst.msk [vmem:[#allocation2 + $0x160] sm:$0x3] %vm390, 0.0
      %434 = vst.msk [vmem:[#allocation2 + $0x168] sm:$0xff] %vm387, 0.0
      %435 = vst.msk [vmem:[#allocation2 + $0x170] sm:$0xff] %vm387, 0.0
      %436 = vst.msk [vmem:[#allocation2 + $0x178] sm:$0x3] %vm390, 0.0
      %437 = vst.msk [vmem:[#allocation2 + $0x180] sm:$0xff] %vm387, 0.0
      %438 = vst.msk [vmem:[#allocation2 + $0x188] sm:$0xff] %vm387, 0.0
      %439 = vst.msk [vmem:[#allocation2 + $0x190] sm:$0x3] %vm390, 0.0
      %440 = vst.msk [vmem:[#allocation2 + $0x198] sm:$0xff] %vm387, 0.0
      %441 = vst.msk [vmem:[#allocation2 + $0x1a0] sm:$0xff] %vm387, 0.0
      %442 = vst.msk [vmem:[#allocation2 + $0x1a8] sm:$0x3] %vm390, 0.0
      %vm443 = vcmask 261120
      %444 = vst.msk [vmem:[#allocation3] sm:$0xff] %vm443, 0.0
      %445 = vst.msk [vmem:[#allocation3 + $0x8] sm:$0xff] %vm443, 0.0
      %vm446 = vcmask 254976
      %447 = vst.msk [vmem:[#allocation3 + $0x10] sm:$0x3] %vm446, 0.0
      %448 = vst.msk [vmem:[#allocation3 + $0x18] sm:$0xff] %vm443, 0.0
      %449 = vst.msk [vmem:[#allocation3 + $0x20] sm:$0xff] %vm443, 0.0
      %450 = vst.msk [vmem:[#allocation3 + $0x28] sm:$0x3] %vm446, 0.0
      %451 = vst.msk [vmem:[#allocation3 + $0x30] sm:$0xff] %vm443, 0.0
      %452 = vst.msk [vmem:[#allocation3 + $0x38] sm:$0xff] %vm443, 0.0
      %453 = vst.msk [vmem:[#allocation3 + $0x40] sm:$0x3] %vm446, 0.0
      %454 = vst.msk [vmem:[#allocation3 + $0x48] sm:$0xff] %vm443, 0.0
      %455 = vst.msk [vmem:[#allocation3 + $0x50] sm:$0xff] %vm443, 0.0
      %456 = vst.msk [vmem:[#allocation3 + $0x58] sm:$0x3] %vm446, 0.0
      %457 = vst.msk [vmem:[#allocation3 + $0x60] sm:$0xff] %vm443, 0.0
      %458 = vst.msk [vmem:[#allocation3 + $0x68] sm:$0xff] %vm443, 0.0
      %459 = vst.msk [vmem:[#allocation3 + $0x70] sm:$0x3] %vm446, 0.0
      %460 = vst.msk [vmem:[#allocation3 + $0x78] sm:$0xff] %vm443, 0.0
      %461 = vst.msk [vmem:[#allocation3 + $0x80] sm:$0xff] %vm443, 0.0
      %462 = vst.msk [vmem:[#allocation3 + $0x88] sm:$0x3] %vm446, 0.0
      %463 = vst.msk [vmem:[#allocation3 + $0x90] sm:$0xff] %vm443, 0.0
      %464 = vst.msk [vmem:[#allocation3 + $0x98] sm:$0xff] %vm443, 0.0
      %465 = vst.msk [vmem:[#allocation3 + $0xa0] sm:$0x3] %vm446, 0.0
      %466 = vst.msk [vmem:[#allocation3 + $0xa8] sm:$0xff] %vm443, 0.0
      %467 = vst.msk [vmem:[#allocation3 + $0xb0] sm:$0xff] %vm443, 0.0
      %468 = vst.msk [vmem:[#allocation3 + $0xb8] sm:$0x3] %vm446, 0.0
      %469 = vst.msk [vmem:[#allocation3 + $0xc0] sm:$0xff] %vm443, 0.0
      %470 = vst.msk [vmem:[#allocation3 + $0xc8] sm:$0xff] %vm443, 0.0
      %471 = vst.msk [vmem:[#allocation3 + $0xd0] sm:$0x3] %vm446, 0.0
      %472 = vst.msk [vmem:[#allocation3 + $0xd8] sm:$0xff] %vm443, 0.0
      %473 = vst.msk [vmem:[#allocation3 + $0xe0] sm:$0xff] %vm443, 0.0
      %474 = vst.msk [vmem:[#allocation3 + $0xe8] sm:$0x3] %vm446, 0.0
      %475 = vst.msk [vmem:[#allocation3 + $0xf0] sm:$0xff] %vm443, 0.0
      %476 = vst.msk [vmem:[#allocation3 + $0xf8] sm:$0xff] %vm443, 0.0
      %477 = vst.msk [vmem:[#allocation3 + $0x100] sm:$0x3] %vm446, 0.0
      %478 = vst.msk [vmem:[#allocation3 + $0x108] sm:$0xff] %vm443, 0.0
      %479 = vst.msk [vmem:[#allocation3 + $0x110] sm:$0xff] %vm443, 0.0
      %480 = vst.msk [vmem:[#allocation3 + $0x118] sm:$0x3] %vm446, 0.0
      %481 = vst.msk [vmem:[#allocation3 + $0x120] sm:$0xff] %vm443, 0.0
      %482 = vst.msk [vmem:[#allocation3 + $0x128] sm:$0xff] %vm443, 0.0
      %483 = vst.msk [vmem:[#allocation3 + $0x130] sm:$0x3] %vm446, 0.0
      %484 = vst.msk [vmem:[#allocation3 + $0x138] sm:$0xff] %vm443, 0.0
      %485 = vst.msk [vmem:[#allocation3 + $0x140] sm:$0xff] %vm443, 0.0
      %486 = vst.msk [vmem:[#allocation3 + $0x148] sm:$0x3] %vm446, 0.0
      %487 = vst.msk [vmem:[#allocation3 + $0x150] sm:$0xff] %vm443, 0.0
      %488 = vst.msk [vmem:[#allocation3 + $0x158] sm:$0xff] %vm443, 0.0
      %489 = vst.msk [vmem:[#allocation3 + $0x160] sm:$0x3] %vm446, 0.0
      %490 = vst.msk [vmem:[#allocation3 + $0x168] sm:$0xff] %vm443, 0.0
      %491 = vst.msk [vmem:[#allocation3 + $0x170] sm:$0xff] %vm443, 0.0
      %492 = vst.msk [vmem:[#allocation3 + $0x178] sm:$0x3] %vm446, 0.0
      %493 = vst.msk [vmem:[#allocation3 + $0x180] sm:$0xff] %vm443, 0.0
      %494 = vst.msk [vmem:[#allocation3 + $0x188] sm:$0xff] %vm443, 0.0
      %495 = vst.msk [vmem:[#allocation3 + $0x190] sm:$0x3] %vm446, 0.0
      %496 = vst.msk [vmem:[#allocation3 + $0x198] sm:$0xff] %vm443, 0.0
      %497 = vst.msk [vmem:[#allocation3 + $0x1a0] sm:$0xff] %vm443, 0.0
      %498 = vst.msk [vmem:[#allocation3 + $0x1a8] sm:$0x3] %vm446, 0.0
      %499 = vst.msk [vmem:[#allocation4] sm:$0xff] %vm443, 0.0
      %500 = vst.msk [vmem:[#allocation4 + $0x8] sm:$0xff] %vm443, 0.0
      %501 = vst.msk [vmem:[#allocation4 + $0x10] sm:$0x3] %vm446, 0.0
      %502 = vst.msk [vmem:[#allocation4 + $0x18] sm:$0xff] %vm443, 0.0
      %503 = vst.msk [vmem:[#allocation4 + $0x20] sm:$0xff] %vm443, 0.0
      %504 = vst.msk [vmem:[#allocation4 + $0x28] sm:$0x3] %vm446, 0.0
      %505 = vst.msk [vmem:[#allocation4 + $0x30] sm:$0xff] %vm443, 0.0
      %506 = vst.msk [vmem:[#allocation4 + $0x38] sm:$0xff] %vm443, 0.0
      %507 = vst.msk [vmem:[#allocation4 + $0x40] sm:$0x3] %vm446, 0.0
      %508 = vst.msk [vmem:[#allocation4 + $0x48] sm:$0xff] %vm443, 0.0
      %509 = vst.msk [vmem:[#allocation4 + $0x50] sm:$0xff] %vm443, 0.0
      %510 = vst.msk [vmem:[#allocation4 + $0x58] sm:$0x3] %vm446, 0.0
      %511 = vst.msk [vmem:[#allocation4 + $0x60] sm:$0xff] %vm443, 0.0
      %512 = vst.msk [vmem:[#allocation4 + $0x68] sm:$0xff] %vm443, 0.0
      %513 = vst.msk [vmem:[#allocation4 + $0x70] sm:$0x3] %vm446, 0.0
      %514 = vst.msk [vmem:[#allocation4 + $0x78] sm:$0xff] %vm443, 0.0
      %515 = vst.msk [vmem:[#allocation4 + $0x80] sm:$0xff] %vm443, 0.0
      %516 = vst.msk [vmem:[#allocation4 + $0x88] sm:$0x3] %vm446, 0.0
      %517 = vst.msk [vmem:[#allocation4 + $0x90] sm:$0xff] %vm443, 0.0
      %518 = vst.msk [vmem:[#allocation4 + $0x98] sm:$0xff] %vm443, 0.0
      %519 = vst.msk [vmem:[#allocation4 + $0xa0] sm:$0x3] %vm446, 0.0
      %520 = vst.msk [vmem:[#allocation4 + $0xa8] sm:$0xff] %vm443, 0.0
      %521 = vst.msk [vmem:[#allocation4 + $0xb0] sm:$0xff] %vm443, 0.0
      %522 = vst.msk [vmem:[#allocation4 + $0xb8] sm:$0x3] %vm446, 0.0
      %523 = vst.msk [vmem:[#allocation4 + $0xc0] sm:$0xff] %vm443, 0.0
      %524 = vst.msk [vmem:[#allocation4 + $0xc8] sm:$0xff] %vm443, 0.0
      %525 = vst.msk [vmem:[#allocation4 + $0xd0] sm:$0x3] %vm446, 0.0
      %526 = vst.msk [vmem:[#allocation4 + $0xd8] sm:$0xff] %vm443, 0.0
      %527 = vst.msk [vmem:[#allocation4 + $0xe0] sm:$0xff] %vm443, 0.0
      %528 = vst.msk [vmem:[#allocation4 + $0xe8] sm:$0x3] %vm446, 0.0
      %529 = vst.msk [vmem:[#allocation4 + $0xf0] sm:$0xff] %vm443, 0.0
      %530 = vst.msk [vmem:[#allocation4 + $0xf8] sm:$0xff] %vm443, 0.0
      %531 = vst.msk [vmem:[#allocation4 + $0x100] sm:$0x3] %vm446, 0.0
      %532 = vst.msk [vmem:[#allocation4 + $0x108] sm:$0xff] %vm443, 0.0
      %533 = vst.msk [vmem:[#allocation4 + $0x110] sm:$0xff] %vm443, 0.0
      %534 = vst.msk [vmem:[#allocation4 + $0x118] sm:$0x3] %vm446, 0.0
      %535 = vst.msk [vmem:[#allocation4 + $0x120] sm:$0xff] %vm443, 0.0
      %536 = vst.msk [vmem:[#allocation4 + $0x128] sm:$0xff] %vm443, 0.0
      %537 = vst.msk [vmem:[#allocation4 + $0x130] sm:$0x3] %vm446, 0.0
      %538 = vst.msk [vmem:[#allocation4 + $0x138] sm:$0xff] %vm443, 0.0
      %539 = vst.msk [vmem:[#allocation4 + $0x140] sm:$0xff] %vm443, 0.0
      %540 = vst.msk [vmem:[#allocation4 + $0x148] sm:$0x3] %vm446, 0.0
      %541 = vst.msk [vmem:[#allocation4 + $0x150] sm:$0xff] %vm443, 0.0
      %542 = vst.msk [vmem:[#allocation4 + $0x158] sm:$0xff] %vm443, 0.0
      %543 = vst.msk [vmem:[#allocation4 + $0x160] sm:$0x3] %vm446, 0.0
      %544 = vst.msk [vmem:[#allocation4 + $0x168] sm:$0xff] %vm443, 0.0
      %545 = vst.msk [vmem:[#allocation4 + $0x170] sm:$0xff] %vm443, 0.0
      %546 = vst.msk [vmem:[#allocation4 + $0x178] sm:$0x3] %vm446, 0.0
      %547 = vst.msk [vmem:[#allocation4 + $0x180] sm:$0xff] %vm443, 0.0
      %548 = vst.msk [vmem:[#allocation4 + $0x188] sm:$0xff] %vm443, 0.0
      %549 = vst.msk [vmem:[#allocation4 + $0x190] sm:$0x3] %vm446, 0.0
      %550 = vst.msk [vmem:[#allocation4 + $0x198] sm:$0xff] %vm443, 0.0
      %551 = vst.msk [vmem:[#allocation4 + $0x1a0] sm:$0xff] %vm443, 0.0
      %552 = vst.msk [vmem:[#allocation4 + $0x1a8] sm:$0x3] %vm446, 0.0
      %v553 = vld [vmem:[%s381] sm:$0xff]
      %v554 = vld [vmem:[%s381 + $0x8] sm:$0xff]
      %v555 = vld [vmem:[%s381 + $0x10] sm:$0xff]
      %v556 = vld [vmem:[%s381 + $0x18] sm:$0xff]
      %v557 = vld [vmem:[%s381 + $0x20] sm:$0xff]
      %v558 = vld [vmem:[%s381 + $0x28] sm:$0xff]
      %v559 = vld [vmem:[%s381 + $0x30] sm:$0xff]
      %v560 = vld [vmem:[%s381 + $0x38] sm:$0xff]
      %v561 = vld [vmem:[%s381 + $0x40] sm:$0xff]
      %v562 = vld [vmem:[%s381 + $0x48] sm:$0xff]
      %v563 = vld [vmem:[%s381 + $0x50] sm:$0xff]
      %v564 = vld [vmem:[%s381 + $0x58] sm:$0xff]
      %v565 = vld [vmem:[%s381 + $0x60] sm:$0xff]
      %v566 = vld [vmem:[%s381 + $0x68] sm:$0xff]
      %v567 = vld [vmem:[%s381 + $0x70] sm:$0xff]
      %v568 = vld [vmem:[%s381 + $0x78] sm:$0xff]
      %v569 = vld [vmem:[%s381 + $0x80] sm:$0xff]
      %v570 = vld [vmem:[%s381 + $0x88] sm:$0xff]
      %v571 = vld [vmem:[%s381 + $0x90] sm:$0xff]
      %v572 = vld [vmem:[%s381 + $0x98] sm:$0xff]
      %v573 = vld [vmem:[%s381 + $0xa0] sm:$0xff]
      %v574 = vld [vmem:[%s381 + $0xa8] sm:$0xff]
      %v575 = vld [vmem:[%s381 + $0xb0] sm:$0xff]
      %v576 = vld [vmem:[%s381 + $0xb8] sm:$0xff]
      %v577 = vld [vmem:[%s381 + $0xc0] sm:$0xff]
      %v578 = vld [vmem:[%s381 + $0xc8] sm:$0xff]
      %v579 = vld [vmem:[%s381 + $0xd0] sm:$0xff]
      %v580 = vld [vmem:[%s381 + $0xd8] sm:$0xff]
      %v581 = vld [vmem:[%s381 + $0xe0] sm:$0xff]
      %v582 = vld [vmem:[%s381 + $0xe8] sm:$0xff]
      %v583 = vld [vmem:[%s381 + $0xf0] sm:$0xff]
      %v584 = vld [vmem:[%s381 + $0xf8] sm:$0xff]
      %s585 = scalar_lea.vmem [#allocation2], 24
      %586 = vst.msk [vmem:[%s585 + $0x1] sm:$0xff] %vm387, %v553
      %587 = vst.msk [vmem:[%s585 + $0x9] sm:$0xff] %vm387, %v554
      %588 = vst.msk [vmem:[%s585 + $0x19] sm:$0xff] %vm387, %v555
      %589 = vst.msk [vmem:[%s585 + $0x21] sm:$0xff] %vm387, %v556
      %590 = vst.msk [vmem:[%s585 + $0x31] sm:$0xff] %vm387, %v557
      %591 = vst.msk [vmem:[%s585 + $0x39] sm:$0xff] %vm387, %v558
      %592 = vst.msk [vmem:[%s585 + $0x49] sm:$0xff] %vm387, %v559
      %593 = vst.msk [vmem:[%s585 + $0x51] sm:$0xff] %vm387, %v560
      %594 = vst.msk [vmem:[%s585 + $0x61] sm:$0xff] %vm387, %v561
      %595 = vst.msk [vmem:[%s585 + $0x69] sm:$0xff] %vm387, %v562
      %596 = vst.msk [vmem:[%s585 + $0x79] sm:$0xff] %vm387, %v563
      %597 = vst.msk [vmem:[%s585 + $0x81] sm:$0xff] %vm387, %v564
      %598 = vst.msk [vmem:[%s585 + $0x91] sm:$0xff] %vm387, %v565
      %599 = vst.msk [vmem:[%s585 + $0x99] sm:$0xff] %vm387, %v566
      %600 = vst.msk [vmem:[%s585 + $0xa9] sm:$0xff] %vm387, %v567
      %601 = vst.msk [vmem:[%s585 + $0xb1] sm:$0xff] %vm387, %v568
      %602 = vst.msk [vmem:[%s585 + $0xc1] sm:$0xff] %vm387, %v569
      %603 = vst.msk [vmem:[%s585 + $0xc9] sm:$0xff] %vm387, %v570
      %604 = vst.msk [vmem:[%s585 + $0xd9] sm:$0xff] %vm387, %v571
      %605 = vst.msk [vmem:[%s585 + $0xe1] sm:$0xff] %vm387, %v572
      %606 = vst.msk [vmem:[%s585 + $0xf1] sm:$0xff] %vm387, %v573
      %607 = vst.msk [vmem:[%s585 + $0xf9] sm:$0xff] %vm387, %v574
      %608 = vst.msk [vmem:[%s585 + $0x109] sm:$0xff] %vm387, %v575
      %609 = vst.msk [vmem:[%s585 + $0x111] sm:$0xff] %vm387, %v576
      %610 = vst.msk [vmem:[%s585 + $0x121] sm:$0xff] %vm387, %v577
      %611 = vst.msk [vmem:[%s585 + $0x129] sm:$0xff] %vm387, %v578
      %612 = vst.msk [vmem:[%s585 + $0x139] sm:$0xff] %vm387, %v579
      %613 = vst.msk [vmem:[%s585 + $0x141] sm:$0xff] %vm387, %v580
      %614 = vst.msk [vmem:[%s585 + $0x151] sm:$0xff] %vm387, %v581
      %615 = vst.msk [vmem:[%s585 + $0x159] sm:$0xff] %vm387, %v582
      %616 = vst.msk [vmem:[%s585 + $0x169] sm:$0xff] %vm387, %v583
      %617 = vst.msk [vmem:[%s585 + $0x171] sm:$0xff] %vm387, %v584
      %v618 = vld [vmem:[#allocation2] sm:$0xff]
      %v619 = vld [vmem:[#allocation2 + $0x8] sm:$0xff]
      %v620 = vld [vmem:[#allocation2 + $0x10] sm:$0x3]
      %v621 = vld [vmem:[#allocation2 + $0x18] sm:$0xff]
      %v622 = vld [vmem:[#allocation2 + $0x20] sm:$0xff]
      %v623 = vld [vmem:[#allocation2 + $0x28] sm:$0x3]
      %v624 = vld [vmem:[#allocation2 + $0x30] sm:$0xff]
      %v625 = vld [vmem:[#allocation2 + $0x38] sm:$0xff]
      %v626 = vld [vmem:[#allocation2 + $0x40] sm:$0x3]
      %v627 = vld [vmem:[#allocation2 + $0x48] sm:$0xff]
      %v628 = vld [vmem:[#allocation2 + $0x50] sm:$0xff]
      %v629 = vld [vmem:[#allocation2 + $0x58] sm:$0x3]
      %v630 = vld [vmem:[#allocation2 + $0x60] sm:$0xff]
      %v631 = vld [vmem:[#allocation2 + $0x68] sm:$0xff]
      %v632 = vld [vmem:[#allocation2 + $0x70] sm:$0x3]
      %v633 = vld [vmem:[#allocation2 + $0x78] sm:$0xff]
      %v634 = vld [vmem:[#allocation2 + $0x80] sm:$0xff]
      %v635 = vld [vmem:[#allocation2 + $0x88] sm:$0x3]
      %v636 = vld [vmem:[#allocation2 + $0x90] sm:$0xff]
      %v637 = vld [vmem:[#allocation2 + $0x98] sm:$0xff]
      %v638 = vld [vmem:[#allocation2 + $0xa0] sm:$0x3]
      %v639 = vld [vmem:[#allocation2 + $0xa8] sm:$0xff]
      %v640 = vld [vmem:[#allocation2 + $0xb0] sm:$0xff]
      %v641 = vld [vmem:[#allocation2 + $0xb8] sm:$0x3]
      %v642 = vld [vmem:[#allocation2 + $0xc0] sm:$0xff]
      %v643 = vld [vmem:[#allocation2 + $0xc8] sm:$0xff]
      %v644 = vld [vmem:[#allocation2 + $0xd0] sm:$0x3]
      %v645 = vld [vmem:[#allocation2 + $0xd8] sm:$0xff]
      %v646 = vld [vmem:[#allocation2 + $0xe0] sm:$0xff]
      %v647 = vld [vmem:[#allocation2 + $0xe8] sm:$0x3]
      %v648 = vld [vmem:[#allocation2 + $0xf0] sm:$0xff]
      %v649 = vld [vmem:[#allocation2 + $0xf8] sm:$0xff]
      %v650 = vld [vmem:[#allocation2 + $0x100] sm:$0x3]
      %v651 = vld [vmem:[#allocation2 + $0x108] sm:$0xff]
      %v652 = vld [vmem:[#allocation2 + $0x110] sm:$0xff]
      %v653 = vld [vmem:[#allocation2 + $0x118] sm:$0x3]
      %v654 = vld [vmem:[#allocation2 + $0x120] sm:$0xff]
      %v655 = vld [vmem:[#allocation2 + $0x128] sm:$0xff]
      %v656 = vld [vmem:[#allocation2 + $0x130] sm:$0x3]
      %v657 = vld [vmem:[#allocation2 + $0x138] sm:$0xff]
      %v658 = vld [vmem:[#allocation2 + $0x140] sm:$0xff]
      %v659 = vld [vmem:[#allocation2 + $0x148] sm:$0x3]
      %v660 = vld [vmem:[#allocation2 + $0x150] sm:$0xff]
      %v661 = vld [vmem:[#allocation2 + $0x158] sm:$0xff]
      %v662 = vld [vmem:[#allocation2 + $0x160] sm:$0x3]
      %v663 = vld [vmem:[#allocation2 + $0x168] sm:$0xff]
      %v664 = vld [vmem:[#allocation2 + $0x170] sm:$0xff]
      %v665 = vld [vmem:[#allocation2 + $0x178] sm:$0x3]
      %v666 = vld [vmem:[#allocation2 + $0x180] sm:$0xff]
      %v667 = vld [vmem:[#allocation2 + $0x188] sm:$0xff]
      %v668 = vld [vmem:[#allocation2 + $0x190] sm:$0x3]
      %v669 = vld [vmem:[#allocation2 + $0x198] sm:$0xff]
      %v670 = vld [vmem:[#allocation2 + $0x1a0] sm:$0xff]
      %v671 = vld [vmem:[#allocation2 + $0x1a8] sm:$0x3]
      %vm726 = vcmask 1046528
      %v727 = vrot.slane %v618, 1
      %v728 = vrot.slane %v619, 1
      %v729 = vsel %vm726, %v727, %v728
      %v730 = vrot.slane %v620, 1
      %v731 = vsel %vm726, %v728, %v730
      %v732 = vrot.slane %v621, 1
      %v733 = vrot.slane %v622, 1
      %v734 = vsel %vm726, %v732, %v733
      %v735 = vrot.slane %v623, 1
      %v736 = vsel %vm726, %v733, %v735
      %v737 = vrot.slane %v624, 1
      %v738 = vrot.slane %v625, 1
      %v739 = vsel %vm726, %v737, %v738
      %v740 = vrot.slane %v626, 1
      %v741 = vsel %vm726, %v738, %v740
      %v742 = vrot.slane %v627, 1
      %v743 = vrot.slane %v628, 1
      %v744 = vsel %vm726, %v742, %v743
      %v745 = vrot.slane %v629, 1
      %v746 = vsel %vm726, %v743, %v745
      %v747 = vrot.slane %v630, 1
      %v748 = vrot.slane %v631, 1
      %v749 = vsel %vm726, %v747, %v748
      %v750 = vrot.slane %v632, 1
      %v751 = vsel %vm726, %v748, %v750
      %v752 = vrot.slane %v633, 1
      %v753 = vrot.slane %v634, 1
      %v754 = vsel %vm726, %v752, %v753
      %v755 = vrot.slane %v635, 1
      %v756 = vsel %vm726, %v753, %v755
      %v757 = vrot.slane %v636, 1
      %v758 = vrot.slane %v637, 1
      %v759 = vsel %vm726, %v757, %v758
      %v760 = vrot.slane %v638, 1
      %v761 = vsel %vm726, %v758, %v760
      %v762 = vrot.slane %v639, 1
      %v763 = vrot.slane %v640, 1
      %v764 = vsel %vm726, %v762, %v763
      %v765 = vrot.slane %v641, 1
      %v766 = vsel %vm726, %v763, %v765
      %v767 = vrot.slane %v642, 1
      %v768 = vrot.slane %v643, 1
      %v769 = vsel %vm726, %v767, %v768
      %v770 = vrot.slane %v644, 1
      %v771 = vsel %vm726, %v768, %v770
      %v772 = vrot.slane %v645, 1
      %v773 = vrot.slane %v646, 1
      %v774 = vsel %vm726, %v772, %v773
      %v775 = vrot.slane %v647, 1
      %v776 = vsel %vm726, %v773, %v775
      %v777 = vrot.slane %v648, 1
      %v778 = vrot.slane %v649, 1
      %v779 = vsel %vm726, %v777, %v778
      %v780 = vrot.slane %v650, 1
      %v781 = vsel %vm726, %v778, %v780
      %v782 = vrot.slane %v651, 1
      %v783 = vrot.slane %v652, 1
      %v784 = vsel %vm726, %v782, %v783
      %v785 = vrot.slane %v653, 1
      %v786 = vsel %vm726, %v783, %v785
      %v787 = vrot.slane %v654, 1
      %v788 = vrot.slane %v655, 1
      %v789 = vsel %vm726, %v787, %v788
      %v790 = vrot.slane %v656, 1
      %v791 = vsel %vm726, %v788, %v790
      %v792 = vrot.slane %v657, 1
      %v793 = vrot.slane %v658, 1
      %v794 = vsel %vm726, %v792, %v793
      %v795 = vrot.slane %v659, 1
      %v796 = vsel %vm726, %v793, %v795
      %v797 = vrot.slane %v660, 1
      %v798 = vrot.slane %v661, 1
      %v799 = vsel %vm726, %v797, %v798
      %v800 = vrot.slane %v662, 1
      %v801 = vsel %vm726, %v798, %v800
      %v802 = vrot.slane %v663, 1
      %v803 = vrot.slane %v664, 1
      %v804 = vsel %vm726, %v802, %v803
      %v805 = vrot.slane %v665, 1
      %v806 = vsel %vm726, %v803, %v805
      %v807 = vrot.slane %v666, 1
      %v808 = vrot.slane %v667, 1
      %v809 = vsel %vm726, %v807, %v808
      %v810 = vrot.slane %v668, 1
      %v811 = vsel %vm726, %v808, %v810
      %v812 = vrot.slane %v669, 1
      %v813 = vrot.slane %v670, 1
      %v814 = vsel %vm726, %v812, %v813
      %v815 = vrot.slane %v671, 1
      %v816 = vsel %vm726, %v813, %v815
      %817 = vrot.lane.b32.xlu0 %v729, 2
      %v818 = vpop.permute.xlu0 %817
      %819 = vrot.lane.b32.xlu0 %v731, 2
      %v820 = vpop.permute.xlu0 %819
      %821 = vrot.lane.b32.xlu0 %v734, 2
      %v822 = vpop.permute.xlu0 %821
      %823 = vrot.lane.b32.xlu0 %v736, 2
      %v824 = vpop.permute.xlu0 %823
      %825 = vrot.lane.b32.xlu0 %v739, 2
      %v826 = vpop.permute.xlu0 %825
      %827 = vrot.lane.b32.xlu0 %v741, 2
      %v828 = vpop.permute.xlu0 %827
      %829 = vrot.lane.b32.xlu0 %v744, 2
      %v830 = vpop.permute.xlu0 %829
      %831 = vrot.lane.b32.xlu0 %v746, 2
      %v832 = vpop.permute.xlu0 %831
      %833 = vrot.lane.b32.xlu0 %v749, 2
      %v834 = vpop.permute.xlu0 %833
      %835 = vrot.lane.b32.xlu0 %v751, 2
      %v836 = vpop.permute.xlu0 %835
      %837 = vrot.lane.b32.xlu0 %v754, 2
      %v838 = vpop.permute.xlu0 %837
      %839 = vrot.lane.b32.xlu0 %v756, 2
      %v840 = vpop.permute.xlu0 %839
      %841 = vrot.lane.b32.xlu0 %v759, 2
      %v842 = vpop.permute.xlu0 %841
      %843 = vrot.lane.b32.xlu0 %v761, 2
      %v844 = vpop.permute.xlu0 %843
      %845 = vrot.lane.b32.xlu0 %v764, 2
      %v846 = vpop.permute.xlu0 %845
      %847 = vrot.lane.b32.xlu0 %v766, 2
      %v848 = vpop.permute.xlu0 %847
      %849 = vrot.lane.b32.xlu0 %v769, 2
      %v850 = vpop.permute.xlu0 %849
      %851 = vrot.lane.b32.xlu0 %v771, 2
      %v852 = vpop.permute.xlu0 %851
      %853 = vrot.lane.b32.xlu0 %v774, 2
      %v854 = vpop.permute.xlu0 %853
      %855 = vrot.lane.b32.xlu0 %v776, 2
      %v856 = vpop.permute.xlu0 %855
      %857 = vrot.lane.b32.xlu0 %v779, 2
      %v858 = vpop.permute.xlu0 %857
      %859 = vrot.lane.b32.xlu0 %v781, 2
      %v860 = vpop.permute.xlu0 %859
      %861 = vrot.lane.b32.xlu0 %v784, 2
      %v862 = vpop.permute.xlu0 %861
      %863 = vrot.lane.b32.xlu0 %v786, 2
      %v864 = vpop.permute.xlu0 %863
      %865 = vrot.lane.b32.xlu0 %v789, 2
      %v866 = vpop.permute.xlu0 %865
      %867 = vrot.lane.b32.xlu0 %v791, 2
      %v868 = vpop.permute.xlu0 %867
      %869 = vrot.lane.b32.xlu0 %v794, 2
      %v870 = vpop.permute.xlu0 %869
      %871 = vrot.lane.b32.xlu0 %v796, 2
      %v872 = vpop.permute.xlu0 %871
      %873 = vrot.lane.b32.xlu0 %v799, 2
      %v874 = vpop.permute.xlu0 %873
      %875 = vrot.lane.b32.xlu0 %v801, 2
      %v876 = vpop.permute.xlu0 %875
      %877 = vrot.lane.b32.xlu0 %v804, 2
      %v878 = vpop.permute.xlu0 %877
      %879 = vrot.lane.b32.xlu0 %v806, 2
      %v880 = vpop.permute.xlu0 %879
      %881 = vrot.lane.b32.xlu0 %v809, 2
      %v882 = vpop.permute.xlu0 %881
      %883 = vrot.lane.b32.xlu0 %v811, 2
      %v884 = vpop.permute.xlu0 %883
      %885 = vrot.lane.b32.xlu0 %v814, 2
      %v886 = vpop.permute.xlu0 %885
      %887 = vrot.lane.b32.xlu0 %v816, 2
      %v888 = vpop.permute.xlu0 %887
      %vm925 = vcmask 1045504
      %v926 = vrot.slane %v618, 2
      %v927 = vrot.slane %v619, 2
      %v928 = vsel %vm925, %v926, %v927
      %v929 = vrot.slane %v620, 2
      %v930 = vsel %vm925, %v927, %v929
      %v931 = vrot.slane %v621, 2
      %v932 = vrot.slane %v622, 2
      %v933 = vsel %vm925, %v931, %v932
      %v934 = vrot.slane %v623, 2
      %v935 = vsel %vm925, %v932, %v934
      %v936 = vrot.slane %v624, 2
      %v937 = vrot.slane %v625, 2
      %v938 = vsel %vm925, %v936, %v937
      %v939 = vrot.slane %v626, 2
      %v940 = vsel %vm925, %v937, %v939
      %v941 = vrot.slane %v627, 2
      %v942 = vrot.slane %v628, 2
      %v943 = vsel %vm925, %v941, %v942
      %v944 = vrot.slane %v629, 2
      %v945 = vsel %vm925, %v942, %v944
      %v946 = vrot.slane %v630, 2
      %v947 = vrot.slane %v631, 2
      %v948 = vsel %vm925, %v946, %v947
      %v949 = vrot.slane %v632, 2
      %v950 = vsel %vm925, %v947, %v949
      %v951 = vrot.slane %v633, 2
      %v952 = vrot.slane %v634, 2
      %v953 = vsel %vm925, %v951, %v952
      %v954 = vrot.slane %v635, 2
      %v955 = vsel %vm925, %v952, %v954
      %v956 = vrot.slane %v636, 2
      %v957 = vrot.slane %v637, 2
      %v958 = vsel %vm925, %v956, %v957
      %v959 = vrot.slane %v638, 2
      %v960 = vsel %vm925, %v957, %v959
      %v961 = vrot.slane %v639, 2
      %v962 = vrot.slane %v640, 2
      %v963 = vsel %vm925, %v961, %v962
      %v964 = vrot.slane %v641, 2
      %v965 = vsel %vm925, %v962, %v964
      %v966 = vrot.slane %v642, 2
      %v967 = vrot.slane %v643, 2
      %v968 = vsel %vm925, %v966, %v967
      %v969 = vrot.slane %v644, 2
      %v970 = vsel %vm925, %v967, %v969
      %v971 = vrot.slane %v645, 2
      %v972 = vrot.slane %v646, 2
      %v973 = vsel %vm925, %v971, %v972
      %v974 = vrot.slane %v647, 2
      %v975 = vsel %vm925, %v972, %v974
      %v976 = vrot.slane %v648, 2
      %v977 = vrot.slane %v649, 2
      %v978 = vsel %vm925, %v976, %v977
      %v979 = vrot.slane %v650, 2
      %v980 = vsel %vm925, %v977, %v979
      %v981 = vrot.slane %v651, 2
      %v982 = vrot.slane %v652, 2
      %v983 = vsel %vm925, %v981, %v982
      %v984 = vrot.slane %v653, 2
      %v985 = vsel %vm925, %v982, %v984
      %v986 = vrot.slane %v654, 2
      %v987 = vrot.slane %v655, 2
      %v988 = vsel %vm925, %v986, %v987
      %v989 = vrot.slane %v656, 2
      %v990 = vsel %vm925, %v987, %v989
      %v991 = vrot.slane %v657, 2
      %v992 = vrot.slane %v658, 2
      %v993 = vsel %vm925, %v991, %v992
      %v994 = vrot.slane %v659, 2
      %v995 = vsel %vm925, %v992, %v994
      %v996 = vrot.slane %v660, 2
      %v997 = vrot.slane %v661, 2
      %v998 = vsel %vm925, %v996, %v997
      %v999 = vrot.slane %v662, 2
      %v1000 = vsel %vm925, %v997, %v999
      %v1001 = vrot.slane %v663, 2
      %v1002 = vrot.slane %v664, 2
      %v1003 = vsel %vm925, %v1001, %v1002
      %v1004 = vrot.slane %v665, 2
      %v1005 = vsel %vm925, %v1002, %v1004
      %v1006 = vrot.slane %v666, 2
      %v1007 = vrot.slane %v667, 2
      %v1008 = vsel %vm925, %v1006, %v1007
      %v1009 = vrot.slane %v668, 2
      %v1010 = vsel %vm925, %v1007, %v1009
      %v1011 = vrot.slane %v669, 2
      %v1012 = vrot.slane %v670, 2
      %v1013 = vsel %vm925, %v1011, %v1012
      %v1014 = vrot.slane %v671, 2
      %v1015 = vsel %vm925, %v1012, %v1014
      %1016 = vrot.lane.b32.xlu0 %v928, 4
      %v1017 = vpop.permute.xlu0 %1016
      %1018 = vrot.lane.b32.xlu0 %v930, 4
      %v1019 = vpop.permute.xlu0 %1018
      %1020 = vrot.lane.b32.xlu0 %v933, 4
      %v1021 = vpop.permute.xlu0 %1020
      %1022 = vrot.lane.b32.xlu0 %v935, 4
      %v1023 = vpop.permute.xlu0 %1022
      %1024 = vrot.lane.b32.xlu0 %v938, 4
      %v1025 = vpop.permute.xlu0 %1024
      %1026 = vrot.lane.b32.xlu0 %v940, 4
      %v1027 = vpop.permute.xlu0 %1026
      %1028 = vrot.lane.b32.xlu0 %v943, 4
      %v1029 = vpop.permute.xlu0 %1028
      %1030 = vrot.lane.b32.xlu0 %v945, 4
      %v1031 = vpop.permute.xlu0 %1030
      %1032 = vrot.lane.b32.xlu0 %v948, 4
      %v1033 = vpop.permute.xlu0 %1032
      %1034 = vrot.lane.b32.xlu0 %v950, 4
      %v1035 = vpop.permute.xlu0 %1034
      %1036 = vrot.lane.b32.xlu0 %v953, 4
      %v1037 = vpop.permute.xlu0 %1036
      %1038 = vrot.lane.b32.xlu0 %v955, 4
      %v1039 = vpop.permute.xlu0 %1038
      %1040 = vrot.lane.b32.xlu0 %v958, 4
      %v1041 = vpop.permute.xlu0 %1040
      %1042 = vrot.lane.b32.xlu0 %v960, 4
      %v1043 = vpop.permute.xlu0 %1042
      %1044 = vrot.lane.b32.xlu0 %v963, 4
      %v1045 = vpop.permute.xlu0 %1044
      %1046 = vrot.lane.b32.xlu0 %v965, 4
      %v1047 = vpop.permute.xlu0 %1046
      %1048 = vrot.lane.b32.xlu0 %v968, 4
      %v1049 = vpop.permute.xlu0 %1048
      %1050 = vrot.lane.b32.xlu0 %v970, 4
      %v1051 = vpop.permute.xlu0 %1050
      %1052 = vrot.lane.b32.xlu0 %v973, 4
      %v1053 = vpop.permute.xlu0 %1052
      %1054 = vrot.lane.b32.xlu0 %v975, 4
      %v1055 = vpop.permute.xlu0 %1054
      %1056 = vrot.lane.b32.xlu0 %v978, 4
      %v1057 = vpop.permute.xlu0 %1056
      %1058 = vrot.lane.b32.xlu0 %v980, 4
      %v1059 = vpop.permute.xlu0 %1058
      %1060 = vrot.lane.b32.xlu0 %v983, 4
      %v1061 = vpop.permute.xlu0 %1060
      %1062 = vrot.lane.b32.xlu0 %v985, 4
      %v1063 = vpop.permute.xlu0 %1062
      %1064 = vrot.lane.b32.xlu0 %v988, 4
      %v1065 = vpop.permute.xlu0 %1064
      %1066 = vrot.lane.b32.xlu0 %v990, 4
      %v1067 = vpop.permute.xlu0 %1066
      %1068 = vrot.lane.b32.xlu0 %v993, 4
      %v1069 = vpop.permute.xlu0 %1068
      %1070 = vrot.lane.b32.xlu0 %v995, 4
      %v1071 = vpop.permute.xlu0 %1070
      %1072 = vrot.lane.b32.xlu0 %v998, 4
      %v1073 = vpop.permute.xlu0 %1072
      %1074 = vrot.lane.b32.xlu0 %v1000, 4
      %v1075 = vpop.permute.xlu0 %1074
      %1076 = vrot.lane.b32.xlu0 %v1003, 4
      %v1077 = vpop.permute.xlu0 %1076
      %1078 = vrot.lane.b32.xlu0 %v1005, 4
      %v1079 = vpop.permute.xlu0 %1078
      %1080 = vrot.lane.b32.xlu0 %v1008, 4
      %v1081 = vpop.permute.xlu0 %1080
      %1082 = vrot.lane.b32.xlu0 %v1010, 4
      %v1083 = vpop.permute.xlu0 %1082
      %1084 = vrot.lane.b32.xlu0 %v1013, 4
      %v1085 = vpop.permute.xlu0 %1084
      %1086 = vrot.lane.b32.xlu0 %v1015, 4
      %v1087 = vpop.permute.xlu0 %1086
      %v1124 = vsel %vm387, %v618, %v818
      %v1125 = vsel %vm387, %v619, %v820
      %v1126 = vsel %vm387, %v621, %v822
      %v1127 = vsel %vm387, %v622, %v824
      %v1128 = vsel %vm387, %v624, %v826
      %v1129 = vsel %vm387, %v625, %v828
      %v1130 = vsel %vm387, %v627, %v830
      %v1131 = vsel %vm387, %v628, %v832
      %v1132 = vsel %vm387, %v630, %v834
      %v1133 = vsel %vm387, %v631, %v836
      %v1134 = vsel %vm387, %v633, %v838
      %v1135 = vsel %vm387, %v634, %v840
      %v1136 = vsel %vm387, %v636, %v842
      %v1137 = vsel %vm387, %v637, %v844
      %v1138 = vsel %vm387, %v639, %v846
      %v1139 = vsel %vm387, %v640, %v848
      %v1140 = vsel %vm387, %v642, %v850
      %v1141 = vsel %vm387, %v643, %v852
      %v1142 = vsel %vm387, %v645, %v854
      %v1143 = vsel %vm387, %v646, %v856
      %v1144 = vsel %vm387, %v648, %v858
      %v1145 = vsel %vm387, %v649, %v860
      %v1146 = vsel %vm387, %v651, %v862
      %v1147 = vsel %vm387, %v652, %v864
      %v1148 = vsel %vm387, %v654, %v866
      %v1149 = vsel %vm387, %v655, %v868
      %v1150 = vsel %vm387, %v657, %v870
      %v1151 = vsel %vm387, %v658, %v872
      %v1152 = vsel %vm387, %v660, %v874
      %v1153 = vsel %vm387, %v661, %v876
      %v1154 = vsel %vm387, %v663, %v878
      %v1155 = vsel %vm387, %v664, %v880
      %v1156 = vsel %vm387, %v666, %v882
      %v1157 = vsel %vm387, %v667, %v884
      %v1158 = vsel %vm387, %v669, %v886
      %v1159 = vsel %vm387, %v670, %v888
      %vm1160 = vcmask 31744
      %v1161 = vsel %vm1160, %v1124, %v1017
      %v1162 = vsel %vm1160, %v1125, %v1019
      %v1163 = vsel %vm1160, %v1126, %v1021
      %v1164 = vsel %vm1160, %v1127, %v1023
      %v1165 = vsel %vm1160, %v1128, %v1025
      %v1166 = vsel %vm1160, %v1129, %v1027
      %v1167 = vsel %vm1160, %v1130, %v1029
      %v1168 = vsel %vm1160, %v1131, %v1031
      %v1169 = vsel %vm1160, %v1132, %v1033
      %v1170 = vsel %vm1160, %v1133, %v1035
      %v1171 = vsel %vm1160, %v1134, %v1037
      %v1172 = vsel %vm1160, %v1135, %v1039
      %v1173 = vsel %vm1160, %v1136, %v1041
      %v1174 = vsel %vm1160, %v1137, %v1043
      %v1175 = vsel %vm1160, %v1138, %v1045
      %v1176 = vsel %vm1160, %v1139, %v1047
      %v1177 = vsel %vm1160, %v1140, %v1049
      %v1178 = vsel %vm1160, %v1141, %v1051
      %v1179 = vsel %vm1160, %v1142, %v1053
      %v1180 = vsel %vm1160, %v1143, %v1055
      %v1181 = vsel %vm1160, %v1144, %v1057
      %v1182 = vsel %vm1160, %v1145, %v1059
      %v1183 = vsel %vm1160, %v1146, %v1061
      %v1184 = vsel %vm1160, %v1147, %v1063
      %v1185 = vsel %vm1160, %v1148, %v1065
      %v1186 = vsel %vm1160, %v1149, %v1067
      %v1187 = vsel %vm1160, %v1150, %v1069
      %v1188 = vsel %vm1160, %v1151, %v1071
      %v1189 = vsel %vm1160, %v1152, %v1073
      %v1190 = vsel %vm1160, %v1153, %v1075
      %v1191 = vsel %vm1160, %v1154, %v1077
      %v1192 = vsel %vm1160, %v1155, %v1079
      %v1193 = vsel %vm1160, %v1156, %v1081
      %v1194 = vsel %vm1160, %v1157, %v1083
      %v1195 = vsel %vm1160, %v1158, %v1085
      %v1196 = vsel %vm1160, %v1159, %v1087
      %1229 = vrot.lane.b32.xlu0 %v1163, 6
      %v1230 = vpop.permute.xlu0 %1229
      %1231 = vrot.lane.b32.xlu0 %v1164, 6
      %v1232 = vpop.permute.xlu0 %1231
      %1233 = vrot.lane.b32.xlu0 %v1165, 6
      %v1234 = vpop.permute.xlu0 %1233
      %1235 = vrot.lane.b32.xlu0 %v1166, 6
      %v1236 = vpop.permute.xlu0 %1235
      %1237 = vrot.lane.b32.xlu0 %v1167, 6
      %v1238 = vpop.permute.xlu0 %1237
      %1239 = vrot.lane.b32.xlu0 %v1168, 6
      %v1240 = vpop.permute.xlu0 %1239
      %1241 = vrot.lane.b32.xlu0 %v1169, 6
      %v1242 = vpop.permute.xlu0 %1241
      %1243 = vrot.lane.b32.xlu0 %v1170, 6
      %v1244 = vpop.permute.xlu0 %1243
      %1245 = vrot.lane.b32.xlu0 %v1171, 6
      %v1246 = vpop.permute.xlu0 %1245
      %1247 = vrot.lane.b32.xlu0 %v1172, 6
      %v1248 = vpop.permute.xlu0 %1247
      %1249 = vrot.lane.b32.xlu0 %v1173, 6
      %v1250 = vpop.permute.xlu0 %1249
      %1251 = vrot.lane.b32.xlu0 %v1174, 6
      %v1252 = vpop.permute.xlu0 %1251
      %1253 = vrot.lane.b32.xlu0 %v1175, 6
      %v1254 = vpop.permute.xlu0 %1253
      %1255 = vrot.lane.b32.xlu0 %v1176, 6
      %v1256 = vpop.permute.xlu0 %1255
      %1257 = vrot.lane.b32.xlu0 %v1177, 6
      %v1258 = vpop.permute.xlu0 %1257
      %1259 = vrot.lane.b32.xlu0 %v1178, 6
      %v1260 = vpop.permute.xlu0 %1259
      %1261 = vrot.lane.b32.xlu0 %v1179, 6
      %v1262 = vpop.permute.xlu0 %1261
      %1263 = vrot.lane.b32.xlu0 %v1180, 6
      %v1264 = vpop.permute.xlu0 %1263
      %1265 = vrot.lane.b32.xlu0 %v1181, 6
      %v1266 = vpop.permute.xlu0 %1265
      %1267 = vrot.lane.b32.xlu0 %v1182, 6
      %v1268 = vpop.permute.xlu0 %1267
      %1269 = vrot.lane.b32.xlu0 %v1183, 6
      %v1270 = vpop.permute.xlu0 %1269
      %1271 = vrot.lane.b32.xlu0 %v1184, 6
      %v1272 = vpop.permute.xlu0 %1271
      %1273 = vrot.lane.b32.xlu0 %v1185, 6
      %v1274 = vpop.permute.xlu0 %1273
      %1275 = vrot.lane.b32.xlu0 %v1186, 6
      %v1276 = vpop.permute.xlu0 %1275
      %1277 = vrot.lane.b32.xlu0 %v1187, 6
      %v1278 = vpop.permute.xlu0 %1277
      %1279 = vrot.lane.b32.xlu0 %v1188, 6
      %v1280 = vpop.permute.xlu0 %1279
      %1281 = vrot.lane.b32.xlu0 %v1189, 6
      %v1282 = vpop.permute.xlu0 %1281
      %1283 = vrot.lane.b32.xlu0 %v1190, 6
      %v1284 = vpop.permute.xlu0 %1283
      %1285 = vrot.lane.b32.xlu0 %v1191, 6
      %v1286 = vpop.permute.xlu0 %1285
      %1287 = vrot.lane.b32.xlu0 %v1192, 6
      %v1288 = vpop.permute.xlu0 %1287
      %1289 = vrot.lane.b32.xlu0 %v1193, 6
      %v1290 = vpop.permute.xlu0 %1289
      %1291 = vrot.lane.b32.xlu0 %v1194, 6
      %v1292 = vpop.permute.xlu0 %1291
      %1327 = vrot.lane.b32.xlu0 %v1165, 12
      %v1328 = vpop.permute.xlu0 %1327
      %1329 = vrot.lane.b32.xlu0 %v1166, 12
      %v1330 = vpop.permute.xlu0 %1329
      %1331 = vrot.lane.b32.xlu0 %v1167, 12
      %v1332 = vpop.permute.xlu0 %1331
      %1333 = vrot.lane.b32.xlu0 %v1168, 12
      %v1334 = vpop.permute.xlu0 %1333
      %1335 = vrot.lane.b32.xlu0 %v1169, 12
      %v1336 = vpop.permute.xlu0 %1335
      %1337 = vrot.lane.b32.xlu0 %v1170, 12
      %v1338 = vpop.permute.xlu0 %1337
      %1339 = vrot.lane.b32.xlu0 %v1171, 12
      %v1340 = vpop.permute.xlu0 %1339
      %1341 = vrot.lane.b32.xlu0 %v1172, 12
      %v1342 = vpop.permute.xlu0 %1341
      %1343 = vrot.lane.b32.xlu0 %v1173, 12
      %v1344 = vpop.permute.xlu0 %1343
      %1345 = vrot.lane.b32.xlu0 %v1174, 12
      %v1346 = vpop.permute.xlu0 %1345
      %1347 = vrot.lane.b32.xlu0 %v1175, 12
      %v1348 = vpop.permute.xlu0 %1347
      %1349 = vrot.lane.b32.xlu0 %v1176, 12
      %v1350 = vpop.permute.xlu0 %1349
      %1351 = vrot.lane.b32.xlu0 %v1177, 12
      %v1352 = vpop.permute.xlu0 %1351
      %1353 = vrot.lane.b32.xlu0 %v1178, 12
      %v1354 = vpop.permute.xlu0 %1353
      %1355 = vrot.lane.b32.xlu0 %v1179, 12
      %v1356 = vpop.permute.xlu0 %1355
      %1357 = vrot.lane.b32.xlu0 %v1180, 12
      %v1358 = vpop.permute.xlu0 %1357
      %1359 = vrot.lane.b32.xlu0 %v1181, 12
      %v1360 = vpop.permute.xlu0 %1359
      %1361 = vrot.lane.b32.xlu0 %v1182, 12
      %v1362 = vpop.permute.xlu0 %1361
      %1363 = vrot.lane.b32.xlu0 %v1183, 12
      %v1364 = vpop.permute.xlu0 %1363
      %1365 = vrot.lane.b32.xlu0 %v1184, 12
      %v1366 = vpop.permute.xlu0 %1365
      %1367 = vrot.lane.b32.xlu0 %v1185, 12
      %v1368 = vpop.permute.xlu0 %1367
      %1369 = vrot.lane.b32.xlu0 %v1186, 12
      %v1370 = vpop.permute.xlu0 %1369
      %1371 = vrot.lane.b32.xlu0 %v1187, 12
      %v1372 = vpop.permute.xlu0 %1371
      %1373 = vrot.lane.b32.xlu0 %v1188, 12
      %v1374 = vpop.permute.xlu0 %1373
      %1375 = vrot.lane.b32.xlu0 %v1189, 12
      %v1376 = vpop.permute.xlu0 %1375
      %1377 = vrot.lane.b32.xlu0 %v1190, 12
      %v1378 = vpop.permute.xlu0 %1377
      %1379 = vrot.lane.b32.xlu0 %v1191, 12
      %v1380 = vpop.permute.xlu0 %1379
      %1381 = vrot.lane.b32.xlu0 %v1192, 12
      %v1382 = vpop.permute.xlu0 %1381
      %1383 = vrot.lane.b32.xlu0 %v1193, 12
      %v1384 = vpop.permute.xlu0 %1383
      %1385 = vrot.lane.b32.xlu0 %v1194, 12
      %v1386 = vpop.permute.xlu0 %1385
      %1387 = vrot.lane.b32.xlu0 %v1195, 12
      %v1388 = vpop.permute.xlu0 %1387
      %1389 = vrot.lane.b32.xlu0 %v1196, 12
      %v1390 = vpop.permute.xlu0 %1389
      %vm1423 = vcmask 48128
      %v1424 = vsel %vm1423, %v1161, %v1230
      %v1425 = vsel %vm1423, %v1162, %v1232
      %v1426 = vsel %vm1423, %v1163, %v1234
      %v1427 = vsel %vm1423, %v1164, %v1236
      %v1428 = vsel %vm1423, %v1165, %v1238
      %v1429 = vsel %vm1423, %v1166, %v1240
      %v1430 = vsel %vm1423, %v1167, %v1242
      %v1431 = vsel %vm1423, %v1168, %v1244
      %v1432 = vsel %vm1423, %v1169, %v1246
      %v1433 = vsel %vm1423, %v1170, %v1248
      %v1434 = vsel %vm1423, %v1171, %v1250
      %v1435 = vsel %vm1423, %v1172, %v1252
      %v1436 = vsel %vm1423, %v1173, %v1254
      %v1437 = vsel %vm1423, %v1174, %v1256
      %v1438 = vsel %vm1423, %v1175, %v1258
      %v1439 = vsel %vm1423, %v1176, %v1260
      %v1440 = vsel %vm1423, %v1177, %v1262
      %v1441 = vsel %vm1423, %v1178, %v1264
      %v1442 = vsel %vm1423, %v1179, %v1266
      %v1443 = vsel %vm1423, %v1180, %v1268
      %v1444 = vsel %vm1423, %v1181, %v1270
      %v1445 = vsel %vm1423, %v1182, %v1272
      %v1446 = vsel %vm1423, %v1183, %v1274
      %v1447 = vsel %vm1423, %v1184, %v1276
      %v1448 = vsel %vm1423, %v1185, %v1278
      %v1449 = vsel %vm1423, %v1186, %v1280
      %v1450 = vsel %vm1423, %v1187, %v1282
      %v1451 = vsel %vm1423, %v1188, %v1284
      %v1452 = vsel %vm1423, %v1189, %v1286
      %v1453 = vsel %vm1423, %v1190, %v1288
      %v1454 = vsel %vm1423, %v1191, %v1290
      %v1455 = vsel %vm1423, %v1192, %v1292
      %vm1456 = vcmask 97280
      %v1457 = vsel %vm1456, %v1424, %v1328
      %v1458 = vsel %vm1456, %v1425, %v1330
      %v1459 = vsel %vm1456, %v1426, %v1332
      %v1460 = vsel %vm1456, %v1427, %v1334
      %v1461 = vsel %vm1456, %v1428, %v1336
      %v1462 = vsel %vm1456, %v1429, %v1338
      %v1463 = vsel %vm1456, %v1430, %v1340
      %v1464 = vsel %vm1456, %v1431, %v1342
      %v1465 = vsel %vm1456, %v1432, %v1344
      %v1466 = vsel %vm1456, %v1433, %v1346
      %v1467 = vsel %vm1456, %v1434, %v1348
      %v1468 = vsel %vm1456, %v1435, %v1350
      %v1469 = vsel %vm1456, %v1436, %v1352
      %v1470 = vsel %vm1456, %v1437, %v1354
      %v1471 = vsel %vm1456, %v1438, %v1356
      %v1472 = vsel %vm1456, %v1439, %v1358
      %v1473 = vsel %vm1456, %v1440, %v1360
      %v1474 = vsel %vm1456, %v1441, %v1362
      %v1475 = vsel %vm1456, %v1442, %v1364
      %v1476 = vsel %vm1456, %v1443, %v1366
      %v1477 = vsel %vm1456, %v1444, %v1368
      %v1478 = vsel %vm1456, %v1445, %v1370
      %v1479 = vsel %vm1456, %v1446, %v1372
      %v1480 = vsel %vm1456, %v1447, %v1374
      %v1481 = vsel %vm1456, %v1448, %v1376
      %v1482 = vsel %vm1456, %v1449, %v1378
      %v1483 = vsel %vm1456, %v1450, %v1380
      %v1484 = vsel %vm1456, %v1451, %v1382
      %v1485 = vsel %vm1456, %v1452, %v1384
      %v1486 = vsel %vm1456, %v1453, %v1386
      %v1487 = vsel %vm1456, %v1454, %v1388
      %v1488 = vsel %vm1456, %v1455, %v1390
      %v1489 = vld [vmem:[%s1] sm:$0xff]
      %v1490 = vld [vmem:[%s1 + $0x8] sm:$0xff]
      %v1491 = vld [vmem:[%s1 + $0x10] sm:$0x3]
      %v1492 = vld [vmem:[%s6] sm:$0x1]
      %v1494 = vlaneseq
      %v1495 = vshrl.u32 %v1494, 7
      %v1496 = vsub.s32 0, %v1495
      %v1497 = vrot.slane %v1492, %v1496
      %vm1499 = vcmask 146432
      %v1501 = vsel %vm1499, %v1457, 0
      %v1504 = vsel %vm1499, %v1458, 0
      %v1507 = vsel %vm1499, %v1459, 0
      %v1510 = vsel %vm1499, %v1460, 0
      %v1513 = vsel %vm1499, %v1461, 0
      %v1516 = vsel %vm1499, %v1462, 0
      %v1519 = vsel %vm1499, %v1463, 0
      %v1522 = vsel %vm1499, %v1464, 0
      %v1525 = vsel %vm1499, %v1465, 0
      %v1528 = vsel %vm1499, %v1466, 0
      %v1531 = vsel %vm1499, %v1467, 0
      %v1534 = vsel %vm1499, %v1468, 0
      %v1537 = vsel %vm1499, %v1469, 0
      %v1540 = vsel %vm1499, %v1470, 0
      %v1543 = vsel %vm1499, %v1471, 0
      %v1546 = vsel %vm1499, %v1472, 0
      %v1549 = vsel %vm1499, %v1473, 0
      %v1552 = vsel %vm1499, %v1474, 0
      %v1555 = vsel %vm1499, %v1475, 0
      %v1558 = vsel %vm1499, %v1476, 0
      %v1561 = vsel %vm1499, %v1477, 0
      %v1564 = vsel %vm1499, %v1478, 0
      %v1567 = vsel %vm1499, %v1479, 0
      %v1570 = vsel %vm1499, %v1480, 0
      %v1573 = vsel %vm1499, %v1481, 0
      %v1576 = vsel %vm1499, %v1482, 0
      %v1579 = vsel %vm1499, %v1483, 0
      %v1582 = vsel %vm1499, %v1484, 0
      %v1585 = vsel %vm1499, %v1485, 0
      %v1588 = vsel %vm1499, %v1486, 0
      %v1591 = vsel %vm1499, %v1487, 0
      %v1594 = vsel %vm1499, %v1488, 0
      %vm1596 = vcmask 1041408
      %v1598 = vsel %vm1596, %v1491, 0
      %1600 = vmatprep.subr.mxu0 0.0
      %1601 = vmatpush1.msra.mxu0 %v1489
      %1602 = vmatprep.subr.mxu0 0.0
      %1603 = vmatpush1.msra.mxu0 %v1490
      %1604 = vmatprep.subr.mxu0 0.0
      %1605 = vmatpush1.msra.mxu0 %v1598
      %1606 = vmatprep.subr.mxu0 0.0
      %1607 = vmatpush1.msra.mxu0 0.0
      %1608 = vmatprep.subr.mxu0 0.0
      %1609 = vmatpush1.msra.mxu0 0.0
      %1610 = vmatprep.subr.mxu0 0.0
      %1611 = vmatpush1.msra.mxu0 0.0
      %1612 = vmatprep.subr.mxu0 0.0
      %1613 = vmatpush1.msra.mxu0 0.0
      %1614 = vmatprep.subr.mxu0 0.0
      %1615 = vmatpush1.msra.mxu0 0.0
      %1616 = vmatprep.subr.mxu0 0.0
      %1617 = vmatpush1.msra.mxu0 0.0
      %1618 = vmatprep.subr.mxu0 0.0
      %1619 = vmatpush1.msra.mxu0 0.0
      %1620 = vmatprep.subr.mxu0 0.0
      %1621 = vmatpush1.msra.mxu0 0.0
      %1622 = vmatprep.subr.mxu0 0.0
      %1623 = vmatpush1.msra.mxu0 0.0
      %1624 = vmatprep.subr.mxu0 0.0
      %1625 = vmatpush1.msra.mxu0 0.0
      %1626 = vmatprep.subr.mxu0 0.0
      %1627 = vmatpush1.msra.mxu0 0.0
      %1628 = vmatprep.subr.mxu0 0.0
      %1629 = vmatpush1.msra.mxu0 0.0
      %1630 = vmatprep.subr.mxu0 0.0
      %1631 = vmatpush1.msra.mxu0 0.0
      %1632 = vmatprep.subr.mxu0 0.0
      %1633 = vmatpush1.msra.mxu0 0.0
      %1634 = vmatprep.subr.mxu0 0.0
      %1635 = vmatpush1.msra.mxu0 0.0
      %1636 = vmatprep.subr.mxu0 0.0
      %1637 = vmatpush1.msra.mxu0 0.0
      %1638 = vmatprep.subr.mxu0 0.0
      %1639 = vmatpush1.msra.mxu0 0.0
      %1640 = vmatprep.subr.mxu0 0.0
      %1641 = vmatpush1.msra.mxu0 0.0
      %1642 = vmatprep.subr.mxu0 0.0
      %1643 = vmatpush1.msra.mxu0 0.0
      %1644 = vmatprep.subr.mxu0 0.0
      %1645 = vmatpush1.msra.mxu0 0.0
      %1646 = vmatprep.subr.mxu0 0.0
      %1647 = vmatpush1.msra.mxu0 0.0
      %1648 = vmatprep.subr.mxu0 0.0
      %1649 = vmatpush1.msra.mxu0 0.0
      %1650 = vmatprep.subr.mxu0 0.0
      %1651 = vmatpush1.msra.mxu0 0.0
      %1652 = vmatprep.subr.mxu0 0.0
      %1653 = vmatpush1.msra.mxu0 0.0
      %1654 = vmatprep.subr.mxu0 0.0
      %1655 = vmatpush1.msra.mxu0 0.0
      %1656 = vmatprep.subr.mxu0 0.0
      %1657 = vmatpush1.msra.mxu0 0.0
      %1658 = vmatprep.subr.mxu0 0.0
      %1659 = vmatpush1.msra.mxu0 0.0
      %1660 = vmatprep.subr.mxu0 0.0
      %1661 = vmatpush1.msra.mxu0 0.0
      %1662 = vmatprep.subr.mxu0 0.0
      %1663 = vmatpush1.msra.mxu0 0.0
      %1664 = vmatprep.mubr.f32.mxu0 0.0
      %1665 = vmatmul.mubr.f32.gmra.mrb[0].mxu0 %v1501
      %v1666 = vpop.f32.mrb[0].mxu0
      %v1667 = vadd.f32 %v1497, %v1666
      %v1668 = vpop.f32.mrb[0].mxu0
      %1669 = vmatprep.mubr.f32.mxu0 0.0
      %1670 = vmatmul.mubr.f32.gmra.mrb[0].mxu0 %v1504
      %v1671 = vpop.f32.mrb[0].mxu0
      %v1672 = vadd.f32 %v1497, %v1671
      %v1673 = vpop.f32.mrb[0].mxu0
      %1674 = vmatprep.mubr.f32.mxu0 0.0
      %1675 = vmatmul.mubr.f32.gmra.mrb[0].mxu0 %v1507
      %v1676 = vpop.f32.mrb[0].mxu0
      %v1677 = vadd.f32 %v1497, %v1676
      %v1678 = vpop.f32.mrb[0].mxu0
      %1679 = vmatprep.mubr.f32.mxu0 0.0
      %1680 = vmatmul.mubr.f32.gmra.mrb[0].mxu0 %v1510
      %v1681 = vpop.f32.mrb[0].mxu0
      %v1682 = vadd.f32 %v1497, %v1681
      %v1683 = vpop.f32.mrb[0].mxu0
      %1684 = vmatprep.mubr.f32.mxu0 0.0
      %1685 = vmatmul.mubr.f32.gmra.mrb[0].mxu0 %v1513
      %v1686 = vpop.f32.mrb[0].mxu0
      %v1687 = vadd.f32 %v1497, %v1686
      %v1688 = vpop.f32.mrb[0].mxu0
      %1689 = vmatprep.mubr.f32.mxu0 0.0
      %1690 = vmatmul.mubr.f32.gmra.mrb[0].mxu0 %v1516
      %v1691 = vpop.f32.mrb[0].mxu0
      %v1692 = vadd.f32 %v1497, %v1691
      %v1693 = vpop.f32.mrb[0].mxu0
      %1694 = vmatprep.mubr.f32.mxu0 0.0
      %1695 = vmatmul.mubr.f32.gmra.mrb[0].mxu0 %v1519
      %v1696 = vpop.f32.mrb[0].mxu0
      %v1697 = vadd.f32 %v1497, %v1696
      %v1698 = vpop.f32.mrb[0].mxu0
      %1699 = vmatprep.mubr.f32.mxu0 0.0
      %1700 = vmatmul.mubr.f32.gmra.mrb[0].mxu0 %v1522
      %v1701 = vpop.f32.mrb[0].mxu0
      %v1702 = vadd.f32 %v1497, %v1701
      %v1703 = vpop.f32.mrb[0].mxu0
      %1704 = vmatprep.mubr.f32.mxu0 0.0
      %1705 = vmatmul.mubr.f32.gmra.mrb[0].mxu0 %v1525
      %v1706 = vpop.f32.mrb[0].mxu0
      %v1707 = vadd.f32 %v1497, %v1706
      %v1708 = vpop.f32.mrb[0].mxu0
      %1709 = vmatprep.mubr.f32.mxu0 0.0
      %1710 = vmatmul.mubr.f32.gmra.mrb[0].mxu0 %v1528
      %v1711 = vpop.f32.mrb[0].mxu0
      %v1712 = vadd.f32 %v1497, %v1711
      %v1713 = vpop.f32.mrb[0].mxu0
      %1714 = vmatprep.mubr.f32.mxu0 0.0
      %1715 = vmatmul.mubr.f32.gmra.mrb[0].mxu0 %v1531
      %v1716 = vpop.f32.mrb[0].mxu0
      %v1717 = vadd.f32 %v1497, %v1716
      %v1718 = vpop.f32.mrb[0].mxu0
      %1719 = vmatprep.mubr.f32.mxu0 0.0
      %1720 = vmatmul.mubr.f32.gmra.mrb[0].mxu0 %v1534
      %v1721 = vpop.f32.mrb[0].mxu0
      %v1722 = vadd.f32 %v1497, %v1721
      %v1723 = vpop.f32.mrb[0].mxu0
      %1724 = vmatprep.mubr.f32.mxu0 0.0
      %1725 = vmatmul.mubr.f32.gmra.mrb[0].mxu0 %v1537
      %v1726 = vpop.f32.mrb[0].mxu0
      %v1727 = vadd.f32 %v1497, %v1726
      %v1728 = vpop.f32.mrb[0].mxu0
      %1729 = vmatprep.mubr.f32.mxu0 0.0
      %1730 = vmatmul.mubr.f32.gmra.mrb[0].mxu0 %v1540
      %v1731 = vpop.f32.mrb[0].mxu0
      %v1732 = vadd.f32 %v1497, %v1731
      %v1733 = vpop.f32.mrb[0].mxu0
      %1734 = vmatprep.mubr.f32.mxu0 0.0
      %1735 = vmatmul.mubr.f32.gmra.mrb[0].mxu0 %v1543
      %v1736 = vpop.f32.mrb[0].mxu0
      %v1737 = vadd.f32 %v1497, %v1736
      %v1738 = vpop.f32.mrb[0].mxu0
      %1739 = vmatprep.mubr.f32.mxu0 0.0
      %1740 = vmatmul.mubr.f32.gmra.mrb[0].mxu0 %v1546
      %v1741 = vpop.f32.mrb[0].mxu0
      %v1742 = vadd.f32 %v1497, %v1741
      %v1743 = vpop.f32.mrb[0].mxu0
      %1744 = vmatprep.mubr.f32.mxu0 0.0
      %1745 = vmatmul.mubr.f32.gmra.mrb[0].mxu0 %v1549
      %v1746 = vpop.f32.mrb[0].mxu0
      %v1747 = vadd.f32 %v1497, %v1746
      %v1748 = vpop.f32.mrb[0].mxu0
      %1749 = vmatprep.mubr.f32.mxu0 0.0
      %1750 = vmatmul.mubr.f32.gmra.mrb[0].mxu0 %v1552
      %v1751 = vpop.f32.mrb[0].mxu0
      %v1752 = vadd.f32 %v1497, %v1751
      %v1753 = vpop.f32.mrb[0].mxu0
      %1754 = vmatprep.mubr.f32.mxu0 0.0
      %1755 = vmatmul.mubr.f32.gmra.mrb[0].mxu0 %v1555
      %v1756 = vpop.f32.mrb[0].mxu0
      %v1757 = vadd.f32 %v1497, %v1756
      %v1758 = vpop.f32.mrb[0].mxu0
      %1759 = vmatprep.mubr.f32.mxu0 0.0
      %1760 = vmatmul.mubr.f32.gmra.mrb[0].mxu0 %v1558
      %v1761 = vpop.f32.mrb[0].mxu0
      %v1762 = vadd.f32 %v1497, %v1761
      %v1763 = vpop.f32.mrb[0].mxu0
      %1764 = vmatprep.mubr.f32.mxu0 0.0
      %1765 = vmatmul.mubr.f32.gmra.mrb[0].mxu0 %v1561
      %v1766 = vpop.f32.mrb[0].mxu0
      %v1767 = vadd.f32 %v1497, %v1766
      %v1768 = vpop.f32.mrb[0].mxu0
      %1769 = vmatprep.mubr.f32.mxu0 0.0
      %1770 = vmatmul.mubr.f32.gmra.mrb[0].mxu0 %v1564
      %v1771 = vpop.f32.mrb[0].mxu0
      %v1772 = vadd.f32 %v1497, %v1771
      %v1773 = vpop.f32.mrb[0].mxu0
      %1774 = vmatprep.mubr.f32.mxu0 0.0
      %1775 = vmatmul.mubr.f32.gmra.mrb[0].mxu0 %v1567
      %v1776 = vpop.f32.mrb[0].mxu0
      %v1777 = vadd.f32 %v1497, %v1776
      %v1778 = vpop.f32.mrb[0].mxu0
      %1779 = vmatprep.mubr.f32.mxu0 0.0
      %1780 = vmatmul.mubr.f32.gmra.mrb[0].mxu0 %v1570
      %v1781 = vpop.f32.mrb[0].mxu0
      %v1782 = vadd.f32 %v1497, %v1781
      %v1783 = vpop.f32.mrb[0].mxu0
      %1784 = vmatprep.mubr.f32.mxu0 0.0
      %1785 = vmatmul.mubr.f32.gmra.mrb[0].mxu0 %v1573
      %v1786 = vpop.f32.mrb[0].mxu0
      %v1787 = vadd.f32 %v1497, %v1786
      %v1788 = vpop.f32.mrb[0].mxu0
      %1789 = vmatprep.mubr.f32.mxu0 0.0
      %1790 = vmatmul.mubr.f32.gmra.mrb[0].mxu0 %v1576
      %v1791 = vpop.f32.mrb[0].mxu0
      %v1792 = vadd.f32 %v1497, %v1791
      %v1793 = vpop.f32.mrb[0].mxu0
      %1794 = vmatprep.mubr.f32.mxu0 0.0
      %1795 = vmatmul.mubr.f32.gmra.mrb[0].mxu0 %v1579
      %v1796 = vpop.f32.mrb[0].mxu0
      %v1797 = vadd.f32 %v1497, %v1796
      %v1798 = vpop.f32.mrb[0].mxu0
      %1799 = vmatprep.mubr.f32.mxu0 0.0
      %1800 = vmatmul.mubr.f32.gmra.mrb[0].mxu0 %v1582
      %v1801 = vpop.f32.mrb[0].mxu0
      %v1802 = vadd.f32 %v1497, %v1801
      %v1803 = vpop.f32.mrb[0].mxu0
      %1804 = vmatprep.mubr.f32.mxu0 0.0
      %1805 = vmatmul.mubr.f32.gmra.mrb[0].mxu0 %v1585
      %v1806 = vpop.f32.mrb[0].mxu0
      %v1807 = vadd.f32 %v1497, %v1806
      %v1808 = vpop.f32.mrb[0].mxu0
      %1809 = vmatprep.mubr.f32.mxu0 0.0
      %1810 = vmatmul.mubr.f32.gmra.mrb[0].mxu0 %v1588
      %v1811 = vpop.f32.mrb[0].mxu0
      %v1812 = vadd.f32 %v1497, %v1811
      %v1813 = vpop.f32.mrb[0].mxu0
      %1814 = vmatprep.mubr.f32.mxu0 0.0
      %1815 = vmatmul.mubr.f32.gmra.mrb[0].mxu0 %v1591
      %v1816 = vpop.f32.mrb[0].mxu0
      %v1817 = vadd.f32 %v1497, %v1816
      %v1818 = vpop.f32.mrb[0].mxu0
      %1819 = vmatprep.mubr.f32.mxu0 0.0
      %1820 = vmatmul.mubr.f32.gmra.mrb[0].mxu0 %v1594
      %v1821 = vpop.f32.mrb[0].mxu0
      %v1822 = vadd.f32 %v1497, %v1821
      %v1823 = vpop.f32.mrb[0].mxu0
      %1824 = vdwg.mxu0
      %v1825 = vmax.f32 %v1667, 0.0
      %v1826 = vmax.f32 %v1672, 0.0
      %v1827 = vmax.f32 %v1677, 0.0
      %v1828 = vmax.f32 %v1682, 0.0
      %v1829 = vmax.f32 %v1687, 0.0
      %v1830 = vmax.f32 %v1692, 0.0
      %v1831 = vmax.f32 %v1697, 0.0
      %v1832 = vmax.f32 %v1702, 0.0
      %v1833 = vmax.f32 %v1707, 0.0
      %v1834 = vmax.f32 %v1712, 0.0
      %v1835 = vmax.f32 %v1717, 0.0
      %v1836 = vmax.f32 %v1722, 0.0
      %v1837 = vmax.f32 %v1727, 0.0
      %v1838 = vmax.f32 %v1732, 0.0
      %v1839 = vmax.f32 %v1737, 0.0
      %v1840 = vmax.f32 %v1742, 0.0
      %v1841 = vmax.f32 %v1747, 0.0
      %v1842 = vmax.f32 %v1752, 0.0
      %v1843 = vmax.f32 %v1757, 0.0
      %v1844 = vmax.f32 %v1762, 0.0
      %v1845 = vmax.f32 %v1767, 0.0
      %v1846 = vmax.f32 %v1772, 0.0
      %v1847 = vmax.f32 %v1777, 0.0
      %v1848 = vmax.f32 %v1782, 0.0
      %v1849 = vmax.f32 %v1787, 0.0
      %v1850 = vmax.f32 %v1792, 0.0
      %v1851 = vmax.f32 %v1797, 0.0
      %v1852 = vmax.f32 %v1802, 0.0
      %v1853 = vmax.f32 %v1807, 0.0
      %v1854 = vmax.f32 %v1812, 0.0
      %v1855 = vmax.f32 %v1817, 0.0
      %v1856 = vmax.f32 %v1822, 0.0
      %s1857 = scalar_lea.vmem [#allocation3], 24
      %1858 = vst.msk [vmem:[%s1857 + $0x1] sm:$0xff] %vm443, %v1825
      %1859 = vst.msk [vmem:[%s1857 + $0x9] sm:$0xff] %vm443, %v1826
      %1860 = vst.msk [vmem:[%s1857 + $0x19] sm:$0xff] %vm443, %v1827
      %1861 = vst.msk [vmem:[%s1857 + $0x21] sm:$0xff] %vm443, %v1828
      %1862 = vst.msk [vmem:[%s1857 + $0x31] sm:$0xff] %vm443, %v1829
      %1863 = vst.msk [vmem:[%s1857 + $0x39] sm:$0xff] %vm443, %v1830
      %1864 = vst.msk [vmem:[%s1857 + $0x49] sm:$0xff] %vm443, %v1831
      %1865 = vst.msk [vmem:[%s1857 + $0x51] sm:$0xff] %vm443, %v1832
      %1866 = vst.msk [vmem:[%s1857 + $0x61] sm:$0xff] %vm443, %v1833
      %1867 = vst.msk [vmem:[%s1857 + $0x69] sm:$0xff] %vm443, %v1834
      %1868 = vst.msk [vmem:[%s1857 + $0x79] sm:$0xff] %vm443, %v1835
      %1869 = vst.msk [vmem:[%s1857 + $0x81] sm:$0xff] %vm443, %v1836
      %1870 = vst.msk [vmem:[%s1857 + $0x91] sm:$0xff] %vm443, %v1837
      %1871 = vst.msk [vmem:[%s1857 + $0x99] sm:$0xff] %vm443, %v1838
      %1872 = vst.msk [vmem:[%s1857 + $0xa9] sm:$0xff] %vm443, %v1839
      %1873 = vst.msk [vmem:[%s1857 + $0xb1] sm:$0xff] %vm443, %v1840
      %1874 = vst.msk [vmem:[%s1857 + $0xc1] sm:$0xff] %vm443, %v1841
      %1875 = vst.msk [vmem:[%s1857 + $0xc9] sm:$0xff] %vm443, %v1842
      %1876 = vst.msk [vmem:[%s1857 + $0xd9] sm:$0xff] %vm443, %v1843
      %1877 = vst.msk [vmem:[%s1857 + $0xe1] sm:$0xff] %vm443, %v1844
      %1878 = vst.msk [vmem:[%s1857 + $0xf1] sm:$0xff] %vm443, %v1845
      %1879 = vst.msk [vmem:[%s1857 + $0xf9] sm:$0xff] %vm443, %v1846
      %1880 = vst.msk [vmem:[%s1857 + $0x109] sm:$0xff] %vm443, %v1847
      %1881 = vst.msk [vmem:[%s1857 + $0x111] sm:$0xff] %vm443, %v1848
      %1882 = vst.msk [vmem:[%s1857 + $0x121] sm:$0xff] %vm443, %v1849
      %1883 = vst.msk [vmem:[%s1857 + $0x129] sm:$0xff] %vm443, %v1850
      %1884 = vst.msk [vmem:[%s1857 + $0x139] sm:$0xff] %vm443, %v1851
      %1885 = vst.msk [vmem:[%s1857 + $0x141] sm:$0xff] %vm443, %v1852
      %1886 = vst.msk [vmem:[%s1857 + $0x151] sm:$0xff] %vm443, %v1853
      %1887 = vst.msk [vmem:[%s1857 + $0x159] sm:$0xff] %vm443, %v1854
      %1888 = vst.msk [vmem:[%s1857 + $0x169] sm:$0xff] %vm443, %v1855
      %1889 = vst.msk [vmem:[%s1857 + $0x171] sm:$0xff] %vm443, %v1856
      %v1890 = vld [vmem:[#allocation3] sm:$0xff]
      %v1891 = vld [vmem:[#allocation3 + $0x8] sm:$0xff]
      %v1892 = vld [vmem:[#allocation3 + $0x10] sm:$0x3]
      %v1893 = vld [vmem:[#allocation3 + $0x18] sm:$0xff]
      %v1894 = vld [vmem:[#allocation3 + $0x20] sm:$0xff]
      %v1895 = vld [vmem:[#allocation3 + $0x28] sm:$0x3]
      %v1896 = vld [vmem:[#allocation3 + $0x30] sm:$0xff]
      %v1897 = vld [vmem:[#allocation3 + $0x38] sm:$0xff]
      %v1898 = vld [vmem:[#allocation3 + $0x40] sm:$0x3]
      %v1899 = vld [vmem:[#allocation3 + $0x48] sm:$0xff]
      %v1900 = vld [vmem:[#allocation3 + $0x50] sm:$0xff]
      %v1901 = vld [vmem:[#allocation3 + $0x58] sm:$0x3]
      %v1902 = vld [vmem:[#allocation3 + $0x60] sm:$0xff]
      %v1903 = vld [vmem:[#allocation3 + $0x68] sm:$0xff]
      %v1904 = vld [vmem:[#allocation3 + $0x70] sm:$0x3]
      %v1905 = vld [vmem:[#allocation3 + $0x78] sm:$0xff]
      %v1906 = vld [vmem:[#allocation3 + $0x80] sm:$0xff]
      %v1907 = vld [vmem:[#allocation3 + $0x88] sm:$0x3]
      %v1908 = vld [vmem:[#allocation3 + $0x90] sm:$0xff]
      %v1909 = vld [vmem:[#allocation3 + $0x98] sm:$0xff]
      %v1910 = vld [vmem:[#allocation3 + $0xa0] sm:$0x3]
      %v1911 = vld [vmem:[#allocation3 + $0xa8] sm:$0xff]
      %v1912 = vld [vmem:[#allocation3 + $0xb0] sm:$0xff]
      %v1913 = vld [vmem:[#allocation3 + $0xb8] sm:$0x3]
      %v1914 = vld [vmem:[#allocation3 + $0xc0] sm:$0xff]
      %v1915 = vld [vmem:[#allocation3 + $0xc8] sm:$0xff]
      %v1916 = vld [vmem:[#allocation3 + $0xd0] sm:$0x3]
      %v1917 = vld [vmem:[#allocation3 + $0xd8] sm:$0xff]
      %v1918 = vld [vmem:[#allocation3 + $0xe0] sm:$0xff]
      %v1919 = vld [vmem:[#allocation3 + $0xe8] sm:$0x3]
      %v1920 = vld [vmem:[#allocation3 + $0xf0] sm:$0xff]
      %v1921 = vld [vmem:[#allocation3 + $0xf8] sm:$0xff]
      %v1922 = vld [vmem:[#allocation3 + $0x100] sm:$0x3]
      %v1923 = vld [vmem:[#allocation3 + $0x108] sm:$0xff]
      %v1924 = vld [vmem:[#allocation3 + $0x110] sm:$0xff]
      %v1925 = vld [vmem:[#allocation3 + $0x118] sm:$0x3]
      %v1926 = vld [vmem:[#allocation3 + $0x120] sm:$0xff]
      %v1927 = vld [vmem:[#allocation3 + $0x128] sm:$0xff]
      %v1928 = vld [vmem:[#allocation3 + $0x130] sm:$0x3]
      %v1929 = vld [vmem:[#allocation3 + $0x138] sm:$0xff]
      %v1930 = vld [vmem:[#allocation3 + $0x140] sm:$0xff]
      %v1931 = vld [vmem:[#allocation3 + $0x148] sm:$0x3]
      %v1932 = vld [vmem:[#allocation3 + $0x150] sm:$0xff]
      %v1933 = vld [vmem:[#allocation3 + $0x158] sm:$0xff]
      %v1934 = vld [vmem:[#allocation3 + $0x160] sm:$0x3]
      %v1935 = vld [vmem:[#allocation3 + $0x168] sm:$0xff]
      %v1936 = vld [vmem:[#allocation3 + $0x170] sm:$0xff]
      %v1937 = vld [vmem:[#allocation3 + $0x178] sm:$0x3]
      %v1938 = vld [vmem:[#allocation3 + $0x180] sm:$0xff]
      %v1939 = vld [vmem:[#allocation3 + $0x188] sm:$0xff]
      %v1940 = vld [vmem:[#allocation3 + $0x190] sm:$0x3]
      %v1941 = vld [vmem:[#allocation3 + $0x198] sm:$0xff]
      %v1942 = vld [vmem:[#allocation3 + $0x1a0] sm:$0xff]
      %v1943 = vld [vmem:[#allocation3 + $0x1a8] sm:$0x3]
      %v1998 = vrot.slane %v1890, 1
      %v1999 = vrot.slane %v1891, 1
      %v2000 = vsel %vm726, %v1998, %v1999
      %v2001 = vrot.slane %v1892, 1
      %v2002 = vsel %vm726, %v1999, %v2001
      %v2003 = vrot.slane %v1893, 1
      %v2004 = vrot.slane %v1894, 1
      %v2005 = vsel %vm726, %v2003, %v2004
      %v2006 = vrot.slane %v1895, 1
      %v2007 = vsel %vm726, %v2004, %v2006
      %v2008 = vrot.slane %v1896, 1
      %v2009 = vrot.slane %v1897, 1
      %v2010 = vsel %vm726, %v2008, %v2009
      %v2011 = vrot.slane %v1898, 1
      %v2012 = vsel %vm726, %v2009, %v2011
      %v2013 = vrot.slane %v1899, 1
      %v2014 = vrot.slane %v1900, 1
      %v2015 = vsel %vm726, %v2013, %v2014
      %v2016 = vrot.slane %v1901, 1
      %v2017 = vsel %vm726, %v2014, %v2016
      %v2018 = vrot.slane %v1902, 1
      %v2019 = vrot.slane %v1903, 1
      %v2020 = vsel %vm726, %v2018, %v2019
      %v2021 = vrot.slane %v1904, 1
      %v2022 = vsel %vm726, %v2019, %v2021
      %v2023 = vrot.slane %v1905, 1
      %v2024 = vrot.slane %v1906, 1
      %v2025 = vsel %vm726, %v2023, %v2024
      %v2026 = vrot.slane %v1907, 1
      %v2027 = vsel %vm726, %v2024, %v2026
      %v2028 = vrot.slane %v1908, 1
      %v2029 = vrot.slane %v1909, 1
      %v2030 = vsel %vm726, %v2028, %v2029
      %v2031 = vrot.slane %v1910, 1
      %v2032 = vsel %vm726, %v2029, %v2031
      %v2033 = vrot.slane %v1911, 1
      %v2034 = vrot.slane %v1912, 1
      %v2035 = vsel %vm726, %v2033, %v2034
      %v2036 = vrot.slane %v1913, 1
      %v2037 = vsel %vm726, %v2034, %v2036
      %v2038 = vrot.slane %v1914, 1
      %v2039 = vrot.slane %v1915, 1
      %v2040 = vsel %vm726, %v2038, %v2039
      %v2041 = vrot.slane %v1916, 1
      %v2042 = vsel %vm726, %v2039, %v2041
      %v2043 = vrot.slane %v1917, 1
      %v2044 = vrot.slane %v1918, 1
      %v2045 = vsel %vm726, %v2043, %v2044
      %v2046 = vrot.slane %v1919, 1
      %v2047 = vsel %vm726, %v2044, %v2046
      %v2048 = vrot.slane %v1920, 1
      %v2049 = vrot.slane %v1921, 1
      %v2050 = vsel %vm726, %v2048, %v2049
      %v2051 = vrot.slane %v1922, 1
      %v2052 = vsel %vm726, %v2049, %v2051
      %v2053 = vrot.slane %v1923, 1
      %v2054 = vrot.slane %v1924, 1
      %v2055 = vsel %vm726, %v2053, %v2054
      %v2056 = vrot.slane %v1925, 1
      %v2057 = vsel %vm726, %v2054, %v2056
      %v2058 = vrot.slane %v1926, 1
      %v2059 = vrot.slane %v1927, 1
      %v2060 = vsel %vm726, %v2058, %v2059
      %v2061 = vrot.slane %v1928, 1
      %v2062 = vsel %vm726, %v2059, %v2061
      %v2063 = vrot.slane %v1929, 1
      %v2064 = vrot.slane %v1930, 1
      %v2065 = vsel %vm726, %v2063, %v2064
      %v2066 = vrot.slane %v1931, 1
      %v2067 = vsel %vm726, %v2064, %v2066
      %v2068 = vrot.slane %v1932, 1
      %v2069 = vrot.slane %v1933, 1
      %v2070 = vsel %vm726, %v2068, %v2069
      %v2071 = vrot.slane %v1934, 1
      %v2072 = vsel %vm726, %v2069, %v2071
      %v2073 = vrot.slane %v1935, 1
      %v2074 = vrot.slane %v1936, 1
      %v2075 = vsel %vm726, %v2073, %v2074
      %v2076 = vrot.slane %v1937, 1
      %v2077 = vsel %vm726, %v2074, %v2076
      %v2078 = vrot.slane %v1938, 1
      %v2079 = vrot.slane %v1939, 1
      %v2080 = vsel %vm726, %v2078, %v2079
      %v2081 = vrot.slane %v1940, 1
      %v2082 = vsel %vm726, %v2079, %v2081
      %v2083 = vrot.slane %v1941, 1
      %v2084 = vrot.slane %v1942, 1
      %v2085 = vsel %vm726, %v2083, %v2084
      %v2086 = vrot.slane %v1943, 1
      %v2087 = vsel %vm726, %v2084, %v2086
      %2088 = vrot.lane.b32.xlu0 %v2000, 32
      %v2089 = vpop.permute.xlu0 %2088
      %2090 = vrot.lane.b32.xlu0 %v2002, 32
      %v2091 = vpop.permute.xlu0 %2090
      %2092 = vrot.lane.b32.xlu0 %v2005, 32
      %v2093 = vpop.permute.xlu0 %2092
      %2094 = vrot.lane.b32.xlu0 %v2007, 32
      %v2095 = vpop.permute.xlu0 %2094
      %2096 = vrot.lane.b32.xlu0 %v2010, 32
      %v2097 = vpop.permute.xlu0 %2096
      %2098 = vrot.lane.b32.xlu0 %v2012, 32
      %v2099 = vpop.permute.xlu0 %2098
      %2100 = vrot.lane.b32.xlu0 %v2015, 32
      %v2101 = vpop.permute.xlu0 %2100
      %2102 = vrot.lane.b32.xlu0 %v2017, 32
      %v2103 = vpop.permute.xlu0 %2102
      %2104 = vrot.lane.b32.xlu0 %v2020, 32
      %v2105 = vpop.permute.xlu0 %2104
      %2106 = vrot.lane.b32.xlu0 %v2022, 32
      %v2107 = vpop.permute.xlu0 %2106
      %2108 = vrot.lane.b32.xlu0 %v2025, 32
      %v2109 = vpop.permute.xlu0 %2108
      %2110 = vrot.lane.b32.xlu0 %v2027, 32
      %v2111 = vpop.permute.xlu0 %2110
      %2112 = vrot.lane.b32.xlu0 %v2030, 32
      %v2113 = vpop.permute.xlu0 %2112
      %2114 = vrot.lane.b32.xlu0 %v2032, 32
      %v2115 = vpop.permute.xlu0 %2114
      %2116 = vrot.lane.b32.xlu0 %v2035, 32
      %v2117 = vpop.permute.xlu0 %2116
      %2118 = vrot.lane.b32.xlu0 %v2037, 32
      %v2119 = vpop.permute.xlu0 %2118
      %2120 = vrot.lane.b32.xlu0 %v2040, 32
      %v2121 = vpop.permute.xlu0 %2120
      %2122 = vrot.lane.b32.xlu0 %v2042, 32
      %v2123 = vpop.permute.xlu0 %2122
      %2124 = vrot.lane.b32.xlu0 %v2045, 32
      %v2125 = vpop.permute.xlu0 %2124
      %2126 = vrot.lane.b32.xlu0 %v2047, 32
      %v2127 = vpop.permute.xlu0 %2126
      %2128 = vrot.lane.b32.xlu0 %v2050, 32
      %v2129 = vpop.permute.xlu0 %2128
      %2130 = vrot.lane.b32.xlu0 %v2052, 32
      %v2131 = vpop.permute.xlu0 %2130
      %2132 = vrot.lane.b32.xlu0 %v2055, 32
      %v2133 = vpop.permute.xlu0 %2132
      %2134 = vrot.lane.b32.xlu0 %v2057, 32
      %v2135 = vpop.permute.xlu0 %2134
      %2136 = vrot.lane.b32.xlu0 %v2060, 32
      %v2137 = vpop.permute.xlu0 %2136
      %2138 = vrot.lane.b32.xlu0 %v2062, 32
      %v2139 = vpop.permute.xlu0 %2138
      %2140 = vrot.lane.b32.xlu0 %v2065, 32
      %v2141 = vpop.permute.xlu0 %2140
      %2142 = vrot.lane.b32.xlu0 %v2067, 32
      %v2143 = vpop.permute.xlu0 %2142
      %2144 = vrot.lane.b32.xlu0 %v2070, 32
      %v2145 = vpop.permute.xlu0 %2144
      %2146 = vrot.lane.b32.xlu0 %v2072, 32
      %v2147 = vpop.permute.xlu0 %2146
      %2148 = vrot.lane.b32.xlu0 %v2075, 32
      %v2149 = vpop.permute.xlu0 %2148
      %2150 = vrot.lane.b32.xlu0 %v2077, 32
      %v2151 = vpop.permute.xlu0 %2150
      %2152 = vrot.lane.b32.xlu0 %v2080, 32
      %v2153 = vpop.permute.xlu0 %2152
      %2154 = vrot.lane.b32.xlu0 %v2082, 32
      %v2155 = vpop.permute.xlu0 %2154
      %2156 = vrot.lane.b32.xlu0 %v2085, 32
      %v2157 = vpop.permute.xlu0 %2156
      %2158 = vrot.lane.b32.xlu0 %v2087, 32
      %v2159 = vpop.permute.xlu0 %2158
      %v2196 = vrot.slane %v1890, 2
      %v2197 = vrot.slane %v1891, 2
      %v2198 = vsel %vm925, %v2196, %v2197
      %v2199 = vrot.slane %v1892, 2
      %v2200 = vsel %vm925, %v2197, %v2199
      %v2201 = vrot.slane %v1893, 2
      %v2202 = vrot.slane %v1894, 2
      %v2203 = vsel %vm925, %v2201, %v2202
      %v2204 = vrot.slane %v1895, 2
      %v2205 = vsel %vm925, %v2202, %v2204
      %v2206 = vrot.slane %v1896, 2
      %v2207 = vrot.slane %v1897, 2
      %v2208 = vsel %vm925, %v2206, %v2207
      %v2209 = vrot.slane %v1898, 2
      %v2210 = vsel %vm925, %v2207, %v2209
      %v2211 = vrot.slane %v1899, 2
      %v2212 = vrot.slane %v1900, 2
      %v2213 = vsel %vm925, %v2211, %v2212
      %v2214 = vrot.slane %v1901, 2
      %v2215 = vsel %vm925, %v2212, %v2214
      %v2216 = vrot.slane %v1902, 2
      %v2217 = vrot.slane %v1903, 2
      %v2218 = vsel %vm925, %v2216, %v2217
      %v2219 = vrot.slane %v1904, 2
      %v2220 = vsel %vm925, %v2217, %v2219
      %v2221 = vrot.slane %v1905, 2
      %v2222 = vrot.slane %v1906, 2
      %v2223 = vsel %vm925, %v2221, %v2222
      %v2224 = vrot.slane %v1907, 2
      %v2225 = vsel %vm925, %v2222, %v2224
      %v2226 = vrot.slane %v1908, 2
      %v2227 = vrot.slane %v1909, 2
      %v2228 = vsel %vm925, %v2226, %v2227
      %v2229 = vrot.slane %v1910, 2
      %v2230 = vsel %vm925, %v2227, %v2229
      %v2231 = vrot.slane %v1911, 2
      %v2232 = vrot.slane %v1912, 2
      %v2233 = vsel %vm925, %v2231, %v2232
      %v2234 = vrot.slane %v1913, 2
      %v2235 = vsel %vm925, %v2232, %v2234
      %v2236 = vrot.slane %v1914, 2
      %v2237 = vrot.slane %v1915, 2
      %v2238 = vsel %vm925, %v2236, %v2237
      %v2239 = vrot.slane %v1916, 2
      %v2240 = vsel %vm925, %v2237, %v2239
      %v2241 = vrot.slane %v1917, 2
      %v2242 = vrot.slane %v1918, 2
      %v2243 = vsel %vm925, %v2241, %v2242
      %v2244 = vrot.slane %v1919, 2
      %v2245 = vsel %vm925, %v2242, %v2244
      %v2246 = vrot.slane %v1920, 2
      %v2247 = vrot.slane %v1921, 2
      %v2248 = vsel %vm925, %v2246, %v2247
      %v2249 = vrot.slane %v1922, 2
      %v2250 = vsel %vm925, %v2247, %v2249
      %v2251 = vrot.slane %v1923, 2
      %v2252 = vrot.slane %v1924, 2
      %v2253 = vsel %vm925, %v2251, %v2252
      %v2254 = vrot.slane %v1925, 2
      %v2255 = vsel %vm925, %v2252, %v2254
      %v2256 = vrot.slane %v1926, 2
      %v2257 = vrot.slane %v1927, 2
      %v2258 = vsel %vm925, %v2256, %v2257
      %v2259 = vrot.slane %v1928, 2
      %v2260 = vsel %vm925, %v2257, %v2259
      %v2261 = vrot.slane %v1929, 2
      %v2262 = vrot.slane %v1930, 2
      %v2263 = vsel %vm925, %v2261, %v2262
      %v2264 = vrot.slane %v1931, 2
      %v2265 = vsel %vm925, %v2262, %v2264
      %v2266 = vrot.slane %v1932, 2
      %v2267 = vrot.slane %v1933, 2
      %v2268 = vsel %vm925, %v2266, %v2267
      %v2269 = vrot.slane %v1934, 2
      %v2270 = vsel %vm925, %v2267, %v2269
      %v2271 = vrot.slane %v1935, 2
      %v2272 = vrot.slane %v1936, 2
      %v2273 = vsel %vm925, %v2271, %v2272
      %v2274 = vrot.slane %v1937, 2
      %v2275 = vsel %vm925, %v2272, %v2274
      %v2276 = vrot.slane %v1938, 2
      %v2277 = vrot.slane %v1939, 2
      %v2278 = vsel %vm925, %v2276, %v2277
      %v2279 = vrot.slane %v1940, 2
      %v2280 = vsel %vm925, %v2277, %v2279
      %v2281 = vrot.slane %v1941, 2
      %v2282 = vrot.slane %v1942, 2
      %v2283 = vsel %vm925, %v2281, %v2282
      %v2284 = vrot.slane %v1943, 2
      %v2285 = vsel %vm925, %v2282, %v2284
      %2286 = vrot.lane.b32.xlu0 %v2198, 64
      %v2287 = vpop.permute.xlu0 %2286
      %2288 = vrot.lane.b32.xlu0 %v2200, 64
      %v2289 = vpop.permute.xlu0 %2288
      %2290 = vrot.lane.b32.xlu0 %v2203, 64
      %v2291 = vpop.permute.xlu0 %2290
      %2292 = vrot.lane.b32.xlu0 %v2205, 64
      %v2293 = vpop.permute.xlu0 %2292
      %2294 = vrot.lane.b32.xlu0 %v2208, 64
      %v2295 = vpop.permute.xlu0 %2294
      %2296 = vrot.lane.b32.xlu0 %v2210, 64
      %v2297 = vpop.permute.xlu0 %2296
      %2298 = vrot.lane.b32.xlu0 %v2213, 64
      %v2299 = vpop.permute.xlu0 %2298
      %2300 = vrot.lane.b32.xlu0 %v2215, 64
      %v2301 = vpop.permute.xlu0 %2300
      %2302 = vrot.lane.b32.xlu0 %v2218, 64
      %v2303 = vpop.permute.xlu0 %2302
      %2304 = vrot.lane.b32.xlu0 %v2220, 64
      %v2305 = vpop.permute.xlu0 %2304
      %2306 = vrot.lane.b32.xlu0 %v2223, 64
      %v2307 = vpop.permute.xlu0 %2306
      %2308 = vrot.lane.b32.xlu0 %v2225, 64
      %v2309 = vpop.permute.xlu0 %2308
      %2310 = vrot.lane.b32.xlu0 %v2228, 64
      %v2311 = vpop.permute.xlu0 %2310
      %2312 = vrot.lane.b32.xlu0 %v2230, 64
      %v2313 = vpop.permute.xlu0 %2312
      %2314 = vrot.lane.b32.xlu0 %v2233, 64
      %v2315 = vpop.permute.xlu0 %2314
      %2316 = vrot.lane.b32.xlu0 %v2235, 64
      %v2317 = vpop.permute.xlu0 %2316
      %2318 = vrot.lane.b32.xlu0 %v2238, 64
      %v2319 = vpop.permute.xlu0 %2318
      %2320 = vrot.lane.b32.xlu0 %v2240, 64
      %v2321 = vpop.permute.xlu0 %2320
      %2322 = vrot.lane.b32.xlu0 %v2243, 64
      %v2323 = vpop.permute.xlu0 %2322
      %2324 = vrot.lane.b32.xlu0 %v2245, 64
      %v2325 = vpop.permute.xlu0 %2324
      %2326 = vrot.lane.b32.xlu0 %v2248, 64
      %v2327 = vpop.permute.xlu0 %2326
      %2328 = vrot.lane.b32.xlu0 %v2250, 64
      %v2329 = vpop.permute.xlu0 %2328
      %2330 = vrot.lane.b32.xlu0 %v2253, 64
      %v2331 = vpop.permute.xlu0 %2330
      %2332 = vrot.lane.b32.xlu0 %v2255, 64
      %v2333 = vpop.permute.xlu0 %2332
      %2334 = vrot.lane.b32.xlu0 %v2258, 64
      %v2335 = vpop.permute.xlu0 %2334
      %2336 = vrot.lane.b32.xlu0 %v2260, 64
      %v2337 = vpop.permute.xlu0 %2336
      %2338 = vrot.lane.b32.xlu0 %v2263, 64
      %v2339 = vpop.permute.xlu0 %2338
      %2340 = vrot.lane.b32.xlu0 %v2265, 64
      %v2341 = vpop.permute.xlu0 %2340
      %2342 = vrot.lane.b32.xlu0 %v2268, 64
      %v2343 = vpop.permute.xlu0 %2342
      %2344 = vrot.lane.b32.xlu0 %v2270, 64
      %v2345 = vpop.permute.xlu0 %2344
      %2346 = vrot.lane.b32.xlu0 %v2273, 64
      %v2347 = vpop.permute.xlu0 %2346
      %2348 = vrot.lane.b32.xlu0 %v2275, 64
      %v2349 = vpop.permute.xlu0 %2348
      %2350 = vrot.lane.b32.xlu0 %v2278, 64
      %v2351 = vpop.permute.xlu0 %2350
      %2352 = vrot.lane.b32.xlu0 %v2280, 64
      %v2353 = vpop.permute.xlu0 %2352
      %2354 = vrot.lane.b32.xlu0 %v2283, 64
      %v2355 = vpop.permute.xlu0 %2354
      %2356 = vrot.lane.b32.xlu0 %v2285, 64
      %v2357 = vpop.permute.xlu0 %2356
      %v2394 = vsel %vm443, %v1890, %v2089
      %v2395 = vsel %vm443, %v1891, %v2091
      %v2396 = vsel %vm443, %v1893, %v2093
      %v2397 = vsel %vm443, %v1894, %v2095
      %v2398 = vsel %vm443, %v1896, %v2097
      %v2399 = vsel %vm443, %v1897, %v2099
      %v2400 = vsel %vm443, %v1899, %v2101
      %v2401 = vsel %vm443, %v1900, %v2103
      %v2402 = vsel %vm443, %v1902, %v2105
      %v2403 = vsel %vm443, %v1903, %v2107
      %v2404 = vsel %vm443, %v1905, %v2109
      %v2405 = vsel %vm443, %v1906, %v2111
      %v2406 = vsel %vm443, %v1908, %v2113
      %v2407 = vsel %vm443, %v1909, %v2115
      %v2408 = vsel %vm443, %v1911, %v2117
      %v2409 = vsel %vm443, %v1912, %v2119
      %v2410 = vsel %vm443, %v1914, %v2121
      %v2411 = vsel %vm443, %v1915, %v2123
      %v2412 = vsel %vm443, %v1917, %v2125
      %v2413 = vsel %vm443, %v1918, %v2127
      %v2414 = vsel %vm443, %v1920, %v2129
      %v2415 = vsel %vm443, %v1921, %v2131
      %v2416 = vsel %vm443, %v1923, %v2133
      %v2417 = vsel %vm443, %v1924, %v2135
      %v2418 = vsel %vm443, %v1926, %v2137
      %v2419 = vsel %vm443, %v1927, %v2139
      %v2420 = vsel %vm443, %v1929, %v2141
      %v2421 = vsel %vm443, %v1930, %v2143
      %v2422 = vsel %vm443, %v1932, %v2145
      %v2423 = vsel %vm443, %v1933, %v2147
      %v2424 = vsel %vm443, %v1935, %v2149
      %v2425 = vsel %vm443, %v1936, %v2151
      %v2426 = vsel %vm443, %v1938, %v2153
      %v2427 = vsel %vm443, %v1939, %v2155
      %v2428 = vsel %vm443, %v1941, %v2157
      %v2429 = vsel %vm443, %v1942, %v2159
      %vm2430 = vcmask 523264
      %v2431 = vsel %vm2430, %v2394, %v2287
      %v2432 = vsel %vm2430, %v2395, %v2289
      %v2433 = vsel %vm2430, %v2396, %v2291
      %v2434 = vsel %vm2430, %v2397, %v2293
      %v2435 = vsel %vm2430, %v2398, %v2295
      %v2436 = vsel %vm2430, %v2399, %v2297
      %v2437 = vsel %vm2430, %v2400, %v2299
      %v2438 = vsel %vm2430, %v2401, %v2301
      %v2439 = vsel %vm2430, %v2402, %v2303
      %v2440 = vsel %vm2430, %v2403, %v2305
      %v2441 = vsel %vm2430, %v2404, %v2307
      %v2442 = vsel %vm2430, %v2405, %v2309
      %v2443 = vsel %vm2430, %v2406, %v2311
      %v2444 = vsel %vm2430, %v2407, %v2313
      %v2445 = vsel %vm2430, %v2408, %v2315
      %v2446 = vsel %vm2430, %v2409, %v2317
      %v2447 = vsel %vm2430, %v2410, %v2319
      %v2448 = vsel %vm2430, %v2411, %v2321
      %v2449 = vsel %vm2430, %v2412, %v2323
      %v2450 = vsel %vm2430, %v2413, %v2325
      %v2451 = vsel %vm2430, %v2414, %v2327
      %v2452 = vsel %vm2430, %v2415, %v2329
      %v2453 = vsel %vm2430, %v2416, %v2331
      %v2454 = vsel %vm2430, %v2417, %v2333
      %v2455 = vsel %vm2430, %v2418, %v2335
      %v2456 = vsel %vm2430, %v2419, %v2337
      %v2457 = vsel %vm2430, %v2420, %v2339
      %v2458 = vsel %vm2430, %v2421, %v2341
      %v2459 = vsel %vm2430, %v2422, %v2343
      %v2460 = vsel %vm2430, %v2423, %v2345
      %v2461 = vsel %vm2430, %v2424, %v2347
      %v2462 = vsel %vm2430, %v2425, %v2349
      %v2463 = vsel %vm2430, %v2426, %v2351
      %v2464 = vsel %vm2430, %v2427, %v2353
      %v2465 = vsel %vm2430, %v2428, %v2355
      %v2466 = vsel %vm2430, %v2429, %v2357
      %2499 = vrot.lane.b32.xlu0 %v2433, 96
      %v2500 = vpop.permute.xlu0 %2499
      %2501 = vrot.lane.b32.xlu0 %v2434, 96
      %v2502 = vpop.permute.xlu0 %2501
      %2503 = vrot.lane.b32.xlu0 %v2435, 96
      %v2504 = vpop.permute.xlu0 %2503
      %2505 = vrot.lane.b32.xlu0 %v2436, 96
      %v2506 = vpop.permute.xlu0 %2505
      %2507 = vrot.lane.b32.xlu0 %v2437, 96
      %v2508 = vpop.permute.xlu0 %2507
      %2509 = vrot.lane.b32.xlu0 %v2438, 96
      %v2510 = vpop.permute.xlu0 %2509
      %2511 = vrot.lane.b32.xlu0 %v2439, 96
      %v2512 = vpop.permute.xlu0 %2511
      %2513 = vrot.lane.b32.xlu0 %v2440, 96
      %v2514 = vpop.permute.xlu0 %2513
      %2515 = vrot.lane.b32.xlu0 %v2441, 96
      %v2516 = vpop.permute.xlu0 %2515
      %2517 = vrot.lane.b32.xlu0 %v2442, 96
      %v2518 = vpop.permute.xlu0 %2517
      %2519 = vrot.lane.b32.xlu0 %v2443, 96
      %v2520 = vpop.permute.xlu0 %2519
      %2521 = vrot.lane.b32.xlu0 %v2444, 96
      %v2522 = vpop.permute.xlu0 %2521
      %2523 = vrot.lane.b32.xlu0 %v2445, 96
      %v2524 = vpop.permute.xlu0 %2523
      %2525 = vrot.lane.b32.xlu0 %v2446, 96
      %v2526 = vpop.permute.xlu0 %2525
      %2527 = vrot.lane.b32.xlu0 %v2447, 96
      %v2528 = vpop.permute.xlu0 %2527
      %2529 = vrot.lane.b32.xlu0 %v2448, 96
      %v2530 = vpop.permute.xlu0 %2529
      %2531 = vrot.lane.b32.xlu0 %v2449, 96
      %v2532 = vpop.permute.xlu0 %2531
      %2533 = vrot.lane.b32.xlu0 %v2450, 96
      %v2534 = vpop.permute.xlu0 %2533
      %2535 = vrot.lane.b32.xlu0 %v2451, 96
      %v2536 = vpop.permute.xlu0 %2535
      %2537 = vrot.lane.b32.xlu0 %v2452, 96
      %v2538 = vpop.permute.xlu0 %2537
      %2539 = vrot.lane.b32.xlu0 %v2453, 96
      %v2540 = vpop.permute.xlu0 %2539
      %2541 = vrot.lane.b32.xlu0 %v2454, 96
      %v2542 = vpop.permute.xlu0 %2541
      %2543 = vrot.lane.b32.xlu0 %v2455, 96
      %v2544 = vpop.permute.xlu0 %2543
      %2545 = vrot.lane.b32.xlu0 %v2456, 96
      %v2546 = vpop.permute.xlu0 %2545
      %2547 = vrot.lane.b32.xlu0 %v2457, 96
      %v2548 = vpop.permute.xlu0 %2547
      %2549 = vrot.lane.b32.xlu0 %v2458, 96
      %v2550 = vpop.permute.xlu0 %2549
      %2551 = vrot.lane.b32.xlu0 %v2459, 96
      %v2552 = vpop.permute.xlu0 %2551
      %2553 = vrot.lane.b32.xlu0 %v2460, 96
      %v2554 = vpop.permute.xlu0 %2553
      %2555 = vrot.lane.b32.xlu0 %v2461, 96
      %v2556 = vpop.permute.xlu0 %2555
      %2557 = vrot.lane.b32.xlu0 %v2462, 96
      %v2558 = vpop.permute.xlu0 %2557
      %2559 = vrot.lane.b32.xlu0 %v2463, 96
      %v2560 = vpop.permute.xlu0 %2559
      %2561 = vrot.lane.b32.xlu0 %v2464, 96
      %v2562 = vpop.permute.xlu0 %2561
      %2597 = vrot.lane.b32.xlu0 %v2435, 64
      %v2598 = vpop.permute.xlu0 %2597
      %2599 = vrot.lane.b32.xlu0 %v2436, 64
      %v2600 = vpop.permute.xlu0 %2599
      %2601 = vrot.lane.b32.xlu0 %v2437, 64
      %v2602 = vpop.permute.xlu0 %2601
      %2603 = vrot.lane.b32.xlu0 %v2438, 64
      %v2604 = vpop.permute.xlu0 %2603
      %2605 = vrot.lane.b32.xlu0 %v2439, 64
      %v2606 = vpop.permute.xlu0 %2605
      %2607 = vrot.lane.b32.xlu0 %v2440, 64
      %v2608 = vpop.permute.xlu0 %2607
      %2609 = vrot.lane.b32.xlu0 %v2441, 64
      %v2610 = vpop.permute.xlu0 %2609
      %2611 = vrot.lane.b32.xlu0 %v2442, 64
      %v2612 = vpop.permute.xlu0 %2611
      %2613 = vrot.lane.b32.xlu0 %v2443, 64
      %v2614 = vpop.permute.xlu0 %2613
      %2615 = vrot.lane.b32.xlu0 %v2444, 64
      %v2616 = vpop.permute.xlu0 %2615
      %2617 = vrot.lane.b32.xlu0 %v2445, 64
      %v2618 = vpop.permute.xlu0 %2617
      %2619 = vrot.lane.b32.xlu0 %v2446, 64
      %v2620 = vpop.permute.xlu0 %2619
      %2621 = vrot.lane.b32.xlu0 %v2447, 64
      %v2622 = vpop.permute.xlu0 %2621
      %2623 = vrot.lane.b32.xlu0 %v2448, 64
      %v2624 = vpop.permute.xlu0 %2623
      %2625 = vrot.lane.b32.xlu0 %v2449, 64
      %v2626 = vpop.permute.xlu0 %2625
      %2627 = vrot.lane.b32.xlu0 %v2450, 64
      %v2628 = vpop.permute.xlu0 %2627
      %2629 = vrot.lane.b32.xlu0 %v2451, 64
      %v2630 = vpop.permute.xlu0 %2629
      %2631 = vrot.lane.b32.xlu0 %v2452, 64
      %v2632 = vpop.permute.xlu0 %2631
      %2633 = vrot.lane.b32.xlu0 %v2453, 64
      %v2634 = vpop.permute.xlu0 %2633
      %2635 = vrot.lane.b32.xlu0 %v2454, 64
      %v2636 = vpop.permute.xlu0 %2635
      %2637 = vrot.lane.b32.xlu0 %v2455, 64
      %v2638 = vpop.permute.xlu0 %2637
      %2639 = vrot.lane.b32.xlu0 %v2456, 64
      %v2640 = vpop.permute.xlu0 %2639
      %2641 = vrot.lane.b32.xlu0 %v2457, 64
      %v2642 = vpop.permute.xlu0 %2641
      %2643 = vrot.lane.b32.xlu0 %v2458, 64
      %v2644 = vpop.permute.xlu0 %2643
      %2645 = vrot.lane.b32.xlu0 %v2459, 64
      %v2646 = vpop.permute.xlu0 %2645
      %2647 = vrot.lane.b32.xlu0 %v2460, 64
      %v2648 = vpop.permute.xlu0 %2647
      %2649 = vrot.lane.b32.xlu0 %v2461, 64
      %v2650 = vpop.permute.xlu0 %2649
      %2651 = vrot.lane.b32.xlu0 %v2462, 64
      %v2652 = vpop.permute.xlu0 %2651
      %2653 = vrot.lane.b32.xlu0 %v2463, 64
      %v2654 = vpop.permute.xlu0 %2653
      %2655 = vrot.lane.b32.xlu0 %v2464, 64
      %v2656 = vpop.permute.xlu0 %2655
      %2657 = vrot.lane.b32.xlu0 %v2465, 64
      %v2658 = vpop.permute.xlu0 %2657
      %2659 = vrot.lane.b32.xlu0 %v2466, 64
      %v2660 = vpop.permute.xlu0 %2659
      %vm2693 = vcmask 785408
      %v2694 = vsel %vm2693, %v2431, %v2500
      %v2695 = vsel %vm2693, %v2432, %v2502
      %v2696 = vsel %vm2693, %v2433, %v2504
      %v2697 = vsel %vm2693, %v2434, %v2506
      %v2698 = vsel %vm2693, %v2435, %v2508
      %v2699 = vsel %vm2693, %v2436, %v2510
      %v2700 = vsel %vm2693, %v2437, %v2512
      %v2701 = vsel %vm2693, %v2438, %v2514
      %v2702 = vsel %vm2693, %v2439, %v2516
      %v2703 = vsel %vm2693, %v2440, %v2518
      %v2704 = vsel %vm2693, %v2441, %v2520
      %v2705 = vsel %vm2693, %v2442, %v2522
      %v2706 = vsel %vm2693, %v2443, %v2524
      %v2707 = vsel %vm2693, %v2444, %v2526
      %v2708 = vsel %vm2693, %v2445, %v2528
      %v2709 = vsel %vm2693, %v2446, %v2530
      %v2710 = vsel %vm2693, %v2447, %v2532
      %v2711 = vsel %vm2693, %v2448, %v2534
      %v2712 = vsel %vm2693, %v2449, %v2536
      %v2713 = vsel %vm2693, %v2450, %v2538
      %v2714 = vsel %vm2693, %v2451, %v2540
      %v2715 = vsel %vm2693, %v2452, %v2542
      %v2716 = vsel %vm2693, %v2453, %v2544
      %v2717 = vsel %vm2693, %v2454, %v2546
      %v2718 = vsel %vm2693, %v2455, %v2548
      %v2719 = vsel %vm2693, %v2456, %v2550
      %v2720 = vsel %vm2693, %v2457, %v2552
      %v2721 = vsel %vm2693, %v2458, %v2554
      %v2722 = vsel %vm2693, %v2459, %v2556
      %v2723 = vsel %vm2693, %v2460, %v2558
      %v2724 = vsel %vm2693, %v2461, %v2560
      %v2725 = vsel %vm2693, %v2462, %v2562
      %v2726 = vsel %vm2430, %v2500, %v2598
      %v2727 = vsel %vm2430, %v2502, %v2600
      %v2728 = vsel %vm2430, %v2504, %v2602
      %v2729 = vsel %vm2430, %v2506, %v2604
      %v2730 = vsel %vm2430, %v2508, %v2606
      %v2731 = vsel %vm2430, %v2510, %v2608
      %v2732 = vsel %vm2430, %v2512, %v2610
      %v2733 = vsel %vm2430, %v2514, %v2612
      %v2734 = vsel %vm2430, %v2516, %v2614
      %v2735 = vsel %vm2430, %v2518, %v2616
      %v2736 = vsel %vm2430, %v2520, %v2618
      %v2737 = vsel %vm2430, %v2522, %v2620
      %v2738 = vsel %vm2430, %v2524, %v2622
      %v2739 = vsel %vm2430, %v2526, %v2624
      %v2740 = vsel %vm2430, %v2528, %v2626
      %v2741 = vsel %vm2430, %v2530, %v2628
      %v2742 = vsel %vm2430, %v2532, %v2630
      %v2743 = vsel %vm2430, %v2534, %v2632
      %v2744 = vsel %vm2430, %v2536, %v2634
      %v2745 = vsel %vm2430, %v2538, %v2636
      %v2746 = vsel %vm2430, %v2540, %v2638
      %v2747 = vsel %vm2430, %v2542, %v2640
      %v2748 = vsel %vm2430, %v2544, %v2642
      %v2749 = vsel %vm2430, %v2546, %v2644
      %v2750 = vsel %vm2430, %v2548, %v2646
      %v2751 = vsel %vm2430, %v2550, %v2648
      %v2752 = vsel %vm2430, %v2552, %v2650
      %v2753 = vsel %vm2430, %v2554, %v2652
      %v2754 = vsel %vm2430, %v2556, %v2654
      %v2755 = vsel %vm2430, %v2558, %v2656
      %v2756 = vsel %vm2430, %v2560, %v2658
      %v2757 = vsel %vm2430, %v2562, %v2660
      %v2758 = vld [vmem:[%s2] sm:$0xff]
      %v2759 = vld [vmem:[%s2 + $0x8] sm:$0xff]
      %v2760 = vld [vmem:[%s2 + $0x10] sm:$0xff]
      %v2761 = vld [vmem:[%s2 + $0x18] sm:$0xff]
      %v2762 = vld [vmem:[%s2 + $0x20] sm:$0xff]
      %v2763 = vld [vmem:[%s2 + $0x28] sm:$0xff]
      %v2764 = vld [vmem:[%s2 + $0x30] sm:$0xff]
      %v2765 = vld [vmem:[%s2 + $0x38] sm:$0xff]
      %v2766 = vld [vmem:[%s2 + $0x40] sm:$0xff]
      %v2767 = vld [vmem:[%s2 + $0x48] sm:$0xff]
      %v2768 = vld [vmem:[%s2 + $0x50] sm:$0xff]
      %v2769 = vld [vmem:[%s2 + $0x58] sm:$0xff]
      %v2770 = vld [vmem:[%s2 + $0x60] sm:$0xff]
      %v2771 = vld [vmem:[%s2 + $0x68] sm:$0xff]
      %v2772 = vld [vmem:[%s2 + $0x70] sm:$0xff]
      %v2773 = vld [vmem:[%s2 + $0x78] sm:$0xff]
      %v2774 = vld [vmem:[%s2 + $0x80] sm:$0xff]
      %v2775 = vld [vmem:[%s2 + $0x88] sm:$0xff]
      %v2776 = vld [vmem:[%s2 + $0x90] sm:$0xff]
      %v2777 = vld [vmem:[%s2 + $0x98] sm:$0xff]
      %v2778 = vld [vmem:[%s2 + $0xa0] sm:$0xff]
      %v2779 = vld [vmem:[%s2 + $0xa8] sm:$0xff]
      %v2780 = vld [vmem:[%s2 + $0xb0] sm:$0xff]
      %v2781 = vld [vmem:[%s2 + $0xb8] sm:$0xff]
      %v2782 = vld [vmem:[%s2 + $0xc0] sm:$0xff]
      %v2783 = vld [vmem:[%s2 + $0xc8] sm:$0xff]
      %v2784 = vld [vmem:[%s2 + $0xd0] sm:$0xff]
      %v2785 = vld [vmem:[%s2 + $0xd8] sm:$0xff]
      %v2786 = vld [vmem:[%s2 + $0xe0] sm:$0xff]
      %v2787 = vld [vmem:[%s2 + $0xe8] sm:$0xff]
      %v2788 = vld [vmem:[%s2 + $0xf0] sm:$0xff]
      %v2789 = vld [vmem:[%s2 + $0xf8] sm:$0xff]
      %v2790 = vld [vmem:[%s2 + $0x100] sm:$0xff]
      %v2791 = vld [vmem:[%s2 + $0x108] sm:$0xff]
      %v2792 = vld [vmem:[%s2 + $0x110] sm:$0xff]
      %v2793 = vld [vmem:[%s2 + $0x118] sm:$0xff]
      %v2794 = vld [vmem:[%s7] sm:$0x1]
      %v2796 = vlaneseq
      %v2797 = vshrl.u32 %v2796, 7
      %v2798 = vsub.s32 0, %v2797
      %v2799 = vrot.slane %v2794, %v2798
      %v2801 = vsel %vm443, %v2598, 0
      %v2803 = vsel %vm443, %v2600, 0
      %v2805 = vsel %vm443, %v2602, 0
      %v2807 = vsel %vm443, %v2604, 0
      %v2809 = vsel %vm443, %v2606, 0
      %v2811 = vsel %vm443, %v2608, 0
      %v2813 = vsel %vm443, %v2610, 0
      %v2815 = vsel %vm443, %v2612, 0
      %v2817 = vsel %vm443, %v2614, 0
      %v2819 = vsel %vm443, %v2616, 0
      %v2821 = vsel %vm443, %v2618, 0
      %v2823 = vsel %vm443, %v2620, 0
      %v2825 = vsel %vm443, %v2622, 0
      %v2827 = vsel %vm443, %v2624, 0
      %v2829 = vsel %vm443, %v2626, 0
      %v2831 = vsel %vm443, %v2628, 0
      %v2833 = vsel %vm443, %v2630, 0
      %v2835 = vsel %vm443, %v2632, 0
      %v2837 = vsel %vm443, %v2634, 0
      %v2839 = vsel %vm443, %v2636, 0
      %v2841 = vsel %vm443, %v2638, 0
      %v2843 = vsel %vm443, %v2640, 0
      %v2845 = vsel %vm443, %v2642, 0
      %v2847 = vsel %vm443, %v2644, 0
      %v2849 = vsel %vm443, %v2646, 0
      %v2851 = vsel %vm443, %v2648, 0
      %v2853 = vsel %vm443, %v2650, 0
      %v2855 = vsel %vm443, %v2652, 0
      %v2857 = vsel %vm443, %v2654, 0
      %v2859 = vsel %vm443, %v2656, 0
      %v2861 = vsel %vm443, %v2658, 0
      %v2863 = vsel %vm443, %v2660, 0
      %2865 = vmatprep.subr.mxu0 0.0
      %2866 = vmatpush1.msra.mxu0 %v2758
      %2867 = vmatprep.subr.mxu0 0.0
      %2868 = vmatpush1.msra.mxu0 %v2759
      %2869 = vmatprep.subr.mxu0 0.0
      %2870 = vmatpush1.msra.mxu0 %v2760
      %2871 = vmatprep.subr.mxu0 0.0
      %2872 = vmatpush1.msra.mxu0 %v2761
      %2873 = vmatprep.subr.mxu0 0.0
      %2874 = vmatpush1.msra.mxu0 %v2762
      %2875 = vmatprep.subr.mxu0 0.0
      %2876 = vmatpush1.msra.mxu0 %v2763
      %2877 = vmatprep.subr.mxu0 0.0
      %2878 = vmatpush1.msra.mxu0 %v2764
      %2879 = vmatprep.subr.mxu0 0.0
      %2880 = vmatpush1.msra.mxu0 %v2765
      %2881 = vmatprep.subr.mxu0 0.0
      %2882 = vmatpush1.msra.mxu0 %v2766
      %2883 = vmatprep.subr.mxu0 0.0
      %2884 = vmatpush1.msra.mxu0 %v2767
      %2885 = vmatprep.subr.mxu0 0.0
      %2886 = vmatpush1.msra.mxu0 %v2768
      %2887 = vmatprep.subr.mxu0 0.0
      %2888 = vmatpush1.msra.mxu0 %v2769
      %2889 = vmatprep.subr.mxu0 0.0
      %2890 = vmatpush1.msra.mxu0 %v2770
      %2891 = vmatprep.subr.mxu0 0.0
      %2892 = vmatpush1.msra.mxu0 %v2771
      %2893 = vmatprep.subr.mxu0 0.0
      %2894 = vmatpush1.msra.mxu0 %v2772
      %2895 = vmatprep.subr.mxu0 0.0
      %2896 = vmatpush1.msra.mxu0 %v2773
      %2897 = vmatprep.subr.mxu0 0.0
      %2898 = vmatpush1.msra.mxu0 %v2774
      %2899 = vmatprep.subr.mxu0 0.0
      %2900 = vmatpush1.msra.mxu0 %v2775
      %2901 = vmatprep.subr.mxu0 0.0
      %2902 = vmatpush1.msra.mxu0 %v2776
      %2903 = vmatprep.subr.mxu0 0.0
      %2904 = vmatpush1.msra.mxu0 %v2777
      %2905 = vmatprep.subr.mxu0 0.0
      %2906 = vmatpush1.msra.mxu0 %v2778
      %2907 = vmatprep.subr.mxu0 0.0
      %2908 = vmatpush1.msra.mxu0 %v2779
      %2909 = vmatprep.subr.mxu0 0.0
      %2910 = vmatpush1.msra.mxu0 %v2780
      %2911 = vmatprep.subr.mxu0 0.0
      %2912 = vmatpush1.msra.mxu0 %v2781
      %2913 = vmatprep.subr.mxu0 0.0
      %2914 = vmatpush1.msra.mxu0 %v2782
      %2915 = vmatprep.subr.mxu0 0.0
      %2916 = vmatpush1.msra.mxu0 %v2783
      %2917 = vmatprep.subr.mxu0 0.0
      %2918 = vmatpush1.msra.mxu0 %v2784
      %2919 = vmatprep.subr.mxu0 0.0
      %2920 = vmatpush1.msra.mxu0 %v2785
      %2921 = vmatprep.subr.mxu0 0.0
      %2922 = vmatpush1.msra.mxu0 %v2786
      %2923 = vmatprep.subr.mxu0 0.0
      %2924 = vmatpush1.msra.mxu0 %v2787
      %2925 = vmatprep.subr.mxu0 0.0
      %2926 = vmatpush1.msra.mxu0 %v2788
      %2927 = vmatprep.subr.mxu0 0.0
      %2928 = vmatpush1.msra.mxu0 %v2789
      %2929 = vmatprep.mubr.f32.mxu0 %v2726
      %2930 = vmatmul.mubr.f32.gmra.mrb[0].mxu0 %v2694
      %v2931 = vpop.f32.mrb[0].mxu0
      %v2932 = vadd.f32 %v2799, %v2931
      %v2933 = vpop.f32.mrb[0].mxu0
      %2934 = vmatprep.mubr.f32.mxu0 %v2727
      %2935 = vmatmul.mubr.f32.gmra.mrb[0].mxu0 %v2695
      %v2936 = vpop.f32.mrb[0].mxu0
      %v2937 = vadd.f32 %v2799, %v2936
      %v2938 = vpop.f32.mrb[0].mxu0
      %2939 = vmatprep.mubr.f32.mxu0 %v2728
      %2940 = vmatmul.mubr.f32.gmra.mrb[0].mxu0 %v2696
      %v2941 = vpop.f32.mrb[0].mxu0
      %v2942 = vadd.f32 %v2799, %v2941
      %v2943 = vpop.f32.mrb[0].mxu0
      %2944 = vmatprep.mubr.f32.mxu0 %v2729
      %2945 = vmatmul.mubr.f32.gmra.mrb[0].mxu0 %v2697
      %v2946 = vpop.f32.mrb[0].mxu0
      %v2947 = vadd.f32 %v2799, %v2946
      %v2948 = vpop.f32.mrb[0].mxu0
      %2949 = vmatprep.mubr.f32.mxu0 %v2730
      %2950 = vmatmul.mubr.f32.gmra.mrb[0].mxu0 %v2698
      %v2951 = vpop.f32.mrb[0].mxu0
      %v2952 = vadd.f32 %v2799, %v2951
      %v2953 = vpop.f32.mrb[0].mxu0
      %2954 = vmatprep.mubr.f32.mxu0 %v2731
      %2955 = vmatmul.mubr.f32.gmra.mrb[0].mxu0 %v2699
      %v2956 = vpop.f32.mrb[0].mxu0
      %v2957 = vadd.f32 %v2799, %v2956
      %v2958 = vpop.f32.mrb[0].mxu0
      %2959 = vmatprep.mubr.f32.mxu0 %v2732
      %2960 = vmatmul.mubr.f32.gmra.mrb[0].mxu0 %v2700
      %v2961 = vpop.f32.mrb[0].mxu0
      %v2962 = vadd.f32 %v2799, %v2961
      %v2963 = vpop.f32.mrb[0].mxu0
      %2964 = vmatprep.mubr.f32.mxu0 %v2733
      %2965 = vmatmul.mubr.f32.gmra.mrb[0].mxu0 %v2701
      %v2966 = vpop.f32.mrb[0].mxu0
      %v2967 = vadd.f32 %v2799, %v2966
      %v2968 = vpop.f32.mrb[0].mxu0
      %2969 = vmatprep.mubr.f32.mxu0 %v2734
      %2970 = vmatmul.mubr.f32.gmra.mrb[0].mxu0 %v2702
      %v2971 = vpop.f32.mrb[0].mxu0
      %v2972 = vadd.f32 %v2799, %v2971
      %v2973 = vpop.f32.mrb[0].mxu0
      %2974 = vmatprep.mubr.f32.mxu0 %v2735
      %2975 = vmatmul.mubr.f32.gmra.mrb[0].mxu0 %v2703
      %v2976 = vpop.f32.mrb[0].mxu0
      %v2977 = vadd.f32 %v2799, %v2976
      %v2978 = vpop.f32.mrb[0].mxu0
      %2979 = vmatprep.mubr.f32.mxu0 %v2736
      %2980 = vmatmul.mubr.f32.gmra.mrb[0].mxu0 %v2704
      %v2981 = vpop.f32.mrb[0].mxu0
      %v2982 = vadd.f32 %v2799, %v2981
      %v2983 = vpop.f32.mrb[0].mxu0
      %2984 = vmatprep.mubr.f32.mxu0 %v2737
      %2985 = vmatmul.mubr.f32.gmra.mrb[0].mxu0 %v2705
      %v2986 = vpop.f32.mrb[0].mxu0
      %v2987 = vadd.f32 %v2799, %v2986
      %v2988 = vpop.f32.mrb[0].mxu0
      %2989 = vmatprep.mubr.f32.mxu0 %v2738
      %2990 = vmatmul.mubr.f32.gmra.mrb[0].mxu0 %v2706
      %v2991 = vpop.f32.mrb[0].mxu0
      %v2992 = vadd.f32 %v2799, %v2991
      %v2993 = vpop.f32.mrb[0].mxu0
      %2994 = vmatprep.mubr.f32.mxu0 %v2739
      %2995 = vmatmul.mubr.f32.gmra.mrb[0].mxu0 %v2707
      %v2996 = vpop.f32.mrb[0].mxu0
      %v2997 = vadd.f32 %v2799, %v2996
      %v2998 = vpop.f32.mrb[0].mxu0
      %2999 = vmatprep.mubr.f32.mxu0 %v2740
      %3000 = vmatmul.mubr.f32.gmra.mrb[0].mxu0 %v2708
      %v3001 = vpop.f32.mrb[0].mxu0
      %v3002 = vadd.f32 %v2799, %v3001
      %v3003 = vpop.f32.mrb[0].mxu0
      %3004 = vmatprep.mubr.f32.mxu0 %v2741
      %3005 = vmatmul.mubr.f32.gmra.mrb[0].mxu0 %v2709
      %v3006 = vpop.f32.mrb[0].mxu0
      %v3007 = vadd.f32 %v2799, %v3006
      %v3008 = vpop.f32.mrb[0].mxu0
      %3009 = vmatprep.mubr.f32.mxu0 %v2742
      %3010 = vmatmul.mubr.f32.gmra.mrb[0].mxu0 %v2710
      %v3011 = vpop.f32.mrb[0].mxu0
      %v3012 = vadd.f32 %v2799, %v3011
      %v3013 = vpop.f32.mrb[0].mxu0
      %3014 = vmatprep.mubr.f32.mxu0 %v2743
      %3015 = vmatmul.mubr.f32.gmra.mrb[0].mxu0 %v2711
      %v3016 = vpop.f32.mrb[0].mxu0
      %v3017 = vadd.f32 %v2799, %v3016
      %v3018 = vpop.f32.mrb[0].mxu0
      %3019 = vmatprep.mubr.f32.mxu0 %v2744
      %3020 = vmatmul.mubr.f32.gmra.mrb[0].mxu0 %v2712
      %v3021 = vpop.f32.mrb[0].mxu0
      %v3022 = vadd.f32 %v2799, %v3021
      %v3023 = vpop.f32.mrb[0].mxu0
      %3024 = vmatprep.mubr.f32.mxu0 %v2745
      %3025 = vmatmul.mubr.f32.gmra.mrb[0].mxu0 %v2713
      %v3026 = vpop.f32.mrb[0].mxu0
      %v3027 = vadd.f32 %v2799, %v3026
      %v3028 = vpop.f32.mrb[0].mxu0
      %3029 = vmatprep.mubr.f32.mxu0 %v2746
      %3030 = vmatmul.mubr.f32.gmra.mrb[0].mxu0 %v2714
      %v3031 = vpop.f32.mrb[0].mxu0
      %v3032 = vadd.f32 %v2799, %v3031
      %v3033 = vpop.f32.mrb[0].mxu0
      %3034 = vmatprep.mubr.f32.mxu0 %v2747
      %3035 = vmatmul.mubr.f32.gmra.mrb[0].mxu0 %v2715
      %v3036 = vpop.f32.mrb[0].mxu0
      %v3037 = vadd.f32 %v2799, %v3036
      %v3038 = vpop.f32.mrb[0].mxu0
      %3039 = vmatprep.mubr.f32.mxu0 %v2748
      %3040 = vmatmul.mubr.f32.gmra.mrb[0].mxu0 %v2716
      %v3041 = vpop.f32.mrb[0].mxu0
      %v3042 = vadd.f32 %v2799, %v3041
      %v3043 = vpop.f32.mrb[0].mxu0
      %3044 = vmatprep.mubr.f32.mxu0 %v2749
      %3045 = vmatmul.mubr.f32.gmra.mrb[0].mxu0 %v2717
      %v3046 = vpop.f32.mrb[0].mxu0
      %v3047 = vadd.f32 %v2799, %v3046
      %v3048 = vpop.f32.mrb[0].mxu0
      %3049 = vmatprep.mubr.f32.mxu0 %v2750
      %3050 = vmatmul.mubr.f32.gmra.mrb[0].mxu0 %v2718
      %v3051 = vpop.f32.mrb[0].mxu0
      %v3052 = vadd.f32 %v2799, %v3051
      %v3053 = vpop.f32.mrb[0].mxu0
      %3054 = vmatprep.mubr.f32.mxu0 %v2751
      %3055 = vmatmul.mubr.f32.gmra.mrb[0].mxu0 %v2719
      %v3056 = vpop.f32.mrb[0].mxu0
      %v3057 = vadd.f32 %v2799, %v3056
      %v3058 = vpop.f32.mrb[0].mxu0
      %3059 = vmatprep.mubr.f32.mxu0 %v2752
      %3060 = vmatmul.mubr.f32.gmra.mrb[0].mxu0 %v2720
      %v3061 = vpop.f32.mrb[0].mxu0
      %v3062 = vadd.f32 %v2799, %v3061
      %v3063 = vpop.f32.mrb[0].mxu0
      %3064 = vmatprep.mubr.f32.mxu0 %v2753
      %3065 = vmatmul.mubr.f32.gmra.mrb[0].mxu0 %v2721
      %v3066 = vpop.f32.mrb[0].mxu0
      %v3067 = vadd.f32 %v2799, %v3066
      %v3068 = vpop.f32.mrb[0].mxu0
      %3069 = vmatprep.mubr.f32.mxu0 %v2754
      %3070 = vmatmul.mubr.f32.gmra.mrb[0].mxu0 %v2722
      %v3071 = vpop.f32.mrb[0].mxu0
      %v3072 = vadd.f32 %v2799, %v3071
      %v3073 = vpop.f32.mrb[0].mxu0
      %3074 = vmatprep.mubr.f32.mxu0 %v2755
      %3075 = vmatmul.mubr.f32.gmra.mrb[0].mxu0 %v2723
      %v3076 = vpop.f32.mrb[0].mxu0
      %v3077 = vadd.f32 %v2799, %v3076
      %v3078 = vpop.f32.mrb[0].mxu0
      %3079 = vmatprep.mubr.f32.mxu0 %v2756
      %3080 = vmatmul.mubr.f32.gmra.mrb[0].mxu0 %v2724
      %v3081 = vpop.f32.mrb[0].mxu0
      %v3082 = vadd.f32 %v2799, %v3081
      %v3083 = vpop.f32.mrb[0].mxu0
      %3084 = vmatprep.mubr.f32.mxu0 %v2757
      %3085 = vmatmul.mubr.f32.gmra.mrb[0].mxu0 %v2725
      %v3086 = vpop.f32.mrb[0].mxu0
      %v3087 = vadd.f32 %v2799, %v3086
      %v3088 = vpop.f32.mrb[0].mxu0
      %3089 = vdwg.mxu0
      %3090 = vmatprep.subr.mxu0 0.0
      %3091 = vmatpush1.msra.mxu0 %v2790
      %3092 = vmatprep.subr.mxu0 0.0
      %3093 = vmatpush1.msra.mxu0 %v2791
      %3094 = vmatprep.subr.mxu0 0.0
      %3095 = vmatpush1.msra.mxu0 %v2792
      %3096 = vmatprep.subr.mxu0 0.0
      %3097 = vmatpush1.msra.mxu0 %v2793
      %3098 = vmatprep.subr.mxu0 0.0
      %3099 = vmatpush1.msra.mxu0 0.0
      %3100 = vmatprep.subr.mxu0 0.0
      %3101 = vmatpush1.msra.mxu0 0.0
      %3102 = vmatprep.subr.mxu0 0.0
      %3103 = vmatpush1.msra.mxu0 0.0
      %3104 = vmatprep.subr.mxu0 0.0
      %3105 = vmatpush1.msra.mxu0 0.0
      %3106 = vmatprep.subr.mxu0 0.0
      %3107 = vmatpush1.msra.mxu0 0.0
      %3108 = vmatprep.subr.mxu0 0.0
      %3109 = vmatpush1.msra.mxu0 0.0
      %3110 = vmatprep.subr.mxu0 0.0
      %3111 = vmatpush1.msra.mxu0 0.0
      %3112 = vmatprep.subr.mxu0 0.0
      %3113 = vmatpush1.msra.mxu0 0.0
      %3114 = vmatprep.subr.mxu0 0.0
      %3115 = vmatpush1.msra.mxu0 0.0
      %3116 = vmatprep.subr.mxu0 0.0
      %3117 = vmatpush1.msra.mxu0 0.0
      %3118 = vmatprep.subr.mxu0 0.0
      %3119 = vmatpush1.msra.mxu0 0.0
      %3120 = vmatprep.subr.mxu0 0.0
      %3121 = vmatpush1.msra.mxu0 0.0
      %3122 = vmatprep.subr.mxu0 0.0
      %3123 = vmatpush1.msra.mxu0 0.0
      %3124 = vmatprep.subr.mxu0 0.0
      %3125 = vmatpush1.msra.mxu0 0.0
      %3126 = vmatprep.subr.mxu0 0.0
      %3127 = vmatpush1.msra.mxu0 0.0
      %3128 = vmatprep.subr.mxu0 0.0
      %3129 = vmatpush1.msra.mxu0 0.0
      %3130 = vmatprep.subr.mxu0 0.0
      %3131 = vmatpush1.msra.mxu0 0.0
      %3132 = vmatprep.subr.mxu0 0.0
      %3133 = vmatpush1.msra.mxu0 0.0
      %3134 = vmatprep.subr.mxu0 0.0
      %3135 = vmatpush1.msra.mxu0 0.0
      %3136 = vmatprep.subr.mxu0 0.0
      %3137 = vmatpush1.msra.mxu0 0.0
      %3138 = vmatprep.subr.mxu0 0.0
      %3139 = vmatpush1.msra.mxu0 0.0
      %3140 = vmatprep.subr.mxu0 0.0
      %3141 = vmatpush1.msra.mxu0 0.0
      %3142 = vmatprep.subr.mxu0 0.0
      %3143 = vmatpush1.msra.mxu0 0.0
      %3144 = vmatprep.subr.mxu0 0.0
      %3145 = vmatpush1.msra.mxu0 0.0
      %3146 = vmatprep.subr.mxu0 0.0
      %3147 = vmatpush1.msra.mxu0 0.0
      %3148 = vmatprep.subr.mxu0 0.0
      %3149 = vmatpush1.msra.mxu0 0.0
      %3150 = vmatprep.subr.mxu0 0.0
      %3151 = vmatpush1.msra.mxu0 0.0
      %3152 = vmatprep.subr.mxu0 0.0
      %3153 = vmatpush1.msra.mxu0 0.0
      %3154 = vmatprep.mubr.f32.mxu0 0.0
      %3155 = vmatmul.mubr.f32.gmra.mrb[0].mxu0 %v2801
      %v3156 = vpop.f32.mrb[0].mxu0
      %v3157 = vadd.f32 %v2932, %v3156
      %v3158 = vpop.f32.mrb[0].mxu0
      %3159 = vmatprep.mubr.f32.mxu0 0.0
      %3160 = vmatmul.mubr.f32.gmra.mrb[0].mxu0 %v2803
      %v3161 = vpop.f32.mrb[0].mxu0
      %v3162 = vadd.f32 %v2937, %v3161
      %v3163 = vpop.f32.mrb[0].mxu0
      %3164 = vmatprep.mubr.f32.mxu0 0.0
      %3165 = vmatmul.mubr.f32.gmra.mrb[0].mxu0 %v2805
      %v3166 = vpop.f32.mrb[0].mxu0
      %v3167 = vadd.f32 %v2942, %v3166
      %v3168 = vpop.f32.mrb[0].mxu0
      %3169 = vmatprep.mubr.f32.mxu0 0.0
      %3170 = vmatmul.mubr.f32.gmra.mrb[0].mxu0 %v2807
      %v3171 = vpop.f32.mrb[0].mxu0
      %v3172 = vadd.f32 %v2947, %v3171
      %v3173 = vpop.f32.mrb[0].mxu0
      %3174 = vmatprep.mubr.f32.mxu0 0.0
      %3175 = vmatmul.mubr.f32.gmra.mrb[0].mxu0 %v2809
      %v3176 = vpop.f32.mrb[0].mxu0
      %v3177 = vadd.f32 %v2952, %v3176
      %v3178 = vpop.f32.mrb[0].mxu0
      %3179 = vmatprep.mubr.f32.mxu0 0.0
      %3180 = vmatmul.mubr.f32.gmra.mrb[0].mxu0 %v2811
      %v3181 = vpop.f32.mrb[0].mxu0
      %v3182 = vadd.f32 %v2957, %v3181
      %v3183 = vpop.f32.mrb[0].mxu0
      %3184 = vmatprep.mubr.f32.mxu0 0.0
      %3185 = vmatmul.mubr.f32.gmra.mrb[0].mxu0 %v2813
      %v3186 = vpop.f32.mrb[0].mxu0
      %v3187 = vadd.f32 %v2962, %v3186
      %v3188 = vpop.f32.mrb[0].mxu0
      %3189 = vmatprep.mubr.f32.mxu0 0.0
      %3190 = vmatmul.mubr.f32.gmra.mrb[0].mxu0 %v2815
      %v3191 = vpop.f32.mrb[0].mxu0
      %v3192 = vadd.f32 %v2967, %v3191
      %v3193 = vpop.f32.mrb[0].mxu0
      %3194 = vmatprep.mubr.f32.mxu0 0.0
      %3195 = vmatmul.mubr.f32.gmra.mrb[0].mxu0 %v2817
      %v3196 = vpop.f32.mrb[0].mxu0
      %v3197 = vadd.f32 %v2972, %v3196
      %v3198 = vpop.f32.mrb[0].mxu0
      %3199 = vmatprep.mubr.f32.mxu0 0.0
      %3200 = vmatmul.mubr.f32.gmra.mrb[0].mxu0 %v2819
      %v3201 = vpop.f32.mrb[0].mxu0
      %v3202 = vadd.f32 %v2977, %v3201
      %v3203 = vpop.f32.mrb[0].mxu0
      %3204 = vmatprep.mubr.f32.mxu0 0.0
      %3205 = vmatmul.mubr.f32.gmra.mrb[0].mxu0 %v2821
      %v3206 = vpop.f32.mrb[0].mxu0
      %v3207 = vadd.f32 %v2982, %v3206
      %v3208 = vpop.f32.mrb[0].mxu0
      %3209 = vmatprep.mubr.f32.mxu0 0.0
      %3210 = vmatmul.mubr.f32.gmra.mrb[0].mxu0 %v2823
      %v3211 = vpop.f32.mrb[0].mxu0
      %v3212 = vadd.f32 %v2987, %v3211
      %v3213 = vpop.f32.mrb[0].mxu0
      %3214 = vmatprep.mubr.f32.mxu0 0.0
      %3215 = vmatmul.mubr.f32.gmra.mrb[0].mxu0 %v2825
      %v3216 = vpop.f32.mrb[0].mxu0
      %v3217 = vadd.f32 %v2992, %v3216
      %v3218 = vpop.f32.mrb[0].mxu0
      %3219 = vmatprep.mubr.f32.mxu0 0.0
      %3220 = vmatmul.mubr.f32.gmra.mrb[0].mxu0 %v2827
      %v3221 = vpop.f32.mrb[0].mxu0
      %v3222 = vadd.f32 %v2997, %v3221
      %v3223 = vpop.f32.mrb[0].mxu0
      %3224 = vmatprep.mubr.f32.mxu0 0.0
      %3225 = vmatmul.mubr.f32.gmra.mrb[0].mxu0 %v2829
      %v3226 = vpop.f32.mrb[0].mxu0
      %v3227 = vadd.f32 %v3002, %v3226
      %v3228 = vpop.f32.mrb[0].mxu0
      %3229 = vmatprep.mubr.f32.mxu0 0.0
      %3230 = vmatmul.mubr.f32.gmra.mrb[0].mxu0 %v2831
      %v3231 = vpop.f32.mrb[0].mxu0
      %v3232 = vadd.f32 %v3007, %v3231
      %v3233 = vpop.f32.mrb[0].mxu0
      %3234 = vmatprep.mubr.f32.mxu0 0.0
      %3235 = vmatmul.mubr.f32.gmra.mrb[0].mxu0 %v2833
      %v3236 = vpop.f32.mrb[0].mxu0
      %v3237 = vadd.f32 %v3012, %v3236
      %v3238 = vpop.f32.mrb[0].mxu0
      %3239 = vmatprep.mubr.f32.mxu0 0.0
      %3240 = vmatmul.mubr.f32.gmra.mrb[0].mxu0 %v2835
      %v3241 = vpop.f32.mrb[0].mxu0
      %v3242 = vadd.f32 %v3017, %v3241
      %v3243 = vpop.f32.mrb[0].mxu0
      %3244 = vmatprep.mubr.f32.mxu0 0.0
      %3245 = vmatmul.mubr.f32.gmra.mrb[0].mxu0 %v2837
      %v3246 = vpop.f32.mrb[0].mxu0
      %v3247 = vadd.f32 %v3022, %v3246
      %v3248 = vpop.f32.mrb[0].mxu0
      %3249 = vmatprep.mubr.f32.mxu0 0.0
      %3250 = vmatmul.mubr.f32.gmra.mrb[0].mxu0 %v2839
      %v3251 = vpop.f32.mrb[0].mxu0
      %v3252 = vadd.f32 %v3027, %v3251
      %v3253 = vpop.f32.mrb[0].mxu0
      %3254 = vmatprep.mubr.f32.mxu0 0.0
      %3255 = vmatmul.mubr.f32.gmra.mrb[0].mxu0 %v2841
      %v3256 = vpop.f32.mrb[0].mxu0
      %v3257 = vadd.f32 %v3032, %v3256
      %v3258 = vpop.f32.mrb[0].mxu0
      %3259 = vmatprep.mubr.f32.mxu0 0.0
      %3260 = vmatmul.mubr.f32.gmra.mrb[0].mxu0 %v2843
      %v3261 = vpop.f32.mrb[0].mxu0
      %v3262 = vadd.f32 %v3037, %v3261
      %v3263 = vpop.f32.mrb[0].mxu0
      %3264 = vmatprep.mubr.f32.mxu0 0.0
      %3265 = vmatmul.mubr.f32.gmra.mrb[0].mxu0 %v2845
      %v3266 = vpop.f32.mrb[0].mxu0
      %v3267 = vadd.f32 %v3042, %v3266
      %v3268 = vpop.f32.mrb[0].mxu0
      %3269 = vmatprep.mubr.f32.mxu0 0.0
      %3270 = vmatmul.mubr.f32.gmra.mrb[0].mxu0 %v2847
      %v3271 = vpop.f32.mrb[0].mxu0
      %v3272 = vadd.f32 %v3047, %v3271
      %v3273 = vpop.f32.mrb[0].mxu0
      %3274 = vmatprep.mubr.f32.mxu0 0.0
      %3275 = vmatmul.mubr.f32.gmra.mrb[0].mxu0 %v2849
      %v3276 = vpop.f32.mrb[0].mxu0
      %v3277 = vadd.f32 %v3052, %v3276
      %v3278 = vpop.f32.mrb[0].mxu0
      %3279 = vmatprep.mubr.f32.mxu0 0.0
      %3280 = vmatmul.mubr.f32.gmra.mrb[0].mxu0 %v2851
      %v3281 = vpop.f32.mrb[0].mxu0
      %v3282 = vadd.f32 %v3057, %v3281
      %v3283 = vpop.f32.mrb[0].mxu0
      %3284 = vmatprep.mubr.f32.mxu0 0.0
      %3285 = vmatmul.mubr.f32.gmra.mrb[0].mxu0 %v2853
      %v3286 = vpop.f32.mrb[0].mxu0
      %v3287 = vadd.f32 %v3062, %v3286
      %v3288 = vpop.f32.mrb[0].mxu0
      %3289 = vmatprep.mubr.f32.mxu0 0.0
      %3290 = vmatmul.mubr.f32.gmra.mrb[0].mxu0 %v2855
      %v3291 = vpop.f32.mrb[0].mxu0
      %v3292 = vadd.f32 %v3067, %v3291
      %v3293 = vpop.f32.mrb[0].mxu0
      %3294 = vmatprep.mubr.f32.mxu0 0.0
      %3295 = vmatmul.mubr.f32.gmra.mrb[0].mxu0 %v2857
      %v3296 = vpop.f32.mrb[0].mxu0
      %v3297 = vadd.f32 %v3072, %v3296
      %v3298 = vpop.f32.mrb[0].mxu0
      %3299 = vmatprep.mubr.f32.mxu0 0.0
      %3300 = vmatmul.mubr.f32.gmra.mrb[0].mxu0 %v2859
      %v3301 = vpop.f32.mrb[0].mxu0
      %v3302 = vadd.f32 %v3077, %v3301
      %v3303 = vpop.f32.mrb[0].mxu0
      %3304 = vmatprep.mubr.f32.mxu0 0.0
      %3305 = vmatmul.mubr.f32.gmra.mrb[0].mxu0 %v2861
      %v3306 = vpop.f32.mrb[0].mxu0
      %v3307 = vadd.f32 %v3082, %v3306
      %v3308 = vpop.f32.mrb[0].mxu0
      %3309 = vmatprep.mubr.f32.mxu0 0.0
      %3310 = vmatmul.mubr.f32.gmra.mrb[0].mxu0 %v2863
      %v3311 = vpop.f32.mrb[0].mxu0
      %v3312 = vadd.f32 %v3087, %v3311
      %v3313 = vpop.f32.mrb[0].mxu0
      %3314 = vdwg.mxu0
      %v3315 = vmax.f32 %v3157, 0.0
      %v3316 = vmax.f32 %v3162, 0.0
      %v3317 = vmax.f32 %v3167, 0.0
      %v3318 = vmax.f32 %v3172, 0.0
      %v3319 = vmax.f32 %v3177, 0.0
      %v3320 = vmax.f32 %v3182, 0.0
      %v3321 = vmax.f32 %v3187, 0.0
      %v3322 = vmax.f32 %v3192, 0.0
      %v3323 = vmax.f32 %v3197, 0.0
      %v3324 = vmax.f32 %v3202, 0.0
      %v3325 = vmax.f32 %v3207, 0.0
      %v3326 = vmax.f32 %v3212, 0.0
      %v3327 = vmax.f32 %v3217, 0.0
      %v3328 = vmax.f32 %v3222, 0.0
      %v3329 = vmax.f32 %v3227, 0.0
      %v3330 = vmax.f32 %v3232, 0.0
      %v3331 = vmax.f32 %v3237, 0.0
      %v3332 = vmax.f32 %v3242, 0.0
      %v3333 = vmax.f32 %v3247, 0.0
      %v3334 = vmax.f32 %v3252, 0.0
      %v3335 = vmax.f32 %v3257, 0.0
      %v3336 = vmax.f32 %v3262, 0.0
      %v3337 = vmax.f32 %v3267, 0.0
      %v3338 = vmax.f32 %v3272, 0.0
      %v3339 = vmax.f32 %v3277, 0.0
      %v3340 = vmax.f32 %v3282, 0.0
      %v3341 = vmax.f32 %v3287, 0.0
      %v3342 = vmax.f32 %v3292, 0.0
      %v3343 = vmax.f32 %v3297, 0.0
      %v3344 = vmax.f32 %v3302, 0.0
      %v3345 = vmax.f32 %v3307, 0.0
      %v3346 = vmax.f32 %v3312, 0.0
      %s3347 = scalar_lea.vmem [#allocation4], 24
      %3348 = vst.msk [vmem:[%s3347 + $0x1] sm:$0xff] %vm443, %v3315
      %3349 = vst.msk [vmem:[%s3347 + $0x9] sm:$0xff] %vm443, %v3316
      %3350 = vst.msk [vmem:[%s3347 + $0x19] sm:$0xff] %vm443, %v3317
      %3351 = vst.msk [vmem:[%s3347 + $0x21] sm:$0xff] %vm443, %v3318
      %3352 = vst.msk [vmem:[%s3347 + $0x31] sm:$0xff] %vm443, %v3319
      %3353 = vst.msk [vmem:[%s3347 + $0x39] sm:$0xff] %vm443, %v3320
      %3354 = vst.msk [vmem:[%s3347 + $0x49] sm:$0xff] %vm443, %v3321
      %3355 = vst.msk [vmem:[%s3347 + $0x51] sm:$0xff] %vm443, %v3322
      %3356 = vst.msk [vmem:[%s3347 + $0x61] sm:$0xff] %vm443, %v3323
      %3357 = vst.msk [vmem:[%s3347 + $0x69] sm:$0xff] %vm443, %v3324
      %3358 = vst.msk [vmem:[%s3347 + $0x79] sm:$0xff] %vm443, %v3325
      %3359 = vst.msk [vmem:[%s3347 + $0x81] sm:$0xff] %vm443, %v3326
      %3360 = vst.msk [vmem:[%s3347 + $0x91] sm:$0xff] %vm443, %v3327
      %3361 = vst.msk [vmem:[%s3347 + $0x99] sm:$0xff] %vm443, %v3328
      %3362 = vst.msk [vmem:[%s3347 + $0xa9] sm:$0xff] %vm443, %v3329
      %3363 = vst.msk [vmem:[%s3347 + $0xb1] sm:$0xff] %vm443, %v3330
      %3364 = vst.msk [vmem:[%s3347 + $0xc1] sm:$0xff] %vm443, %v3331
      %3365 = vst.msk [vmem:[%s3347 + $0xc9] sm:$0xff] %vm443, %v3332
      %3366 = vst.msk [vmem:[%s3347 + $0xd9] sm:$0xff] %vm443, %v3333
      %3367 = vst.msk [vmem:[%s3347 + $0xe1] sm:$0xff] %vm443, %v3334
      %3368 = vst.msk [vmem:[%s3347 + $0xf1] sm:$0xff] %vm443, %v3335
      %3369 = vst.msk [vmem:[%s3347 + $0xf9] sm:$0xff] %vm443, %v3336
      %3370 = vst.msk [vmem:[%s3347 + $0x109] sm:$0xff] %vm443, %v3337
      %3371 = vst.msk [vmem:[%s3347 + $0x111] sm:$0xff] %vm443, %v3338
      %3372 = vst.msk [vmem:[%s3347 + $0x121] sm:$0xff] %vm443, %v3339
      %3373 = vst.msk [vmem:[%s3347 + $0x129] sm:$0xff] %vm443, %v3340
      %3374 = vst.msk [vmem:[%s3347 + $0x139] sm:$0xff] %vm443, %v3341
      %3375 = vst.msk [vmem:[%s3347 + $0x141] sm:$0xff] %vm443, %v3342
      %3376 = vst.msk [vmem:[%s3347 + $0x151] sm:$0xff] %vm443, %v3343
      %3377 = vst.msk [vmem:[%s3347 + $0x159] sm:$0xff] %vm443, %v3344
      %3378 = vst.msk [vmem:[%s3347 + $0x169] sm:$0xff] %vm443, %v3345
      %3379 = vst.msk [vmem:[%s3347 + $0x171] sm:$0xff] %vm443, %v3346
      %v3380 = vld [vmem:[#allocation4] sm:$0xff]
      %v3381 = vld [vmem:[#allocation4 + $0x8] sm:$0xff]
      %v3382 = vld [vmem:[#allocation4 + $0x10] sm:$0x3]
      %v3383 = vld [vmem:[#allocation4 + $0x18] sm:$0xff]
      %v3384 = vld [vmem:[#allocation4 + $0x20] sm:$0xff]
      %v3385 = vld [vmem:[#allocation4 + $0x28] sm:$0x3]
      %v3386 = vld [vmem:[#allocation4 + $0x30] sm:$0xff]
      %v3387 = vld [vmem:[#allocation4 + $0x38] sm:$0xff]
      %v3388 = vld [vmem:[#allocation4 + $0x40] sm:$0x3]
      %v3389 = vld [vmem:[#allocation4 + $0x48] sm:$0xff]
      %v3390 = vld [vmem:[#allocation4 + $0x50] sm:$0xff]
      %v3391 = vld [vmem:[#allocation4 + $0x58] sm:$0x3]
      %v3392 = vld [vmem:[#allocation4 + $0x60] sm:$0xff]
      %v3393 = vld [vmem:[#allocation4 + $0x68] sm:$0xff]
      %v3394 = vld [vmem:[#allocation4 + $0x70] sm:$0x3]
      %v3395 = vld [vmem:[#allocation4 + $0x78] sm:$0xff]
      %v3396 = vld [vmem:[#allocation4 + $0x80] sm:$0xff]
      %v3397 = vld [vmem:[#allocation4 + $0x88] sm:$0x3]
      %v3398 = vld [vmem:[#allocation4 + $0x90] sm:$0xff]
      %v3399 = vld [vmem:[#allocation4 + $0x98] sm:$0xff]
      %v3400 = vld [vmem:[#allocation4 + $0xa0] sm:$0x3]
      %v3401 = vld [vmem:[#allocation4 + $0xa8] sm:$0xff]
      %v3402 = vld [vmem:[#allocation4 + $0xb0] sm:$0xff]
      %v3403 = vld [vmem:[#allocation4 + $0xb8] sm:$0x3]
      %v3404 = vld [vmem:[#allocation4 + $0xc0] sm:$0xff]
      %v3405 = vld [vmem:[#allocation4 + $0xc8] sm:$0xff]
      %v3406 = vld [vmem:[#allocation4 + $0xd0] sm:$0x3]
      %v3407 = vld [vmem:[#allocation4 + $0xd8] sm:$0xff]
      %v3408 = vld [vmem:[#allocation4 + $0xe0] sm:$0xff]
      %v3409 = vld [vmem:[#allocation4 + $0xe8] sm:$0x3]
      %v3410 = vld [vmem:[#allocation4 + $0xf0] sm:$0xff]
      %v3411 = vld [vmem:[#allocation4 + $0xf8] sm:$0xff]
      %v3412 = vld [vmem:[#allocation4 + $0x100] sm:$0x3]
      %v3413 = vld [vmem:[#allocation4 + $0x108] sm:$0xff]
      %v3414 = vld [vmem:[#allocation4 + $0x110] sm:$0xff]
      %v3415 = vld [vmem:[#allocation4 + $0x118] sm:$0x3]
      %v3416 = vld [vmem:[#allocation4 + $0x120] sm:$0xff]
      %v3417 = vld [vmem:[#allocation4 + $0x128] sm:$0xff]
      %v3418 = vld [vmem:[#allocation4 + $0x130] sm:$0x3]
      %v3419 = vld [vmem:[#allocation4 + $0x138] sm:$0xff]
      %v3420 = vld [vmem:[#allocation4 + $0x140] sm:$0xff]
      %v3421 = vld [vmem:[#allocation4 + $0x148] sm:$0x3]
      %v3422 = vld [vmem:[#allocation4 + $0x150] sm:$0xff]
      %v3423 = vld [vmem:[#allocation4 + $0x158] sm:$0xff]
      %v3424 = vld [vmem:[#allocation4 + $0x160] sm:$0x3]
      %v3425 = vld [vmem:[#allocation4 + $0x168] sm:$0xff]
      %v3426 = vld [vmem:[#allocation4 + $0x170] sm:$0xff]
      %v3427 = vld [vmem:[#allocation4 + $0x178] sm:$0x3]
      %v3428 = vld [vmem:[#allocation4 + $0x180] sm:$0xff]
      %v3429 = vld [vmem:[#allocation4 + $0x188] sm:$0xff]
      %v3430 = vld [vmem:[#allocation4 + $0x190] sm:$0x3]
      %v3431 = vld [vmem:[#allocation4 + $0x198] sm:$0xff]
      %v3432 = vld [vmem:[#allocation4 + $0x1a0] sm:$0xff]
      %v3433 = vld [vmem:[#allocation4 + $0x1a8] sm:$0x3]
      %v3488 = vrot.slane %v3380, 1
      %v3489 = vrot.slane %v3381, 1
      %v3490 = vsel %vm726, %v3488, %v3489
      %v3491 = vrot.slane %v3382, 1
      %v3492 = vsel %vm726, %v3489, %v3491
      %v3493 = vrot.slane %v3383, 1
      %v3494 = vrot.slane %v3384, 1
      %v3495 = vsel %vm726, %v3493, %v3494
      %v3496 = vrot.slane %v3385, 1
      %v3497 = vsel %vm726, %v3494, %v3496
      %v3498 = vrot.slane %v3386, 1
      %v3499 = vrot.slane %v3387, 1
      %v3500 = vsel %vm726, %v3498, %v3499
      %v3501 = vrot.slane %v3388, 1
      %v3502 = vsel %vm726, %v3499, %v3501
      %v3503 = vrot.slane %v3389, 1
      %v3504 = vrot.slane %v3390, 1
      %v3505 = vsel %vm726, %v3503, %v3504
      %v3506 = vrot.slane %v3391, 1
      %v3507 = vsel %vm726, %v3504, %v3506
      %v3508 = vrot.slane %v3392, 1
      %v3509 = vrot.slane %v3393, 1
      %v3510 = vsel %vm726, %v3508, %v3509
      %v3511 = vrot.slane %v3394, 1
      %v3512 = vsel %vm726, %v3509, %v3511
      %v3513 = vrot.slane %v3395, 1
      %v3514 = vrot.slane %v3396, 1
      %v3515 = vsel %vm726, %v3513, %v3514
      %v3516 = vrot.slane %v3397, 1
      %v3517 = vsel %vm726, %v3514, %v3516
      %v3518 = vrot.slane %v3398, 1
      %v3519 = vrot.slane %v3399, 1
      %v3520 = vsel %vm726, %v3518, %v3519
      %v3521 = vrot.slane %v3400, 1
      %v3522 = vsel %vm726, %v3519, %v3521
      %v3523 = vrot.slane %v3401, 1
      %v3524 = vrot.slane %v3402, 1
      %v3525 = vsel %vm726, %v3523, %v3524
      %v3526 = vrot.slane %v3403, 1
      %v3527 = vsel %vm726, %v3524, %v3526
      %v3528 = vrot.slane %v3404, 1
      %v3529 = vrot.slane %v3405, 1
      %v3530 = vsel %vm726, %v3528, %v3529
      %v3531 = vrot.slane %v3406, 1
      %v3532 = vsel %vm726, %v3529, %v3531
      %v3533 = vrot.slane %v3407, 1
      %v3534 = vrot.slane %v3408, 1
      %v3535 = vsel %vm726, %v3533, %v3534
      %v3536 = vrot.slane %v3409, 1
      %v3537 = vsel %vm726, %v3534, %v3536
      %v3538 = vrot.slane %v3410, 1
      %v3539 = vrot.slane %v3411, 1
      %v3540 = vsel %vm726, %v3538, %v3539
      %v3541 = vrot.slane %v3412, 1
      %v3542 = vsel %vm726, %v3539, %v3541
      %v3543 = vrot.slane %v3413, 1
      %v3544 = vrot.slane %v3414, 1
      %v3545 = vsel %vm726, %v3543, %v3544
      %v3546 = vrot.slane %v3415, 1
      %v3547 = vsel %vm726, %v3544, %v3546
      %v3548 = vrot.slane %v3416, 1
      %v3549 = vrot.slane %v3417, 1
      %v3550 = vsel %vm726, %v3548, %v3549
      %v3551 = vrot.slane %v3418, 1
      %v3552 = vsel %vm726, %v3549, %v3551
      %v3553 = vrot.slane %v3419, 1
      %v3554 = vrot.slane %v3420, 1
      %v3555 = vsel %vm726, %v3553, %v3554
      %v3556 = vrot.slane %v3421, 1
      %v3557 = vsel %vm726, %v3554, %v3556
      %v3558 = vrot.slane %v3422, 1
      %v3559 = vrot.slane %v3423, 1
      %v3560 = vsel %vm726, %v3558, %v3559
      %v3561 = vrot.slane %v3424, 1
      %v3562 = vsel %vm726, %v3559, %v3561
      %v3563 = vrot.slane %v3425, 1
      %v3564 = vrot.slane %v3426, 1
      %v3565 = vsel %vm726, %v3563, %v3564
      %v3566 = vrot.slane %v3427, 1
      %v3567 = vsel %vm726, %v3564, %v3566
      %v3568 = vrot.slane %v3428, 1
      %v3569 = vrot.slane %v3429, 1
      %v3570 = vsel %vm726, %v3568, %v3569
      %v3571 = vrot.slane %v3430, 1
      %v3572 = vsel %vm726, %v3569, %v3571
      %v3573 = vrot.slane %v3431, 1
      %v3574 = vrot.slane %v3432, 1
      %v3575 = vsel %vm726, %v3573, %v3574
      %v3576 = vrot.slane %v3433, 1
      %v3577 = vsel %vm726, %v3574, %v3576
      %3578 = vrot.lane.b32.xlu0 %v3490, 32
      %v3579 = vpop.permute.xlu0 %3578
      %3580 = vrot.lane.b32.xlu0 %v3492, 32
      %v3581 = vpop.permute.xlu0 %3580
      %3582 = vrot.lane.b32.xlu0 %v3495, 32
      %v3583 = vpop.permute.xlu0 %3582
      %3584 = vrot.lane.b32.xlu0 %v3497, 32
      %v3585 = vpop.permute.xlu0 %3584
      %3586 = vrot.lane.b32.xlu0 %v3500, 32
      %v3587 = vpop.permute.xlu0 %3586
      %3588 = vrot.lane.b32.xlu0 %v3502, 32
      %v3589 = vpop.permute.xlu0 %3588
      %3590 = vrot.lane.b32.xlu0 %v3505, 32
      %v3591 = vpop.permute.xlu0 %3590
      %3592 = vrot.lane.b32.xlu0 %v3507, 32
      %v3593 = vpop.permute.xlu0 %3592
      %3594 = vrot.lane.b32.xlu0 %v3510, 32
      %v3595 = vpop.permute.xlu0 %3594
      %3596 = vrot.lane.b32.xlu0 %v3512, 32
      %v3597 = vpop.permute.xlu0 %3596
      %3598 = vrot.lane.b32.xlu0 %v3515, 32
      %v3599 = vpop.permute.xlu0 %3598
      %3600 = vrot.lane.b32.xlu0 %v3517, 32
      %v3601 = vpop.permute.xlu0 %3600
      %3602 = vrot.lane.b32.xlu0 %v3520, 32
      %v3603 = vpop.permute.xlu0 %3602
      %3604 = vrot.lane.b32.xlu0 %v3522, 32
      %v3605 = vpop.permute.xlu0 %3604
      %3606 = vrot.lane.b32.xlu0 %v3525, 32
      %v3607 = vpop.permute.xlu0 %3606
      %3608 = vrot.lane.b32.xlu0 %v3527, 32
      %v3609 = vpop.permute.xlu0 %3608
      %3610 = vrot.lane.b32.xlu0 %v3530, 32
      %v3611 = vpop.permute.xlu0 %3610
      %3612 = vrot.lane.b32.xlu0 %v3532, 32
      %v3613 = vpop.permute.xlu0 %3612
      %3614 = vrot.lane.b32.xlu0 %v3535, 32
      %v3615 = vpop.permute.xlu0 %3614
      %3616 = vrot.lane.b32.xlu0 %v3537, 32
      %v3617 = vpop.permute.xlu0 %3616
      %3618 = vrot.lane.b32.xlu0 %v3540, 32
      %v3619 = vpop.permute.xlu0 %3618
      %3620 = vrot.lane.b32.xlu0 %v3542, 32
      %v3621 = vpop.permute.xlu0 %3620
      %3622 = vrot.lane.b32.xlu0 %v3545, 32
      %v3623 = vpop.permute.xlu0 %3622
      %3624 = vrot.lane.b32.xlu0 %v3547, 32
      %v3625 = vpop.permute.xlu0 %3624
      %3626 = vrot.lane.b32.xlu0 %v3550, 32
      %v3627 = vpop.permute.xlu0 %3626
      %3628 = vrot.lane.b32.xlu0 %v3552, 32
      %v3629 = vpop.permute.xlu0 %3628
      %3630 = vrot.lane.b32.xlu0 %v3555, 32
      %v3631 = vpop.permute.xlu0 %3630
      %3632 = vrot.lane.b32.xlu0 %v3557, 32
      %v3633 = vpop.permute.xlu0 %3632
      %3634 = vrot.lane.b32.xlu0 %v3560, 32
      %v3635 = vpop.permute.xlu0 %3634
      %3636 = vrot.lane.b32.xlu0 %v3562, 32
      %v3637 = vpop.permute.xlu0 %3636
      %3638 = vrot.lane.b32.xlu0 %v3565, 32
      %v3639 = vpop.permute.xlu0 %3638
      %3640 = vrot.lane.b32.xlu0 %v3567, 32
      %v3641 = vpop.permute.xlu0 %3640
      %3642 = vrot.lane.b32.xlu0 %v3570, 32
      %v3643 = vpop.permute.xlu0 %3642
      %3644 = vrot.lane.b32.xlu0 %v3572, 32
      %v3645 = vpop.permute.xlu0 %3644
      %3646 = vrot.lane.b32.xlu0 %v3575, 32
      %v3647 = vpop.permute.xlu0 %3646
      %3648 = vrot.lane.b32.xlu0 %v3577, 32
      %v3649 = vpop.permute.xlu0 %3648
      %v3686 = vrot.slane %v3380, 2
      %v3687 = vrot.slane %v3381, 2
      %v3688 = vsel %vm925, %v3686, %v3687
      %v3689 = vrot.slane %v3382, 2
      %v3690 = vsel %vm925, %v3687, %v3689
      %v3691 = vrot.slane %v3383, 2
      %v3692 = vrot.slane %v3384, 2
      %v3693 = vsel %vm925, %v3691, %v3692
      %v3694 = vrot.slane %v3385, 2
      %v3695 = vsel %vm925, %v3692, %v3694
      %v3696 = vrot.slane %v3386, 2
      %v3697 = vrot.slane %v3387, 2
      %v3698 = vsel %vm925, %v3696, %v3697
      %v3699 = vrot.slane %v3388, 2
      %v3700 = vsel %vm925, %v3697, %v3699
      %v3701 = vrot.slane %v3389, 2
      %v3702 = vrot.slane %v3390, 2
      %v3703 = vsel %vm925, %v3701, %v3702
      %v3704 = vrot.slane %v3391, 2
      %v3705 = vsel %vm925, %v3702, %v3704
      %v3706 = vrot.slane %v3392, 2
      %v3707 = vrot.slane %v3393, 2
      %v3708 = vsel %vm925, %v3706, %v3707
      %v3709 = vrot.slane %v3394, 2
      %v3710 = vsel %vm925, %v3707, %v3709
      %v3711 = vrot.slane %v3395, 2
      %v3712 = vrot.slane %v3396, 2
      %v3713 = vsel %vm925, %v3711, %v3712
      %v3714 = vrot.slane %v3397, 2
      %v3715 = vsel %vm925, %v3712, %v3714
      %v3716 = vrot.slane %v3398, 2
      %v3717 = vrot.slane %v3399, 2
      %v3718 = vsel %vm925, %v3716, %v3717
      %v3719 = vrot.slane %v3400, 2
      %v3720 = vsel %vm925, %v3717, %v3719
      %v3721 = vrot.slane %v3401, 2
      %v3722 = vrot.slane %v3402, 2
      %v3723 = vsel %vm925, %v3721, %v3722
      %v3724 = vrot.slane %v3403, 2
      %v3725 = vsel %vm925, %v3722, %v3724
      %v3726 = vrot.slane %v3404, 2
      %v3727 = vrot.slane %v3405, 2
      %v3728 = vsel %vm925, %v3726, %v3727
      %v3729 = vrot.slane %v3406, 2
      %v3730 = vsel %vm925, %v3727, %v3729
      %v3731 = vrot.slane %v3407, 2
      %v3732 = vrot.slane %v3408, 2
      %v3733 = vsel %vm925, %v3731, %v3732
      %v3734 = vrot.slane %v3409, 2
      %v3735 = vsel %vm925, %v3732, %v3734
      %v3736 = vrot.slane %v3410, 2
      %v3737 = vrot.slane %v3411, 2
      %v3738 = vsel %vm925, %v3736, %v3737
      %v3739 = vrot.slane %v3412, 2
      %v3740 = vsel %vm925, %v3737, %v3739
      %v3741 = vrot.slane %v3413, 2
      %v3742 = vrot.slane %v3414, 2
      %v3743 = vsel %vm925, %v3741, %v3742
      %v3744 = vrot.slane %v3415, 2
      %v3745 = vsel %vm925, %v3742, %v3744
      %v3746 = vrot.slane %v3416, 2
      %v3747 = vrot.slane %v3417, 2
      %v3748 = vsel %vm925, %v3746, %v3747
      %v3749 = vrot.slane %v3418, 2
      %v3750 = vsel %vm925, %v3747, %v3749
      %v3751 = vrot.slane %v3419, 2
      %v3752 = vrot.slane %v3420, 2
      %v3753 = vsel %vm925, %v3751, %v3752
      %v3754 = vrot.slane %v3421, 2
      %v3755 = vsel %vm925, %v3752, %v3754
      %v3756 = vrot.slane %v3422, 2
      %v3757 = vrot.slane %v3423, 2
      %v3758 = vsel %vm925, %v3756, %v3757
      %v3759 = vrot.slane %v3424, 2
      %v3760 = vsel %vm925, %v3757, %v3759
      %v3761 = vrot.slane %v3425, 2
      %v3762 = vrot.slane %v3426, 2
      %v3763 = vsel %vm925, %v3761, %v3762
      %v3764 = vrot.slane %v3427, 2
      %v3765 = vsel %vm925, %v3762, %v3764
      %v3766 = vrot.slane %v3428, 2
      %v3767 = vrot.slane %v3429, 2
      %v3768 = vsel %vm925, %v3766, %v3767
      %v3769 = vrot.slane %v3430, 2
      %v3770 = vsel %vm925, %v3767, %v3769
      %v3771 = vrot.slane %v3431, 2
      %v3772 = vrot.slane %v3432, 2
      %v3773 = vsel %vm925, %v3771, %v3772
      %v3774 = vrot.slane %v3433, 2
      %v3775 = vsel %vm925, %v3772, %v3774
      %3776 = vrot.lane.b32.xlu0 %v3688, 64
      %v3777 = vpop.permute.xlu0 %3776
      %3778 = vrot.lane.b32.xlu0 %v3690, 64
      %v3779 = vpop.permute.xlu0 %3778
      %3780 = vrot.lane.b32.xlu0 %v3693, 64
      %v3781 = vpop.permute.xlu0 %3780
      %3782 = vrot.lane.b32.xlu0 %v3695, 64
      %v3783 = vpop.permute.xlu0 %3782
      %3784 = vrot.lane.b32.xlu0 %v3698, 64
      %v3785 = vpop.permute.xlu0 %3784
      %3786 = vrot.lane.b32.xlu0 %v3700, 64
      %v3787 = vpop.permute.xlu0 %3786
      %3788 = vrot.lane.b32.xlu0 %v3703, 64
      %v3789 = vpop.permute.xlu0 %3788
      %3790 = vrot.lane.b32.xlu0 %v3705, 64
      %v3791 = vpop.permute.xlu0 %3790
      %3792 = vrot.lane.b32.xlu0 %v3708, 64
      %v3793 = vpop.permute.xlu0 %3792
      %3794 = vrot.lane.b32.xlu0 %v3710, 64
      %v3795 = vpop.permute.xlu0 %3794
      %3796 = vrot.lane.b32.xlu0 %v3713, 64
      %v3797 = vpop.permute.xlu0 %3796
      %3798 = vrot.lane.b32.xlu0 %v3715, 64
      %v3799 = vpop.permute.xlu0 %3798
      %3800 = vrot.lane.b32.xlu0 %v3718, 64
      %v3801 = vpop.permute.xlu0 %3800
      %3802 = vrot.lane.b32.xlu0 %v3720, 64
      %v3803 = vpop.permute.xlu0 %3802
      %3804 = vrot.lane.b32.xlu0 %v3723, 64
      %v3805 = vpop.permute.xlu0 %3804
      %3806 = vrot.lane.b32.xlu0 %v3725, 64
      %v3807 = vpop.permute.xlu0 %3806
      %3808 = vrot.lane.b32.xlu0 %v3728, 64
      %v3809 = vpop.permute.xlu0 %3808
      %3810 = vrot.lane.b32.xlu0 %v3730, 64
      %v3811 = vpop.permute.xlu0 %3810
      %3812 = vrot.lane.b32.xlu0 %v3733, 64
      %v3813 = vpop.permute.xlu0 %3812
      %3814 = vrot.lane.b32.xlu0 %v3735, 64
      %v3815 = vpop.permute.xlu0 %3814
      %3816 = vrot.lane.b32.xlu0 %v3738, 64
      %v3817 = vpop.permute.xlu0 %3816
      %3818 = vrot.lane.b32.xlu0 %v3740, 64
      %v3819 = vpop.permute.xlu0 %3818
      %3820 = vrot.lane.b32.xlu0 %v3743, 64
      %v3821 = vpop.permute.xlu0 %3820
      %3822 = vrot.lane.b32.xlu0 %v3745, 64
      %v3823 = vpop.permute.xlu0 %3822
      %3824 = vrot.lane.b32.xlu0 %v3748, 64
      %v3825 = vpop.permute.xlu0 %3824
      %3826 = vrot.lane.b32.xlu0 %v3750, 64
      %v3827 = vpop.permute.xlu0 %3826
      %3828 = vrot.lane.b32.xlu0 %v3753, 64
      %v3829 = vpop.permute.xlu0 %3828
      %3830 = vrot.lane.b32.xlu0 %v3755, 64
      %v3831 = vpop.permute.xlu0 %3830
      %3832 = vrot.lane.b32.xlu0 %v3758, 64
      %v3833 = vpop.permute.xlu0 %3832
      %3834 = vrot.lane.b32.xlu0 %v3760, 64
      %v3835 = vpop.permute.xlu0 %3834
      %3836 = vrot.lane.b32.xlu0 %v3763, 64
      %v3837 = vpop.permute.xlu0 %3836
      %3838 = vrot.lane.b32.xlu0 %v3765, 64
      %v3839 = vpop.permute.xlu0 %3838
      %3840 = vrot.lane.b32.xlu0 %v3768, 64
      %v3841 = vpop.permute.xlu0 %3840
      %3842 = vrot.lane.b32.xlu0 %v3770, 64
      %v3843 = vpop.permute.xlu0 %3842
      %3844 = vrot.lane.b32.xlu0 %v3773, 64
      %v3845 = vpop.permute.xlu0 %3844
      %3846 = vrot.lane.b32.xlu0 %v3775, 64
      %v3847 = vpop.permute.xlu0 %3846
      %v3884 = vsel %vm443, %v3380, %v3579
      %v3885 = vsel %vm443, %v3381, %v3581
      %v3886 = vsel %vm443, %v3383, %v3583
      %v3887 = vsel %vm443, %v3384, %v3585
      %v3888 = vsel %vm443, %v3386, %v3587
      %v3889 = vsel %vm443, %v3387, %v3589
      %v3890 = vsel %vm443, %v3389, %v3591
      %v3891 = vsel %vm443, %v3390, %v3593
      %v3892 = vsel %vm443, %v3392, %v3595
      %v3893 = vsel %vm443, %v3393, %v3597
      %v3894 = vsel %vm443, %v3395, %v3599
      %v3895 = vsel %vm443, %v3396, %v3601
      %v3896 = vsel %vm443, %v3398, %v3603
      %v3897 = vsel %vm443, %v3399, %v3605
      %v3898 = vsel %vm443, %v3401, %v3607
      %v3899 = vsel %vm443, %v3402, %v3609
      %v3900 = vsel %vm443, %v3404, %v3611
      %v3901 = vsel %vm443, %v3405, %v3613
      %v3902 = vsel %vm443, %v3407, %v3615
      %v3903 = vsel %vm443, %v3408, %v3617
      %v3904 = vsel %vm443, %v3410, %v3619
      %v3905 = vsel %vm443, %v3411, %v3621
      %v3906 = vsel %vm443, %v3413, %v3623
      %v3907 = vsel %vm443, %v3414, %v3625
      %v3908 = vsel %vm443, %v3416, %v3627
      %v3909 = vsel %vm443, %v3417, %v3629
      %v3910 = vsel %vm443, %v3419, %v3631
      %v3911 = vsel %vm443, %v3420, %v3633
      %v3912 = vsel %vm443, %v3422, %v3635
      %v3913 = vsel %vm443, %v3423, %v3637
      %v3914 = vsel %vm443, %v3425, %v3639
      %v3915 = vsel %vm443, %v3426, %v3641
      %v3916 = vsel %vm443, %v3428, %v3643
      %v3917 = vsel %vm443, %v3429, %v3645
      %v3918 = vsel %vm443, %v3431, %v3647
      %v3919 = vsel %vm443, %v3432, %v3649
      %v3920 = vsel %vm2430, %v3884, %v3777
      %v3921 = vsel %vm2430, %v3885, %v3779
      %v3922 = vsel %vm2430, %v3886, %v3781
      %v3923 = vsel %vm2430, %v3887, %v3783
      %v3924 = vsel %vm2430, %v3888, %v3785
      %v3925 = vsel %vm2430, %v3889, %v3787
      %v3926 = vsel %vm2430, %v3890, %v3789
      %v3927 = vsel %vm2430, %v3891, %v3791
      %v3928 = vsel %vm2430, %v3892, %v3793
      %v3929 = vsel %vm2430, %v3893, %v3795
      %v3930 = vsel %vm2430, %v3894, %v3797
      %v3931 = vsel %vm2430, %v3895, %v3799
      %v3932 = vsel %vm2430, %v3896, %v3801
      %v3933 = vsel %vm2430, %v3897, %v3803
      %v3934 = vsel %vm2430, %v3898, %v3805
      %v3935 = vsel %vm2430, %v3899, %v3807
      %v3936 = vsel %vm2430, %v3900, %v3809
      %v3937 = vsel %vm2430, %v3901, %v3811
      %v3938 = vsel %vm2430, %v3902, %v3813
      %v3939 = vsel %vm2430, %v3903, %v3815
      %v3940 = vsel %vm2430, %v3904, %v3817
      %v3941 = vsel %vm2430, %v3905, %v3819
      %v3942 = vsel %vm2430, %v3906, %v3821
      %v3943 = vsel %vm2430, %v3907, %v3823
      %v3944 = vsel %vm2430, %v3908, %v3825
      %v3945 = vsel %vm2430, %v3909, %v3827
      %v3946 = vsel %vm2430, %v3910, %v3829
      %v3947 = vsel %vm2430, %v3911, %v3831
      %v3948 = vsel %vm2430, %v3912, %v3833
      %v3949 = vsel %vm2430, %v3913, %v3835
      %v3950 = vsel %vm2430, %v3914, %v3837
      %v3951 = vsel %vm2430, %v3915, %v3839
      %v3952 = vsel %vm2430, %v3916, %v3841
      %v3953 = vsel %vm2430, %v3917, %v3843
      %v3954 = vsel %vm2430, %v3918, %v3845
      %v3955 = vsel %vm2430, %v3919, %v3847
      %3988 = vrot.lane.b32.xlu0 %v3922, 96
      %v3989 = vpop.permute.xlu0 %3988
      %3990 = vrot.lane.b32.xlu0 %v3923, 96
      %v3991 = vpop.permute.xlu0 %3990
      %3992 = vrot.lane.b32.xlu0 %v3924, 96
      %v3993 = vpop.permute.xlu0 %3992
      %3994 = vrot.lane.b32.xlu0 %v3925, 96
      %v3995 = vpop.permute.xlu0 %3994
      %3996 = vrot.lane.b32.xlu0 %v3926, 96
      %v3997 = vpop.permute.xlu0 %3996
      %3998 = vrot.lane.b32.xlu0 %v3927, 96
      %v3999 = vpop.permute.xlu0 %3998
      %4000 = vrot.lane.b32.xlu0 %v3928, 96
      %v4001 = vpop.permute.xlu0 %4000
      %4002 = vrot.lane.b32.xlu0 %v3929, 96
      %v4003 = vpop.permute.xlu0 %4002
      %4004 = vrot.lane.b32.xlu0 %v3930, 96
      %v4005 = vpop.permute.xlu0 %4004
      %4006 = vrot.lane.b32.xlu0 %v3931, 96
      %v4007 = vpop.permute.xlu0 %4006
      %4008 = vrot.lane.b32.xlu0 %v3932, 96
      %v4009 = vpop.permute.xlu0 %4008
      %4010 = vrot.lane.b32.xlu0 %v3933, 96
      %v4011 = vpop.permute.xlu0 %4010
      %4012 = vrot.lane.b32.xlu0 %v3934, 96
      %v4013 = vpop.permute.xlu0 %4012
      %4014 = vrot.lane.b32.xlu0 %v3935, 96
      %v4015 = vpop.permute.xlu0 %4014
      %4016 = vrot.lane.b32.xlu0 %v3936, 96
      %v4017 = vpop.permute.xlu0 %4016
      %4018 = vrot.lane.b32.xlu0 %v3937, 96
      %v4019 = vpop.permute.xlu0 %4018
      %4020 = vrot.lane.b32.xlu0 %v3938, 96
      %v4021 = vpop.permute.xlu0 %4020
      %4022 = vrot.lane.b32.xlu0 %v3939, 96
      %v4023 = vpop.permute.xlu0 %4022
      %4024 = vrot.lane.b32.xlu0 %v3940, 96
      %v4025 = vpop.permute.xlu0 %4024
      %4026 = vrot.lane.b32.xlu0 %v3941, 96
      %v4027 = vpop.permute.xlu0 %4026
      %4028 = vrot.lane.b32.xlu0 %v3942, 96
      %v4029 = vpop.permute.xlu0 %4028
      %4030 = vrot.lane.b32.xlu0 %v3943, 96
      %v4031 = vpop.permute.xlu0 %4030
      %4032 = vrot.lane.b32.xlu0 %v3944, 96
      %v4033 = vpop.permute.xlu0 %4032
      %4034 = vrot.lane.b32.xlu0 %v3945, 96
      %v4035 = vpop.permute.xlu0 %4034
      %4036 = vrot.lane.b32.xlu0 %v3946, 96
      %v4037 = vpop.permute.xlu0 %4036
      %4038 = vrot.lane.b32.xlu0 %v3947, 96
      %v4039 = vpop.permute.xlu0 %4038
      %4040 = vrot.lane.b32.xlu0 %v3948, 96
      %v4041 = vpop.permute.xlu0 %4040
      %4042 = vrot.lane.b32.xlu0 %v3949, 96
      %v4043 = vpop.permute.xlu0 %4042
      %4044 = vrot.lane.b32.xlu0 %v3950, 96
      %v4045 = vpop.permute.xlu0 %4044
      %4046 = vrot.lane.b32.xlu0 %v3951, 96
      %v4047 = vpop.permute.xlu0 %4046
      %4048 = vrot.lane.b32.xlu0 %v3952, 96
      %v4049 = vpop.permute.xlu0 %4048
      %4050 = vrot.lane.b32.xlu0 %v3953, 96
      %v4051 = vpop.permute.xlu0 %4050
      %4086 = vrot.lane.b32.xlu0 %v3924, 64
      %v4087 = vpop.permute.xlu0 %4086
      %4088 = vrot.lane.b32.xlu0 %v3925, 64
      %v4089 = vpop.permute.xlu0 %4088
      %4090 = vrot.lane.b32.xlu0 %v3926, 64
      %v4091 = vpop.permute.xlu0 %4090
      %4092 = vrot.lane.b32.xlu0 %v3927, 64
      %v4093 = vpop.permute.xlu0 %4092
      %4094 = vrot.lane.b32.xlu0 %v3928, 64
      %v4095 = vpop.permute.xlu0 %4094
      %4096 = vrot.lane.b32.xlu0 %v3929, 64
      %v4097 = vpop.permute.xlu0 %4096
      %4098 = vrot.lane.b32.xlu0 %v3930, 64
      %v4099 = vpop.permute.xlu0 %4098
      %4100 = vrot.lane.b32.xlu0 %v3931, 64
      %v4101 = vpop.permute.xlu0 %4100
      %4102 = vrot.lane.b32.xlu0 %v3932, 64
      %v4103 = vpop.permute.xlu0 %4102
      %4104 = vrot.lane.b32.xlu0 %v3933, 64
      %v4105 = vpop.permute.xlu0 %4104
      %4106 = vrot.lane.b32.xlu0 %v3934, 64
      %v4107 = vpop.permute.xlu0 %4106
      %4108 = vrot.lane.b32.xlu0 %v3935, 64
      %v4109 = vpop.permute.xlu0 %4108
      %4110 = vrot.lane.b32.xlu0 %v3936, 64
      %v4111 = vpop.permute.xlu0 %4110
      %4112 = vrot.lane.b32.xlu0 %v3937, 64
      %v4113 = vpop.permute.xlu0 %4112
      %4114 = vrot.lane.b32.xlu0 %v3938, 64
      %v4115 = vpop.permute.xlu0 %4114
      %4116 = vrot.lane.b32.xlu0 %v3939, 64
      %v4117 = vpop.permute.xlu0 %4116
      %4118 = vrot.lane.b32.xlu0 %v3940, 64
      %v4119 = vpop.permute.xlu0 %4118
      %4120 = vrot.lane.b32.xlu0 %v3941, 64
      %v4121 = vpop.permute.xlu0 %4120
      %4122 = vrot.lane.b32.xlu0 %v3942, 64
      %v4123 = vpop.permute.xlu0 %4122
      %4124 = vrot.lane.b32.xlu0 %v3943, 64
      %v4125 = vpop.permute.xlu0 %4124
      %4126 = vrot.lane.b32.xlu0 %v3944, 64
      %v4127 = vpop.permute.xlu0 %4126
      %4128 = vrot.lane.b32.xlu0 %v3945, 64
      %v4129 = vpop.permute.xlu0 %4128
      %4130 = vrot.lane.b32.xlu0 %v3946, 64
      %v4131 = vpop.permute.xlu0 %4130
      %4132 = vrot.lane.b32.xlu0 %v3947, 64
      %v4133 = vpop.permute.xlu0 %4132
      %4134 = vrot.lane.b32.xlu0 %v3948, 64
      %v4135 = vpop.permute.xlu0 %4134
      %4136 = vrot.lane.b32.xlu0 %v3949, 64
      %v4137 = vpop.permute.xlu0 %4136
      %4138 = vrot.lane.b32.xlu0 %v3950, 64
      %v4139 = vpop.permute.xlu0 %4138
      %4140 = vrot.lane.b32.xlu0 %v3951, 64
      %v4141 = vpop.permute.xlu0 %4140
      %4142 = vrot.lane.b32.xlu0 %v3952, 64
      %v4143 = vpop.permute.xlu0 %4142
      %4144 = vrot.lane.b32.xlu0 %v3953, 64
      %v4145 = vpop.permute.xlu0 %4144
      %4146 = vrot.lane.b32.xlu0 %v3954, 64
      %v4147 = vpop.permute.xlu0 %4146
      %4148 = vrot.lane.b32.xlu0 %v3955, 64
      %v4149 = vpop.permute.xlu0 %4148
      %v4182 = vsel %vm2693, %v3920, %v3989
      %v4183 = vsel %vm2693, %v3921, %v3991
      %v4184 = vsel %vm2693, %v3922, %v3993
      %v4185 = vsel %vm2693, %v3923, %v3995
      %v4186 = vsel %vm2693, %v3924, %v3997
      %v4187 = vsel %vm2693, %v3925, %v3999
      %v4188 = vsel %vm2693, %v3926, %v4001
      %v4189 = vsel %vm2693, %v3927, %v4003
      %v4190 = vsel %vm2693, %v3928, %v4005
      %v4191 = vsel %vm2693, %v3929, %v4007
      %v4192 = vsel %vm2693, %v3930, %v4009
      %v4193 = vsel %vm2693, %v3931, %v4011
      %v4194 = vsel %vm2693, %v3932, %v4013
      %v4195 = vsel %vm2693, %v3933, %v4015
      %v4196 = vsel %vm2693, %v3934, %v4017
      %v4197 = vsel %vm2693, %v3935, %v4019
      %v4198 = vsel %vm2693, %v3936, %v4021
      %v4199 = vsel %vm2693, %v3937, %v4023
      %v4200 = vsel %vm2693, %v3938, %v4025
      %v4201 = vsel %vm2693, %v3939, %v4027
      %v4202 = vsel %vm2693, %v3940, %v4029
      %v4203 = vsel %vm2693, %v3941, %v4031
      %v4204 = vsel %vm2693, %v3942, %v4033
      %v4205 = vsel %vm2693, %v3943, %v4035
      %v4206 = vsel %vm2693, %v3944, %v4037
      %v4207 = vsel %vm2693, %v3945, %v4039
      %v4208 = vsel %vm2693, %v3946, %v4041
      %v4209 = vsel %vm2693, %v3947, %v4043
      %v4210 = vsel %vm2693, %v3948, %v4045
      %v4211 = vsel %vm2693, %v3949, %v4047
      %v4212 = vsel %vm2693, %v3950, %v4049
      %v4213 = vsel %vm2693, %v3951, %v4051
      %v4214 = vsel %vm2430, %v3989, %v4087
      %v4215 = vsel %vm2430, %v3991, %v4089
      %v4216 = vsel %vm2430, %v3993, %v4091
      %v4217 = vsel %vm2430, %v3995, %v4093
      %v4218 = vsel %vm2430, %v3997, %v4095
      %v4219 = vsel %vm2430, %v3999, %v4097
      %v4220 = vsel %vm2430, %v4001, %v4099
      %v4221 = vsel %vm2430, %v4003, %v4101
      %v4222 = vsel %vm2430, %v4005, %v4103
      %v4223 = vsel %vm2430, %v4007, %v4105
      %v4224 = vsel %vm2430, %v4009, %v4107
      %v4225 = vsel %vm2430, %v4011, %v4109
      %v4226 = vsel %vm2430, %v4013, %v4111
      %v4227 = vsel %vm2430, %v4015, %v4113
      %v4228 = vsel %vm2430, %v4017, %v4115
      %v4229 = vsel %vm2430, %v4019, %v4117
      %v4230 = vsel %vm2430, %v4021, %v4119
      %v4231 = vsel %vm2430, %v4023, %v4121
      %v4232 = vsel %vm2430, %v4025, %v4123
      %v4233 = vsel %vm2430, %v4027, %v4125
      %v4234 = vsel %vm2430, %v4029, %v4127
      %v4235 = vsel %vm2430, %v4031, %v4129
      %v4236 = vsel %vm2430, %v4033, %v4131
      %v4237 = vsel %vm2430, %v4035, %v4133
      %v4238 = vsel %vm2430, %v4037, %v4135
      %v4239 = vsel %vm2430, %v4039, %v4137
      %v4240 = vsel %vm2430, %v4041, %v4139
      %v4241 = vsel %vm2430, %v4043, %v4141
      %v4242 = vsel %vm2430, %v4045, %v4143
      %v4243 = vsel %vm2430, %v4047, %v4145
      %v4244 = vsel %vm2430, %v4049, %v4147
      %v4245 = vsel %vm2430, %v4051, %v4149
      %v4246 = vld [vmem:[%s3] sm:$0xff]
      %v4247 = vld [vmem:[%s3 + $0x8] sm:$0xff]
      %v4248 = vld [vmem:[%s3 + $0x10] sm:$0xff]
      %v4249 = vld [vmem:[%s3 + $0x18] sm:$0xff]
      %v4250 = vld [vmem:[%s3 + $0x20] sm:$0xff]
      %v4251 = vld [vmem:[%s3 + $0x28] sm:$0xff]
      %v4252 = vld [vmem:[%s3 + $0x30] sm:$0xff]
      %v4253 = vld [vmem:[%s3 + $0x38] sm:$0xff]
      %v4254 = vld [vmem:[%s3 + $0x40] sm:$0xff]
      %v4255 = vld [vmem:[%s3 + $0x48] sm:$0xff]
      %v4256 = vld [vmem:[%s3 + $0x50] sm:$0xff]
      %v4257 = vld [vmem:[%s3 + $0x58] sm:$0xff]
      %v4258 = vld [vmem:[%s3 + $0x60] sm:$0xff]
      %v4259 = vld [vmem:[%s3 + $0x68] sm:$0xff]
      %v4260 = vld [vmem:[%s3 + $0x70] sm:$0xff]
      %v4261 = vld [vmem:[%s3 + $0x78] sm:$0xff]
      %v4262 = vld [vmem:[%s3 + $0x80] sm:$0xff]
      %v4263 = vld [vmem:[%s3 + $0x88] sm:$0xff]
      %v4264 = vld [vmem:[%s3 + $0x90] sm:$0xff]
      %v4265 = vld [vmem:[%s3 + $0x98] sm:$0xff]
      %v4266 = vld [vmem:[%s3 + $0xa0] sm:$0xff]
      %v4267 = vld [vmem:[%s3 + $0xa8] sm:$0xff]
      %v4268 = vld [vmem:[%s3 + $0xb0] sm:$0xff]
      %v4269 = vld [vmem:[%s3 + $0xb8] sm:$0xff]
      %v4270 = vld [vmem:[%s3 + $0xc0] sm:$0xff]
      %v4271 = vld [vmem:[%s3 + $0xc8] sm:$0xff]
      %v4272 = vld [vmem:[%s3 + $0xd0] sm:$0xff]
      %v4273 = vld [vmem:[%s3 + $0xd8] sm:$0xff]
      %v4274 = vld [vmem:[%s3 + $0xe0] sm:$0xff]
      %v4275 = vld [vmem:[%s3 + $0xe8] sm:$0xff]
      %v4276 = vld [vmem:[%s3 + $0xf0] sm:$0xff]
      %v4277 = vld [vmem:[%s3 + $0xf8] sm:$0xff]
      %v4278 = vld [vmem:[%s3 + $0x100] sm:$0xff]
      %v4279 = vld [vmem:[%s3 + $0x108] sm:$0xff]
      %v4280 = vld [vmem:[%s3 + $0x110] sm:$0xff]
      %v4281 = vld [vmem:[%s3 + $0x118] sm:$0xff]
      %v4282 = vld [vmem:[%s8] sm:$0x1]
      %v4284 = vlaneseq
      %v4285 = vshrl.u32 %v4284, 7
      %v4286 = vsub.s32 0, %v4285
      %v4287 = vrot.slane %v4282, %v4286
      %v4289 = vsel %vm443, %v4087, 0
      %v4291 = vsel %vm443, %v4089, 0
      %v4293 = vsel %vm443, %v4091, 0
      %v4295 = vsel %vm443, %v4093, 0
      %v4297 = vsel %vm443, %v4095, 0
      %v4299 = vsel %vm443, %v4097, 0
      %v4301 = vsel %vm443, %v4099, 0
      %v4303 = vsel %vm443, %v4101, 0
      %v4305 = vsel %vm443, %v4103, 0
      %v4307 = vsel %vm443, %v4105, 0
      %v4309 = vsel %vm443, %v4107, 0
      %v4311 = vsel %vm443, %v4109, 0
      %v4313 = vsel %vm443, %v4111, 0
      %v4315 = vsel %vm443, %v4113, 0
      %v4317 = vsel %vm443, %v4115, 0
      %v4319 = vsel %vm443, %v4117, 0
      %v4321 = vsel %vm443, %v4119, 0
      %v4323 = vsel %vm443, %v4121, 0
      %v4325 = vsel %vm443, %v4123, 0
      %v4327 = vsel %vm443, %v4125, 0
      %v4329 = vsel %vm443, %v4127, 0
      %v4331 = vsel %vm443, %v4129, 0
      %v4333 = vsel %vm443, %v4131, 0
      %v4335 = vsel %vm443, %v4133, 0
      %v4337 = vsel %vm443, %v4135, 0
      %v4339 = vsel %vm443, %v4137, 0
      %v4341 = vsel %vm443, %v4139, 0
      %v4343 = vsel %vm443, %v4141, 0
      %v4345 = vsel %vm443, %v4143, 0
      %v4347 = vsel %vm443, %v4145, 0
      %v4349 = vsel %vm443, %v4147, 0
      %v4351 = vsel %vm443, %v4149, 0
      %4353 = vmatprep.subr.mxu0 0.0
      %4354 = vmatpush1.msra.mxu0 %v4246
      %4355 = vmatprep.subr.mxu0 0.0
      %4356 = vmatpush1.msra.mxu0 %v4247
      %4357 = vmatprep.subr.mxu0 0.0
      %4358 = vmatpush1.msra.mxu0 %v4248
      %4359 = vmatprep.subr.mxu0 0.0
      %4360 = vmatpush1.msra.mxu0 %v4249
      %4361 = vmatprep.subr.mxu0 0.0
      %4362 = vmatpush1.msra.mxu0 %v4250
      %4363 = vmatprep.subr.mxu0 0.0
      %4364 = vmatpush1.msra.mxu0 %v4251
      %4365 = vmatprep.subr.mxu0 0.0
      %4366 = vmatpush1.msra.mxu0 %v4252
      %4367 = vmatprep.subr.mxu0 0.0
      %4368 = vmatpush1.msra.mxu0 %v4253
      %4369 = vmatprep.subr.mxu0 0.0
      %4370 = vmatpush1.msra.mxu0 %v4254
      %4371 = vmatprep.subr.mxu0 0.0
      %4372 = vmatpush1.msra.mxu0 %v4255
      %4373 = vmatprep.subr.mxu0 0.0
      %4374 = vmatpush1.msra.mxu0 %v4256
      %4375 = vmatprep.subr.mxu0 0.0
      %4376 = vmatpush1.msra.mxu0 %v4257
      %4377 = vmatprep.subr.mxu0 0.0
      %4378 = vmatpush1.msra.mxu0 %v4258
      %4379 = vmatprep.subr.mxu0 0.0
      %4380 = vmatpush1.msra.mxu0 %v4259
      %4381 = vmatprep.subr.mxu0 0.0
      %4382 = vmatpush1.msra.mxu0 %v4260
      %4383 = vmatprep.subr.mxu0 0.0
      %4384 = vmatpush1.msra.mxu0 %v4261
      %4385 = vmatprep.subr.mxu0 0.0
      %4386 = vmatpush1.msra.mxu0 %v4262
      %4387 = vmatprep.subr.mxu0 0.0
      %4388 = vmatpush1.msra.mxu0 %v4263
      %4389 = vmatprep.subr.mxu0 0.0
      %4390 = vmatpush1.msra.mxu0 %v4264
      %4391 = vmatprep.subr.mxu0 0.0
      %4392 = vmatpush1.msra.mxu0 %v4265
      %4393 = vmatprep.subr.mxu0 0.0
      %4394 = vmatpush1.msra.mxu0 %v4266
      %4395 = vmatprep.subr.mxu0 0.0
      %4396 = vmatpush1.msra.mxu0 %v4267
      %4397 = vmatprep.subr.mxu0 0.0
      %4398 = vmatpush1.msra.mxu0 %v4268
      %4399 = vmatprep.subr.mxu0 0.0
      %4400 = vmatpush1.msra.mxu0 %v4269
      %4401 = vmatprep.subr.mxu0 0.0
      %4402 = vmatpush1.msra.mxu0 %v4270
      %4403 = vmatprep.subr.mxu0 0.0
      %4404 = vmatpush1.msra.mxu0 %v4271
      %4405 = vmatprep.subr.mxu0 0.0
      %4406 = vmatpush1.msra.mxu0 %v4272
      %4407 = vmatprep.subr.mxu0 0.0
      %4408 = vmatpush1.msra.mxu0 %v4273
      %4409 = vmatprep.subr.mxu0 0.0
      %4410 = vmatpush1.msra.mxu0 %v4274
      %4411 = vmatprep.subr.mxu0 0.0
      %4412 = vmatpush1.msra.mxu0 %v4275
      %4413 = vmatprep.subr.mxu0 0.0
      %4414 = vmatpush1.msra.mxu0 %v4276
      %4415 = vmatprep.subr.mxu0 0.0
      %4416 = vmatpush1.msra.mxu0 %v4277
      %4417 = vmatprep.mubr.f32.mxu0 %v4214
      %4418 = vmatmul.mubr.f32.gmra.mrb[0].mxu0 %v4182
      %v4419 = vpop.f32.mrb[0].mxu0
      %v4420 = vadd.f32 %v4287, %v4419
      %v4421 = vpop.f32.mrb[0].mxu0
      %4422 = vmatprep.mubr.f32.mxu0 %v4215
      %4423 = vmatmul.mubr.f32.gmra.mrb[0].mxu0 %v4183
      %v4424 = vpop.f32.mrb[0].mxu0
      %v4425 = vadd.f32 %v4287, %v4424
      %v4426 = vpop.f32.mrb[0].mxu0
      %4427 = vmatprep.mubr.f32.mxu0 %v4216
      %4428 = vmatmul.mubr.f32.gmra.mrb[0].mxu0 %v4184
      %v4429 = vpop.f32.mrb[0].mxu0
      %v4430 = vadd.f32 %v4287, %v4429
      %v4431 = vpop.f32.mrb[0].mxu0
      %4432 = vmatprep.mubr.f32.mxu0 %v4217
      %4433 = vmatmul.mubr.f32.gmra.mrb[0].mxu0 %v4185
      %v4434 = vpop.f32.mrb[0].mxu0
      %v4435 = vadd.f32 %v4287, %v4434
      %v4436 = vpop.f32.mrb[0].mxu0
      %4437 = vmatprep.mubr.f32.mxu0 %v4218
      %4438 = vmatmul.mubr.f32.gmra.mrb[0].mxu0 %v4186
      %v4439 = vpop.f32.mrb[0].mxu0
      %v4440 = vadd.f32 %v4287, %v4439
      %v4441 = vpop.f32.mrb[0].mxu0
      %4442 = vmatprep.mubr.f32.mxu0 %v4219
      %4443 = vmatmul.mubr.f32.gmra.mrb[0].mxu0 %v4187
      %v4444 = vpop.f32.mrb[0].mxu0
      %v4445 = vadd.f32 %v4287, %v4444
      %v4446 = vpop.f32.mrb[0].mxu0
      %4447 = vmatprep.mubr.f32.mxu0 %v4220
      %4448 = vmatmul.mubr.f32.gmra.mrb[0].mxu0 %v4188
      %v4449 = vpop.f32.mrb[0].mxu0
      %v4450 = vadd.f32 %v4287, %v4449
      %v4451 = vpop.f32.mrb[0].mxu0
      %4452 = vmatprep.mubr.f32.mxu0 %v4221
      %4453 = vmatmul.mubr.f32.gmra.mrb[0].mxu0 %v4189
      %v4454 = vpop.f32.mrb[0].mxu0
      %v4455 = vadd.f32 %v4287, %v4454
      %v4456 = vpop.f32.mrb[0].mxu0
      %4457 = vmatprep.mubr.f32.mxu0 %v4222
      %4458 = vmatmul.mubr.f32.gmra.mrb[0].mxu0 %v4190
      %v4459 = vpop.f32.mrb[0].mxu0
      %v4460 = vadd.f32 %v4287, %v4459
      %v4461 = vpop.f32.mrb[0].mxu0
      %4462 = vmatprep.mubr.f32.mxu0 %v4223
      %4463 = vmatmul.mubr.f32.gmra.mrb[0].mxu0 %v4191
      %v4464 = vpop.f32.mrb[0].mxu0
      %v4465 = vadd.f32 %v4287, %v4464
      %v4466 = vpop.f32.mrb[0].mxu0
      %4467 = vmatprep.mubr.f32.mxu0 %v4224
      %4468 = vmatmul.mubr.f32.gmra.mrb[0].mxu0 %v4192
      %v4469 = vpop.f32.mrb[0].mxu0
      %v4470 = vadd.f32 %v4287, %v4469
      %v4471 = vpop.f32.mrb[0].mxu0
      %4472 = vmatprep.mubr.f32.mxu0 %v4225
      %4473 = vmatmul.mubr.f32.gmra.mrb[0].mxu0 %v4193
      %v4474 = vpop.f32.mrb[0].mxu0
      %v4475 = vadd.f32 %v4287, %v4474
      %v4476 = vpop.f32.mrb[0].mxu0
      %4477 = vmatprep.mubr.f32.mxu0 %v4226
      %4478 = vmatmul.mubr.f32.gmra.mrb[0].mxu0 %v4194
      %v4479 = vpop.f32.mrb[0].mxu0
      %v4480 = vadd.f32 %v4287, %v4479
      %v4481 = vpop.f32.mrb[0].mxu0
      %4482 = vmatprep.mubr.f32.mxu0 %v4227
      %4483 = vmatmul.mubr.f32.gmra.mrb[0].mxu0 %v4195
      %v4484 = vpop.f32.mrb[0].mxu0
      %v4485 = vadd.f32 %v4287, %v4484
      %v4486 = vpop.f32.mrb[0].mxu0
      %4487 = vmatprep.mubr.f32.mxu0 %v4228
      %4488 = vmatmul.mubr.f32.gmra.mrb[0].mxu0 %v4196
      %v4489 = vpop.f32.mrb[0].mxu0
      %v4490 = vadd.f32 %v4287, %v4489
      %v4491 = vpop.f32.mrb[0].mxu0
      %4492 = vmatprep.mubr.f32.mxu0 %v4229
      %4493 = vmatmul.mubr.f32.gmra.mrb[0].mxu0 %v4197
      %v4494 = vpop.f32.mrb[0].mxu0
      %v4495 = vadd.f32 %v4287, %v4494
      %v4496 = vpop.f32.mrb[0].mxu0
      %4497 = vmatprep.mubr.f32.mxu0 %v4230
      %4498 = vmatmul.mubr.f32.gmra.mrb[0].mxu0 %v4198
      %v4499 = vpop.f32.mrb[0].mxu0
      %v4500 = vadd.f32 %v4287, %v4499
      %v4501 = vpop.f32.mrb[0].mxu0
      %4502 = vmatprep.mubr.f32.mxu0 %v4231
      %4503 = vmatmul.mubr.f32.gmra.mrb[0].mxu0 %v4199
      %v4504 = vpop.f32.mrb[0].mxu0
      %v4505 = vadd.f32 %v4287, %v4504
      %v4506 = vpop.f32.mrb[0].mxu0
      %4507 = vmatprep.mubr.f32.mxu0 %v4232
      %4508 = vmatmul.mubr.f32.gmra.mrb[0].mxu0 %v4200
      %v4509 = vpop.f32.mrb[0].mxu0
      %v4510 = vadd.f32 %v4287, %v4509
      %v4511 = vpop.f32.mrb[0].mxu0
      %4512 = vmatprep.mubr.f32.mxu0 %v4233
      %4513 = vmatmul.mubr.f32.gmra.mrb[0].mxu0 %v4201
      %v4514 = vpop.f32.mrb[0].mxu0
      %v4515 = vadd.f32 %v4287, %v4514
      %v4516 = vpop.f32.mrb[0].mxu0
      %4517 = vmatprep.mubr.f32.mxu0 %v4234
      %4518 = vmatmul.mubr.f32.gmra.mrb[0].mxu0 %v4202
      %v4519 = vpop.f32.mrb[0].mxu0
      %v4520 = vadd.f32 %v4287, %v4519
      %v4521 = vpop.f32.mrb[0].mxu0
      %4522 = vmatprep.mubr.f32.mxu0 %v4235
      %4523 = vmatmul.mubr.f32.gmra.mrb[0].mxu0 %v4203
      %v4524 = vpop.f32.mrb[0].mxu0
      %v4525 = vadd.f32 %v4287, %v4524
      %v4526 = vpop.f32.mrb[0].mxu0
      %4527 = vmatprep.mubr.f32.mxu0 %v4236
      %4528 = vmatmul.mubr.f32.gmra.mrb[0].mxu0 %v4204
      %v4529 = vpop.f32.mrb[0].mxu0
      %v4530 = vadd.f32 %v4287, %v4529
      %v4531 = vpop.f32.mrb[0].mxu0
      %4532 = vmatprep.mubr.f32.mxu0 %v4237
      %4533 = vmatmul.mubr.f32.gmra.mrb[0].mxu0 %v4205
      %v4534 = vpop.f32.mrb[0].mxu0
      %v4535 = vadd.f32 %v4287, %v4534
      %v4536 = vpop.f32.mrb[0].mxu0
      %4537 = vmatprep.mubr.f32.mxu0 %v4238
      %4538 = vmatmul.mubr.f32.gmra.mrb[0].mxu0 %v4206
      %v4539 = vpop.f32.mrb[0].mxu0
      %v4540 = vadd.f32 %v4287, %v4539
      %v4541 = vpop.f32.mrb[0].mxu0
      %4542 = vmatprep.mubr.f32.mxu0 %v4239
      %4543 = vmatmul.mubr.f32.gmra.mrb[0].mxu0 %v4207
      %v4544 = vpop.f32.mrb[0].mxu0
      %v4545 = vadd.f32 %v4287, %v4544
      %v4546 = vpop.f32.mrb[0].mxu0
      %4547 = vmatprep.mubr.f32.mxu0 %v4240
      %4548 = vmatmul.mubr.f32.gmra.mrb[0].mxu0 %v4208
      %v4549 = vpop.f32.mrb[0].mxu0
      %v4550 = vadd.f32 %v4287, %v4549
      %v4551 = vpop.f32.mrb[0].mxu0
      %4552 = vmatprep.mubr.f32.mxu0 %v4241
      %4553 = vmatmul.mubr.f32.gmra.mrb[0].mxu0 %v4209
      %v4554 = vpop.f32.mrb[0].mxu0
      %v4555 = vadd.f32 %v4287, %v4554
      %v4556 = vpop.f32.mrb[0].mxu0
      %4557 = vmatprep.mubr.f32.mxu0 %v4242
      %4558 = vmatmul.mubr.f32.gmra.mrb[0].mxu0 %v4210
      %v4559 = vpop.f32.mrb[0].mxu0
      %v4560 = vadd.f32 %v4287, %v4559
      %v4561 = vpop.f32.mrb[0].mxu0
      %4562 = vmatprep.mubr.f32.mxu0 %v4243
      %4563 = vmatmul.mubr.f32.gmra.mrb[0].mxu0 %v4211
      %v4564 = vpop.f32.mrb[0].mxu0
      %v4565 = vadd.f32 %v4287, %v4564
      %v4566 = vpop.f32.mrb[0].mxu0
      %4567 = vmatprep.mubr.f32.mxu0 %v4244
      %4568 = vmatmul.mubr.f32.gmra.mrb[0].mxu0 %v4212
      %v4569 = vpop.f32.mrb[0].mxu0
      %v4570 = vadd.f32 %v4287, %v4569
      %v4571 = vpop.f32.mrb[0].mxu0
      %4572 = vmatprep.mubr.f32.mxu0 %v4245
      %4573 = vmatmul.mubr.f32.gmra.mrb[0].mxu0 %v4213
      %v4574 = vpop.f32.mrb[0].mxu0
      %v4575 = vadd.f32 %v4287, %v4574
      %v4576 = vpop.f32.mrb[0].mxu0
      %4577 = vdwg.mxu0
      %4578 = vmatprep.subr.mxu0 0.0
      %4579 = vmatpush1.msra.mxu0 %v4278
      %4580 = vmatprep.subr.mxu0 0.0
      %4581 = vmatpush1.msra.mxu0 %v4279
      %4582 = vmatprep.subr.mxu0 0.0
      %4583 = vmatpush1.msra.mxu0 %v4280
      %4584 = vmatprep.subr.mxu0 0.0
      %4585 = vmatpush1.msra.mxu0 %v4281
      %4586 = vmatprep.subr.mxu0 0.0
      %4587 = vmatpush1.msra.mxu0 0.0
      %4588 = vmatprep.subr.mxu0 0.0
      %4589 = vmatpush1.msra.mxu0 0.0
      %4590 = vmatprep.subr.mxu0 0.0
      %4591 = vmatpush1.msra.mxu0 0.0
      %4592 = vmatprep.subr.mxu0 0.0
      %4593 = vmatpush1.msra.mxu0 0.0
      %4594 = vmatprep.subr.mxu0 0.0
      %4595 = vmatpush1.msra.mxu0 0.0
      %4596 = vmatprep.subr.mxu0 0.0
      %4597 = vmatpush1.msra.mxu0 0.0
      %4598 = vmatprep.subr.mxu0 0.0
      %4599 = vmatpush1.msra.mxu0 0.0
      %4600 = vmatprep.subr.mxu0 0.0
      %4601 = vmatpush1.msra.mxu0 0.0
      %4602 = vmatprep.subr.mxu0 0.0
      %4603 = vmatpush1.msra.mxu0 0.0
      %4604 = vmatprep.subr.mxu0 0.0
      %4605 = vmatpush1.msra.mxu0 0.0
      %4606 = vmatprep.subr.mxu0 0.0
      %4607 = vmatpush1.msra.mxu0 0.0
      %4608 = vmatprep.subr.mxu0 0.0
      %4609 = vmatpush1.msra.mxu0 0.0
      %4610 = vmatprep.subr.mxu0 0.0
      %4611 = vmatpush1.msra.mxu0 0.0
      %4612 = vmatprep.subr.mxu0 0.0
      %4613 = vmatpush1.msra.mxu0 0.0
      %4614 = vmatprep.subr.mxu0 0.0
      %4615 = vmatpush1.msra.mxu0 0.0
      %4616 = vmatprep.subr.mxu0 0.0
      %4617 = vmatpush1.msra.mxu0 0.0
      %4618 = vmatprep.subr.mxu0 0.0
      %4619 = vmatpush1.msra.mxu0 0.0
      %4620 = vmatprep.subr.mxu0 0.0
      %4621 = vmatpush1.msra.mxu0 0.0
      %4622 = vmatprep.subr.mxu0 0.0
      %4623 = vmatpush1.msra.mxu0 0.0
      %4624 = vmatprep.subr.mxu0 0.0
      %4625 = vmatpush1.msra.mxu0 0.0
      %4626 = vmatprep.subr.mxu0 0.0
      %4627 = vmatpush1.msra.mxu0 0.0
      %4628 = vmatprep.subr.mxu0 0.0
      %4629 = vmatpush1.msra.mxu0 0.0
      %4630 = vmatprep.subr.mxu0 0.0
      %4631 = vmatpush1.msra.mxu0 0.0
      %4632 = vmatprep.subr.mxu0 0.0
      %4633 = vmatpush1.msra.mxu0 0.0
      %4634 = vmatprep.subr.mxu0 0.0
      %4635 = vmatpush1.msra.mxu0 0.0
      %4636 = vmatprep.subr.mxu0 0.0
      %4637 = vmatpush1.msra.mxu0 0.0
      %4638 = vmatprep.subr.mxu0 0.0
      %4639 = vmatpush1.msra.mxu0 0.0
      %4640 = vmatprep.subr.mxu0 0.0
      %4641 = vmatpush1.msra.mxu0 0.0
      %4642 = vmatprep.mubr.f32.mxu0 0.0
      %4643 = vmatmul.mubr.f32.gmra.mrb[0].mxu0 %v4289
      %v4644 = vpop.f32.mrb[0].mxu0
      %v4645 = vadd.f32 %v4420, %v4644
      %v4646 = vpop.f32.mrb[0].mxu0
      %4647 = vmatprep.mubr.f32.mxu0 0.0
      %4648 = vmatmul.mubr.f32.gmra.mrb[0].mxu0 %v4291
      %v4649 = vpop.f32.mrb[0].mxu0
      %v4650 = vadd.f32 %v4425, %v4649
      %v4651 = vpop.f32.mrb[0].mxu0
      %4652 = vmatprep.mubr.f32.mxu0 0.0
      %4653 = vmatmul.mubr.f32.gmra.mrb[0].mxu0 %v4293
      %v4654 = vpop.f32.mrb[0].mxu0
      %v4655 = vadd.f32 %v4430, %v4654
      %v4656 = vpop.f32.mrb[0].mxu0
      %4657 = vmatprep.mubr.f32.mxu0 0.0
      %4658 = vmatmul.mubr.f32.gmra.mrb[0].mxu0 %v4295
      %v4659 = vpop.f32.mrb[0].mxu0
      %v4660 = vadd.f32 %v4435, %v4659
      %v4661 = vpop.f32.mrb[0].mxu0
      %4662 = vmatprep.mubr.f32.mxu0 0.0
      %4663 = vmatmul.mubr.f32.gmra.mrb[0].mxu0 %v4297
      %v4664 = vpop.f32.mrb[0].mxu0
      %v4665 = vadd.f32 %v4440, %v4664
      %v4666 = vpop.f32.mrb[0].mxu0
      %4667 = vmatprep.mubr.f32.mxu0 0.0
      %4668 = vmatmul.mubr.f32.gmra.mrb[0].mxu0 %v4299
      %v4669 = vpop.f32.mrb[0].mxu0
      %v4670 = vadd.f32 %v4445, %v4669
      %v4671 = vpop.f32.mrb[0].mxu0
      %4672 = vmatprep.mubr.f32.mxu0 0.0
      %4673 = vmatmul.mubr.f32.gmra.mrb[0].mxu0 %v4301
      %v4674 = vpop.f32.mrb[0].mxu0
      %v4675 = vadd.f32 %v4450, %v4674
      %v4676 = vpop.f32.mrb[0].mxu0
      %4677 = vmatprep.mubr.f32.mxu0 0.0
      %4678 = vmatmul.mubr.f32.gmra.mrb[0].mxu0 %v4303
      %v4679 = vpop.f32.mrb[0].mxu0
      %v4680 = vadd.f32 %v4455, %v4679
      %v4681 = vpop.f32.mrb[0].mxu0
      %4682 = vmatprep.mubr.f32.mxu0 0.0
      %4683 = vmatmul.mubr.f32.gmra.mrb[0].mxu0 %v4305
      %v4684 = vpop.f32.mrb[0].mxu0
      %v4685 = vadd.f32 %v4460, %v4684
      %v4686 = vpop.f32.mrb[0].mxu0
      %4687 = vmatprep.mubr.f32.mxu0 0.0
      %4688 = vmatmul.mubr.f32.gmra.mrb[0].mxu0 %v4307
      %v4689 = vpop.f32.mrb[0].mxu0
      %v4690 = vadd.f32 %v4465, %v4689
      %v4691 = vpop.f32.mrb[0].mxu0
      %4692 = vmatprep.mubr.f32.mxu0 0.0
      %4693 = vmatmul.mubr.f32.gmra.mrb[0].mxu0 %v4309
      %v4694 = vpop.f32.mrb[0].mxu0
      %v4695 = vadd.f32 %v4470, %v4694
      %v4696 = vpop.f32.mrb[0].mxu0
      %4697 = vmatprep.mubr.f32.mxu0 0.0
      %4698 = vmatmul.mubr.f32.gmra.mrb[0].mxu0 %v4311
      %v4699 = vpop.f32.mrb[0].mxu0
      %v4700 = vadd.f32 %v4475, %v4699
      %v4701 = vpop.f32.mrb[0].mxu0
      %4702 = vmatprep.mubr.f32.mxu0 0.0
      %4703 = vmatmul.mubr.f32.gmra.mrb[0].mxu0 %v4313
      %v4704 = vpop.f32.mrb[0].mxu0
      %v4705 = vadd.f32 %v4480, %v4704
      %v4706 = vpop.f32.mrb[0].mxu0
      %4707 = vmatprep.mubr.f32.mxu0 0.0
      %4708 = vmatmul.mubr.f32.gmra.mrb[0].mxu0 %v4315
      %v4709 = vpop.f32.mrb[0].mxu0
      %v4710 = vadd.f32 %v4485, %v4709
      %v4711 = vpop.f32.mrb[0].mxu0
      %4712 = vmatprep.mubr.f32.mxu0 0.0
      %4713 = vmatmul.mubr.f32.gmra.mrb[0].mxu0 %v4317
      %v4714 = vpop.f32.mrb[0].mxu0
      %v4715 = vadd.f32 %v4490, %v4714
      %v4716 = vpop.f32.mrb[0].mxu0
      %4717 = vmatprep.mubr.f32.mxu0 0.0
      %4718 = vmatmul.mubr.f32.gmra.mrb[0].mxu0 %v4319
      %v4719 = vpop.f32.mrb[0].mxu0
      %v4720 = vadd.f32 %v4495, %v4719
      %v4721 = vpop.f32.mrb[0].mxu0
      %4722 = vmatprep.mubr.f32.mxu0 0.0
      %4723 = vmatmul.mubr.f32.gmra.mrb[0].mxu0 %v4321
      %v4724 = vpop.f32.mrb[0].mxu0
      %v4725 = vadd.f32 %v4500, %v4724
      %v4726 = vpop.f32.mrb[0].mxu0
      %4727 = vmatprep.mubr.f32.mxu0 0.0
      %4728 = vmatmul.mubr.f32.gmra.mrb[0].mxu0 %v4323
      %v4729 = vpop.f32.mrb[0].mxu0
      %v4730 = vadd.f32 %v4505, %v4729
      %v4731 = vpop.f32.mrb[0].mxu0
      %4732 = vmatprep.mubr.f32.mxu0 0.0
      %4733 = vmatmul.mubr.f32.gmra.mrb[0].mxu0 %v4325
      %v4734 = vpop.f32.mrb[0].mxu0
      %v4735 = vadd.f32 %v4510, %v4734
      %v4736 = vpop.f32.mrb[0].mxu0
      %4737 = vmatprep.mubr.f32.mxu0 0.0
      %4738 = vmatmul.mubr.f32.gmra.mrb[0].mxu0 %v4327
      %v4739 = vpop.f32.mrb[0].mxu0
      %v4740 = vadd.f32 %v4515, %v4739
      %v4741 = vpop.f32.mrb[0].mxu0
      %4742 = vmatprep.mubr.f32.mxu0 0.0
      %4743 = vmatmul.mubr.f32.gmra.mrb[0].mxu0 %v4329
      %v4744 = vpop.f32.mrb[0].mxu0
      %v4745 = vadd.f32 %v4520, %v4744
      %v4746 = vpop.f32.mrb[0].mxu0
      %4747 = vmatprep.mubr.f32.mxu0 0.0
      %4748 = vmatmul.mubr.f32.gmra.mrb[0].mxu0 %v4331
      %v4749 = vpop.f32.mrb[0].mxu0
      %v4750 = vadd.f32 %v4525, %v4749
      %v4751 = vpop.f32.mrb[0].mxu0
      %4752 = vmatprep.mubr.f32.mxu0 0.0
      %4753 = vmatmul.mubr.f32.gmra.mrb[0].mxu0 %v4333
      %v4754 = vpop.f32.mrb[0].mxu0
      %v4755 = vadd.f32 %v4530, %v4754
      %v4756 = vpop.f32.mrb[0].mxu0
      %4757 = vmatprep.mubr.f32.mxu0 0.0
      %4758 = vmatmul.mubr.f32.gmra.mrb[0].mxu0 %v4335
      %v4759 = vpop.f32.mrb[0].mxu0
      %v4760 = vadd.f32 %v4535, %v4759
      %v4761 = vpop.f32.mrb[0].mxu0
      %4762 = vmatprep.mubr.f32.mxu0 0.0
      %4763 = vmatmul.mubr.f32.gmra.mrb[0].mxu0 %v4337
      %v4764 = vpop.f32.mrb[0].mxu0
      %v4765 = vadd.f32 %v4540, %v4764
      %v4766 = vpop.f32.mrb[0].mxu0
      %4767 = vmatprep.mubr.f32.mxu0 0.0
      %4768 = vmatmul.mubr.f32.gmra.mrb[0].mxu0 %v4339
      %v4769 = vpop.f32.mrb[0].mxu0
      %v4770 = vadd.f32 %v4545, %v4769
      %v4771 = vpop.f32.mrb[0].mxu0
      %4772 = vmatprep.mubr.f32.mxu0 0.0
      %4773 = vmatmul.mubr.f32.gmra.mrb[0].mxu0 %v4341
      %v4774 = vpop.f32.mrb[0].mxu0
      %v4775 = vadd.f32 %v4550, %v4774
      %v4776 = vpop.f32.mrb[0].mxu0
      %4777 = vmatprep.mubr.f32.mxu0 0.0
      %4778 = vmatmul.mubr.f32.gmra.mrb[0].mxu0 %v4343
      %v4779 = vpop.f32.mrb[0].mxu0
      %v4780 = vadd.f32 %v4555, %v4779
      %v4781 = vpop.f32.mrb[0].mxu0
      %4782 = vmatprep.mubr.f32.mxu0 0.0
      %4783 = vmatmul.mubr.f32.gmra.mrb[0].mxu0 %v4345
      %v4784 = vpop.f32.mrb[0].mxu0
      %v4785 = vadd.f32 %v4560, %v4784
      %v4786 = vpop.f32.mrb[0].mxu0
      %4787 = vmatprep.mubr.f32.mxu0 0.0
      %4788 = vmatmul.mubr.f32.gmra.mrb[0].mxu0 %v4347
      %v4789 = vpop.f32.mrb[0].mxu0
      %v4790 = vadd.f32 %v4565, %v4789
      %v4791 = vpop.f32.mrb[0].mxu0
      %4792 = vmatprep.mubr.f32.mxu0 0.0
      %4793 = vmatmul.mubr.f32.gmra.mrb[0].mxu0 %v4349
      %v4794 = vpop.f32.mrb[0].mxu0
      %v4795 = vadd.f32 %v4570, %v4794
      %v4796 = vpop.f32.mrb[0].mxu0
      %4797 = vmatprep.mubr.f32.mxu0 0.0
      %4798 = vmatmul.mubr.f32.gmra.mrb[0].mxu0 %v4351
      %v4799 = vpop.f32.mrb[0].mxu0
      %v4800 = vadd.f32 %v4575, %v4799
      %v4801 = vpop.f32.mrb[0].mxu0
      %4802 = vdwg.mxu0
      %v4803 = vmax.f32 %v4645, 0.0
      %v4804 = vmax.f32 %v4650, 0.0
      %v4805 = vmax.f32 %v4655, 0.0
      %v4806 = vmax.f32 %v4660, 0.0
      %v4807 = vmax.f32 %v4665, 0.0
      %v4808 = vmax.f32 %v4670, 0.0
      %v4809 = vmax.f32 %v4675, 0.0
      %v4810 = vmax.f32 %v4680, 0.0
      %v4811 = vmax.f32 %v4685, 0.0
      %v4812 = vmax.f32 %v4690, 0.0
      %v4813 = vmax.f32 %v4695, 0.0
      %v4814 = vmax.f32 %v4700, 0.0
      %v4815 = vmax.f32 %v4705, 0.0
      %v4816 = vmax.f32 %v4710, 0.0
      %v4817 = vmax.f32 %v4715, 0.0
      %v4818 = vmax.f32 %v4720, 0.0
      %v4819 = vmax.f32 %v4725, 0.0
      %v4820 = vmax.f32 %v4730, 0.0
      %v4821 = vmax.f32 %v4735, 0.0
      %v4822 = vmax.f32 %v4740, 0.0
      %v4823 = vmax.f32 %v4745, 0.0
      %v4824 = vmax.f32 %v4750, 0.0
      %v4825 = vmax.f32 %v4755, 0.0
      %v4826 = vmax.f32 %v4760, 0.0
      %v4827 = vmax.f32 %v4765, 0.0
      %v4828 = vmax.f32 %v4770, 0.0
      %v4829 = vmax.f32 %v4775, 0.0
      %v4830 = vmax.f32 %v4780, 0.0
      %v4831 = vmax.f32 %v4785, 0.0
      %v4832 = vmax.f32 %v4790, 0.0
      %v4833 = vmax.f32 %v4795, 0.0
      %v4834 = vmax.f32 %v4800, 0.0
      %4835 = vst.msk [vmem:[%s1857 + $0x1] sm:$0xff] %vm443, %v4803
      %4836 = vst.msk [vmem:[%s1857 + $0x9] sm:$0xff] %vm443, %v4804
      %4837 = vst.msk [vmem:[%s1857 + $0x19] sm:$0xff] %vm443, %v4805
      %4838 = vst.msk [vmem:[%s1857 + $0x21] sm:$0xff] %vm443, %v4806
      %4839 = vst.msk [vmem:[%s1857 + $0x31] sm:$0xff] %vm443, %v4807
      %4840 = vst.msk [vmem:[%s1857 + $0x39] sm:$0xff] %vm443, %v4808
      %4841 = vst.msk [vmem:[%s1857 + $0x49] sm:$0xff] %vm443, %v4809
      %4842 = vst.msk [vmem:[%s1857 + $0x51] sm:$0xff] %vm443, %v4810
      %4843 = vst.msk [vmem:[%s1857 + $0x61] sm:$0xff] %vm443, %v4811
      %4844 = vst.msk [vmem:[%s1857 + $0x69] sm:$0xff] %vm443, %v4812
      %4845 = vst.msk [vmem:[%s1857 + $0x79] sm:$0xff] %vm443, %v4813
      %4846 = vst.msk [vmem:[%s1857 + $0x81] sm:$0xff] %vm443, %v4814
      %4847 = vst.msk [vmem:[%s1857 + $0x91] sm:$0xff] %vm443, %v4815
      %4848 = vst.msk [vmem:[%s1857 + $0x99] sm:$0xff] %vm443, %v4816
      %4849 = vst.msk [vmem:[%s1857 + $0xa9] sm:$0xff] %vm443, %v4817
      %4850 = vst.msk [vmem:[%s1857 + $0xb1] sm:$0xff] %vm443, %v4818
      %4851 = vst.msk [vmem:[%s1857 + $0xc1] sm:$0xff] %vm443, %v4819
      %4852 = vst.msk [vmem:[%s1857 + $0xc9] sm:$0xff] %vm443, %v4820
      %4853 = vst.msk [vmem:[%s1857 + $0xd9] sm:$0xff] %vm443, %v4821
      %4854 = vst.msk [vmem:[%s1857 + $0xe1] sm:$0xff] %vm443, %v4822
      %4855 = vst.msk [vmem:[%s1857 + $0xf1] sm:$0xff] %vm443, %v4823
      %4856 = vst.msk [vmem:[%s1857 + $0xf9] sm:$0xff] %vm443, %v4824
      %4857 = vst.msk [vmem:[%s1857 + $0x109] sm:$0xff] %vm443, %v4825
      %4858 = vst.msk [vmem:[%s1857 + $0x111] sm:$0xff] %vm443, %v4826
      %4859 = vst.msk [vmem:[%s1857 + $0x121] sm:$0xff] %vm443, %v4827
      %4860 = vst.msk [vmem:[%s1857 + $0x129] sm:$0xff] %vm443, %v4828
      %4861 = vst.msk [vmem:[%s1857 + $0x139] sm:$0xff] %vm443, %v4829
      %4862 = vst.msk [vmem:[%s1857 + $0x141] sm:$0xff] %vm443, %v4830
      %4863 = vst.msk [vmem:[%s1857 + $0x151] sm:$0xff] %vm443, %v4831
      %4864 = vst.msk [vmem:[%s1857 + $0x159] sm:$0xff] %vm443, %v4832
      %4865 = vst.msk [vmem:[%s1857 + $0x169] sm:$0xff] %vm443, %v4833
      %4866 = vst.msk [vmem:[%s1857 + $0x171] sm:$0xff] %vm443, %v4834
      %v4867 = vld [vmem:[#allocation3] sm:$0xff]
      %v4868 = vld [vmem:[#allocation3 + $0x8] sm:$0xff]
      %v4869 = vld [vmem:[#allocation3 + $0x10] sm:$0x3]
      %v4870 = vld [vmem:[#allocation3 + $0x18] sm:$0xff]
      %v4871 = vld [vmem:[#allocation3 + $0x20] sm:$0xff]
      %v4872 = vld [vmem:[#allocation3 + $0x28] sm:$0x3]
      %v4873 = vld [vmem:[#allocation3 + $0x30] sm:$0xff]
      %v4874 = vld [vmem:[#allocation3 + $0x38] sm:$0xff]
      %v4875 = vld [vmem:[#allocation3 + $0x40] sm:$0x3]
      %v4876 = vld [vmem:[#allocation3 + $0x48] sm:$0xff]
      %v4877 = vld [vmem:[#allocation3 + $0x50] sm:$0xff]
      %v4878 = vld [vmem:[#allocation3 + $0x58] sm:$0x3]
      %v4879 = vld [vmem:[#allocation3 + $0x60] sm:$0xff]
      %v4880 = vld [vmem:[#allocation3 + $0x68] sm:$0xff]
      %v4881 = vld [vmem:[#allocation3 + $0x70] sm:$0x3]
      %v4882 = vld [vmem:[#allocation3 + $0x78] sm:$0xff]
      %v4883 = vld [vmem:[#allocation3 + $0x80] sm:$0xff]
      %v4884 = vld [vmem:[#allocation3 + $0x88] sm:$0x3]
      %v4885 = vld [vmem:[#allocation3 + $0x90] sm:$0xff]
      %v4886 = vld [vmem:[#allocation3 + $0x98] sm:$0xff]
      %v4887 = vld [vmem:[#allocation3 + $0xa0] sm:$0x3]
      %v4888 = vld [vmem:[#allocation3 + $0xa8] sm:$0xff]
      %v4889 = vld [vmem:[#allocation3 + $0xb0] sm:$0xff]
      %v4890 = vld [vmem:[#allocation3 + $0xb8] sm:$0x3]
      %v4891 = vld [vmem:[#allocation3 + $0xc0] sm:$0xff]
      %v4892 = vld [vmem:[#allocation3 + $0xc8] sm:$0xff]
      %v4893 = vld [vmem:[#allocation3 + $0xd0] sm:$0x3]
      %v4894 = vld [vmem:[#allocation3 + $0xd8] sm:$0xff]
      %v4895 = vld [vmem:[#allocation3 + $0xe0] sm:$0xff]
      %v4896 = vld [vmem:[#allocation3 + $0xe8] sm:$0x3]
      %v4897 = vld [vmem:[#allocation3 + $0xf0] sm:$0xff]
      %v4898 = vld [vmem:[#allocation3 + $0xf8] sm:$0xff]
      %v4899 = vld [vmem:[#allocation3 + $0x100] sm:$0x3]
      %v4900 = vld [vmem:[#allocation3 + $0x108] sm:$0xff]
      %v4901 = vld [vmem:[#allocation3 + $0x110] sm:$0xff]
      %v4902 = vld [vmem:[#allocation3 + $0x118] sm:$0x3]
      %v4903 = vld [vmem:[#allocation3 + $0x120] sm:$0xff]
      %v4904 = vld [vmem:[#allocation3 + $0x128] sm:$0xff]
      %v4905 = vld [vmem:[#allocation3 + $0x130] sm:$0x3]
      %v4906 = vld [vmem:[#allocation3 + $0x138] sm:$0xff]
      %v4907 = vld [vmem:[#allocation3 + $0x140] sm:$0xff]
      %v4908 = vld [vmem:[#allocation3 + $0x148] sm:$0x3]
      %v4909 = vld [vmem:[#allocation3 + $0x150] sm:$0xff]
      %v4910 = vld [vmem:[#allocation3 + $0x158] sm:$0xff]
      %v4911 = vld [vmem:[#allocation3 + $0x160] sm:$0x3]
      %v4912 = vld [vmem:[#allocation3 + $0x168] sm:$0xff]
      %v4913 = vld [vmem:[#allocation3 + $0x170] sm:$0xff]
      %v4914 = vld [vmem:[#allocation3 + $0x178] sm:$0x3]
      %v4915 = vld [vmem:[#allocation3 + $0x180] sm:$0xff]
      %v4916 = vld [vmem:[#allocation3 + $0x188] sm:$0xff]
      %v4917 = vld [vmem:[#allocation3 + $0x190] sm:$0x3]
      %v4918 = vld [vmem:[#allocation3 + $0x198] sm:$0xff]
      %v4919 = vld [vmem:[#allocation3 + $0x1a0] sm:$0xff]
      %v4920 = vld [vmem:[#allocation3 + $0x1a8] sm:$0x3]
      %v4975 = vrot.slane %v4867, 1
      %v4976 = vrot.slane %v4868, 1
      %v4977 = vsel %vm726, %v4975, %v4976
      %v4978 = vrot.slane %v4869, 1
      %v4979 = vsel %vm726, %v4976, %v4978
      %v4980 = vrot.slane %v4870, 1
      %v4981 = vrot.slane %v4871, 1
      %v4982 = vsel %vm726, %v4980, %v4981
      %v4983 = vrot.slane %v4872, 1
      %v4984 = vsel %vm726, %v4981, %v4983
      %v4985 = vrot.slane %v4873, 1
      %v4986 = vrot.slane %v4874, 1
      %v4987 = vsel %vm726, %v4985, %v4986
      %v4988 = vrot.slane %v4875, 1
      %v4989 = vsel %vm726, %v4986, %v4988
      %v4990 = vrot.slane %v4876, 1
      %v4991 = vrot.slane %v4877, 1
      %v4992 = vsel %vm726, %v4990, %v4991
      %v4993 = vrot.slane %v4878, 1
      %v4994 = vsel %vm726, %v4991, %v4993
      %v4995 = vrot.slane %v4879, 1
      %v4996 = vrot.slane %v4880, 1
      %v4997 = vsel %vm726, %v4995, %v4996
      %v4998 = vrot.slane %v4881, 1
      %v4999 = vsel %vm726, %v4996, %v4998
      %v5000 = vrot.slane %v4882, 1
      %v5001 = vrot.slane %v4883, 1
      %v5002 = vsel %vm726, %v5000, %v5001
      %v5003 = vrot.slane %v4884, 1
      %v5004 = vsel %vm726, %v5001, %v5003
      %v5005 = vrot.slane %v4885, 1
      %v5006 = vrot.slane %v4886, 1
      %v5007 = vsel %vm726, %v5005, %v5006
      %v5008 = vrot.slane %v4887, 1
      %v5009 = vsel %vm726, %v5006, %v5008
      %v5010 = vrot.slane %v4888, 1
      %v5011 = vrot.slane %v4889, 1
      %v5012 = vsel %vm726, %v5010, %v5011
      %v5013 = vrot.slane %v4890, 1
      %v5014 = vsel %vm726, %v5011, %v5013
      %v5015 = vrot.slane %v4891, 1
      %v5016 = vrot.slane %v4892, 1
      %v5017 = vsel %vm726, %v5015, %v5016
      %v5018 = vrot.slane %v4893, 1
      %v5019 = vsel %vm726, %v5016, %v5018
      %v5020 = vrot.slane %v4894, 1
      %v5021 = vrot.slane %v4895, 1
      %v5022 = vsel %vm726, %v5020, %v5021
      %v5023 = vrot.slane %v4896, 1
      %v5024 = vsel %vm726, %v5021, %v5023
      %v5025 = vrot.slane %v4897, 1
      %v5026 = vrot.slane %v4898, 1
      %v5027 = vsel %vm726, %v5025, %v5026
      %v5028 = vrot.slane %v4899, 1
      %v5029 = vsel %vm726, %v5026, %v5028
      %v5030 = vrot.slane %v4900, 1
      %v5031 = vrot.slane %v4901, 1
      %v5032 = vsel %vm726, %v5030, %v5031
      %v5033 = vrot.slane %v4902, 1
      %v5034 = vsel %vm726, %v5031, %v5033
      %v5035 = vrot.slane %v4903, 1
      %v5036 = vrot.slane %v4904, 1
      %v5037 = vsel %vm726, %v5035, %v5036
      %v5038 = vrot.slane %v4905, 1
      %v5039 = vsel %vm726, %v5036, %v5038
      %v5040 = vrot.slane %v4906, 1
      %v5041 = vrot.slane %v4907, 1
      %v5042 = vsel %vm726, %v5040, %v5041
      %v5043 = vrot.slane %v4908, 1
      %v5044 = vsel %vm726, %v5041, %v5043
      %v5045 = vrot.slane %v4909, 1
      %v5046 = vrot.slane %v4910, 1
      %v5047 = vsel %vm726, %v5045, %v5046
      %v5048 = vrot.slane %v4911, 1
      %v5049 = vsel %vm726, %v5046, %v5048
      %v5050 = vrot.slane %v4912, 1
      %v5051 = vrot.slane %v4913, 1
      %v5052 = vsel %vm726, %v5050, %v5051
      %v5053 = vrot.slane %v4914, 1
      %v5054 = vsel %vm726, %v5051, %v5053
      %v5055 = vrot.slane %v4915, 1
      %v5056 = vrot.slane %v4916, 1
      %v5057 = vsel %vm726, %v5055, %v5056
      %v5058 = vrot.slane %v4917, 1
      %v5059 = vsel %vm726, %v5056, %v5058
      %v5060 = vrot.slane %v4918, 1
      %v5061 = vrot.slane %v4919, 1
      %v5062 = vsel %vm726, %v5060, %v5061
      %v5063 = vrot.slane %v4920, 1
      %v5064 = vsel %vm726, %v5061, %v5063
      %5065 = vrot.lane.b32.xlu0 %v4977, 32
      %v5066 = vpop.permute.xlu0 %5065
      %5067 = vrot.lane.b32.xlu0 %v4979, 32
      %v5068 = vpop.permute.xlu0 %5067
      %5069 = vrot.lane.b32.xlu0 %v4982, 32
      %v5070 = vpop.permute.xlu0 %5069
      %5071 = vrot.lane.b32.xlu0 %v4984, 32
      %v5072 = vpop.permute.xlu0 %5071
      %5073 = vrot.lane.b32.xlu0 %v4987, 32
      %v5074 = vpop.permute.xlu0 %5073
      %5075 = vrot.lane.b32.xlu0 %v4989, 32
      %v5076 = vpop.permute.xlu0 %5075
      %5077 = vrot.lane.b32.xlu0 %v4992, 32
      %v5078 = vpop.permute.xlu0 %5077
      %5079 = vrot.lane.b32.xlu0 %v4994, 32
      %v5080 = vpop.permute.xlu0 %5079
      %5081 = vrot.lane.b32.xlu0 %v4997, 32
      %v5082 = vpop.permute.xlu0 %5081
      %5083 = vrot.lane.b32.xlu0 %v4999, 32
      %v5084 = vpop.permute.xlu0 %5083
      %5085 = vrot.lane.b32.xlu0 %v5002, 32
      %v5086 = vpop.permute.xlu0 %5085
      %5087 = vrot.lane.b32.xlu0 %v5004, 32
      %v5088 = vpop.permute.xlu0 %5087
      %5089 = vrot.lane.b32.xlu0 %v5007, 32
      %v5090 = vpop.permute.xlu0 %5089
      %5091 = vrot.lane.b32.xlu0 %v5009, 32
      %v5092 = vpop.permute.xlu0 %5091
      %5093 = vrot.lane.b32.xlu0 %v5012, 32
      %v5094 = vpop.permute.xlu0 %5093
      %5095 = vrot.lane.b32.xlu0 %v5014, 32
      %v5096 = vpop.permute.xlu0 %5095
      %5097 = vrot.lane.b32.xlu0 %v5017, 32
      %v5098 = vpop.permute.xlu0 %5097
      %5099 = vrot.lane.b32.xlu0 %v5019, 32
      %v5100 = vpop.permute.xlu0 %5099
      %5101 = vrot.lane.b32.xlu0 %v5022, 32
      %v5102 = vpop.permute.xlu0 %5101
      %5103 = vrot.lane.b32.xlu0 %v5024, 32
      %v5104 = vpop.permute.xlu0 %5103
      %5105 = vrot.lane.b32.xlu0 %v5027, 32
      %v5106 = vpop.permute.xlu0 %5105
      %5107 = vrot.lane.b32.xlu0 %v5029, 32
      %v5108 = vpop.permute.xlu0 %5107
      %5109 = vrot.lane.b32.xlu0 %v5032, 32
      %v5110 = vpop.permute.xlu0 %5109
      %5111 = vrot.lane.b32.xlu0 %v5034, 32
      %v5112 = vpop.permute.xlu0 %5111
      %5113 = vrot.lane.b32.xlu0 %v5037, 32
      %v5114 = vpop.permute.xlu0 %5113
      %5115 = vrot.lane.b32.xlu0 %v5039, 32
      %v5116 = vpop.permute.xlu0 %5115
      %5117 = vrot.lane.b32.xlu0 %v5042, 32
      %v5118 = vpop.permute.xlu0 %5117
      %5119 = vrot.lane.b32.xlu0 %v5044, 32
      %v5120 = vpop.permute.xlu0 %5119
      %5121 = vrot.lane.b32.xlu0 %v5047, 32
      %v5122 = vpop.permute.xlu0 %5121
      %5123 = vrot.lane.b32.xlu0 %v5049, 32
      %v5124 = vpop.permute.xlu0 %5123
      %5125 = vrot.lane.b32.xlu0 %v5052, 32
      %v5126 = vpop.permute.xlu0 %5125
      %5127 = vrot.lane.b32.xlu0 %v5054, 32
      %v5128 = vpop.permute.xlu0 %5127
      %5129 = vrot.lane.b32.xlu0 %v5057, 32
      %v5130 = vpop.permute.xlu0 %5129
      %5131 = vrot.lane.b32.xlu0 %v5059, 32
      %v5132 = vpop.permute.xlu0 %5131
      %5133 = vrot.lane.b32.xlu0 %v5062, 32
      %v5134 = vpop.permute.xlu0 %5133
      %5135 = vrot.lane.b32.xlu0 %v5064, 32
      %v5136 = vpop.permute.xlu0 %5135
      %v5173 = vrot.slane %v4867, 2
      %v5174 = vrot.slane %v4868, 2
      %v5175 = vsel %vm925, %v5173, %v5174
      %v5176 = vrot.slane %v4869, 2
      %v5177 = vsel %vm925, %v5174, %v5176
      %v5178 = vrot.slane %v4870, 2
      %v5179 = vrot.slane %v4871, 2
      %v5180 = vsel %vm925, %v5178, %v5179
      %v5181 = vrot.slane %v4872, 2
      %v5182 = vsel %vm925, %v5179, %v5181
      %v5183 = vrot.slane %v4873, 2
      %v5184 = vrot.slane %v4874, 2
      %v5185 = vsel %vm925, %v5183, %v5184
      %v5186 = vrot.slane %v4875, 2
      %v5187 = vsel %vm925, %v5184, %v5186
      %v5188 = vrot.slane %v4876, 2
      %v5189 = vrot.slane %v4877, 2
      %v5190 = vsel %vm925, %v5188, %v5189
      %v5191 = vrot.slane %v4878, 2
      %v5192 = vsel %vm925, %v5189, %v5191
      %v5193 = vrot.slane %v4879, 2
      %v5194 = vrot.slane %v4880, 2
      %v5195 = vsel %vm925, %v5193, %v5194
      %v5196 = vrot.slane %v4881, 2
      %v5197 = vsel %vm925, %v5194, %v5196
      %v5198 = vrot.slane %v4882, 2
      %v5199 = vrot.slane %v4883, 2
      %v5200 = vsel %vm925, %v5198, %v5199
      %v5201 = vrot.slane %v4884, 2
      %v5202 = vsel %vm925, %v5199, %v5201
      %v5203 = vrot.slane %v4885, 2
      %v5204 = vrot.slane %v4886, 2
      %v5205 = vsel %vm925, %v5203, %v5204
      %v5206 = vrot.slane %v4887, 2
      %v5207 = vsel %vm925, %v5204, %v5206
      %v5208 = vrot.slane %v4888, 2
      %v5209 = vrot.slane %v4889, 2
      %v5210 = vsel %vm925, %v5208, %v5209
      %v5211 = vrot.slane %v4890, 2
      %v5212 = vsel %vm925, %v5209, %v5211
      %v5213 = vrot.slane %v4891, 2
      %v5214 = vrot.slane %v4892, 2
      %v5215 = vsel %vm925, %v5213, %v5214
      %v5216 = vrot.slane %v4893, 2
      %v5217 = vsel %vm925, %v5214, %v5216
      %v5218 = vrot.slane %v4894, 2
      %v5219 = vrot.slane %v4895, 2
      %v5220 = vsel %vm925, %v5218, %v5219
      %v5221 = vrot.slane %v4896, 2
      %v5222 = vsel %vm925, %v5219, %v5221
      %v5223 = vrot.slane %v4897, 2
      %v5224 = vrot.slane %v4898, 2
      %v5225 = vsel %vm925, %v5223, %v5224
      %v5226 = vrot.slane %v4899, 2
      %v5227 = vsel %vm925, %v5224, %v5226
      %v5228 = vrot.slane %v4900, 2
      %v5229 = vrot.slane %v4901, 2
      %v5230 = vsel %vm925, %v5228, %v5229
      %v5231 = vrot.slane %v4902, 2
      %v5232 = vsel %vm925, %v5229, %v5231
      %v5233 = vrot.slane %v4903, 2
      %v5234 = vrot.slane %v4904, 2
      %v5235 = vsel %vm925, %v5233, %v5234
      %v5236 = vrot.slane %v4905, 2
      %v5237 = vsel %vm925, %v5234, %v5236
      %v5238 = vrot.slane %v4906, 2
      %v5239 = vrot.slane %v4907, 2
      %v5240 = vsel %vm925, %v5238, %v5239
      %v5241 = vrot.slane %v4908, 2
      %v5242 = vsel %vm925, %v5239, %v5241
      %v5243 = vrot.slane %v4909, 2
      %v5244 = vrot.slane %v4910, 2
      %v5245 = vsel %vm925, %v5243, %v5244
      %v5246 = vrot.slane %v4911, 2
      %v5247 = vsel %vm925, %v5244, %v5246
      %v5248 = vrot.slane %v4912, 2
      %v5249 = vrot.slane %v4913, 2
      %v5250 = vsel %vm925, %v5248, %v5249
      %v5251 = vrot.slane %v4914, 2
      %v5252 = vsel %vm925, %v5249, %v5251
      %v5253 = vrot.slane %v4915, 2
      %v5254 = vrot.slane %v4916, 2
      %v5255 = vsel %vm925, %v5253, %v5254
      %v5256 = vrot.slane %v4917, 2
      %v5257 = vsel %vm925, %v5254, %v5256
      %v5258 = vrot.slane %v4918, 2
      %v5259 = vrot.slane %v4919, 2
      %v5260 = vsel %vm925, %v5258, %v5259
      %v5261 = vrot.slane %v4920, 2
      %v5262 = vsel %vm925, %v5259, %v5261
      %5263 = vrot.lane.b32.xlu0 %v5175, 64
      %v5264 = vpop.permute.xlu0 %5263
      %5265 = vrot.lane.b32.xlu0 %v5177, 64
      %v5266 = vpop.permute.xlu0 %5265
      %5267 = vrot.lane.b32.xlu0 %v5180, 64
      %v5268 = vpop.permute.xlu0 %5267
      %5269 = vrot.lane.b32.xlu0 %v5182, 64
      %v5270 = vpop.permute.xlu0 %5269
      %5271 = vrot.lane.b32.xlu0 %v5185, 64
      %v5272 = vpop.permute.xlu0 %5271
      %5273 = vrot.lane.b32.xlu0 %v5187, 64
      %v5274 = vpop.permute.xlu0 %5273
      %5275 = vrot.lane.b32.xlu0 %v5190, 64
      %v5276 = vpop.permute.xlu0 %5275
      %5277 = vrot.lane.b32.xlu0 %v5192, 64
      %v5278 = vpop.permute.xlu0 %5277
      %5279 = vrot.lane.b32.xlu0 %v5195, 64
      %v5280 = vpop.permute.xlu0 %5279
      %5281 = vrot.lane.b32.xlu0 %v5197, 64
      %v5282 = vpop.permute.xlu0 %5281
      %5283 = vrot.lane.b32.xlu0 %v5200, 64
      %v5284 = vpop.permute.xlu0 %5283
      %5285 = vrot.lane.b32.xlu0 %v5202, 64
      %v5286 = vpop.permute.xlu0 %5285
      %5287 = vrot.lane.b32.xlu0 %v5205, 64
      %v5288 = vpop.permute.xlu0 %5287
      %5289 = vrot.lane.b32.xlu0 %v5207, 64
      %v5290 = vpop.permute.xlu0 %5289
      %5291 = vrot.lane.b32.xlu0 %v5210, 64
      %v5292 = vpop.permute.xlu0 %5291
      %5293 = vrot.lane.b32.xlu0 %v5212, 64
      %v5294 = vpop.permute.xlu0 %5293
      %5295 = vrot.lane.b32.xlu0 %v5215, 64
      %v5296 = vpop.permute.xlu0 %5295
      %5297 = vrot.lane.b32.xlu0 %v5217, 64
      %v5298 = vpop.permute.xlu0 %5297
      %5299 = vrot.lane.b32.xlu0 %v5220, 64
      %v5300 = vpop.permute.xlu0 %5299
      %5301 = vrot.lane.b32.xlu0 %v5222, 64
      %v5302 = vpop.permute.xlu0 %5301
      %5303 = vrot.lane.b32.xlu0 %v5225, 64
      %v5304 = vpop.permute.xlu0 %5303
      %5305 = vrot.lane.b32.xlu0 %v5227, 64
      %v5306 = vpop.permute.xlu0 %5305
      %5307 = vrot.lane.b32.xlu0 %v5230, 64
      %v5308 = vpop.permute.xlu0 %5307
      %5309 = vrot.lane.b32.xlu0 %v5232, 64
      %v5310 = vpop.permute.xlu0 %5309
      %5311 = vrot.lane.b32.xlu0 %v5235, 64
      %v5312 = vpop.permute.xlu0 %5311
      %5313 = vrot.lane.b32.xlu0 %v5237, 64
      %v5314 = vpop.permute.xlu0 %5313
      %5315 = vrot.lane.b32.xlu0 %v5240, 64
      %v5316 = vpop.permute.xlu0 %5315
      %5317 = vrot.lane.b32.xlu0 %v5242, 64
      %v5318 = vpop.permute.xlu0 %5317
      %5319 = vrot.lane.b32.xlu0 %v5245, 64
      %v5320 = vpop.permute.xlu0 %5319
      %5321 = vrot.lane.b32.xlu0 %v5247, 64
      %v5322 = vpop.permute.xlu0 %5321
      %5323 = vrot.lane.b32.xlu0 %v5250, 64
      %v5324 = vpop.permute.xlu0 %5323
      %5325 = vrot.lane.b32.xlu0 %v5252, 64
      %v5326 = vpop.permute.xlu0 %5325
      %5327 = vrot.lane.b32.xlu0 %v5255, 64
      %v5328 = vpop.permute.xlu0 %5327
      %5329 = vrot.lane.b32.xlu0 %v5257, 64
      %v5330 = vpop.permute.xlu0 %5329
      %5331 = vrot.lane.b32.xlu0 %v5260, 64
      %v5332 = vpop.permute.xlu0 %5331
      %5333 = vrot.lane.b32.xlu0 %v5262, 64
      %v5334 = vpop.permute.xlu0 %5333
      %v5371 = vsel %vm443, %v4867, %v5066
      %v5372 = vsel %vm443, %v4868, %v5068
      %v5373 = vsel %vm443, %v4870, %v5070
      %v5374 = vsel %vm443, %v4871, %v5072
      %v5375 = vsel %vm443, %v4873, %v5074
      %v5376 = vsel %vm443, %v4874, %v5076
      %v5377 = vsel %vm443, %v4876, %v5078
      %v5378 = vsel %vm443, %v4877, %v5080
      %v5379 = vsel %vm443, %v4879, %v5082
      %v5380 = vsel %vm443, %v4880, %v5084
      %v5381 = vsel %vm443, %v4882, %v5086
      %v5382 = vsel %vm443, %v4883, %v5088
      %v5383 = vsel %vm443, %v4885, %v5090
      %v5384 = vsel %vm443, %v4886, %v5092
      %v5385 = vsel %vm443, %v4888, %v5094
      %v5386 = vsel %vm443, %v4889, %v5096
      %v5387 = vsel %vm443, %v4891, %v5098
      %v5388 = vsel %vm443, %v4892, %v5100
      %v5389 = vsel %vm443, %v4894, %v5102
      %v5390 = vsel %vm443, %v4895, %v5104
      %v5391 = vsel %vm443, %v4897, %v5106
      %v5392 = vsel %vm443, %v4898, %v5108
      %v5393 = vsel %vm443, %v4900, %v5110
      %v5394 = vsel %vm443, %v4901, %v5112
      %v5395 = vsel %vm443, %v4903, %v5114
      %v5396 = vsel %vm443, %v4904, %v5116
      %v5397 = vsel %vm443, %v4906, %v5118
      %v5398 = vsel %vm443, %v4907, %v5120
      %v5399 = vsel %vm443, %v4909, %v5122
      %v5400 = vsel %vm443, %v4910, %v5124
      %v5401 = vsel %vm443, %v4912, %v5126
      %v5402 = vsel %vm443, %v4913, %v5128
      %v5403 = vsel %vm443, %v4915, %v5130
      %v5404 = vsel %vm443, %v4916, %v5132
      %v5405 = vsel %vm443, %v4918, %v5134
      %v5406 = vsel %vm443, %v4919, %v5136
      %v5407 = vsel %vm2430, %v5371, %v5264
      %v5408 = vsel %vm2430, %v5372, %v5266
      %v5409 = vsel %vm2430, %v5373, %v5268
      %v5410 = vsel %vm2430, %v5374, %v5270
      %v5411 = vsel %vm2430, %v5375, %v5272
      %v5412 = vsel %vm2430, %v5376, %v5274
      %v5413 = vsel %vm2430, %v5377, %v5276
      %v5414 = vsel %vm2430, %v5378, %v5278
      %v5415 = vsel %vm2430, %v5379, %v5280
      %v5416 = vsel %vm2430, %v5380, %v5282
      %v5417 = vsel %vm2430, %v5381, %v5284
      %v5418 = vsel %vm2430, %v5382, %v5286
      %v5419 = vsel %vm2430, %v5383, %v5288
      %v5420 = vsel %vm2430, %v5384, %v5290
      %v5421 = vsel %vm2430, %v5385, %v5292
      %v5422 = vsel %vm2430, %v5386, %v5294
      %v5423 = vsel %vm2430, %v5387, %v5296
      %v5424 = vsel %vm2430, %v5388, %v5298
      %v5425 = vsel %vm2430, %v5389, %v5300
      %v5426 = vsel %vm2430, %v5390, %v5302
      %v5427 = vsel %vm2430, %v5391, %v5304
      %v5428 = vsel %vm2430, %v5392, %v5306
      %v5429 = vsel %vm2430, %v5393, %v5308
      %v5430 = vsel %vm2430, %v5394, %v5310
      %v5431 = vsel %vm2430, %v5395, %v5312
      %v5432 = vsel %vm2430, %v5396, %v5314
      %v5433 = vsel %vm2430, %v5397, %v5316
      %v5434 = vsel %vm2430, %v5398, %v5318
      %v5435 = vsel %vm2430, %v5399, %v5320
      %v5436 = vsel %vm2430, %v5400, %v5322
      %v5437 = vsel %vm2430, %v5401, %v5324
      %v5438 = vsel %vm2430, %v5402, %v5326
      %v5439 = vsel %vm2430, %v5403, %v5328
      %v5440 = vsel %vm2430, %v5404, %v5330
      %v5441 = vsel %vm2430, %v5405, %v5332
      %v5442 = vsel %vm2430, %v5406, %v5334
      %5475 = vrot.lane.b32.xlu0 %v5409, 96
      %v5476 = vpop.permute.xlu0 %5475
      %5477 = vrot.lane.b32.xlu0 %v5410, 96
      %v5478 = vpop.permute.xlu0 %5477
      %5479 = vrot.lane.b32.xlu0 %v5411, 96
      %v5480 = vpop.permute.xlu0 %5479
      %5481 = vrot.lane.b32.xlu0 %v5412, 96
      %v5482 = vpop.permute.xlu0 %5481
      %5483 = vrot.lane.b32.xlu0 %v5413, 96
      %v5484 = vpop.permute.xlu0 %5483
      %5485 = vrot.lane.b32.xlu0 %v5414, 96
      %v5486 = vpop.permute.xlu0 %5485
      %5487 = vrot.lane.b32.xlu0 %v5415, 96
      %v5488 = vpop.permute.xlu0 %5487
      %5489 = vrot.lane.b32.xlu0 %v5416, 96
      %v5490 = vpop.permute.xlu0 %5489
      %5491 = vrot.lane.b32.xlu0 %v5417, 96
      %v5492 = vpop.permute.xlu0 %5491
      %5493 = vrot.lane.b32.xlu0 %v5418, 96
      %v5494 = vpop.permute.xlu0 %5493
      %5495 = vrot.lane.b32.xlu0 %v5419, 96
      %v5496 = vpop.permute.xlu0 %5495
      %5497 = vrot.lane.b32.xlu0 %v5420, 96
      %v5498 = vpop.permute.xlu0 %5497
      %5499 = vrot.lane.b32.xlu0 %v5421, 96
      %v5500 = vpop.permute.xlu0 %5499
      %5501 = vrot.lane.b32.xlu0 %v5422, 96
      %v5502 = vpop.permute.xlu0 %5501
      %5503 = vrot.lane.b32.xlu0 %v5423, 96
      %v5504 = vpop.permute.xlu0 %5503
      %5505 = vrot.lane.b32.xlu0 %v5424, 96
      %v5506 = vpop.permute.xlu0 %5505
      %5507 = vrot.lane.b32.xlu0 %v5425, 96
      %v5508 = vpop.permute.xlu0 %5507
      %5509 = vrot.lane.b32.xlu0 %v5426, 96
      %v5510 = vpop.permute.xlu0 %5509
      %5511 = vrot.lane.b32.xlu0 %v5427, 96
      %v5512 = vpop.permute.xlu0 %5511
      %5513 = vrot.lane.b32.xlu0 %v5428, 96
      %v5514 = vpop.permute.xlu0 %5513
      %5515 = vrot.lane.b32.xlu0 %v5429, 96
      %v5516 = vpop.permute.xlu0 %5515
      %5517 = vrot.lane.b32.xlu0 %v5430, 96
      %v5518 = vpop.permute.xlu0 %5517
      %5519 = vrot.lane.b32.xlu0 %v5431, 96
      %v5520 = vpop.permute.xlu0 %5519
      %5521 = vrot.lane.b32.xlu0 %v5432, 96
      %v5522 = vpop.permute.xlu0 %5521
      %5523 = vrot.lane.b32.xlu0 %v5433, 96
      %v5524 = vpop.permute.xlu0 %5523
      %5525 = vrot.lane.b32.xlu0 %v5434, 96
      %v5526 = vpop.permute.xlu0 %5525
      %5527 = vrot.lane.b32.xlu0 %v5435, 96
      %v5528 = vpop.permute.xlu0 %5527
      %5529 = vrot.lane.b32.xlu0 %v5436, 96
      %v5530 = vpop.permute.xlu0 %5529
      %5531 = vrot.lane.b32.xlu0 %v5437, 96
      %v5532 = vpop.permute.xlu0 %5531
      %5533 = vrot.lane.b32.xlu0 %v5438, 96
      %v5534 = vpop.permute.xlu0 %5533
      %5535 = vrot.lane.b32.xlu0 %v5439, 96
      %v5536 = vpop.permute.xlu0 %5535
      %5537 = vrot.lane.b32.xlu0 %v5440, 96
      %v5538 = vpop.permute.xlu0 %5537
      %5573 = vrot.lane.b32.xlu0 %v5411, 64
      %v5574 = vpop.permute.xlu0 %5573
      %5575 = vrot.lane.b32.xlu0 %v5412, 64
      %v5576 = vpop.permute.xlu0 %5575
      %5577 = vrot.lane.b32.xlu0 %v5413, 64
      %v5578 = vpop.permute.xlu0 %5577
      %5579 = vrot.lane.b32.xlu0 %v5414, 64
      %v5580 = vpop.permute.xlu0 %5579
      %5581 = vrot.lane.b32.xlu0 %v5415, 64
      %v5582 = vpop.permute.xlu0 %5581
      %5583 = vrot.lane.b32.xlu0 %v5416, 64
      %v5584 = vpop.permute.xlu0 %5583
      %5585 = vrot.lane.b32.xlu0 %v5417, 64
      %v5586 = vpop.permute.xlu0 %5585
      %5587 = vrot.lane.b32.xlu0 %v5418, 64
      %v5588 = vpop.permute.xlu0 %5587
      %5589 = vrot.lane.b32.xlu0 %v5419, 64
      %v5590 = vpop.permute.xlu0 %5589
      %5591 = vrot.lane.b32.xlu0 %v5420, 64
      %v5592 = vpop.permute.xlu0 %5591
      %5593 = vrot.lane.b32.xlu0 %v5421, 64
      %v5594 = vpop.permute.xlu0 %5593
      %5595 = vrot.lane.b32.xlu0 %v5422, 64
      %v5596 = vpop.permute.xlu0 %5595
      %5597 = vrot.lane.b32.xlu0 %v5423, 64
      %v5598 = vpop.permute.xlu0 %5597
      %5599 = vrot.lane.b32.xlu0 %v5424, 64
      %v5600 = vpop.permute.xlu0 %5599
      %5601 = vrot.lane.b32.xlu0 %v5425, 64
      %v5602 = vpop.permute.xlu0 %5601
      %5603 = vrot.lane.b32.xlu0 %v5426, 64
      %v5604 = vpop.permute.xlu0 %5603
      %5605 = vrot.lane.b32.xlu0 %v5427, 64
      %v5606 = vpop.permute.xlu0 %5605
      %5607 = vrot.lane.b32.xlu0 %v5428, 64
      %v5608 = vpop.permute.xlu0 %5607
      %5609 = vrot.lane.b32.xlu0 %v5429, 64
      %v5610 = vpop.permute.xlu0 %5609
      %5611 = vrot.lane.b32.xlu0 %v5430, 64
      %v5612 = vpop.permute.xlu0 %5611
      %5613 = vrot.lane.b32.xlu0 %v5431, 64
      %v5614 = vpop.permute.xlu0 %5613
      %5615 = vrot.lane.b32.xlu0 %v5432, 64
      %v5616 = vpop.permute.xlu0 %5615
      %5617 = vrot.lane.b32.xlu0 %v5433, 64
      %v5618 = vpop.permute.xlu0 %5617
      %5619 = vrot.lane.b32.xlu0 %v5434, 64
      %v5620 = vpop.permute.xlu0 %5619
      %5621 = vrot.lane.b32.xlu0 %v5435, 64
      %v5622 = vpop.permute.xlu0 %5621
      %5623 = vrot.lane.b32.xlu0 %v5436, 64
      %v5624 = vpop.permute.xlu0 %5623
      %5625 = vrot.lane.b32.xlu0 %v5437, 64
      %v5626 = vpop.permute.xlu0 %5625
      %5627 = vrot.lane.b32.xlu0 %v5438, 64
      %v5628 = vpop.permute.xlu0 %5627
      %5629 = vrot.lane.b32.xlu0 %v5439, 64
      %v5630 = vpop.permute.xlu0 %5629
      %5631 = vrot.lane.b32.xlu0 %v5440, 64
      %v5632 = vpop.permute.xlu0 %5631
      %5633 = vrot.lane.b32.xlu0 %v5441, 64
      %v5634 = vpop.permute.xlu0 %5633
      %5635 = vrot.lane.b32.xlu0 %v5442, 64
      %v5636 = vpop.permute.xlu0 %5635
      %v5669 = vsel %vm2693, %v5407, %v5476
      %v5670 = vsel %vm2693, %v5408, %v5478
      %v5671 = vsel %vm2693, %v5409, %v5480
      %v5672 = vsel %vm2693, %v5410, %v5482
      %v5673 = vsel %vm2693, %v5411, %v5484
      %v5674 = vsel %vm2693, %v5412, %v5486
      %v5675 = vsel %vm2693, %v5413, %v5488
      %v5676 = vsel %vm2693, %v5414, %v5490
      %v5677 = vsel %vm2693, %v5415, %v5492
      %v5678 = vsel %vm2693, %v5416, %v5494
      %v5679 = vsel %vm2693, %v5417, %v5496
      %v5680 = vsel %vm2693, %v5418, %v5498
      %v5681 = vsel %vm2693, %v5419, %v5500
      %v5682 = vsel %vm2693, %v5420, %v5502
      %v5683 = vsel %vm2693, %v5421, %v5504
      %v5684 = vsel %vm2693, %v5422, %v5506
      %v5685 = vsel %vm2693, %v5423, %v5508
      %v5686 = vsel %vm2693, %v5424, %v5510
      %v5687 = vsel %vm2693, %v5425, %v5512
      %v5688 = vsel %vm2693, %v5426, %v5514
      %v5689 = vsel %vm2693, %v5427, %v5516
      %v5690 = vsel %vm2693, %v5428, %v5518
      %v5691 = vsel %vm2693, %v5429, %v5520
      %v5692 = vsel %vm2693, %v5430, %v5522
      %v5693 = vsel %vm2693, %v5431, %v5524
      %v5694 = vsel %vm2693, %v5432, %v5526
      %v5695 = vsel %vm2693, %v5433, %v5528
      %v5696 = vsel %vm2693, %v5434, %v5530
      %v5697 = vsel %vm2693, %v5435, %v5532
      %v5698 = vsel %vm2693, %v5436, %v5534
      %v5699 = vsel %vm2693, %v5437, %v5536
      %v5700 = vsel %vm2693, %v5438, %v5538
      %v5701 = vsel %vm2430, %v5476, %v5574
      %v5702 = vsel %vm2430, %v5478, %v5576
      %v5703 = vsel %vm2430, %v5480, %v5578
      %v5704 = vsel %vm2430, %v5482, %v5580
      %v5705 = vsel %vm2430, %v5484, %v5582
      %v5706 = vsel %vm2430, %v5486, %v5584
      %v5707 = vsel %vm2430, %v5488, %v5586
      %v5708 = vsel %vm2430, %v5490, %v5588
      %v5709 = vsel %vm2430, %v5492, %v5590
      %v5710 = vsel %vm2430, %v5494, %v5592
      %v5711 = vsel %vm2430, %v5496, %v5594
      %v5712 = vsel %vm2430, %v5498, %v5596
      %v5713 = vsel %vm2430, %v5500, %v5598
      %v5714 = vsel %vm2430, %v5502, %v5600
      %v5715 = vsel %vm2430, %v5504, %v5602
      %v5716 = vsel %vm2430, %v5506, %v5604
      %v5717 = vsel %vm2430, %v5508, %v5606
      %v5718 = vsel %vm2430, %v5510, %v5608
      %v5719 = vsel %vm2430, %v5512, %v5610
      %v5720 = vsel %vm2430, %v5514, %v5612
      %v5721 = vsel %vm2430, %v5516, %v5614
      %v5722 = vsel %vm2430, %v5518, %v5616
      %v5723 = vsel %vm2430, %v5520, %v5618
      %v5724 = vsel %vm2430, %v5522, %v5620
      %v5725 = vsel %vm2430, %v5524, %v5622
      %v5726 = vsel %vm2430, %v5526, %v5624
      %v5727 = vsel %vm2430, %v5528, %v5626
      %v5728 = vsel %vm2430, %v5530, %v5628
      %v5729 = vsel %vm2430, %v5532, %v5630
      %v5730 = vsel %vm2430, %v5534, %v5632
      %v5731 = vsel %vm2430, %v5536, %v5634
      %v5732 = vsel %vm2430, %v5538, %v5636
      %v5733 = vld [vmem:[%s4] sm:$0xff]
      %v5734 = vld [vmem:[%s4 + $0x8] sm:$0xff]
      %v5735 = vld [vmem:[%s4 + $0x10] sm:$0xff]
      %v5736 = vld [vmem:[%s4 + $0x18] sm:$0xff]
      %v5737 = vld [vmem:[%s4 + $0x20] sm:$0xff]
      %v5738 = vld [vmem:[%s4 + $0x28] sm:$0xff]
      %v5739 = vld [vmem:[%s4 + $0x30] sm:$0xff]
      %v5740 = vld [vmem:[%s4 + $0x38] sm:$0xff]
      %v5741 = vld [vmem:[%s4 + $0x40] sm:$0xff]
      %v5742 = vld [vmem:[%s4 + $0x48] sm:$0xff]
      %v5743 = vld [vmem:[%s4 + $0x50] sm:$0xff]
      %v5744 = vld [vmem:[%s4 + $0x58] sm:$0xff]
      %v5745 = vld [vmem:[%s4 + $0x60] sm:$0xff]
      %v5746 = vld [vmem:[%s4 + $0x68] sm:$0xff]
      %v5747 = vld [vmem:[%s4 + $0x70] sm:$0xff]
      %v5748 = vld [vmem:[%s4 + $0x78] sm:$0xff]
      %v5749 = vld [vmem:[%s4 + $0x80] sm:$0xff]
      %v5750 = vld [vmem:[%s4 + $0x88] sm:$0xff]
      %v5751 = vld [vmem:[%s4 + $0x90] sm:$0xff]
      %v5752 = vld [vmem:[%s4 + $0x98] sm:$0xff]
      %v5753 = vld [vmem:[%s4 + $0xa0] sm:$0xff]
      %v5754 = vld [vmem:[%s4 + $0xa8] sm:$0xff]
      %v5755 = vld [vmem:[%s4 + $0xb0] sm:$0xff]
      %v5756 = vld [vmem:[%s4 + $0xb8] sm:$0xff]
      %v5757 = vld [vmem:[%s4 + $0xc0] sm:$0xff]
      %v5758 = vld [vmem:[%s4 + $0xc8] sm:$0xff]
      %v5759 = vld [vmem:[%s4 + $0xd0] sm:$0xff]
      %v5760 = vld [vmem:[%s4 + $0xd8] sm:$0xff]
      %v5761 = vld [vmem:[%s4 + $0xe0] sm:$0xff]
      %v5762 = vld [vmem:[%s4 + $0xe8] sm:$0xff]
      %v5763 = vld [vmem:[%s4 + $0xf0] sm:$0xff]
      %v5764 = vld [vmem:[%s4 + $0xf8] sm:$0xff]
      %v5765 = vld [vmem:[%s4 + $0x100] sm:$0xff]
      %v5766 = vld [vmem:[%s4 + $0x108] sm:$0xff]
      %v5767 = vld [vmem:[%s4 + $0x110] sm:$0xff]
      %v5768 = vld [vmem:[%s4 + $0x118] sm:$0xff]
      %v5769 = vld [vmem:[%s9] sm:$0x1]
      %v5771 = vlaneseq
      %v5772 = vshrl.u32 %v5771, 7
      %v5773 = vsub.s32 0, %v5772
      %v5774 = vrot.slane %v5769, %v5773
      %v5776 = vsel %vm443, %v5574, 0
      %v5778 = vsel %vm443, %v5576, 0
      %v5780 = vsel %vm443, %v5578, 0
      %v5782 = vsel %vm443, %v5580, 0
      %v5784 = vsel %vm443, %v5582, 0
      %v5786 = vsel %vm443, %v5584, 0
      %v5788 = vsel %vm443, %v5586, 0
      %v5790 = vsel %vm443, %v5588, 0
      %v5792 = vsel %vm443, %v5590, 0
      %v5794 = vsel %vm443, %v5592, 0
      %v5796 = vsel %vm443, %v5594, 0
      %v5798 = vsel %vm443, %v5596, 0
      %v5800 = vsel %vm443, %v5598, 0
      %v5802 = vsel %vm443, %v5600, 0
      %v5804 = vsel %vm443, %v5602, 0
      %v5806 = vsel %vm443, %v5604, 0
      %v5808 = vsel %vm443, %v5606, 0
      %v5810 = vsel %vm443, %v5608, 0
      %v5812 = vsel %vm443, %v5610, 0
      %v5814 = vsel %vm443, %v5612, 0
      %v5816 = vsel %vm443, %v5614, 0
      %v5818 = vsel %vm443, %v5616, 0
      %v5820 = vsel %vm443, %v5618, 0
      %v5822 = vsel %vm443, %v5620, 0
      %v5824 = vsel %vm443, %v5622, 0
      %v5826 = vsel %vm443, %v5624, 0
      %v5828 = vsel %vm443, %v5626, 0
      %v5830 = vsel %vm443, %v5628, 0
      %v5832 = vsel %vm443, %v5630, 0
      %v5834 = vsel %vm443, %v5632, 0
      %v5836 = vsel %vm443, %v5634, 0
      %v5838 = vsel %vm443, %v5636, 0
      %5840 = vmatprep.subr.mxu0 0.0
      %5841 = vmatpush1.msra.mxu0 %v5733
      %5842 = vmatprep.subr.mxu0 0.0
      %5843 = vmatpush1.msra.mxu0 %v5734
      %5844 = vmatprep.subr.mxu0 0.0
      %5845 = vmatpush1.msra.mxu0 %v5735
      %5846 = vmatprep.subr.mxu0 0.0
      %5847 = vmatpush1.msra.mxu0 %v5736
      %5848 = vmatprep.subr.mxu0 0.0
      %5849 = vmatpush1.msra.mxu0 %v5737
      %5850 = vmatprep.subr.mxu0 0.0
      %5851 = vmatpush1.msra.mxu0 %v5738
      %5852 = vmatprep.subr.mxu0 0.0
      %5853 = vmatpush1.msra.mxu0 %v5739
      %5854 = vmatprep.subr.mxu0 0.0
      %5855 = vmatpush1.msra.mxu0 %v5740
      %5856 = vmatprep.subr.mxu0 0.0
      %5857 = vmatpush1.msra.mxu0 %v5741
      %5858 = vmatprep.subr.mxu0 0.0
      %5859 = vmatpush1.msra.mxu0 %v5742
      %5860 = vmatprep.subr.mxu0 0.0
      %5861 = vmatpush1.msra.mxu0 %v5743
      %5862 = vmatprep.subr.mxu0 0.0
      %5863 = vmatpush1.msra.mxu0 %v5744
      %5864 = vmatprep.subr.mxu0 0.0
      %5865 = vmatpush1.msra.mxu0 %v5745
      %5866 = vmatprep.subr.mxu0 0.0
      %5867 = vmatpush1.msra.mxu0 %v5746
      %5868 = vmatprep.subr.mxu0 0.0
      %5869 = vmatpush1.msra.mxu0 %v5747
      %5870 = vmatprep.subr.mxu0 0.0
      %5871 = vmatpush1.msra.mxu0 %v5748
      %5872 = vmatprep.subr.mxu0 0.0
      %5873 = vmatpush1.msra.mxu0 %v5749
      %5874 = vmatprep.subr.mxu0 0.0
      %5875 = vmatpush1.msra.mxu0 %v5750
      %5876 = vmatprep.subr.mxu0 0.0
      %5877 = vmatpush1.msra.mxu0 %v5751
      %5878 = vmatprep.subr.mxu0 0.0
      %5879 = vmatpush1.msra.mxu0 %v5752
      %5880 = vmatprep.subr.mxu0 0.0
      %5881 = vmatpush1.msra.mxu0 %v5753
      %5882 = vmatprep.subr.mxu0 0.0
      %5883 = vmatpush1.msra.mxu0 %v5754
      %5884 = vmatprep.subr.mxu0 0.0
      %5885 = vmatpush1.msra.mxu0 %v5755
      %5886 = vmatprep.subr.mxu0 0.0
      %5887 = vmatpush1.msra.mxu0 %v5756
      %5888 = vmatprep.subr.mxu0 0.0
      %5889 = vmatpush1.msra.mxu0 %v5757
      %5890 = vmatprep.subr.mxu0 0.0
      %5891 = vmatpush1.msra.mxu0 %v5758
      %5892 = vmatprep.subr.mxu0 0.0
      %5893 = vmatpush1.msra.mxu0 %v5759
      %5894 = vmatprep.subr.mxu0 0.0
      %5895 = vmatpush1.msra.mxu0 %v5760
      %5896 = vmatprep.subr.mxu0 0.0
      %5897 = vmatpush1.msra.mxu0 %v5761
      %5898 = vmatprep.subr.mxu0 0.0
      %5899 = vmatpush1.msra.mxu0 %v5762
      %5900 = vmatprep.subr.mxu0 0.0
      %5901 = vmatpush1.msra.mxu0 %v5763
      %5902 = vmatprep.subr.mxu0 0.0
      %5903 = vmatpush1.msra.mxu0 %v5764
      %5904 = vmatprep.mubr.f32.mxu0 %v5701
      %5905 = vmatmul.mubr.f32.gmra.mrb[0].mxu0 %v5669
      %v5906 = vpop.f32.mrb[0].mxu0
      %v5907 = vadd.f32 %v5774, %v5906
      %v5908 = vpop.f32.mrb[0].mxu0
      %5909 = vmatprep.mubr.f32.mxu0 %v5702
      %5910 = vmatmul.mubr.f32.gmra.mrb[0].mxu0 %v5670
      %v5911 = vpop.f32.mrb[0].mxu0
      %v5912 = vadd.f32 %v5774, %v5911
      %v5913 = vpop.f32.mrb[0].mxu0
      %5914 = vmatprep.mubr.f32.mxu0 %v5703
      %5915 = vmatmul.mubr.f32.gmra.mrb[0].mxu0 %v5671
      %v5916 = vpop.f32.mrb[0].mxu0
      %v5917 = vadd.f32 %v5774, %v5916
      %v5918 = vpop.f32.mrb[0].mxu0
      %5919 = vmatprep.mubr.f32.mxu0 %v5704
      %5920 = vmatmul.mubr.f32.gmra.mrb[0].mxu0 %v5672
      %v5921 = vpop.f32.mrb[0].mxu0
      %v5922 = vadd.f32 %v5774, %v5921
      %v5923 = vpop.f32.mrb[0].mxu0
      %5924 = vmatprep.mubr.f32.mxu0 %v5705
      %5925 = vmatmul.mubr.f32.gmra.mrb[0].mxu0 %v5673
      %v5926 = vpop.f32.mrb[0].mxu0
      %v5927 = vadd.f32 %v5774, %v5926
      %v5928 = vpop.f32.mrb[0].mxu0
      %5929 = vmatprep.mubr.f32.mxu0 %v5706
      %5930 = vmatmul.mubr.f32.gmra.mrb[0].mxu0 %v5674
      %v5931 = vpop.f32.mrb[0].mxu0
      %v5932 = vadd.f32 %v5774, %v5931
      %v5933 = vpop.f32.mrb[0].mxu0
      %5934 = vmatprep.mubr.f32.mxu0 %v5707
      %5935 = vmatmul.mubr.f32.gmra.mrb[0].mxu0 %v5675
      %v5936 = vpop.f32.mrb[0].mxu0
      %v5937 = vadd.f32 %v5774, %v5936
      %v5938 = vpop.f32.mrb[0].mxu0
      %5939 = vmatprep.mubr.f32.mxu0 %v5708
      %5940 = vmatmul.mubr.f32.gmra.mrb[0].mxu0 %v5676
      %v5941 = vpop.f32.mrb[0].mxu0
      %v5942 = vadd.f32 %v5774, %v5941
      %v5943 = vpop.f32.mrb[0].mxu0
      %5944 = vmatprep.mubr.f32.mxu0 %v5709
      %5945 = vmatmul.mubr.f32.gmra.mrb[0].mxu0 %v5677
      %v5946 = vpop.f32.mrb[0].mxu0
      %v5947 = vadd.f32 %v5774, %v5946
      %v5948 = vpop.f32.mrb[0].mxu0
      %5949 = vmatprep.mubr.f32.mxu0 %v5710
      %5950 = vmatmul.mubr.f32.gmra.mrb[0].mxu0 %v5678
      %v5951 = vpop.f32.mrb[0].mxu0
      %v5952 = vadd.f32 %v5774, %v5951
      %v5953 = vpop.f32.mrb[0].mxu0
      %5954 = vmatprep.mubr.f32.mxu0 %v5711
      %5955 = vmatmul.mubr.f32.gmra.mrb[0].mxu0 %v5679
      %v5956 = vpop.f32.mrb[0].mxu0
      %v5957 = vadd.f32 %v5774, %v5956
      %v5958 = vpop.f32.mrb[0].mxu0
      %5959 = vmatprep.mubr.f32.mxu0 %v5712
      %5960 = vmatmul.mubr.f32.gmra.mrb[0].mxu0 %v5680
      %v5961 = vpop.f32.mrb[0].mxu0
      %v5962 = vadd.f32 %v5774, %v5961
      %v5963 = vpop.f32.mrb[0].mxu0
      %5964 = vmatprep.mubr.f32.mxu0 %v5713
      %5965 = vmatmul.mubr.f32.gmra.mrb[0].mxu0 %v5681
      %v5966 = vpop.f32.mrb[0].mxu0
      %v5967 = vadd.f32 %v5774, %v5966
      %v5968 = vpop.f32.mrb[0].mxu0
      %5969 = vmatprep.mubr.f32.mxu0 %v5714
      %5970 = vmatmul.mubr.f32.gmra.mrb[0].mxu0 %v5682
      %v5971 = vpop.f32.mrb[0].mxu0
      %v5972 = vadd.f32 %v5774, %v5971
      %v5973 = vpop.f32.mrb[0].mxu0
      %5974 = vmatprep.mubr.f32.mxu0 %v5715
      %5975 = vmatmul.mubr.f32.gmra.mrb[0].mxu0 %v5683
      %v5976 = vpop.f32.mrb[0].mxu0
      %v5977 = vadd.f32 %v5774, %v5976
      %v5978 = vpop.f32.mrb[0].mxu0
      %5979 = vmatprep.mubr.f32.mxu0 %v5716
      %5980 = vmatmul.mubr.f32.gmra.mrb[0].mxu0 %v5684
      %v5981 = vpop.f32.mrb[0].mxu0
      %v5982 = vadd.f32 %v5774, %v5981
      %v5983 = vpop.f32.mrb[0].mxu0
      %5984 = vmatprep.mubr.f32.mxu0 %v5717
      %5985 = vmatmul.mubr.f32.gmra.mrb[0].mxu0 %v5685
      %v5986 = vpop.f32.mrb[0].mxu0
      %v5987 = vadd.f32 %v5774, %v5986
      %v5988 = vpop.f32.mrb[0].mxu0
      %5989 = vmatprep.mubr.f32.mxu0 %v5718
      %5990 = vmatmul.mubr.f32.gmra.mrb[0].mxu0 %v5686
      %v5991 = vpop.f32.mrb[0].mxu0
      %v5992 = vadd.f32 %v5774, %v5991
      %v5993 = vpop.f32.mrb[0].mxu0
      %5994 = vmatprep.mubr.f32.mxu0 %v5719
      %5995 = vmatmul.mubr.f32.gmra.mrb[0].mxu0 %v5687
      %v5996 = vpop.f32.mrb[0].mxu0
      %v5997 = vadd.f32 %v5774, %v5996
      %v5998 = vpop.f32.mrb[0].mxu0
      %5999 = vmatprep.mubr.f32.mxu0 %v5720
      %6000 = vmatmul.mubr.f32.gmra.mrb[0].mxu0 %v5688
      %v6001 = vpop.f32.mrb[0].mxu0
      %v6002 = vadd.f32 %v5774, %v6001
      %v6003 = vpop.f32.mrb[0].mxu0
      %6004 = vmatprep.mubr.f32.mxu0 %v5721
      %6005 = vmatmul.mubr.f32.gmra.mrb[0].mxu0 %v5689
      %v6006 = vpop.f32.mrb[0].mxu0
      %v6007 = vadd.f32 %v5774, %v6006
      %v6008 = vpop.f32.mrb[0].mxu0
      %6009 = vmatprep.mubr.f32.mxu0 %v5722
      %6010 = vmatmul.mubr.f32.gmra.mrb[0].mxu0 %v5690
      %v6011 = vpop.f32.mrb[0].mxu0
      %v6012 = vadd.f32 %v5774, %v6011
      %v6013 = vpop.f32.mrb[0].mxu0
      %6014 = vmatprep.mubr.f32.mxu0 %v5723
      %6015 = vmatmul.mubr.f32.gmra.mrb[0].mxu0 %v5691
      %v6016 = vpop.f32.mrb[0].mxu0
      %v6017 = vadd.f32 %v5774, %v6016
      %v6018 = vpop.f32.mrb[0].mxu0
      %6019 = vmatprep.mubr.f32.mxu0 %v5724
      %6020 = vmatmul.mubr.f32.gmra.mrb[0].mxu0 %v5692
      %v6021 = vpop.f32.mrb[0].mxu0
      %v6022 = vadd.f32 %v5774, %v6021
      %v6023 = vpop.f32.mrb[0].mxu0
      %6024 = vmatprep.mubr.f32.mxu0 %v5725
      %6025 = vmatmul.mubr.f32.gmra.mrb[0].mxu0 %v5693
      %v6026 = vpop.f32.mrb[0].mxu0
      %v6027 = vadd.f32 %v5774, %v6026
      %v6028 = vpop.f32.mrb[0].mxu0
      %6029 = vmatprep.mubr.f32.mxu0 %v5726
      %6030 = vmatmul.mubr.f32.gmra.mrb[0].mxu0 %v5694
      %v6031 = vpop.f32.mrb[0].mxu0
      %v6032 = vadd.f32 %v5774, %v6031
      %v6033 = vpop.f32.mrb[0].mxu0
      %6034 = vmatprep.mubr.f32.mxu0 %v5727
      %6035 = vmatmul.mubr.f32.gmra.mrb[0].mxu0 %v5695
      %v6036 = vpop.f32.mrb[0].mxu0
      %v6037 = vadd.f32 %v5774, %v6036
      %v6038 = vpop.f32.mrb[0].mxu0
      %6039 = vmatprep.mubr.f32.mxu0 %v5728
      %6040 = vmatmul.mubr.f32.gmra.mrb[0].mxu0 %v5696
      %v6041 = vpop.f32.mrb[0].mxu0
      %v6042 = vadd.f32 %v5774, %v6041
      %v6043 = vpop.f32.mrb[0].mxu0
      %6044 = vmatprep.mubr.f32.mxu0 %v5729
      %6045 = vmatmul.mubr.f32.gmra.mrb[0].mxu0 %v5697
      %v6046 = vpop.f32.mrb[0].mxu0
      %v6047 = vadd.f32 %v5774, %v6046
      %v6048 = vpop.f32.mrb[0].mxu0
      %6049 = vmatprep.mubr.f32.mxu0 %v5730
      %6050 = vmatmul.mubr.f32.gmra.mrb[0].mxu0 %v5698
      %v6051 = vpop.f32.mrb[0].mxu0
      %v6052 = vadd.f32 %v5774, %v6051
      %v6053 = vpop.f32.mrb[0].mxu0
      %6054 = vmatprep.mubr.f32.mxu0 %v5731
      %6055 = vmatmul.mubr.f32.gmra.mrb[0].mxu0 %v5699
      %v6056 = vpop.f32.mrb[0].mxu0
      %v6057 = vadd.f32 %v5774, %v6056
      %v6058 = vpop.f32.mrb[0].mxu0
      %6059 = vmatprep.mubr.f32.mxu0 %v5732
      %6060 = vmatmul.mubr.f32.gmra.mrb[0].mxu0 %v5700
      %v6061 = vpop.f32.mrb[0].mxu0
      %v6062 = vadd.f32 %v5774, %v6061
      %v6063 = vpop.f32.mrb[0].mxu0
      %6064 = vdwg.mxu0
      %6065 = vmatprep.subr.mxu0 0.0
      %6066 = vmatpush1.msra.mxu0 %v5765
      %6067 = vmatprep.subr.mxu0 0.0
      %6068 = vmatpush1.msra.mxu0 %v5766
      %6069 = vmatprep.subr.mxu0 0.0
      %6070 = vmatpush1.msra.mxu0 %v5767
      %6071 = vmatprep.subr.mxu0 0.0
      %6072 = vmatpush1.msra.mxu0 %v5768
      %6073 = vmatprep.subr.mxu0 0.0
      %6074 = vmatpush1.msra.mxu0 0.0
      %6075 = vmatprep.subr.mxu0 0.0
      %6076 = vmatpush1.msra.mxu0 0.0
      %6077 = vmatprep.subr.mxu0 0.0
      %6078 = vmatpush1.msra.mxu0 0.0
      %6079 = vmatprep.subr.mxu0 0.0
      %6080 = vmatpush1.msra.mxu0 0.0
      %6081 = vmatprep.subr.mxu0 0.0
      %6082 = vmatpush1.msra.mxu0 0.0
      %6083 = vmatprep.subr.mxu0 0.0
      %6084 = vmatpush1.msra.mxu0 0.0
      %6085 = vmatprep.subr.mxu0 0.0
      %6086 = vmatpush1.msra.mxu0 0.0
      %6087 = vmatprep.subr.mxu0 0.0
      %6088 = vmatpush1.msra.mxu0 0.0
      %6089 = vmatprep.subr.mxu0 0.0
      %6090 = vmatpush1.msra.mxu0 0.0
      %6091 = vmatprep.subr.mxu0 0.0
      %6092 = vmatpush1.msra.mxu0 0.0
      %6093 = vmatprep.subr.mxu0 0.0
      %6094 = vmatpush1.msra.mxu0 0.0
      %6095 = vmatprep.subr.mxu0 0.0
      %6096 = vmatpush1.msra.mxu0 0.0
      %6097 = vmatprep.subr.mxu0 0.0
      %6098 = vmatpush1.msra.mxu0 0.0
      %6099 = vmatprep.subr.mxu0 0.0
      %6100 = vmatpush1.msra.mxu0 0.0
      %6101 = vmatprep.subr.mxu0 0.0
      %6102 = vmatpush1.msra.mxu0 0.0
      %6103 = vmatprep.subr.mxu0 0.0
      %6104 = vmatpush1.msra.mxu0 0.0
      %6105 = vmatprep.subr.mxu0 0.0
      %6106 = vmatpush1.msra.mxu0 0.0
      %6107 = vmatprep.subr.mxu0 0.0
      %6108 = vmatpush1.msra.mxu0 0.0
      %6109 = vmatprep.subr.mxu0 0.0
      %6110 = vmatpush1.msra.mxu0 0.0
      %6111 = vmatprep.subr.mxu0 0.0
      %6112 = vmatpush1.msra.mxu0 0.0
      %6113 = vmatprep.subr.mxu0 0.0
      %6114 = vmatpush1.msra.mxu0 0.0
      %6115 = vmatprep.subr.mxu0 0.0
      %6116 = vmatpush1.msra.mxu0 0.0
      %6117 = vmatprep.subr.mxu0 0.0
      %6118 = vmatpush1.msra.mxu0 0.0
      %6119 = vmatprep.subr.mxu0 0.0
      %6120 = vmatpush1.msra.mxu0 0.0
      %6121 = vmatprep.subr.mxu0 0.0
      %6122 = vmatpush1.msra.mxu0 0.0
      %6123 = vmatprep.subr.mxu0 0.0
      %6124 = vmatpush1.msra.mxu0 0.0
      %6125 = vmatprep.subr.mxu0 0.0
      %6126 = vmatpush1.msra.mxu0 0.0
      %6127 = vmatprep.subr.mxu0 0.0
      %6128 = vmatpush1.msra.mxu0 0.0
      %6129 = vmatprep.mubr.f32.mxu0 0.0
      %6130 = vmatmul.mubr.f32.gmra.mrb[0].mxu0 %v5776
      %v6131 = vpop.f32.mrb[0].mxu0
      %v6132 = vadd.f32 %v5907, %v6131
      %v6133 = vpop.f32.mrb[0].mxu0
      %6134 = vmatprep.mubr.f32.mxu0 0.0
      %6135 = vmatmul.mubr.f32.gmra.mrb[0].mxu0 %v5778
      %v6136 = vpop.f32.mrb[0].mxu0
      %v6137 = vadd.f32 %v5912, %v6136
      %v6138 = vpop.f32.mrb[0].mxu0
      %6139 = vmatprep.mubr.f32.mxu0 0.0
      %6140 = vmatmul.mubr.f32.gmra.mrb[0].mxu0 %v5780
      %v6141 = vpop.f32.mrb[0].mxu0
      %v6142 = vadd.f32 %v5917, %v6141
      %v6143 = vpop.f32.mrb[0].mxu0
      %6144 = vmatprep.mubr.f32.mxu0 0.0
      %6145 = vmatmul.mubr.f32.gmra.mrb[0].mxu0 %v5782
      %v6146 = vpop.f32.mrb[0].mxu0
      %v6147 = vadd.f32 %v5922, %v6146
      %v6148 = vpop.f32.mrb[0].mxu0
      %6149 = vmatprep.mubr.f32.mxu0 0.0
      %6150 = vmatmul.mubr.f32.gmra.mrb[0].mxu0 %v5784
      %v6151 = vpop.f32.mrb[0].mxu0
      %v6152 = vadd.f32 %v5927, %v6151
      %v6153 = vpop.f32.mrb[0].mxu0
      %6154 = vmatprep.mubr.f32.mxu0 0.0
      %6155 = vmatmul.mubr.f32.gmra.mrb[0].mxu0 %v5786
      %v6156 = vpop.f32.mrb[0].mxu0
      %v6157 = vadd.f32 %v5932, %v6156
      %v6158 = vpop.f32.mrb[0].mxu0
      %6159 = vmatprep.mubr.f32.mxu0 0.0
      %6160 = vmatmul.mubr.f32.gmra.mrb[0].mxu0 %v5788
      %v6161 = vpop.f32.mrb[0].mxu0
      %v6162 = vadd.f32 %v5937, %v6161
      %v6163 = vpop.f32.mrb[0].mxu0
      %6164 = vmatprep.mubr.f32.mxu0 0.0
      %6165 = vmatmul.mubr.f32.gmra.mrb[0].mxu0 %v5790
      %v6166 = vpop.f32.mrb[0].mxu0
      %v6167 = vadd.f32 %v5942, %v6166
      %v6168 = vpop.f32.mrb[0].mxu0
      %6169 = vmatprep.mubr.f32.mxu0 0.0
      %6170 = vmatmul.mubr.f32.gmra.mrb[0].mxu0 %v5792
      %v6171 = vpop.f32.mrb[0].mxu0
      %v6172 = vadd.f32 %v5947, %v6171
      %v6173 = vpop.f32.mrb[0].mxu0
      %6174 = vmatprep.mubr.f32.mxu0 0.0
      %6175 = vmatmul.mubr.f32.gmra.mrb[0].mxu0 %v5794
      %v6176 = vpop.f32.mrb[0].mxu0
      %v6177 = vadd.f32 %v5952, %v6176
      %v6178 = vpop.f32.mrb[0].mxu0
      %6179 = vmatprep.mubr.f32.mxu0 0.0
      %6180 = vmatmul.mubr.f32.gmra.mrb[0].mxu0 %v5796
      %v6181 = vpop.f32.mrb[0].mxu0
      %v6182 = vadd.f32 %v5957, %v6181
      %v6183 = vpop.f32.mrb[0].mxu0
      %6184 = vmatprep.mubr.f32.mxu0 0.0
      %6185 = vmatmul.mubr.f32.gmra.mrb[0].mxu0 %v5798
      %v6186 = vpop.f32.mrb[0].mxu0
      %v6187 = vadd.f32 %v5962, %v6186
      %v6188 = vpop.f32.mrb[0].mxu0
      %6189 = vmatprep.mubr.f32.mxu0 0.0
      %6190 = vmatmul.mubr.f32.gmra.mrb[0].mxu0 %v5800
      %v6191 = vpop.f32.mrb[0].mxu0
      %v6192 = vadd.f32 %v5967, %v6191
      %v6193 = vpop.f32.mrb[0].mxu0
      %6194 = vmatprep.mubr.f32.mxu0 0.0
      %6195 = vmatmul.mubr.f32.gmra.mrb[0].mxu0 %v5802
      %v6196 = vpop.f32.mrb[0].mxu0
      %v6197 = vadd.f32 %v5972, %v6196
      %v6198 = vpop.f32.mrb[0].mxu0
      %6199 = vmatprep.mubr.f32.mxu0 0.0
      %6200 = vmatmul.mubr.f32.gmra.mrb[0].mxu0 %v5804
      %v6201 = vpop.f32.mrb[0].mxu0
      %v6202 = vadd.f32 %v5977, %v6201
      %v6203 = vpop.f32.mrb[0].mxu0
      %6204 = vmatprep.mubr.f32.mxu0 0.0
      %6205 = vmatmul.mubr.f32.gmra.mrb[0].mxu0 %v5806
      %v6206 = vpop.f32.mrb[0].mxu0
      %v6207 = vadd.f32 %v5982, %v6206
      %v6208 = vpop.f32.mrb[0].mxu0
      %6209 = vmatprep.mubr.f32.mxu0 0.0
      %6210 = vmatmul.mubr.f32.gmra.mrb[0].mxu0 %v5808
      %v6211 = vpop.f32.mrb[0].mxu0
      %v6212 = vadd.f32 %v5987, %v6211
      %v6213 = vpop.f32.mrb[0].mxu0
      %6214 = vmatprep.mubr.f32.mxu0 0.0
      %6215 = vmatmul.mubr.f32.gmra.mrb[0].mxu0 %v5810
      %v6216 = vpop.f32.mrb[0].mxu0
      %v6217 = vadd.f32 %v5992, %v6216
      %v6218 = vpop.f32.mrb[0].mxu0
      %6219 = vmatprep.mubr.f32.mxu0 0.0
      %6220 = vmatmul.mubr.f32.gmra.mrb[0].mxu0 %v5812
      %v6221 = vpop.f32.mrb[0].mxu0
      %v6222 = vadd.f32 %v5997, %v6221
      %v6223 = vpop.f32.mrb[0].mxu0
      %6224 = vmatprep.mubr.f32.mxu0 0.0
      %6225 = vmatmul.mubr.f32.gmra.mrb[0].mxu0 %v5814
      %v6226 = vpop.f32.mrb[0].mxu0
      %v6227 = vadd.f32 %v6002, %v6226
      %v6228 = vpop.f32.mrb[0].mxu0
      %6229 = vmatprep.mubr.f32.mxu0 0.0
      %6230 = vmatmul.mubr.f32.gmra.mrb[0].mxu0 %v5816
      %v6231 = vpop.f32.mrb[0].mxu0
      %v6232 = vadd.f32 %v6007, %v6231
      %v6233 = vpop.f32.mrb[0].mxu0
      %6234 = vmatprep.mubr.f32.mxu0 0.0
      %6235 = vmatmul.mubr.f32.gmra.mrb[0].mxu0 %v5818
      %v6236 = vpop.f32.mrb[0].mxu0
      %v6237 = vadd.f32 %v6012, %v6236
      %v6238 = vpop.f32.mrb[0].mxu0
      %6239 = vmatprep.mubr.f32.mxu0 0.0
      %6240 = vmatmul.mubr.f32.gmra.mrb[0].mxu0 %v5820
      %v6241 = vpop.f32.mrb[0].mxu0
      %v6242 = vadd.f32 %v6017, %v6241
      %v6243 = vpop.f32.mrb[0].mxu0
      %6244 = vmatprep.mubr.f32.mxu0 0.0
      %6245 = vmatmul.mubr.f32.gmra.mrb[0].mxu0 %v5822
      %v6246 = vpop.f32.mrb[0].mxu0
      %v6247 = vadd.f32 %v6022, %v6246
      %v6248 = vpop.f32.mrb[0].mxu0
      %6249 = vmatprep.mubr.f32.mxu0 0.0
      %6250 = vmatmul.mubr.f32.gmra.mrb[0].mxu0 %v5824
      %v6251 = vpop.f32.mrb[0].mxu0
      %v6252 = vadd.f32 %v6027, %v6251
      %v6253 = vpop.f32.mrb[0].mxu0
      %6254 = vmatprep.mubr.f32.mxu0 0.0
      %6255 = vmatmul.mubr.f32.gmra.mrb[0].mxu0 %v5826
      %v6256 = vpop.f32.mrb[0].mxu0
      %v6257 = vadd.f32 %v6032, %v6256
      %v6258 = vpop.f32.mrb[0].mxu0
      %6259 = vmatprep.mubr.f32.mxu0 0.0
      %6260 = vmatmul.mubr.f32.gmra.mrb[0].mxu0 %v5828
      %v6261 = vpop.f32.mrb[0].mxu0
      %v6262 = vadd.f32 %v6037, %v6261
      %v6263 = vpop.f32.mrb[0].mxu0
      %6264 = vmatprep.mubr.f32.mxu0 0.0
      %6265 = vmatmul.mubr.f32.gmra.mrb[0].mxu0 %v5830
      %v6266 = vpop.f32.mrb[0].mxu0
      %v6267 = vadd.f32 %v6042, %v6266
      %v6268 = vpop.f32.mrb[0].mxu0
      %6269 = vmatprep.mubr.f32.mxu0 0.0
      %6270 = vmatmul.mubr.f32.gmra.mrb[0].mxu0 %v5832
      %v6271 = vpop.f32.mrb[0].mxu0
      %v6272 = vadd.f32 %v6047, %v6271
      %v6273 = vpop.f32.mrb[0].mxu0
      %6274 = vmatprep.mubr.f32.mxu0 0.0
      %6275 = vmatmul.mubr.f32.gmra.mrb[0].mxu0 %v5834
      %v6276 = vpop.f32.mrb[0].mxu0
      %v6277 = vadd.f32 %v6052, %v6276
      %v6278 = vpop.f32.mrb[0].mxu0
      %6279 = vmatprep.mubr.f32.mxu0 0.0
      %6280 = vmatmul.mubr.f32.gmra.mrb[0].mxu0 %v5836
      %v6281 = vpop.f32.mrb[0].mxu0
      %v6282 = vadd.f32 %v6057, %v6281
      %v6283 = vpop.f32.mrb[0].mxu0
      %6284 = vmatprep.mubr.f32.mxu0 0.0
      %6285 = vmatmul.mubr.f32.gmra.mrb[0].mxu0 %v5838
      %v6286 = vpop.f32.mrb[0].mxu0
      %v6287 = vadd.f32 %v6062, %v6286
      %v6288 = vpop.f32.mrb[0].mxu0
      %6289 = vdwg.mxu0
      %v6290 = vmax.f32 %v6132, 0.0
      %v6291 = vmax.f32 %v6137, 0.0
      %v6292 = vmax.f32 %v6142, 0.0
      %v6293 = vmax.f32 %v6147, 0.0
      %v6294 = vmax.f32 %v6152, 0.0
      %v6295 = vmax.f32 %v6157, 0.0
      %v6296 = vmax.f32 %v6162, 0.0
      %v6297 = vmax.f32 %v6167, 0.0
      %v6298 = vmax.f32 %v6172, 0.0
      %v6299 = vmax.f32 %v6177, 0.0
      %v6300 = vmax.f32 %v6182, 0.0
      %v6301 = vmax.f32 %v6187, 0.0
      %v6302 = vmax.f32 %v6192, 0.0
      %v6303 = vmax.f32 %v6197, 0.0
      %v6304 = vmax.f32 %v6202, 0.0
      %v6305 = vmax.f32 %v6207, 0.0
      %v6306 = vmax.f32 %v6212, 0.0
      %v6307 = vmax.f32 %v6217, 0.0
      %v6308 = vmax.f32 %v6222, 0.0
      %v6309 = vmax.f32 %v6227, 0.0
      %v6310 = vmax.f32 %v6232, 0.0
      %v6311 = vmax.f32 %v6237, 0.0
      %v6312 = vmax.f32 %v6242, 0.0
      %v6313 = vmax.f32 %v6247, 0.0
      %v6314 = vmax.f32 %v6252, 0.0
      %v6315 = vmax.f32 %v6257, 0.0
      %v6316 = vmax.f32 %v6262, 0.0
      %v6317 = vmax.f32 %v6267, 0.0
      %v6318 = vmax.f32 %v6272, 0.0
      %v6319 = vmax.f32 %v6277, 0.0
      %v6320 = vmax.f32 %v6282, 0.0
      %v6321 = vmax.f32 %v6287, 0.0
      %6322 = vst.msk [vmem:[%s3347 + $0x1] sm:$0xff] %vm443, %v6290
      %6323 = vst.msk [vmem:[%s3347 + $0x9] sm:$0xff] %vm443, %v6291
      %6324 = vst.msk [vmem:[%s3347 + $0x19] sm:$0xff] %vm443, %v6292
      %6325 = vst.msk [vmem:[%s3347 + $0x21] sm:$0xff] %vm443, %v6293
      %6326 = vst.msk [vmem:[%s3347 + $0x31] sm:$0xff] %vm443, %v6294
      %6327 = vst.msk [vmem:[%s3347 + $0x39] sm:$0xff] %vm443, %v6295
      %6328 = vst.msk [vmem:[%s3347 + $0x49] sm:$0xff] %vm443, %v6296
      %6329 = vst.msk [vmem:[%s3347 + $0x51] sm:$0xff] %vm443, %v6297
      %6330 = vst.msk [vmem:[%s3347 + $0x61] sm:$0xff] %vm443, %v6298
      %6331 = vst.msk [vmem:[%s3347 + $0x69] sm:$0xff] %vm443, %v6299
      %6332 = vst.msk [vmem:[%s3347 + $0x79] sm:$0xff] %vm443, %v6300
      %6333 = vst.msk [vmem:[%s3347 + $0x81] sm:$0xff] %vm443, %v6301
      %6334 = vst.msk [vmem:[%s3347 + $0x91] sm:$0xff] %vm443, %v6302
      %6335 = vst.msk [vmem:[%s3347 + $0x99] sm:$0xff] %vm443, %v6303
      %6336 = vst.msk [vmem:[%s3347 + $0xa9] sm:$0xff] %vm443, %v6304
      %6337 = vst.msk [vmem:[%s3347 + $0xb1] sm:$0xff] %vm443, %v6305
      %6338 = vst.msk [vmem:[%s3347 + $0xc1] sm:$0xff] %vm443, %v6306
      %6339 = vst.msk [vmem:[%s3347 + $0xc9] sm:$0xff] %vm443, %v6307
      %6340 = vst.msk [vmem:[%s3347 + $0xd9] sm:$0xff] %vm443, %v6308
      %6341 = vst.msk [vmem:[%s3347 + $0xe1] sm:$0xff] %vm443, %v6309
      %6342 = vst.msk [vmem:[%s3347 + $0xf1] sm:$0xff] %vm443, %v6310
      %6343 = vst.msk [vmem:[%s3347 + $0xf9] sm:$0xff] %vm443, %v6311
      %6344 = vst.msk [vmem:[%s3347 + $0x109] sm:$0xff] %vm443, %v6312
      %6345 = vst.msk [vmem:[%s3347 + $0x111] sm:$0xff] %vm443, %v6313
      %6346 = vst.msk [vmem:[%s3347 + $0x121] sm:$0xff] %vm443, %v6314
      %6347 = vst.msk [vmem:[%s3347 + $0x129] sm:$0xff] %vm443, %v6315
      %6348 = vst.msk [vmem:[%s3347 + $0x139] sm:$0xff] %vm443, %v6316
      %6349 = vst.msk [vmem:[%s3347 + $0x141] sm:$0xff] %vm443, %v6317
      %6350 = vst.msk [vmem:[%s3347 + $0x151] sm:$0xff] %vm443, %v6318
      %6351 = vst.msk [vmem:[%s3347 + $0x159] sm:$0xff] %vm443, %v6319
      %6352 = vst.msk [vmem:[%s3347 + $0x169] sm:$0xff] %vm443, %v6320
      %6353 = vst.msk [vmem:[%s3347 + $0x171] sm:$0xff] %vm443, %v6321
      %v6354 = vld [vmem:[#allocation4] sm:$0xff]
      %v6355 = vld [vmem:[#allocation4 + $0x8] sm:$0xff]
      %v6356 = vld [vmem:[#allocation4 + $0x10] sm:$0x3]
      %v6357 = vld [vmem:[#allocation4 + $0x18] sm:$0xff]
      %v6358 = vld [vmem:[#allocation4 + $0x20] sm:$0xff]
      %v6359 = vld [vmem:[#allocation4 + $0x28] sm:$0x3]
      %v6360 = vld [vmem:[#allocation4 + $0x30] sm:$0xff]
      %v6361 = vld [vmem:[#allocation4 + $0x38] sm:$0xff]
      %v6362 = vld [vmem:[#allocation4 + $0x40] sm:$0x3]
      %v6363 = vld [vmem:[#allocation4 + $0x48] sm:$0xff]
      %v6364 = vld [vmem:[#allocation4 + $0x50] sm:$0xff]
      %v6365 = vld [vmem:[#allocation4 + $0x58] sm:$0x3]
      %v6366 = vld [vmem:[#allocation4 + $0x60] sm:$0xff]
      %v6367 = vld [vmem:[#allocation4 + $0x68] sm:$0xff]
      %v6368 = vld [vmem:[#allocation4 + $0x70] sm:$0x3]
      %v6369 = vld [vmem:[#allocation4 + $0x78] sm:$0xff]
      %v6370 = vld [vmem:[#allocation4 + $0x80] sm:$0xff]
      %v6371 = vld [vmem:[#allocation4 + $0x88] sm:$0x3]
      %v6372 = vld [vmem:[#allocation4 + $0x90] sm:$0xff]
      %v6373 = vld [vmem:[#allocation4 + $0x98] sm:$0xff]
      %v6374 = vld [vmem:[#allocation4 + $0xa0] sm:$0x3]
      %v6375 = vld [vmem:[#allocation4 + $0xa8] sm:$0xff]
      %v6376 = vld [vmem:[#allocation4 + $0xb0] sm:$0xff]
      %v6377 = vld [vmem:[#allocation4 + $0xb8] sm:$0x3]
      %v6378 = vld [vmem:[#allocation4 + $0xc0] sm:$0xff]
      %v6379 = vld [vmem:[#allocation4 + $0xc8] sm:$0xff]
      %v6380 = vld [vmem:[#allocation4 + $0xd0] sm:$0x3]
      %v6381 = vld [vmem:[#allocation4 + $0xd8] sm:$0xff]
      %v6382 = vld [vmem:[#allocation4 + $0xe0] sm:$0xff]
      %v6383 = vld [vmem:[#allocation4 + $0xe8] sm:$0x3]
      %v6384 = vld [vmem:[#allocation4 + $0xf0] sm:$0xff]
      %v6385 = vld [vmem:[#allocation4 + $0xf8] sm:$0xff]
      %v6386 = vld [vmem:[#allocation4 + $0x100] sm:$0x3]
      %v6387 = vld [vmem:[#allocation4 + $0x108] sm:$0xff]
      %v6388 = vld [vmem:[#allocation4 + $0x110] sm:$0xff]
      %v6389 = vld [vmem:[#allocation4 + $0x118] sm:$0x3]
      %v6390 = vld [vmem:[#allocation4 + $0x120] sm:$0xff]
      %v6391 = vld [vmem:[#allocation4 + $0x128] sm:$0xff]
      %v6392 = vld [vmem:[#allocation4 + $0x130] sm:$0x3]
      %v6393 = vld [vmem:[#allocation4 + $0x138] sm:$0xff]
      %v6394 = vld [vmem:[#allocation4 + $0x140] sm:$0xff]
      %v6395 = vld [vmem:[#allocation4 + $0x148] sm:$0x3]
      %v6396 = vld [vmem:[#allocation4 + $0x150] sm:$0xff]
      %v6397 = vld [vmem:[#allocation4 + $0x158] sm:$0xff]
      %v6398 = vld [vmem:[#allocation4 + $0x160] sm:$0x3]
      %v6399 = vld [vmem:[#allocation4 + $0x168] sm:$0xff]
      %v6400 = vld [vmem:[#allocation4 + $0x170] sm:$0xff]
      %v6401 = vld [vmem:[#allocation4 + $0x178] sm:$0x3]
      %v6402 = vld [vmem:[#allocation4 + $0x180] sm:$0xff]
      %v6403 = vld [vmem:[#allocation4 + $0x188] sm:$0xff]
      %v6404 = vld [vmem:[#allocation4 + $0x190] sm:$0x3]
      %v6405 = vld [vmem:[#allocation4 + $0x198] sm:$0xff]
      %v6406 = vld [vmem:[#allocation4 + $0x1a0] sm:$0xff]
      %v6407 = vld [vmem:[#allocation4 + $0x1a8] sm:$0x3]
      %v6462 = vrot.slane %v6354, 1
      %v6463 = vrot.slane %v6355, 1
      %v6464 = vsel %vm726, %v6462, %v6463
      %v6465 = vrot.slane %v6356, 1
      %v6466 = vsel %vm726, %v6463, %v6465
      %v6467 = vrot.slane %v6357, 1
      %v6468 = vrot.slane %v6358, 1
      %v6469 = vsel %vm726, %v6467, %v6468
      %v6470 = vrot.slane %v6359, 1
      %v6471 = vsel %vm726, %v6468, %v6470
      %v6472 = vrot.slane %v6360, 1
      %v6473 = vrot.slane %v6361, 1
      %v6474 = vsel %vm726, %v6472, %v6473
      %v6475 = vrot.slane %v6362, 1
      %v6476 = vsel %vm726, %v6473, %v6475
      %v6477 = vrot.slane %v6363, 1
      %v6478 = vrot.slane %v6364, 1
      %v6479 = vsel %vm726, %v6477, %v6478
      %v6480 = vrot.slane %v6365, 1
      %v6481 = vsel %vm726, %v6478, %v6480
      %v6482 = vrot.slane %v6366, 1
      %v6483 = vrot.slane %v6367, 1
      %v6484 = vsel %vm726, %v6482, %v6483
      %v6485 = vrot.slane %v6368, 1
      %v6486 = vsel %vm726, %v6483, %v6485
      %v6487 = vrot.slane %v6369, 1
      %v6488 = vrot.slane %v6370, 1
      %v6489 = vsel %vm726, %v6487, %v6488
      %v6490 = vrot.slane %v6371, 1
      %v6491 = vsel %vm726, %v6488, %v6490
      %v6492 = vrot.slane %v6372, 1
      %v6493 = vrot.slane %v6373, 1
      %v6494 = vsel %vm726, %v6492, %v6493
      %v6495 = vrot.slane %v6374, 1
      %v6496 = vsel %vm726, %v6493, %v6495
      %v6497 = vrot.slane %v6375, 1
      %v6498 = vrot.slane %v6376, 1
      %v6499 = vsel %vm726, %v6497, %v6498
      %v6500 = vrot.slane %v6377, 1
      %v6501 = vsel %vm726, %v6498, %v6500
      %v6502 = vrot.slane %v6378, 1
      %v6503 = vrot.slane %v6379, 1
      %v6504 = vsel %vm726, %v6502, %v6503
      %v6505 = vrot.slane %v6380, 1
      %v6506 = vsel %vm726, %v6503, %v6505
      %v6507 = vrot.slane %v6381, 1
      %v6508 = vrot.slane %v6382, 1
      %v6509 = vsel %vm726, %v6507, %v6508
      %v6510 = vrot.slane %v6383, 1
      %v6511 = vsel %vm726, %v6508, %v6510
      %v6512 = vrot.slane %v6384, 1
      %v6513 = vrot.slane %v6385, 1
      %v6514 = vsel %vm726, %v6512, %v6513
      %v6515 = vrot.slane %v6386, 1
      %v6516 = vsel %vm726, %v6513, %v6515
      %v6517 = vrot.slane %v6387, 1
      %v6518 = vrot.slane %v6388, 1
      %v6519 = vsel %vm726, %v6517, %v6518
      %v6520 = vrot.slane %v6389, 1
      %v6521 = vsel %vm726, %v6518, %v6520
      %v6522 = vrot.slane %v6390, 1
      %v6523 = vrot.slane %v6391, 1
      %v6524 = vsel %vm726, %v6522, %v6523
      %v6525 = vrot.slane %v6392, 1
      %v6526 = vsel %vm726, %v6523, %v6525
      %v6527 = vrot.slane %v6393, 1
      %v6528 = vrot.slane %v6394, 1
      %v6529 = vsel %vm726, %v6527, %v6528
      %v6530 = vrot.slane %v6395, 1
      %v6531 = vsel %vm726, %v6528, %v6530
      %v6532 = vrot.slane %v6396, 1
      %v6533 = vrot.slane %v6397, 1
      %v6534 = vsel %vm726, %v6532, %v6533
      %v6535 = vrot.slane %v6398, 1
      %v6536 = vsel %vm726, %v6533, %v6535
      %v6537 = vrot.slane %v6399, 1
      %v6538 = vrot.slane %v6400, 1
      %v6539 = vsel %vm726, %v6537, %v6538
      %v6540 = vrot.slane %v6401, 1
      %v6541 = vsel %vm726, %v6538, %v6540
      %v6542 = vrot.slane %v6402, 1
      %v6543 = vrot.slane %v6403, 1
      %v6544 = vsel %vm726, %v6542, %v6543
      %v6545 = vrot.slane %v6404, 1
      %v6546 = vsel %vm726, %v6543, %v6545
      %v6547 = vrot.slane %v6405, 1
      %v6548 = vrot.slane %v6406, 1
      %v6549 = vsel %vm726, %v6547, %v6548
      %v6550 = vrot.slane %v6407, 1
      %v6551 = vsel %vm726, %v6548, %v6550
      %6552 = vrot.lane.b32.xlu0 %v6464, 32
      %v6553 = vpop.permute.xlu0 %6552
      %6554 = vrot.lane.b32.xlu0 %v6466, 32
      %v6555 = vpop.permute.xlu0 %6554
      %6556 = vrot.lane.b32.xlu0 %v6469, 32
      %v6557 = vpop.permute.xlu0 %6556
      %6558 = vrot.lane.b32.xlu0 %v6471, 32
      %v6559 = vpop.permute.xlu0 %6558
      %6560 = vrot.lane.b32.xlu0 %v6474, 32
      %v6561 = vpop.permute.xlu0 %6560
      %6562 = vrot.lane.b32.xlu0 %v6476, 32
      %v6563 = vpop.permute.xlu0 %6562
      %6564 = vrot.lane.b32.xlu0 %v6479, 32
      %v6565 = vpop.permute.xlu0 %6564
      %6566 = vrot.lane.b32.xlu0 %v6481, 32
      %v6567 = vpop.permute.xlu0 %6566
      %6568 = vrot.lane.b32.xlu0 %v6484, 32
      %v6569 = vpop.permute.xlu0 %6568
      %6570 = vrot.lane.b32.xlu0 %v6486, 32
      %v6571 = vpop.permute.xlu0 %6570
      %6572 = vrot.lane.b32.xlu0 %v6489, 32
      %v6573 = vpop.permute.xlu0 %6572
      %6574 = vrot.lane.b32.xlu0 %v6491, 32
      %v6575 = vpop.permute.xlu0 %6574
      %6576 = vrot.lane.b32.xlu0 %v6494, 32
      %v6577 = vpop.permute.xlu0 %6576
      %6578 = vrot.lane.b32.xlu0 %v6496, 32
      %v6579 = vpop.permute.xlu0 %6578
      %6580 = vrot.lane.b32.xlu0 %v6499, 32
      %v6581 = vpop.permute.xlu0 %6580
      %6582 = vrot.lane.b32.xlu0 %v6501, 32
      %v6583 = vpop.permute.xlu0 %6582
      %6584 = vrot.lane.b32.xlu0 %v6504, 32
      %v6585 = vpop.permute.xlu0 %6584
      %6586 = vrot.lane.b32.xlu0 %v6506, 32
      %v6587 = vpop.permute.xlu0 %6586
      %6588 = vrot.lane.b32.xlu0 %v6509, 32
      %v6589 = vpop.permute.xlu0 %6588
      %6590 = vrot.lane.b32.xlu0 %v6511, 32
      %v6591 = vpop.permute.xlu0 %6590
      %6592 = vrot.lane.b32.xlu0 %v6514, 32
      %v6593 = vpop.permute.xlu0 %6592
      %6594 = vrot.lane.b32.xlu0 %v6516, 32
      %v6595 = vpop.permute.xlu0 %6594
      %6596 = vrot.lane.b32.xlu0 %v6519, 32
      %v6597 = vpop.permute.xlu0 %6596
      %6598 = vrot.lane.b32.xlu0 %v6521, 32
      %v6599 = vpop.permute.xlu0 %6598
      %6600 = vrot.lane.b32.xlu0 %v6524, 32
      %v6601 = vpop.permute.xlu0 %6600
      %6602 = vrot.lane.b32.xlu0 %v6526, 32
      %v6603 = vpop.permute.xlu0 %6602
      %6604 = vrot.lane.b32.xlu0 %v6529, 32
      %v6605 = vpop.permute.xlu0 %6604
      %6606 = vrot.lane.b32.xlu0 %v6531, 32
      %v6607 = vpop.permute.xlu0 %6606
      %6608 = vrot.lane.b32.xlu0 %v6534, 32
      %v6609 = vpop.permute.xlu0 %6608
      %6610 = vrot.lane.b32.xlu0 %v6536, 32
      %v6611 = vpop.permute.xlu0 %6610
      %6612 = vrot.lane.b32.xlu0 %v6539, 32
      %v6613 = vpop.permute.xlu0 %6612
      %6614 = vrot.lane.b32.xlu0 %v6541, 32
      %v6615 = vpop.permute.xlu0 %6614
      %6616 = vrot.lane.b32.xlu0 %v6544, 32
      %v6617 = vpop.permute.xlu0 %6616
      %6618 = vrot.lane.b32.xlu0 %v6546, 32
      %v6619 = vpop.permute.xlu0 %6618
      %6620 = vrot.lane.b32.xlu0 %v6549, 32
      %v6621 = vpop.permute.xlu0 %6620
      %6622 = vrot.lane.b32.xlu0 %v6551, 32
      %v6623 = vpop.permute.xlu0 %6622
      %v6660 = vrot.slane %v6354, 2
      %v6661 = vrot.slane %v6355, 2
      %v6662 = vsel %vm925, %v6660, %v6661
      %v6663 = vrot.slane %v6356, 2
      %v6664 = vsel %vm925, %v6661, %v6663
      %v6665 = vrot.slane %v6357, 2
      %v6666 = vrot.slane %v6358, 2
      %v6667 = vsel %vm925, %v6665, %v6666
      %v6668 = vrot.slane %v6359, 2
      %v6669 = vsel %vm925, %v6666, %v6668
      %v6670 = vrot.slane %v6360, 2
      %v6671 = vrot.slane %v6361, 2
      %v6672 = vsel %vm925, %v6670, %v6671
      %v6673 = vrot.slane %v6362, 2
      %v6674 = vsel %vm925, %v6671, %v6673
      %v6675 = vrot.slane %v6363, 2
      %v6676 = vrot.slane %v6364, 2
      %v6677 = vsel %vm925, %v6675, %v6676
      %v6678 = vrot.slane %v6365, 2
      %v6679 = vsel %vm925, %v6676, %v6678
      %v6680 = vrot.slane %v6366, 2
      %v6681 = vrot.slane %v6367, 2
      %v6682 = vsel %vm925, %v6680, %v6681
      %v6683 = vrot.slane %v6368, 2
      %v6684 = vsel %vm925, %v6681, %v6683
      %v6685 = vrot.slane %v6369, 2
      %v6686 = vrot.slane %v6370, 2
      %v6687 = vsel %vm925, %v6685, %v6686
      %v6688 = vrot.slane %v6371, 2
      %v6689 = vsel %vm925, %v6686, %v6688
      %v6690 = vrot.slane %v6372, 2
      %v6691 = vrot.slane %v6373, 2
      %v6692 = vsel %vm925, %v6690, %v6691
      %v6693 = vrot.slane %v6374, 2
      %v6694 = vsel %vm925, %v6691, %v6693
      %v6695 = vrot.slane %v6375, 2
      %v6696 = vrot.slane %v6376, 2
      %v6697 = vsel %vm925, %v6695, %v6696
      %v6698 = vrot.slane %v6377, 2
      %v6699 = vsel %vm925, %v6696, %v6698
      %v6700 = vrot.slane %v6378, 2
      %v6701 = vrot.slane %v6379, 2
      %v6702 = vsel %vm925, %v6700, %v6701
      %v6703 = vrot.slane %v6380, 2
      %v6704 = vsel %vm925, %v6701, %v6703
      %v6705 = vrot.slane %v6381, 2
      %v6706 = vrot.slane %v6382, 2
      %v6707 = vsel %vm925, %v6705, %v6706
      %v6708 = vrot.slane %v6383, 2
      %v6709 = vsel %vm925, %v6706, %v6708
      %v6710 = vrot.slane %v6384, 2
      %v6711 = vrot.slane %v6385, 2
      %v6712 = vsel %vm925, %v6710, %v6711
      %v6713 = vrot.slane %v6386, 2
      %v6714 = vsel %vm925, %v6711, %v6713
      %v6715 = vrot.slane %v6387, 2
      %v6716 = vrot.slane %v6388, 2
      %v6717 = vsel %vm925, %v6715, %v6716
      %v6718 = vrot.slane %v6389, 2
      %v6719 = vsel %vm925, %v6716, %v6718
      %v6720 = vrot.slane %v6390, 2
      %v6721 = vrot.slane %v6391, 2
      %v6722 = vsel %vm925, %v6720, %v6721
      %v6723 = vrot.slane %v6392, 2
      %v6724 = vsel %vm925, %v6721, %v6723
      %v6725 = vrot.slane %v6393, 2
      %v6726 = vrot.slane %v6394, 2
      %v6727 = vsel %vm925, %v6725, %v6726
      %v6728 = vrot.slane %v6395, 2
      %v6729 = vsel %vm925, %v6726, %v6728
      %v6730 = vrot.slane %v6396, 2
      %v6731 = vrot.slane %v6397, 2
      %v6732 = vsel %vm925, %v6730, %v6731
      %v6733 = vrot.slane %v6398, 2
      %v6734 = vsel %vm925, %v6731, %v6733
      %v6735 = vrot.slane %v6399, 2
      %v6736 = vrot.slane %v6400, 2
      %v6737 = vsel %vm925, %v6735, %v6736
      %v6738 = vrot.slane %v6401, 2
      %v6739 = vsel %vm925, %v6736, %v6738
      %v6740 = vrot.slane %v6402, 2
      %v6741 = vrot.slane %v6403, 2
      %v6742 = vsel %vm925, %v6740, %v6741
      %v6743 = vrot.slane %v6404, 2
      %v6744 = vsel %vm925, %v6741, %v6743
      %v6745 = vrot.slane %v6405, 2
      %v6746 = vrot.slane %v6406, 2
      %v6747 = vsel %vm925, %v6745, %v6746
      %v6748 = vrot.slane %v6407, 2
      %v6749 = vsel %vm925, %v6746, %v6748
      %6750 = vrot.lane.b32.xlu0 %v6662, 64
      %v6751 = vpop.permute.xlu0 %6750
      %6752 = vrot.lane.b32.xlu0 %v6664, 64
      %v6753 = vpop.permute.xlu0 %6752
      %6754 = vrot.lane.b32.xlu0 %v6667, 64
      %v6755 = vpop.permute.xlu0 %6754
      %6756 = vrot.lane.b32.xlu0 %v6669, 64
      %v6757 = vpop.permute.xlu0 %6756
      %6758 = vrot.lane.b32.xlu0 %v6672, 64
      %v6759 = vpop.permute.xlu0 %6758
      %6760 = vrot.lane.b32.xlu0 %v6674, 64
      %v6761 = vpop.permute.xlu0 %6760
      %6762 = vrot.lane.b32.xlu0 %v6677, 64
      %v6763 = vpop.permute.xlu0 %6762
      %6764 = vrot.lane.b32.xlu0 %v6679, 64
      %v6765 = vpop.permute.xlu0 %6764
      %6766 = vrot.lane.b32.xlu0 %v6682, 64
      %v6767 = vpop.permute.xlu0 %6766
      %6768 = vrot.lane.b32.xlu0 %v6684, 64
      %v6769 = vpop.permute.xlu0 %6768
      %6770 = vrot.lane.b32.xlu0 %v6687, 64
      %v6771 = vpop.permute.xlu0 %6770
      %6772 = vrot.lane.b32.xlu0 %v6689, 64
      %v6773 = vpop.permute.xlu0 %6772
      %6774 = vrot.lane.b32.xlu0 %v6692, 64
      %v6775 = vpop.permute.xlu0 %6774
      %6776 = vrot.lane.b32.xlu0 %v6694, 64
      %v6777 = vpop.permute.xlu0 %6776
      %6778 = vrot.lane.b32.xlu0 %v6697, 64
      %v6779 = vpop.permute.xlu0 %6778
      %6780 = vrot.lane.b32.xlu0 %v6699, 64
      %v6781 = vpop.permute.xlu0 %6780
      %6782 = vrot.lane.b32.xlu0 %v6702, 64
      %v6783 = vpop.permute.xlu0 %6782
      %6784 = vrot.lane.b32.xlu0 %v6704, 64
      %v6785 = vpop.permute.xlu0 %6784
      %6786 = vrot.lane.b32.xlu0 %v6707, 64
      %v6787 = vpop.permute.xlu0 %6786
      %6788 = vrot.lane.b32.xlu0 %v6709, 64
      %v6789 = vpop.permute.xlu0 %6788
      %6790 = vrot.lane.b32.xlu0 %v6712, 64
      %v6791 = vpop.permute.xlu0 %6790
      %6792 = vrot.lane.b32.xlu0 %v6714, 64
      %v6793 = vpop.permute.xlu0 %6792
      %6794 = vrot.lane.b32.xlu0 %v6717, 64
      %v6795 = vpop.permute.xlu0 %6794
      %6796 = vrot.lane.b32.xlu0 %v6719, 64
      %v6797 = vpop.permute.xlu0 %6796
      %6798 = vrot.lane.b32.xlu0 %v6722, 64
      %v6799 = vpop.permute.xlu0 %6798
      %6800 = vrot.lane.b32.xlu0 %v6724, 64
      %v6801 = vpop.permute.xlu0 %6800
      %6802 = vrot.lane.b32.xlu0 %v6727, 64
      %v6803 = vpop.permute.xlu0 %6802
      %6804 = vrot.lane.b32.xlu0 %v6729, 64
      %v6805 = vpop.permute.xlu0 %6804
      %6806 = vrot.lane.b32.xlu0 %v6732, 64
      %v6807 = vpop.permute.xlu0 %6806
      %6808 = vrot.lane.b32.xlu0 %v6734, 64
      %v6809 = vpop.permute.xlu0 %6808
      %6810 = vrot.lane.b32.xlu0 %v6737, 64
      %v6811 = vpop.permute.xlu0 %6810
      %6812 = vrot.lane.b32.xlu0 %v6739, 64
      %v6813 = vpop.permute.xlu0 %6812
      %6814 = vrot.lane.b32.xlu0 %v6742, 64
      %v6815 = vpop.permute.xlu0 %6814
      %6816 = vrot.lane.b32.xlu0 %v6744, 64
      %v6817 = vpop.permute.xlu0 %6816
      %6818 = vrot.lane.b32.xlu0 %v6747, 64
      %v6819 = vpop.permute.xlu0 %6818
      %6820 = vrot.lane.b32.xlu0 %v6749, 64
      %v6821 = vpop.permute.xlu0 %6820
      %v6858 = vsel %vm443, %v6354, %v6553
      %v6859 = vsel %vm443, %v6355, %v6555
      %v6860 = vsel %vm443, %v6357, %v6557
      %v6861 = vsel %vm443, %v6358, %v6559
      %v6862 = vsel %vm443, %v6360, %v6561
      %v6863 = vsel %vm443, %v6361, %v6563
      %v6864 = vsel %vm443, %v6363, %v6565
      %v6865 = vsel %vm443, %v6364, %v6567
      %v6866 = vsel %vm443, %v6366, %v6569
      %v6867 = vsel %vm443, %v6367, %v6571
      %v6868 = vsel %vm443, %v6369, %v6573
      %v6869 = vsel %vm443, %v6370, %v6575
      %v6870 = vsel %vm443, %v6372, %v6577
      %v6871 = vsel %vm443, %v6373, %v6579
      %v6872 = vsel %vm443, %v6375, %v6581
      %v6873 = vsel %vm443, %v6376, %v6583
      %v6874 = vsel %vm443, %v6378, %v6585
      %v6875 = vsel %vm443, %v6379, %v6587
      %v6876 = vsel %vm443, %v6381, %v6589
      %v6877 = vsel %vm443, %v6382, %v6591
      %v6878 = vsel %vm443, %v6384, %v6593
      %v6879 = vsel %vm443, %v6385, %v6595
      %v6880 = vsel %vm443, %v6387, %v6597
      %v6881 = vsel %vm443, %v6388, %v6599
      %v6882 = vsel %vm443, %v6390, %v6601
      %v6883 = vsel %vm443, %v6391, %v6603
      %v6884 = vsel %vm443, %v6393, %v6605
      %v6885 = vsel %vm443, %v6394, %v6607
      %v6886 = vsel %vm443, %v6396, %v6609
      %v6887 = vsel %vm443, %v6397, %v6611
      %v6888 = vsel %vm443, %v6399, %v6613
      %v6889 = vsel %vm443, %v6400, %v6615
      %v6890 = vsel %vm443, %v6402, %v6617
      %v6891 = vsel %vm443, %v6403, %v6619
      %v6892 = vsel %vm443, %v6405, %v6621
      %v6893 = vsel %vm443, %v6406, %v6623
      %v6894 = vsel %vm2430, %v6858, %v6751
      %v6895 = vsel %vm2430, %v6859, %v6753
      %v6896 = vsel %vm2430, %v6860, %v6755
      %v6897 = vsel %vm2430, %v6861, %v6757
      %v6898 = vsel %vm2430, %v6862, %v6759
      %v6899 = vsel %vm2430, %v6863, %v6761
      %v6900 = vsel %vm2430, %v6864, %v6763
      %v6901 = vsel %vm2430, %v6865, %v6765
      %v6902 = vsel %vm2430, %v6866, %v6767
      %v6903 = vsel %vm2430, %v6867, %v6769
      %v6904 = vsel %vm2430, %v6868, %v6771
      %v6905 = vsel %vm2430, %v6869, %v6773
      %v6906 = vsel %vm2430, %v6870, %v6775
      %v6907 = vsel %vm2430, %v6871, %v6777
      %v6908 = vsel %vm2430, %v6872, %v6779
      %v6909 = vsel %vm2430, %v6873, %v6781
      %v6910 = vsel %vm2430, %v6874, %v6783
      %v6911 = vsel %vm2430, %v6875, %v6785
      %v6912 = vsel %vm2430, %v6876, %v6787
      %v6913 = vsel %vm2430, %v6877, %v6789
      %v6914 = vsel %vm2430, %v6878, %v6791
      %v6915 = vsel %vm2430, %v6879, %v6793
      %v6916 = vsel %vm2430, %v6880, %v6795
      %v6917 = vsel %vm2430, %v6881, %v6797
      %v6918 = vsel %vm2430, %v6882, %v6799
      %v6919 = vsel %vm2430, %v6883, %v6801
      %v6920 = vsel %vm2430, %v6884, %v6803
      %v6921 = vsel %vm2430, %v6885, %v6805
      %v6922 = vsel %vm2430, %v6886, %v6807
      %v6923 = vsel %vm2430, %v6887, %v6809
      %v6924 = vsel %vm2430, %v6888, %v6811
      %v6925 = vsel %vm2430, %v6889, %v6813
      %v6926 = vsel %vm2430, %v6890, %v6815
      %v6927 = vsel %vm2430, %v6891, %v6817
      %v6928 = vsel %vm2430, %v6892, %v6819
      %v6929 = vsel %vm2430, %v6893, %v6821
      %6962 = vrot.lane.b32.xlu0 %v6896, 96
      %v6963 = vpop.permute.xlu0 %6962
      %6964 = vrot.lane.b32.xlu0 %v6897, 96
      %v6965 = vpop.permute.xlu0 %6964
      %6966 = vrot.lane.b32.xlu0 %v6898, 96
      %v6967 = vpop.permute.xlu0 %6966
      %6968 = vrot.lane.b32.xlu0 %v6899, 96
      %v6969 = vpop.permute.xlu0 %6968
      %6970 = vrot.lane.b32.xlu0 %v6900, 96
      %v6971 = vpop.permute.xlu0 %6970
      %6972 = vrot.lane.b32.xlu0 %v6901, 96
      %v6973 = vpop.permute.xlu0 %6972
      %6974 = vrot.lane.b32.xlu0 %v6902, 96
      %v6975 = vpop.permute.xlu0 %6974
      %6976 = vrot.lane.b32.xlu0 %v6903, 96
      %v6977 = vpop.permute.xlu0 %6976
      %6978 = vrot.lane.b32.xlu0 %v6904, 96
      %v6979 = vpop.permute.xlu0 %6978
      %6980 = vrot.lane.b32.xlu0 %v6905, 96
      %v6981 = vpop.permute.xlu0 %6980
      %6982 = vrot.lane.b32.xlu0 %v6906, 96
      %v6983 = vpop.permute.xlu0 %6982
      %6984 = vrot.lane.b32.xlu0 %v6907, 96
      %v6985 = vpop.permute.xlu0 %6984
      %6986 = vrot.lane.b32.xlu0 %v6908, 96
      %v6987 = vpop.permute.xlu0 %6986
      %6988 = vrot.lane.b32.xlu0 %v6909, 96
      %v6989 = vpop.permute.xlu0 %6988
      %6990 = vrot.lane.b32.xlu0 %v6910, 96
      %v6991 = vpop.permute.xlu0 %6990
      %6992 = vrot.lane.b32.xlu0 %v6911, 96
      %v6993 = vpop.permute.xlu0 %6992
      %6994 = vrot.lane.b32.xlu0 %v6912, 96
      %v6995 = vpop.permute.xlu0 %6994
      %6996 = vrot.lane.b32.xlu0 %v6913, 96
      %v6997 = vpop.permute.xlu0 %6996
      %6998 = vrot.lane.b32.xlu0 %v6914, 96
      %v6999 = vpop.permute.xlu0 %6998
      %7000 = vrot.lane.b32.xlu0 %v6915, 96
      %v7001 = vpop.permute.xlu0 %7000
      %7002 = vrot.lane.b32.xlu0 %v6916, 96
      %v7003 = vpop.permute.xlu0 %7002
      %7004 = vrot.lane.b32.xlu0 %v6917, 96
      %v7005 = vpop.permute.xlu0 %7004
      %7006 = vrot.lane.b32.xlu0 %v6918, 96
      %v7007 = vpop.permute.xlu0 %7006
      %7008 = vrot.lane.b32.xlu0 %v6919, 96
      %v7009 = vpop.permute.xlu0 %7008
      %7010 = vrot.lane.b32.xlu0 %v6920, 96
      %v7011 = vpop.permute.xlu0 %7010
      %7012 = vrot.lane.b32.xlu0 %v6921, 96
      %v7013 = vpop.permute.xlu0 %7012
      %7014 = vrot.lane.b32.xlu0 %v6922, 96
      %v7015 = vpop.permute.xlu0 %7014
      %7016 = vrot.lane.b32.xlu0 %v6923, 96
      %v7017 = vpop.permute.xlu0 %7016
      %7018 = vrot.lane.b32.xlu0 %v6924, 96
      %v7019 = vpop.permute.xlu0 %7018
      %7020 = vrot.lane.b32.xlu0 %v6925, 96
      %v7021 = vpop.permute.xlu0 %7020
      %7022 = vrot.lane.b32.xlu0 %v6926, 96
      %v7023 = vpop.permute.xlu0 %7022
      %7024 = vrot.lane.b32.xlu0 %v6927, 96
      %v7025 = vpop.permute.xlu0 %7024
      %7060 = vrot.lane.b32.xlu0 %v6898, 64
      %v7061 = vpop.permute.xlu0 %7060
      %7062 = vrot.lane.b32.xlu0 %v6899, 64
      %v7063 = vpop.permute.xlu0 %7062
      %7064 = vrot.lane.b32.xlu0 %v6900, 64
      %v7065 = vpop.permute.xlu0 %7064
      %7066 = vrot.lane.b32.xlu0 %v6901, 64
      %v7067 = vpop.permute.xlu0 %7066
      %7068 = vrot.lane.b32.xlu0 %v6902, 64
      %v7069 = vpop.permute.xlu0 %7068
      %7070 = vrot.lane.b32.xlu0 %v6903, 64
      %v7071 = vpop.permute.xlu0 %7070
      %7072 = vrot.lane.b32.xlu0 %v6904, 64
      %v7073 = vpop.permute.xlu0 %7072
      %7074 = vrot.lane.b32.xlu0 %v6905, 64
      %v7075 = vpop.permute.xlu0 %7074
      %7076 = vrot.lane.b32.xlu0 %v6906, 64
      %v7077 = vpop.permute.xlu0 %7076
      %7078 = vrot.lane.b32.xlu0 %v6907, 64
      %v7079 = vpop.permute.xlu0 %7078
      %7080 = vrot.lane.b32.xlu0 %v6908, 64
      %v7081 = vpop.permute.xlu0 %7080
      %7082 = vrot.lane.b32.xlu0 %v6909, 64
      %v7083 = vpop.permute.xlu0 %7082
      %7084 = vrot.lane.b32.xlu0 %v6910, 64
      %v7085 = vpop.permute.xlu0 %7084
      %7086 = vrot.lane.b32.xlu0 %v6911, 64
      %v7087 = vpop.permute.xlu0 %7086
      %7088 = vrot.lane.b32.xlu0 %v6912, 64
      %v7089 = vpop.permute.xlu0 %7088
      %7090 = vrot.lane.b32.xlu0 %v6913, 64
      %v7091 = vpop.permute.xlu0 %7090
      %7092 = vrot.lane.b32.xlu0 %v6914, 64
      %v7093 = vpop.permute.xlu0 %7092
      %7094 = vrot.lane.b32.xlu0 %v6915, 64
      %v7095 = vpop.permute.xlu0 %7094
      %7096 = vrot.lane.b32.xlu0 %v6916, 64
      %v7097 = vpop.permute.xlu0 %7096
      %7098 = vrot.lane.b32.xlu0 %v6917, 64
      %v7099 = vpop.permute.xlu0 %7098
      %7100 = vrot.lane.b32.xlu0 %v6918, 64
      %v7101 = vpop.permute.xlu0 %7100
      %7102 = vrot.lane.b32.xlu0 %v6919, 64
      %v7103 = vpop.permute.xlu0 %7102
      %7104 = vrot.lane.b32.xlu0 %v6920, 64
      %v7105 = vpop.permute.xlu0 %7104
      %7106 = vrot.lane.b32.xlu0 %v6921, 64
      %v7107 = vpop.permute.xlu0 %7106
      %7108 = vrot.lane.b32.xlu0 %v6922, 64
      %v7109 = vpop.permute.xlu0 %7108
      %7110 = vrot.lane.b32.xlu0 %v6923, 64
      %v7111 = vpop.permute.xlu0 %7110
      %7112 = vrot.lane.b32.xlu0 %v6924, 64
      %v7113 = vpop.permute.xlu0 %7112
      %7114 = vrot.lane.b32.xlu0 %v6925, 64
      %v7115 = vpop.permute.xlu0 %7114
      %7116 = vrot.lane.b32.xlu0 %v6926, 64
      %v7117 = vpop.permute.xlu0 %7116
      %7118 = vrot.lane.b32.xlu0 %v6927, 64
      %v7119 = vpop.permute.xlu0 %7118
      %7120 = vrot.lane.b32.xlu0 %v6928, 64
      %v7121 = vpop.permute.xlu0 %7120
      %7122 = vrot.lane.b32.xlu0 %v6929, 64
      %v7123 = vpop.permute.xlu0 %7122
      %v7156 = vsel %vm2693, %v6894, %v6963
      %v7157 = vsel %vm2693, %v6895, %v6965
      %v7158 = vsel %vm2693, %v6896, %v6967
      %v7159 = vsel %vm2693, %v6897, %v6969
      %v7160 = vsel %vm2693, %v6898, %v6971
      %v7161 = vsel %vm2693, %v6899, %v6973
      %v7162 = vsel %vm2693, %v6900, %v6975
      %v7163 = vsel %vm2693, %v6901, %v6977
      %v7164 = vsel %vm2693, %v6902, %v6979
      %v7165 = vsel %vm2693, %v6903, %v6981
      %v7166 = vsel %vm2693, %v6904, %v6983
      %v7167 = vsel %vm2693, %v6905, %v6985
      %v7168 = vsel %vm2693, %v6906, %v6987
      %v7169 = vsel %vm2693, %v6907, %v6989
      %v7170 = vsel %vm2693, %v6908, %v6991
      %v7171 = vsel %vm2693, %v6909, %v6993
      %v7172 = vsel %vm2693, %v6910, %v6995
      %v7173 = vsel %vm2693, %v6911, %v6997
      %v7174 = vsel %vm2693, %v6912, %v6999
      %v7175 = vsel %vm2693, %v6913, %v7001
      %v7176 = vsel %vm2693, %v6914, %v7003
      %v7177 = vsel %vm2693, %v6915, %v7005
      %v7178 = vsel %vm2693, %v6916, %v7007
      %v7179 = vsel %vm2693, %v6917, %v7009
      %v7180 = vsel %vm2693, %v6918, %v7011
      %v7181 = vsel %vm2693, %v6919, %v7013
      %v7182 = vsel %vm2693, %v6920, %v7015
      %v7183 = vsel %vm2693, %v6921, %v7017
      %v7184 = vsel %vm2693, %v6922, %v7019
      %v7185 = vsel %vm2693, %v6923, %v7021
      %v7186 = vsel %vm2693, %v6924, %v7023
      %v7187 = vsel %vm2693, %v6925, %v7025
      %v7188 = vsel %vm2430, %v6963, %v7061
      %v7189 = vsel %vm2430, %v6965, %v7063
      %v7190 = vsel %vm2430, %v6967, %v7065
      %v7191 = vsel %vm2430, %v6969, %v7067
      %v7192 = vsel %vm2430, %v6971, %v7069
      %v7193 = vsel %vm2430, %v6973, %v7071
      %v7194 = vsel %vm2430, %v6975, %v7073
      %v7195 = vsel %vm2430, %v6977, %v7075
      %v7196 = vsel %vm2430, %v6979, %v7077
      %v7197 = vsel %vm2430, %v6981, %v7079
      %v7198 = vsel %vm2430, %v6983, %v7081
      %v7199 = vsel %vm2430, %v6985, %v7083
      %v7200 = vsel %vm2430, %v6987, %v7085
      %v7201 = vsel %vm2430, %v6989, %v7087
      %v7202 = vsel %vm2430, %v6991, %v7089
      %v7203 = vsel %vm2430, %v6993, %v7091
      %v7204 = vsel %vm2430, %v6995, %v7093
      %v7205 = vsel %vm2430, %v6997, %v7095
      %v7206 = vsel %vm2430, %v6999, %v7097
      %v7207 = vsel %vm2430, %v7001, %v7099
      %v7208 = vsel %vm2430, %v7003, %v7101
      %v7209 = vsel %vm2430, %v7005, %v7103
      %v7210 = vsel %vm2430, %v7007, %v7105
      %v7211 = vsel %vm2430, %v7009, %v7107
      %v7212 = vsel %vm2430, %v7011, %v7109
      %v7213 = vsel %vm2430, %v7013, %v7111
      %v7214 = vsel %vm2430, %v7015, %v7113
      %v7215 = vsel %vm2430, %v7017, %v7115
      %v7216 = vsel %vm2430, %v7019, %v7117
      %v7217 = vsel %vm2430, %v7021, %v7119
      %v7218 = vsel %vm2430, %v7023, %v7121
      %v7219 = vsel %vm2430, %v7025, %v7123
      %v7220 = vld [vmem:[%s5] sm:$0xff]
      %v7221 = vld [vmem:[%s5 + $0x8] sm:$0xff]
      %v7222 = vld [vmem:[%s5 + $0x10] sm:$0xff]
      %v7223 = vld [vmem:[%s5 + $0x18] sm:$0xff]
      %v7224 = vld [vmem:[%s5 + $0x20] sm:$0xff]
      %v7225 = vld [vmem:[%s5 + $0x28] sm:$0xff]
      %v7226 = vld [vmem:[%s5 + $0x30] sm:$0xff]
      %v7227 = vld [vmem:[%s5 + $0x38] sm:$0xff]
      %v7228 = vld [vmem:[%s5 + $0x40] sm:$0xff]
      %v7229 = vld [vmem:[%s5 + $0x48] sm:$0xff]
      %v7230 = vld [vmem:[%s5 + $0x50] sm:$0xff]
      %v7231 = vld [vmem:[%s5 + $0x58] sm:$0xff]
      %v7232 = vld [vmem:[%s5 + $0x60] sm:$0xff]
      %v7233 = vld [vmem:[%s5 + $0x68] sm:$0xff]
      %v7234 = vld [vmem:[%s5 + $0x70] sm:$0xff]
      %v7235 = vld [vmem:[%s5 + $0x78] sm:$0xff]
      %v7236 = vld [vmem:[%s5 + $0x80] sm:$0xff]
      %v7237 = vld [vmem:[%s5 + $0x88] sm:$0xff]
      %v7238 = vld [vmem:[%s5 + $0x90] sm:$0xff]
      %v7239 = vld [vmem:[%s5 + $0x98] sm:$0xff]
      %v7240 = vld [vmem:[%s5 + $0xa0] sm:$0xff]
      %v7241 = vld [vmem:[%s5 + $0xa8] sm:$0xff]
      %v7242 = vld [vmem:[%s5 + $0xb0] sm:$0xff]
      %v7243 = vld [vmem:[%s5 + $0xb8] sm:$0xff]
      %v7244 = vld [vmem:[%s5 + $0xc0] sm:$0xff]
      %v7245 = vld [vmem:[%s5 + $0xc8] sm:$0xff]
      %v7246 = vld [vmem:[%s5 + $0xd0] sm:$0xff]
      %v7247 = vld [vmem:[%s5 + $0xd8] sm:$0xff]
      %v7248 = vld [vmem:[%s5 + $0xe0] sm:$0xff]
      %v7249 = vld [vmem:[%s5 + $0xe8] sm:$0xff]
      %v7250 = vld [vmem:[%s5 + $0xf0] sm:$0xff]
      %v7251 = vld [vmem:[%s5 + $0xf8] sm:$0xff]
      %v7252 = vld [vmem:[%s5 + $0x100] sm:$0xff]
      %v7253 = vld [vmem:[%s5 + $0x108] sm:$0xff]
      %v7254 = vld [vmem:[%s5 + $0x110] sm:$0xff]
      %v7255 = vld [vmem:[%s5 + $0x118] sm:$0xff]
      %v7256 = vld [vmem:[%s10] sm:$0x1]
      %v7258 = vlaneseq
      %v7259 = vshrl.u32 %v7258, 7
      %v7260 = vsub.s32 0, %v7259
      %v7261 = vrot.slane %v7256, %v7260
      %v7263 = vsel %vm443, %v7061, 0
      %v7265 = vsel %vm443, %v7063, 0
      %v7267 = vsel %vm443, %v7065, 0
      %v7269 = vsel %vm443, %v7067, 0
      %v7271 = vsel %vm443, %v7069, 0
      %v7273 = vsel %vm443, %v7071, 0
      %v7275 = vsel %vm443, %v7073, 0
      %v7277 = vsel %vm443, %v7075, 0
      %v7279 = vsel %vm443, %v7077, 0
      %v7281 = vsel %vm443, %v7079, 0
      %v7283 = vsel %vm443, %v7081, 0
      %v7285 = vsel %vm443, %v7083, 0
      %v7287 = vsel %vm443, %v7085, 0
      %v7289 = vsel %vm443, %v7087, 0
      %v7291 = vsel %vm443, %v7089, 0
      %v7293 = vsel %vm443, %v7091, 0
      %v7295 = vsel %vm443, %v7093, 0
      %v7297 = vsel %vm443, %v7095, 0
      %v7299 = vsel %vm443, %v7097, 0
      %v7301 = vsel %vm443, %v7099, 0
      %v7303 = vsel %vm443, %v7101, 0
      %v7305 = vsel %vm443, %v7103, 0
      %v7307 = vsel %vm443, %v7105, 0
      %v7309 = vsel %vm443, %v7107, 0
      %v7311 = vsel %vm443, %v7109, 0
      %v7313 = vsel %vm443, %v7111, 0
      %v7315 = vsel %vm443, %v7113, 0
      %v7317 = vsel %vm443, %v7115, 0
      %v7319 = vsel %vm443, %v7117, 0
      %v7321 = vsel %vm443, %v7119, 0
      %v7323 = vsel %vm443, %v7121, 0
      %v7325 = vsel %vm443, %v7123, 0
      %7327 = vmatprep.subr.mxu0 0.0
      %7328 = vmatpush1.msra.mxu0 %v7220
      %7329 = vmatprep.subr.mxu0 0.0
      %7330 = vmatpush1.msra.mxu0 %v7221
      %7331 = vmatprep.subr.mxu0 0.0
      %7332 = vmatpush1.msra.mxu0 %v7222
      %7333 = vmatprep.subr.mxu0 0.0
      %7334 = vmatpush1.msra.mxu0 %v7223
      %7335 = vmatprep.subr.mxu0 0.0
      %7336 = vmatpush1.msra.mxu0 %v7224
      %7337 = vmatprep.subr.mxu0 0.0
      %7338 = vmatpush1.msra.mxu0 %v7225
      %7339 = vmatprep.subr.mxu0 0.0
      %7340 = vmatpush1.msra.mxu0 %v7226
      %7341 = vmatprep.subr.mxu0 0.0
      %7342 = vmatpush1.msra.mxu0 %v7227
      %7343 = vmatprep.subr.mxu0 0.0
      %7344 = vmatpush1.msra.mxu0 %v7228
      %7345 = vmatprep.subr.mxu0 0.0
      %7346 = vmatpush1.msra.mxu0 %v7229
      %7347 = vmatprep.subr.mxu0 0.0
      %7348 = vmatpush1.msra.mxu0 %v7230
      %7349 = vmatprep.subr.mxu0 0.0
      %7350 = vmatpush1.msra.mxu0 %v7231
      %7351 = vmatprep.subr.mxu0 0.0
      %7352 = vmatpush1.msra.mxu0 %v7232
      %7353 = vmatprep.subr.mxu0 0.0
      %7354 = vmatpush1.msra.mxu0 %v7233
      %7355 = vmatprep.subr.mxu0 0.0
      %7356 = vmatpush1.msra.mxu0 %v7234
      %7357 = vmatprep.subr.mxu0 0.0
      %7358 = vmatpush1.msra.mxu0 %v7235
      %7359 = vmatprep.subr.mxu0 0.0
      %7360 = vmatpush1.msra.mxu0 %v7236
      %7361 = vmatprep.subr.mxu0 0.0
      %7362 = vmatpush1.msra.mxu0 %v7237
      %7363 = vmatprep.subr.mxu0 0.0
      %7364 = vmatpush1.msra.mxu0 %v7238
      %7365 = vmatprep.subr.mxu0 0.0
      %7366 = vmatpush1.msra.mxu0 %v7239
      %7367 = vmatprep.subr.mxu0 0.0
      %7368 = vmatpush1.msra.mxu0 %v7240
      %7369 = vmatprep.subr.mxu0 0.0
      %7370 = vmatpush1.msra.mxu0 %v7241
      %7371 = vmatprep.subr.mxu0 0.0
      %7372 = vmatpush1.msra.mxu0 %v7242
      %7373 = vmatprep.subr.mxu0 0.0
      %7374 = vmatpush1.msra.mxu0 %v7243
      %7375 = vmatprep.subr.mxu0 0.0
      %7376 = vmatpush1.msra.mxu0 %v7244
      %7377 = vmatprep.subr.mxu0 0.0
      %7378 = vmatpush1.msra.mxu0 %v7245
      %7379 = vmatprep.subr.mxu0 0.0
      %7380 = vmatpush1.msra.mxu0 %v7246
      %7381 = vmatprep.subr.mxu0 0.0
      %7382 = vmatpush1.msra.mxu0 %v7247
      %7383 = vmatprep.subr.mxu0 0.0
      %7384 = vmatpush1.msra.mxu0 %v7248
      %7385 = vmatprep.subr.mxu0 0.0
      %7386 = vmatpush1.msra.mxu0 %v7249
      %7387 = vmatprep.subr.mxu0 0.0
      %7388 = vmatpush1.msra.mxu0 %v7250
      %7389 = vmatprep.subr.mxu0 0.0
      %7390 = vmatpush1.msra.mxu0 %v7251
      %7391 = vmatprep.mubr.f32.mxu0 %v7188
      %7392 = vmatmul.mubr.f32.gmra.mrb[0].mxu0 %v7156
      %v7393 = vpop.f32.mrb[0].mxu0
      %v7394 = vadd.f32 %v7261, %v7393
      %v7395 = vpop.f32.mrb[0].mxu0
      %7396 = vmatprep.mubr.f32.mxu0 %v7189
      %7397 = vmatmul.mubr.f32.gmra.mrb[0].mxu0 %v7157
      %v7398 = vpop.f32.mrb[0].mxu0
      %v7399 = vadd.f32 %v7261, %v7398
      %v7400 = vpop.f32.mrb[0].mxu0
      %7401 = vmatprep.mubr.f32.mxu0 %v7190
      %7402 = vmatmul.mubr.f32.gmra.mrb[0].mxu0 %v7158
      %v7403 = vpop.f32.mrb[0].mxu0
      %v7404 = vadd.f32 %v7261, %v7403
      %v7405 = vpop.f32.mrb[0].mxu0
      %7406 = vmatprep.mubr.f32.mxu0 %v7191
      %7407 = vmatmul.mubr.f32.gmra.mrb[0].mxu0 %v7159
      %v7408 = vpop.f32.mrb[0].mxu0
      %v7409 = vadd.f32 %v7261, %v7408
      %v7410 = vpop.f32.mrb[0].mxu0
      %7411 = vmatprep.mubr.f32.mxu0 %v7192
      %7412 = vmatmul.mubr.f32.gmra.mrb[0].mxu0 %v7160
      %v7413 = vpop.f32.mrb[0].mxu0
      %v7414 = vadd.f32 %v7261, %v7413
      %v7415 = vpop.f32.mrb[0].mxu0
      %7416 = vmatprep.mubr.f32.mxu0 %v7193
      %7417 = vmatmul.mubr.f32.gmra.mrb[0].mxu0 %v7161
      %v7418 = vpop.f32.mrb[0].mxu0
      %v7419 = vadd.f32 %v7261, %v7418
      %v7420 = vpop.f32.mrb[0].mxu0
      %7421 = vmatprep.mubr.f32.mxu0 %v7194
      %7422 = vmatmul.mubr.f32.gmra.mrb[0].mxu0 %v7162
      %v7423 = vpop.f32.mrb[0].mxu0
      %v7424 = vadd.f32 %v7261, %v7423
      %v7425 = vpop.f32.mrb[0].mxu0
      %7426 = vmatprep.mubr.f32.mxu0 %v7195
      %7427 = vmatmul.mubr.f32.gmra.mrb[0].mxu0 %v7163
      %v7428 = vpop.f32.mrb[0].mxu0
      %v7429 = vadd.f32 %v7261, %v7428
      %v7430 = vpop.f32.mrb[0].mxu0
      %7431 = vmatprep.mubr.f32.mxu0 %v7196
      %7432 = vmatmul.mubr.f32.gmra.mrb[0].mxu0 %v7164
      %v7433 = vpop.f32.mrb[0].mxu0
      %v7434 = vadd.f32 %v7261, %v7433
      %v7435 = vpop.f32.mrb[0].mxu0
      %7436 = vmatprep.mubr.f32.mxu0 %v7197
      %7437 = vmatmul.mubr.f32.gmra.mrb[0].mxu0 %v7165
      %v7438 = vpop.f32.mrb[0].mxu0
      %v7439 = vadd.f32 %v7261, %v7438
      %v7440 = vpop.f32.mrb[0].mxu0
      %7441 = vmatprep.mubr.f32.mxu0 %v7198
      %7442 = vmatmul.mubr.f32.gmra.mrb[0].mxu0 %v7166
      %v7443 = vpop.f32.mrb[0].mxu0
      %v7444 = vadd.f32 %v7261, %v7443
      %v7445 = vpop.f32.mrb[0].mxu0
      %7446 = vmatprep.mubr.f32.mxu0 %v7199
      %7447 = vmatmul.mubr.f32.gmra.mrb[0].mxu0 %v7167
      %v7448 = vpop.f32.mrb[0].mxu0
      %v7449 = vadd.f32 %v7261, %v7448
      %v7450 = vpop.f32.mrb[0].mxu0
      %7451 = vmatprep.mubr.f32.mxu0 %v7200
      %7452 = vmatmul.mubr.f32.gmra.mrb[0].mxu0 %v7168
      %v7453 = vpop.f32.mrb[0].mxu0
      %v7454 = vadd.f32 %v7261, %v7453
      %v7455 = vpop.f32.mrb[0].mxu0
      %7456 = vmatprep.mubr.f32.mxu0 %v7201
      %7457 = vmatmul.mubr.f32.gmra.mrb[0].mxu0 %v7169
      %v7458 = vpop.f32.mrb[0].mxu0
      %v7459 = vadd.f32 %v7261, %v7458
      %v7460 = vpop.f32.mrb[0].mxu0
      %7461 = vmatprep.mubr.f32.mxu0 %v7202
      %7462 = vmatmul.mubr.f32.gmra.mrb[0].mxu0 %v7170
      %v7463 = vpop.f32.mrb[0].mxu0
      %v7464 = vadd.f32 %v7261, %v7463
      %v7465 = vpop.f32.mrb[0].mxu0
      %7466 = vmatprep.mubr.f32.mxu0 %v7203
      %7467 = vmatmul.mubr.f32.gmra.mrb[0].mxu0 %v7171
      %v7468 = vpop.f32.mrb[0].mxu0
      %v7469 = vadd.f32 %v7261, %v7468
      %v7470 = vpop.f32.mrb[0].mxu0
      %7471 = vmatprep.mubr.f32.mxu0 %v7204
      %7472 = vmatmul.mubr.f32.gmra.mrb[0].mxu0 %v7172
      %v7473 = vpop.f32.mrb[0].mxu0
      %v7474 = vadd.f32 %v7261, %v7473
      %v7475 = vpop.f32.mrb[0].mxu0
      %7476 = vmatprep.mubr.f32.mxu0 %v7205
      %7477 = vmatmul.mubr.f32.gmra.mrb[0].mxu0 %v7173
      %v7478 = vpop.f32.mrb[0].mxu0
      %v7479 = vadd.f32 %v7261, %v7478
      %v7480 = vpop.f32.mrb[0].mxu0
      %7481 = vmatprep.mubr.f32.mxu0 %v7206
      %7482 = vmatmul.mubr.f32.gmra.mrb[0].mxu0 %v7174
      %v7483 = vpop.f32.mrb[0].mxu0
      %v7484 = vadd.f32 %v7261, %v7483
      %v7485 = vpop.f32.mrb[0].mxu0
      %7486 = vmatprep.mubr.f32.mxu0 %v7207
      %7487 = vmatmul.mubr.f32.gmra.mrb[0].mxu0 %v7175
      %v7488 = vpop.f32.mrb[0].mxu0
      %v7489 = vadd.f32 %v7261, %v7488
      %v7490 = vpop.f32.mrb[0].mxu0
      %7491 = vmatprep.mubr.f32.mxu0 %v7208
      %7492 = vmatmul.mubr.f32.gmra.mrb[0].mxu0 %v7176
      %v7493 = vpop.f32.mrb[0].mxu0
      %v7494 = vadd.f32 %v7261, %v7493
      %v7495 = vpop.f32.mrb[0].mxu0
      %7496 = vmatprep.mubr.f32.mxu0 %v7209
      %7497 = vmatmul.mubr.f32.gmra.mrb[0].mxu0 %v7177
      %v7498 = vpop.f32.mrb[0].mxu0
      %v7499 = vadd.f32 %v7261, %v7498
      %v7500 = vpop.f32.mrb[0].mxu0
      %7501 = vmatprep.mubr.f32.mxu0 %v7210
      %7502 = vmatmul.mubr.f32.gmra.mrb[0].mxu0 %v7178
      %v7503 = vpop.f32.mrb[0].mxu0
      %v7504 = vadd.f32 %v7261, %v7503
      %v7505 = vpop.f32.mrb[0].mxu0
      %7506 = vmatprep.mubr.f32.mxu0 %v7211
      %7507 = vmatmul.mubr.f32.gmra.mrb[0].mxu0 %v7179
      %v7508 = vpop.f32.mrb[0].mxu0
      %v7509 = vadd.f32 %v7261, %v7508
      %v7510 = vpop.f32.mrb[0].mxu0
      %7511 = vmatprep.mubr.f32.mxu0 %v7212
      %7512 = vmatmul.mubr.f32.gmra.mrb[0].mxu0 %v7180
      %v7513 = vpop.f32.mrb[0].mxu0
      %v7514 = vadd.f32 %v7261, %v7513
      %v7515 = vpop.f32.mrb[0].mxu0
      %7516 = vmatprep.mubr.f32.mxu0 %v7213
      %7517 = vmatmul.mubr.f32.gmra.mrb[0].mxu0 %v7181
      %v7518 = vpop.f32.mrb[0].mxu0
      %v7519 = vadd.f32 %v7261, %v7518
      %v7520 = vpop.f32.mrb[0].mxu0
      %7521 = vmatprep.mubr.f32.mxu0 %v7214
      %7522 = vmatmul.mubr.f32.gmra.mrb[0].mxu0 %v7182
      %v7523 = vpop.f32.mrb[0].mxu0
      %v7524 = vadd.f32 %v7261, %v7523
      %v7525 = vpop.f32.mrb[0].mxu0
      %7526 = vmatprep.mubr.f32.mxu0 %v7215
      %7527 = vmatmul.mubr.f32.gmra.mrb[0].mxu0 %v7183
      %v7528 = vpop.f32.mrb[0].mxu0
      %v7529 = vadd.f32 %v7261, %v7528
      %v7530 = vpop.f32.mrb[0].mxu0
      %7531 = vmatprep.mubr.f32.mxu0 %v7216
      %7532 = vmatmul.mubr.f32.gmra.mrb[0].mxu0 %v7184
      %v7533 = vpop.f32.mrb[0].mxu0
      %v7534 = vadd.f32 %v7261, %v7533
      %v7535 = vpop.f32.mrb[0].mxu0
      %7536 = vmatprep.mubr.f32.mxu0 %v7217
      %7537 = vmatmul.mubr.f32.gmra.mrb[0].mxu0 %v7185
      %v7538 = vpop.f32.mrb[0].mxu0
      %v7539 = vadd.f32 %v7261, %v7538
      %v7540 = vpop.f32.mrb[0].mxu0
      %7541 = vmatprep.mubr.f32.mxu0 %v7218
      %7542 = vmatmul.mubr.f32.gmra.mrb[0].mxu0 %v7186
      %v7543 = vpop.f32.mrb[0].mxu0
      %v7544 = vadd.f32 %v7261, %v7543
      %v7545 = vpop.f32.mrb[0].mxu0
      %7546 = vmatprep.mubr.f32.mxu0 %v7219
      %7547 = vmatmul.mubr.f32.gmra.mrb[0].mxu0 %v7187
      %v7548 = vpop.f32.mrb[0].mxu0
      %v7549 = vadd.f32 %v7261, %v7548
      %v7550 = vpop.f32.mrb[0].mxu0
      %7551 = vdwg.mxu0
      %7552 = vmatprep.subr.mxu0 0.0
      %7553 = vmatpush1.msra.mxu0 %v7252
      %7554 = vmatprep.subr.mxu0 0.0
      %7555 = vmatpush1.msra.mxu0 %v7253
      %7556 = vmatprep.subr.mxu0 0.0
      %7557 = vmatpush1.msra.mxu0 %v7254
      %7558 = vmatprep.subr.mxu0 0.0
      %7559 = vmatpush1.msra.mxu0 %v7255
      %7560 = vmatprep.subr.mxu0 0.0
      %7561 = vmatpush1.msra.mxu0 0.0
      %7562 = vmatprep.subr.mxu0 0.0
      %7563 = vmatpush1.msra.mxu0 0.0
      %7564 = vmatprep.subr.mxu0 0.0
      %7565 = vmatpush1.msra.mxu0 0.0
      %7566 = vmatprep.subr.mxu0 0.0
      %7567 = vmatpush1.msra.mxu0 0.0
      %7568 = vmatprep.subr.mxu0 0.0
      %7569 = vmatpush1.msra.mxu0 0.0
      %7570 = vmatprep.subr.mxu0 0.0
      %7571 = vmatpush1.msra.mxu0 0.0
      %7572 = vmatprep.subr.mxu0 0.0
      %7573 = vmatpush1.msra.mxu0 0.0
      %7574 = vmatprep.subr.mxu0 0.0
      %7575 = vmatpush1.msra.mxu0 0.0
      %7576 = vmatprep.subr.mxu0 0.0
      %7577 = vmatpush1.msra.mxu0 0.0
      %7578 = vmatprep.subr.mxu0 0.0
      %7579 = vmatpush1.msra.mxu0 0.0
      %7580 = vmatprep.subr.mxu0 0.0
      %7581 = vmatpush1.msra.mxu0 0.0
      %7582 = vmatprep.subr.mxu0 0.0
      %7583 = vmatpush1.msra.mxu0 0.0
      %7584 = vmatprep.subr.mxu0 0.0
      %7585 = vmatpush1.msra.mxu0 0.0
      %7586 = vmatprep.subr.mxu0 0.0
      %7587 = vmatpush1.msra.mxu0 0.0
      %7588 = vmatprep.subr.mxu0 0.0
      %7589 = vmatpush1.msra.mxu0 0.0
      %7590 = vmatprep.subr.mxu0 0.0
      %7591 = vmatpush1.msra.mxu0 0.0
      %7592 = vmatprep.subr.mxu0 0.0
      %7593 = vmatpush1.msra.mxu0 0.0
      %7594 = vmatprep.subr.mxu0 0.0
      %7595 = vmatpush1.msra.mxu0 0.0
      %7596 = vmatprep.subr.mxu0 0.0
      %7597 = vmatpush1.msra.mxu0 0.0
      %7598 = vmatprep.subr.mxu0 0.0
      %7599 = vmatpush1.msra.mxu0 0.0
      %7600 = vmatprep.subr.mxu0 0.0
      %7601 = vmatpush1.msra.mxu0 0.0
      %7602 = vmatprep.subr.mxu0 0.0
      %7603 = vmatpush1.msra.mxu0 0.0
      %7604 = vmatprep.subr.mxu0 0.0
      %7605 = vmatpush1.msra.mxu0 0.0
      %7606 = vmatprep.subr.mxu0 0.0
      %7607 = vmatpush1.msra.mxu0 0.0
      %7608 = vmatprep.subr.mxu0 0.0
      %7609 = vmatpush1.msra.mxu0 0.0
      %7610 = vmatprep.subr.mxu0 0.0
      %7611 = vmatpush1.msra.mxu0 0.0
      %7612 = vmatprep.subr.mxu0 0.0
      %7613 = vmatpush1.msra.mxu0 0.0
      %7614 = vmatprep.subr.mxu0 0.0
      %7615 = vmatpush1.msra.mxu0 0.0
      %7616 = vmatprep.mubr.f32.mxu0 0.0
      %7617 = vmatmul.mubr.f32.gmra.mrb[0].mxu0 %v7263
      %v7618 = vpop.f32.mrb[0].mxu0
      %v7619 = vadd.f32 %v7394, %v7618
      %v7620 = vpop.f32.mrb[0].mxu0
      %7621 = vmatprep.mubr.f32.mxu0 0.0
      %7622 = vmatmul.mubr.f32.gmra.mrb[0].mxu0 %v7265
      %v7623 = vpop.f32.mrb[0].mxu0
      %v7624 = vadd.f32 %v7399, %v7623
      %v7625 = vpop.f32.mrb[0].mxu0
      %7626 = vmatprep.mubr.f32.mxu0 0.0
      %7627 = vmatmul.mubr.f32.gmra.mrb[0].mxu0 %v7267
      %v7628 = vpop.f32.mrb[0].mxu0
      %v7629 = vadd.f32 %v7404, %v7628
      %v7630 = vpop.f32.mrb[0].mxu0
      %7631 = vmatprep.mubr.f32.mxu0 0.0
      %7632 = vmatmul.mubr.f32.gmra.mrb[0].mxu0 %v7269
      %v7633 = vpop.f32.mrb[0].mxu0
      %v7634 = vadd.f32 %v7409, %v7633
      %v7635 = vpop.f32.mrb[0].mxu0
      %7636 = vmatprep.mubr.f32.mxu0 0.0
      %7637 = vmatmul.mubr.f32.gmra.mrb[0].mxu0 %v7271
      %v7638 = vpop.f32.mrb[0].mxu0
      %v7639 = vadd.f32 %v7414, %v7638
      %v7640 = vpop.f32.mrb[0].mxu0
      %7641 = vmatprep.mubr.f32.mxu0 0.0
      %7642 = vmatmul.mubr.f32.gmra.mrb[0].mxu0 %v7273
      %v7643 = vpop.f32.mrb[0].mxu0
      %v7644 = vadd.f32 %v7419, %v7643
      %v7645 = vpop.f32.mrb[0].mxu0
      %7646 = vmatprep.mubr.f32.mxu0 0.0
      %7647 = vmatmul.mubr.f32.gmra.mrb[0].mxu0 %v7275
      %v7648 = vpop.f32.mrb[0].mxu0
      %v7649 = vadd.f32 %v7424, %v7648
      %v7650 = vpop.f32.mrb[0].mxu0
      %7651 = vmatprep.mubr.f32.mxu0 0.0
      %7652 = vmatmul.mubr.f32.gmra.mrb[0].mxu0 %v7277
      %v7653 = vpop.f32.mrb[0].mxu0
      %v7654 = vadd.f32 %v7429, %v7653
      %v7655 = vpop.f32.mrb[0].mxu0
      %7656 = vmatprep.mubr.f32.mxu0 0.0
      %7657 = vmatmul.mubr.f32.gmra.mrb[0].mxu0 %v7279
      %v7658 = vpop.f32.mrb[0].mxu0
      %v7659 = vadd.f32 %v7434, %v7658
      %v7660 = vpop.f32.mrb[0].mxu0
      %7661 = vmatprep.mubr.f32.mxu0 0.0
      %7662 = vmatmul.mubr.f32.gmra.mrb[0].mxu0 %v7281
      %v7663 = vpop.f32.mrb[0].mxu0
      %v7664 = vadd.f32 %v7439, %v7663
      %v7665 = vpop.f32.mrb[0].mxu0
      %7666 = vmatprep.mubr.f32.mxu0 0.0
      %7667 = vmatmul.mubr.f32.gmra.mrb[0].mxu0 %v7283
      %v7668 = vpop.f32.mrb[0].mxu0
      %v7669 = vadd.f32 %v7444, %v7668
      %v7670 = vpop.f32.mrb[0].mxu0
      %7671 = vmatprep.mubr.f32.mxu0 0.0
      %7672 = vmatmul.mubr.f32.gmra.mrb[0].mxu0 %v7285
      %v7673 = vpop.f32.mrb[0].mxu0
      %v7674 = vadd.f32 %v7449, %v7673
      %v7675 = vpop.f32.mrb[0].mxu0
      %7676 = vmatprep.mubr.f32.mxu0 0.0
      %7677 = vmatmul.mubr.f32.gmra.mrb[0].mxu0 %v7287
      %v7678 = vpop.f32.mrb[0].mxu0
      %v7679 = vadd.f32 %v7454, %v7678
      %v7680 = vpop.f32.mrb[0].mxu0
      %7681 = vmatprep.mubr.f32.mxu0 0.0
      %7682 = vmatmul.mubr.f32.gmra.mrb[0].mxu0 %v7289
      %v7683 = vpop.f32.mrb[0].mxu0
      %v7684 = vadd.f32 %v7459, %v7683
      %v7685 = vpop.f32.mrb[0].mxu0
      %7686 = vmatprep.mubr.f32.mxu0 0.0
      %7687 = vmatmul.mubr.f32.gmra.mrb[0].mxu0 %v7291
      %v7688 = vpop.f32.mrb[0].mxu0
      %v7689 = vadd.f32 %v7464, %v7688
      %v7690 = vpop.f32.mrb[0].mxu0
      %7691 = vmatprep.mubr.f32.mxu0 0.0
      %7692 = vmatmul.mubr.f32.gmra.mrb[0].mxu0 %v7293
      %v7693 = vpop.f32.mrb[0].mxu0
      %v7694 = vadd.f32 %v7469, %v7693
      %v7695 = vpop.f32.mrb[0].mxu0
      %7696 = vmatprep.mubr.f32.mxu0 0.0
      %7697 = vmatmul.mubr.f32.gmra.mrb[0].mxu0 %v7295
      %v7698 = vpop.f32.mrb[0].mxu0
      %v7699 = vadd.f32 %v7474, %v7698
      %v7700 = vpop.f32.mrb[0].mxu0
      %7701 = vmatprep.mubr.f32.mxu0 0.0
      %7702 = vmatmul.mubr.f32.gmra.mrb[0].mxu0 %v7297
      %v7703 = vpop.f32.mrb[0].mxu0
      %v7704 = vadd.f32 %v7479, %v7703
      %v7705 = vpop.f32.mrb[0].mxu0
      %7706 = vmatprep.mubr.f32.mxu0 0.0
      %7707 = vmatmul.mubr.f32.gmra.mrb[0].mxu0 %v7299
      %v7708 = vpop.f32.mrb[0].mxu0
      %v7709 = vadd.f32 %v7484, %v7708
      %v7710 = vpop.f32.mrb[0].mxu0
      %7711 = vmatprep.mubr.f32.mxu0 0.0
      %7712 = vmatmul.mubr.f32.gmra.mrb[0].mxu0 %v7301
      %v7713 = vpop.f32.mrb[0].mxu0
      %v7714 = vadd.f32 %v7489, %v7713
      %v7715 = vpop.f32.mrb[0].mxu0
      %7716 = vmatprep.mubr.f32.mxu0 0.0
      %7717 = vmatmul.mubr.f32.gmra.mrb[0].mxu0 %v7303
      %v7718 = vpop.f32.mrb[0].mxu0
      %v7719 = vadd.f32 %v7494, %v7718
      %v7720 = vpop.f32.mrb[0].mxu0
      %7721 = vmatprep.mubr.f32.mxu0 0.0
      %7722 = vmatmul.mubr.f32.gmra.mrb[0].mxu0 %v7305
      %v7723 = vpop.f32.mrb[0].mxu0
      %v7724 = vadd.f32 %v7499, %v7723
      %v7725 = vpop.f32.mrb[0].mxu0
      %7726 = vmatprep.mubr.f32.mxu0 0.0
      %7727 = vmatmul.mubr.f32.gmra.mrb[0].mxu0 %v7307
      %v7728 = vpop.f32.mrb[0].mxu0
      %v7729 = vadd.f32 %v7504, %v7728
      %v7730 = vpop.f32.mrb[0].mxu0
      %7731 = vmatprep.mubr.f32.mxu0 0.0
      %7732 = vmatmul.mubr.f32.gmra.mrb[0].mxu0 %v7309
      %v7733 = vpop.f32.mrb[0].mxu0
      %v7734 = vadd.f32 %v7509, %v7733
      %v7735 = vpop.f32.mrb[0].mxu0
      %7736 = vmatprep.mubr.f32.mxu0 0.0
      %7737 = vmatmul.mubr.f32.gmra.mrb[0].mxu0 %v7311
      %v7738 = vpop.f32.mrb[0].mxu0
      %v7739 = vadd.f32 %v7514, %v7738
      %v7740 = vpop.f32.mrb[0].mxu0
      %7741 = vmatprep.mubr.f32.mxu0 0.0
      %7742 = vmatmul.mubr.f32.gmra.mrb[0].mxu0 %v7313
      %v7743 = vpop.f32.mrb[0].mxu0
      %v7744 = vadd.f32 %v7519, %v7743
      %v7745 = vpop.f32.mrb[0].mxu0
      %7746 = vmatprep.mubr.f32.mxu0 0.0
      %7747 = vmatmul.mubr.f32.gmra.mrb[0].mxu0 %v7315
      %v7748 = vpop.f32.mrb[0].mxu0
      %v7749 = vadd.f32 %v7524, %v7748
      %v7750 = vpop.f32.mrb[0].mxu0
      %7751 = vmatprep.mubr.f32.mxu0 0.0
      %7752 = vmatmul.mubr.f32.gmra.mrb[0].mxu0 %v7317
      %v7753 = vpop.f32.mrb[0].mxu0
      %v7754 = vadd.f32 %v7529, %v7753
      %v7755 = vpop.f32.mrb[0].mxu0
      %7756 = vmatprep.mubr.f32.mxu0 0.0
      %7757 = vmatmul.mubr.f32.gmra.mrb[0].mxu0 %v7319
      %v7758 = vpop.f32.mrb[0].mxu0
      %v7759 = vadd.f32 %v7534, %v7758
      %v7760 = vpop.f32.mrb[0].mxu0
      %7761 = vmatprep.mubr.f32.mxu0 0.0
      %7762 = vmatmul.mubr.f32.gmra.mrb[0].mxu0 %v7321
      %v7763 = vpop.f32.mrb[0].mxu0
      %v7764 = vadd.f32 %v7539, %v7763
      %v7765 = vpop.f32.mrb[0].mxu0
      %7766 = vmatprep.mubr.f32.mxu0 0.0
      %7767 = vmatmul.mubr.f32.gmra.mrb[0].mxu0 %v7323
      %v7768 = vpop.f32.mrb[0].mxu0
      %v7769 = vadd.f32 %v7544, %v7768
      %v7770 = vpop.f32.mrb[0].mxu0
      %7771 = vmatprep.mubr.f32.mxu0 0.0
      %7772 = vmatmul.mubr.f32.gmra.mrb[0].mxu0 %v7325
      %v7773 = vpop.f32.mrb[0].mxu0
      %v7774 = vadd.f32 %v7549, %v7773
      %v7775 = vpop.f32.mrb[0].mxu0
      %7776 = vdwg.mxu0
      %7777 = vst.msk [vmem:[%s386] sm:$0xff] %vm387, %v7619
      %7778 = vst.msk [vmem:[%s386 + $0x8] sm:$0xff] %vm387, %v7624
      %7779 = vst.msk [vmem:[%s386 + $0x10] sm:$0xff] %vm387, %v7629
      %7780 = vst.msk [vmem:[%s386 + $0x18] sm:$0xff] %vm387, %v7634
      %7781 = vst.msk [vmem:[%s386 + $0x20] sm:$0xff] %vm387, %v7639
      %7782 = vst.msk [vmem:[%s386 + $0x28] sm:$0xff] %vm387, %v7644
      %7783 = vst.msk [vmem:[%s386 + $0x30] sm:$0xff] %vm387, %v7649
      %7784 = vst.msk [vmem:[%s386 + $0x38] sm:$0xff] %vm387, %v7654
      %7785 = vst.msk [vmem:[%s386 + $0x40] sm:$0xff] %vm387, %v7659
      %7786 = vst.msk [vmem:[%s386 + $0x48] sm:$0xff] %vm387, %v7664
      %7787 = vst.msk [vmem:[%s386 + $0x50] sm:$0xff] %vm387, %v7669
      %7788 = vst.msk [vmem:[%s386 + $0x58] sm:$0xff] %vm387, %v7674
      %7789 = vst.msk [vmem:[%s386 + $0x60] sm:$0xff] %vm387, %v7679
      %7790 = vst.msk [vmem:[%s386 + $0x68] sm:$0xff] %vm387, %v7684
      %7791 = vst.msk [vmem:[%s386 + $0x70] sm:$0xff] %vm387, %v7689
      %7792 = vst.msk [vmem:[%s386 + $0x78] sm:$0xff] %vm387, %v7694
      %7793 = vst.msk [vmem:[%s386 + $0x80] sm:$0xff] %vm387, %v7699
      %7794 = vst.msk [vmem:[%s386 + $0x88] sm:$0xff] %vm387, %v7704
      %7795 = vst.msk [vmem:[%s386 + $0x90] sm:$0xff] %vm387, %v7709
      %7796 = vst.msk [vmem:[%s386 + $0x98] sm:$0xff] %vm387, %v7714
      %7797 = vst.msk [vmem:[%s386 + $0xa0] sm:$0xff] %vm387, %v7719
      %7798 = vst.msk [vmem:[%s386 + $0xa8] sm:$0xff] %vm387, %v7724
      %7799 = vst.msk [vmem:[%s386 + $0xb0] sm:$0xff] %vm387, %v7729
      %7800 = vst.msk [vmem:[%s386 + $0xb8] sm:$0xff] %vm387, %v7734
      %7801 = vst.msk [vmem:[%s386 + $0xc0] sm:$0xff] %vm387, %v7739
      %7802 = vst.msk [vmem:[%s386 + $0xc8] sm:$0xff] %vm387, %v7744
      %7803 = vst.msk [vmem:[%s386 + $0xd0] sm:$0xff] %vm387, %v7749
      %7804 = vst.msk [vmem:[%s386 + $0xd8] sm:$0xff] %vm387, %v7754
      %7805 = vst.msk [vmem:[%s386 + $0xe0] sm:$0xff] %vm387, %v7759
      %7806 = vst.msk [vmem:[%s386 + $0xe8] sm:$0xff] %vm387, %v7764
      %7807 = vst.msk [vmem:[%s386 + $0xf0] sm:$0xff] %vm387, %v7769
      %7808 = vst.msk [vmem:[%s386 + $0xf8] sm:$0xff] %vm387, %v7774
      %p7809 = scmp.lt.s32.totalorder %s22, 1
      %s7810 = scalar_select %p7809, %s22, 1
      %s7811 = smul.addr %s7810, 32
      %s7812 = smul.addr %s7811, 8
      %s7813 = scalar_lea.vmem %s11, %s7812
      // Predicated region
      $region65: #{tpu_custom_call.1} parent=63 // pred_check
        %p7814 = pneg %p276
      $region66: #{tpu_custom_call.1} parent=63 // pred_check_branch
        %7816 = sbr.rel (%p7814) target = $region68
      $region67: #{tpu_custom_call.1} parent=63 // pred_region
        _
      $region68: #{tpu_custom_call.1} parent=63 // pred_fallthru
        _
    $region64: #{tpu_custom_call.1} parent=5 // pred_fallthru
      _
    %p7817 = scmp.le.s32.totalorder 2, %s17
    // Predicated region
    $region69: #{tpu_custom_call.1} parent=5 // pred_check
      %p7818 = pneg %p7817
    $region70: #{tpu_custom_call.1} parent=5 // pred_check_branch
      %7820 = sbr.rel (%p7818) target = $region72
    $region71: #{tpu_custom_call.1} parent=5 // pred_region
      %s7821 = ssub.s32 %s17, 2
      // Predicated region
      $region73: #{tpu_custom_call.1} parent=71 // pred_check
        %p7822 = pneg %p282
      $region74: #{tpu_custom_call.1} parent=71 // pred_check_branch
        %7824 = sbr.rel (%p7822) target = $region76
      $region75: #{tpu_custom_call.1} parent=71 // pred_region
        %p7825 = scmp.lt.s32.totalorder %s23, 1
        %s7826 = scalar_select %p7825, %s23, 1
        %s7827 = smul.addr %s7826, 32
        %s7828 = smul.addr %s7827, 8
        %s7829 = scalar_lea.vmem %s11, %s7828
      $region76: #{tpu_custom_call.1} parent=71 // pred_fallthru
        _
    $region72: #{tpu_custom_call.1} parent=5 // pred_fallthru
      _
  $region6: #{tpu_custom_call.1} parent=0 // loop_footer
    %s21 = sadd.s32 1, %s17
  $region7: #{tpu_custom_call.1} parent=0 // loop_footer_branch
    %16 = sbr.rel target = $region3
  $region8: #{tpu_custom_call.1} parent=0 // loop_exit
    _

</llo_original>
